<compile_context>
chip_gen: v6e
topology: v6e:2x2x1
jax: 0.10.0
libtpu: 0.0.40
codegen_flags: <defaults>
</compile_context>

<pallas_src>
import functools

import numpy as np
import jax
import jax.numpy as jnp
from jax.experimental import pallas as pl
from jax.experimental.pallas import tpu as pltpu

GROUPS = 32
EPS = 1e-5


def _silu(x):
    # x * sigmoid(x); sigmoid via a single EUP transcendental (no VPU divide, exact):
    # sigmoid(x) = 0.5 * (1 + tanh(x / 2)).
    return x * (0.5 * jnp.tanh(0.5 * x) + 0.5)


def _group_norm(x3, S_ref, P_ref, gamma_ref, beta_ref, n_per_group):
    """GroupNorm over a (Bt, HW, C) f32 block with per-image statistics.
    S_ref: (C, GROUPS) 0/1 channel->group sum matrix; P_ref = S.T broadcast matrix.
    Variance uses clamped E[x^2]-E[x]^2 in f32; switch to a centered two-pass sum if
    tolerances ever tighten at SD-scale group sizes."""
    s = jnp.sum(x3, axis=1)                        # (Bt, C) per-channel sums
    ss = jnp.sum(x3 * x3, axis=1)                  # (Bt, C) per-channel sum of squares
    gsum = jnp.dot(s, S_ref[...], preferred_element_type=jnp.float32)    # (Bt, G)
    gsq = jnp.dot(ss, S_ref[...], preferred_element_type=jnp.float32)    # (Bt, G)
    mean_g = gsum / n_per_group
    var_g = jnp.maximum(gsq / n_per_group - mean_g * mean_g, 0.0)
    inv_g = jax.lax.rsqrt(var_g + EPS)
    mean_c = jnp.dot(mean_g, P_ref[...], preferred_element_type=jnp.float32)  # (Bt, C)
    inv_c = jnp.dot(inv_g, P_ref[...], preferred_element_type=jnp.float32)    # (Bt, C)
    return ((x3 - mean_c[:, None, :]) * inv_c[:, None, :]
            * gamma_ref[...] + beta_ref[...])


def _zero_halo(pad_ref, H, W):
    """Zero only the halo (interior is fully overwritten each step).  Left/right halo is
    2 columns so bf16 (packed-sublane) stores stay 32-bit-word aligned.  Re-done every
    grid step so correctness holds when the "parallel" batch axis is sharded across
    TensorCores and a core never sees step 0."""
    Bt, Hp, Wp, C = pad_ref.shape
    zr = jnp.zeros((Bt, 1, Wp, C), pad_ref.dtype)
    zc = jnp.zeros((Bt, Hp, 2, C), pad_ref.dtype)
    pad_ref[:, 0:1, :, :] = zr                 # top halo row
    pad_ref[:, H + 1:H + 2, :, :] = zr         # bottom halo row
    pad_ref[:, :, 0:2, :] = zc                 # left halo columns (word-aligned)
    pad_ref[:, :, W + 2:W + 4, :] = zc         # right halo columns (word-aligned)


def _conv3x3(pad_ref, w_ref, H, W):
    """3x3 SAME conv as 9 accumulated K=C MXU dots reading shifted slices of the
    halo-padded scratch directly (no im2col buffer).
    pad_ref: (Bt, H+2, W+4, C), interior at [1:H+1, 2:W+2]; w_ref: (9*C, Cout) bf16."""
    Bt, _, _, C = pad_ref.shape
    M = Bt * H * W
    acc = None
    for k in range(9):                              # static unroll, f32 accumulation
        ky, kx = divmod(k, 3)
        patch = pad_ref[:, ky:ky + H, kx + 1:kx + 1 + W, :]
        patch = patch.reshape(M, C).astype(w_ref.dtype)
        d = jnp.dot(patch, w_ref[k * C:(k + 1) * C, :],
                    preferred_element_type=jnp.float32)
        acc = d if acc is None else acc + d
    return acc                                      # (Bt*H*W, Cout) f32


def resblock_kernel(x_ref, bias1_ref,
                    g1_ref, b1_ref, S1_ref, P1_ref, w1_ref,
                    g2_ref, b2_ref, S2_ref, P2_ref, w2_ref, cb2_ref,
                    *rest, H, W, groups, has_skip_conv):
    if has_skip_conv:
        ws_ref, bs_ref, out_ref, pad1_ref, pad2_ref = rest
    else:
        out_ref, pad1_ref, pad2_ref = rest

    Bt, HW, Cin = x_ref.shape
    Cout = out_ref.shape[-1]

    x_bf = x_ref[...]                               # (Bt, HW, Cin) bf16, lane-dense
    x3 = x_bf.astype(jnp.float32)

    _zero_halo(pad1_ref, H, W)
    _zero_halo(pad2_ref, H, W)

    # ---- in_layers: GroupNorm(32, Cin) -> SiLU -> Conv3x3 (+ emb folded into bias) ----
    h = _silu(_group_norm(x3, S1_ref, P1_ref, g1_ref, b1_ref,
                          float(HW * (Cin // groups))))
    pad1_ref[:, 1:H + 1, 2:W + 2, :] = h.reshape(Bt, H, W, Cin).astype(pad1_ref.dtype)
    h = (_conv3x3(pad1_ref, w1_ref, H, W).reshape(Bt, HW, Cout)
         + bias1_ref[...])                          # bias1 = conv1_b + Linear(SiLU(t_emb))

    # ---- out_layers: GroupNorm(32, Cout) -> SiLU -> Dropout(p=0, identity) -> Conv3x3 ----
    h2 = _silu(_group_norm(h, S2_ref, P2_ref, g2_ref, b2_ref,
                           float(HW * (Cout // groups))))
    pad2_ref[:, 1:H + 1, 2:W + 2, :] = h2.reshape(Bt, H, W, Cout).astype(pad2_ref.dtype)
    h2 = (_conv3x3(pad2_ref, w2_ref, H, W).reshape(Bt, HW, Cout)
          + cb2_ref[...])

    # ---- skip connection + residual add ----
    if has_skip_conv:
        skip = (jnp.dot(x_bf.reshape(Bt * HW, Cin), ws_ref[...],
                        preferred_element_type=jnp.float32).reshape(Bt, HW, Cout)
                + bs_ref[...])
    else:
        skip = x3                                   # identity skip: zero MXU work

    out_ref[...] = (skip + h2).astype(out_ref.dtype)


def resblock_pallas(x_nchw, t_emb, p):
    f32, bf16 = jnp.float32, jnp.bfloat16
    B, Cin, H, W = x_nchw.shape
    Cout = p["conv1_w"].shape[0]
    HW = H * W
    Hp, Wp = H + 2, W + 4                        # 1-row / 2-col halos (aligned bf16 stores)
    has_skip_conv = (Cout != Cin)

    # Batch blocking for small feature maps: pack Bt images per grid step so the conv
    # matmul M dimension (Bt*HW) approaches the MXU's native 256 rows.
    target = max(1, 256 // HW)
    Bt = max(d for d in range(1, B + 1) if B % d == 0 and d <= target)
    n_blocks = B // Bt

    # bf16 conv-input scratch only when packed interior stores stay word-aligned (W even).
    pad_dtype = bf16 if W % 2 == 0 else f32

    # --- layout / parameter glue (plain JAX) ---
    # NCHW -> (B, H*W, C) lane-dense, fed to the kernel in bf16 (halved DMA); GroupNorm
    # math is upcast to f32 inside the kernel.
    x2d = jnp.transpose(x_nchw, (0, 2, 3, 1)).reshape(B, HW, Cin).astype(bf16)

    # Time-embedding Linear hoisted to XLA and folded into conv1's per-image bias.
    emb = (jax.nn.silu(t_emb.astype(f32)) @ jnp.transpose(p["emb_w"]).astype(f32)
           + p["emb_b"].astype(f32))
    bias1 = (emb + p["conv1_b"].astype(f32)).reshape(B, 1, Cout)

    def group_mats(C):
        cg = C // GROUPS
        gidx = jnp.arange(C) // cg
        S = (gidx[:, None] == jnp.arange(GROUPS)[None, :]).astype(f32)   # (C, G)
        return S, jnp.transpose(S)                                       # (C,G), (G,C)

    S1, P1 = group_mats(Cin)
    S2, P2 = group_mats(Cout)

    # conv weights OIHW -> (ky, kx, Cin, Cout) -> (9*Cin, Cout); bf16 MXU operands.
    w1 = jnp.transpose(p["conv1_w"], (2, 3, 1, 0)).reshape(9 * Cin, Cout).astype(bf16)
    w2 = jnp.transpose(p["conv2_w"], (2, 3, 1, 0)).reshape(9 * Cout, Cout).astype(bf16)
    row = lambda v: v.reshape(1, -1).astype(f32)

    inputs = [x2d, bias1,
              row(p["gn1_g"]), row(p["gn1_b"]), S1, P1, w1,
              row(p["gn2_g"]), row(p["gn2_b"]), S2, P2, w2, row(p["conv2_b"])]

    # Grid-invariant operands are single-buffered: no double-buffer VMEM cost for whole
    # weights / GN matrices (decisive at SD widths, especially on v7x's 64 MiB VMEM).
    const = lambda shape: pl.BlockSpec(shape, lambda b, _n=len(shape): (0,) * _n,
                                       pipeline_mode=pl.Buffered(1))
    in_specs = [pl.BlockSpec((Bt, HW, Cin), lambda b: (b, 0, 0)),        # x, per block
                pl.BlockSpec((Bt, 1, Cout), lambda b: (b, 0, 0)),        # fused conv1 bias
                const((1, Cin)), const((1, Cin)),                        # GN1 gamma/beta
                const((Cin, GROUPS)), const((GROUPS, Cin)),              # GN1 sum/bcast
                const((9 * Cin, Cout)),                                  # conv1 weight
                const((1, Cout)), const((1, Cout)),                      # GN2 gamma/beta
                const((Cout, GROUPS)), const((GROUPS, Cout)),            # GN2 sum/bcast
                const((9 * Cout, Cout)), const((1, Cout))]               # conv2 w / b
    if has_skip_conv:
        ws = jnp.transpose(p["skip_w"][:, :, 0, 0]).astype(bf16)         # (Cin, Cout)
        inputs += [ws, row(p["skip_b"])]
        in_specs += [const((Cin, Cout)), const((1, Cout))]

    scratch = [pltpu.VMEM((Bt, Hp, Wp, Cin), pad_dtype),    # conv1 halo-padded input
               pltpu.VMEM((Bt, Hp, Wp, Cout), pad_dtype)]   # conv2 halo-padded input

    # --- generation-aware VMEM budget (leave headroom for compiler scratch) ---
    nbytes = lambda a: int(np.prod(a.shape)) * np.dtype(a.dtype).itemsize
    need = (2 * (Bt * HW * Cin * 2 + Bt * Cout * 4)          # double-buffered x, bias1
            + 2 * (Bt * HW * Cout * 4)                       # double-buffered out
            + sum(nbytes(a) for a in inputs[2:])             # single-buffered constants
            + Bt * Hp * Wp * (Cin + Cout) * np.dtype(pad_dtype).itemsize
            + (8 << 20))                                     # margin
    phys = 128 << 20
    try:
        phys = int(getattr(pltpu.get_tpu_info(), "vmem_capacity_bytes", phys))
    except Exception:
        pass
    cap = max(24 << 20, phys - (12 << 20))      # ~116 MiB on v5e/v6e, ~52 MiB on v7x
    vmem_limit = int(min(max(need, 16 << 20), cap))

    # TODO(synk): at SD-scale widths (C >= ~640) whole (9C, Cout) weights stop fitting
    # v7x's 64 MiB VMEM even single-buffered; add Cout/K grid axes with a pl.when-
    # initialized accumulator so only weight tiles are resident per step.
    # TODO(synk): for B == 1 on v7x, add a second "parallel" spatial-block axis so both
    # TensorCores are used.
    kernel = functools.partial(resblock_kernel, H=H, W=W, groups=GROUPS,
                               has_skip_conv=has_skip_conv)

    out = pl.pallas_call(
        kernel,
        out_shape=jax.ShapeDtypeStruct((B, HW, Cout), f32),
        grid_spec=pltpu.PrefetchScalarGridSpec(
            num_scalar_prefetch=0,
            grid=(n_blocks,),
            in_specs=in_specs,
            out_specs=pl.BlockSpec((Bt, HW, Cout), lambda b: (b, 0, 0)),
            scratch_shapes=scratch,
        ),
        compiler_params=pltpu.CompilerParams(
            dimension_semantics=("parallel",),     # per-batch-block work is disjoint
            vmem_limit_bytes=vmem_limit),
    )(*inputs)

    # (B, HW, Cout) lane-dense kernel output -> NCHW (layout glue only)
    return jnp.transpose(out.reshape(B, H, W, Cout), (0, 3, 1, 2))


# ----------------------------- pure-JAX reference -----------------------------
def resblock_ref(x_nchw, t_emb, p):
    f32 = jnp.float32
    x = jnp.transpose(x_nchw, (0, 2, 3, 1)).astype(f32)
    Cout = p["conv1_w"].shape[0]

    def gn(y, gamma, beta):
        B, H, W, C = y.shape
        cg = C // GROUPS
        yg = y.reshape(B, H * W, GROUPS, cg)
        mean = yg.mean(axis=(1, 3), keepdims=True)
        var = ((yg - mean) ** 2).mean(axis=(1, 3), keepdims=True)
        yn = ((yg - mean) / jnp.sqrt(var + EPS)).reshape(B, H, W, C)
        return yn * gamma + beta

    def conv3x3(y, w_oihw, b):
        w = jnp.transpose(w_oihw, (2, 3, 1, 0))                         # HWIO
        o = jax.lax.conv_general_dilated(y, w, (1, 1), "SAME",
                                         dimension_numbers=("NHWC", "HWIO", "NHWC"))
        return o + b

    silu = jax.nn.silu
    h = conv3x3(silu(gn(x, p["gn1_g"], p["gn1_b"])), p["conv1_w"], p["conv1_b"])
    emb = silu(t_emb) @ p["emb_w"].T + p["emb_b"]
    h = h + emb[:, None, None, :]
    h = conv3x3(silu(gn(h, p["gn2_g"], p["gn2_b"])), p["conv2_w"], p["conv2_b"])
    if Cout == x.shape[-1]:
        skip = x
    else:
        skip = jnp.einsum("bhwc,oc->bhwo", x, p["skip_w"][:, :, 0, 0]) + p["skip_b"]
    return jnp.transpose(skip + h, (0, 3, 1, 2))


if __name__ == "__main__":
    # Channels must be divisible by 32 for GroupNorm(32, C). Two configs exercise both
    # skip branches and both batch-blocking paths (Bt=2 small map / Bt=1 larger map).
    B, Dt = 2, 16
    f32 = jnp.float32

    def make_params(key, Cin, Cout):
        ks = jax.random.split(key, 12)
        p = {
            "gn1_g":   1.0 + 0.1 * jax.random.normal(ks[0], (Cin,), f32),
            "gn1_b":   0.1 * jax.random.normal(ks[1], (Cin,), f32),
            "conv1_w": 0.1 * jax.random.normal(ks[2], (Cout, Cin, 3, 3), f32),
            "conv1_b": 0.1 * jax.random.normal(ks[3], (Cout,), f32),
            "emb_w":   0.1 * jax.random.normal(ks[4], (Cout, Dt), f32),
            "emb_b":   0.1 * jax.random.normal(ks[5], (Cout,), f32),
            "gn2_g":   1.0 + 0.1 * jax.random.normal(ks[6], (Cout,), f32),
            "gn2_b":   0.1 * jax.random.normal(ks[7], (Cout,), f32),
            "conv2_w": 0.1 * jax.random.normal(ks[8], (Cout, Cout, 3, 3), f32),
            "conv2_b": 0.1 * jax.random.normal(ks[9], (Cout,), f32),
        }
        if Cout != Cin:
            p["skip_w"] = 0.1 * jax.random.normal(ks[10], (Cout, Cin, 1, 1), f32)
            p["skip_b"] = 0.1 * jax.random.normal(ks[11], (Cout,), f32)
        return p

    key = jax.random.PRNGKey(0)
    for (Cin, Cout, H, W) in [(32, 64, 8, 8), (32, 32, 16, 16)]:
        kp, kx, kt, key = jax.random.split(key, 4)
        params = make_params(kp, Cin, Cout)
        x = jax.random.normal(kx, (B, Cin, H, W), f32)
        t_emb = jax.random.normal(kt, (B, Dt), f32)

        out = jax.block_until_ready(resblock_pallas(x, t_emb, params))
        ref = jax.block_until_ready(resblock_ref(x, t_emb, params))

        assert out.shape == (B, Cout, H, W) and out.dtype == jnp.float32
        # bf16 input/weight MXU operands vs. full-f32 reference -> relaxed tolerance.
        np.testing.assert_allclose(np.asarray(out), np.asarray(ref),
                                   rtol=5e-2, atol=5e-2)
    print("KERNEL_OK")
</pallas_src>

<mosaic_0001>
module attributes {stable_mosaic.version = 11 : i64} {
  func.func @resblock_kernel(%arg0: i32, %arg1: memref<2x64x32xbf16, #tpu.memory_space<vmem>>, %arg2: memref<2x1x64xf32, #tpu.memory_space<vmem>>, %arg3: memref<1x32xf32, #tpu.memory_space<vmem>>, %arg4: memref<1x32xf32, #tpu.memory_space<vmem>>, %arg5: memref<32x32xf32, #tpu.memory_space<vmem>>, %arg6: memref<32x32xf32, #tpu.memory_space<vmem>>, %arg7: memref<288x64xbf16, #tpu.memory_space<vmem>>, %arg8: memref<1x64xf32, #tpu.memory_space<vmem>>, %arg9: memref<1x64xf32, #tpu.memory_space<vmem>>, %arg10: memref<64x32xf32, #tpu.memory_space<vmem>>, %arg11: memref<32x64xf32, #tpu.memory_space<vmem>>, %arg12: memref<576x64xbf16, #tpu.memory_space<vmem>>, %arg13: memref<1x64xf32, #tpu.memory_space<vmem>>, %arg14: memref<32x64xbf16, #tpu.memory_space<vmem>>, %arg15: memref<1x64xf32, #tpu.memory_space<vmem>>, %arg16: memref<2x64x64xf32, #tpu.memory_space<vmem>>, %arg17: memref<2x10x12x32xbf16, #tpu.memory_space<vmem>>, %arg18: memref<2x10x12x64xbf16, #tpu.memory_space<vmem>>) attributes {dimension_semantics = [#tpu.dimension_semantics<parallel>], iteration_bounds = array<i64: 1>, scalar_prefetch = 0 : i64, scratch_operands = 2 : i64, tpu.core_type = #tpu.core_type<tc>, window_params = [{transform_indices = @transform_0, window_bounds = array<i64: 2, 64, 32>}, {transform_indices = @transform_1, window_bounds = array<i64: 2, 1, 64>}, {pipeline_mode = #tpu.pipeline_mode<synchronous>, transform_indices = @transform_2, window_bounds = array<i64: 1, 32>}, {pipeline_mode = #tpu.pipeline_mode<synchronous>, transform_indices = @transform_3, window_bounds = array<i64: 1, 32>}, {pipeline_mode = #tpu.pipeline_mode<synchronous>, transform_indices = @transform_4, window_bounds = array<i64: 32, 32>}, {pipeline_mode = #tpu.pipeline_mode<synchronous>, transform_indices = @transform_5, window_bounds = array<i64: 32, 32>}, {pipeline_mode = #tpu.pipeline_mode<synchronous>, transform_indices = @transform_6, window_bounds = array<i64: 288, 64>}, {pipeline_mode = #tpu.pipeline_mode<synchronous>, transform_indices = @transform_7, window_bounds = array<i64: 1, 64>}, {pipeline_mode = #tpu.pipeline_mode<synchronous>, transform_indices = @transform_8, window_bounds = array<i64: 1, 64>}, {pipeline_mode = #tpu.pipeline_mode<synchronous>, transform_indices = @transform_9, window_bounds = array<i64: 64, 32>}, {pipeline_mode = #tpu.pipeline_mode<synchronous>, transform_indices = @transform_10, window_bounds = array<i64: 32, 64>}, {pipeline_mode = #tpu.pipeline_mode<synchronous>, transform_indices = @transform_11, window_bounds = array<i64: 576, 64>}, {pipeline_mode = #tpu.pipeline_mode<synchronous>, transform_indices = @transform_12, window_bounds = array<i64: 1, 64>}, {pipeline_mode = #tpu.pipeline_mode<synchronous>, transform_indices = @transform_13, window_bounds = array<i64: 32, 64>}, {pipeline_mode = #tpu.pipeline_mode<synchronous>, transform_indices = @transform_14, window_bounds = array<i64: 1, 64>}, {transform_indices = @transform_15, window_bounds = array<i64: 2, 64, 64>}]} {
    %c0 = arith.constant 0 : index
    %c0_0 = arith.constant 0 : index
    %c0_1 = arith.constant 0 : index
    %0 = vector.load %arg1[%c0, %c0_0, %c0_1] : memref<2x64x32xbf16, #tpu.memory_space<vmem>>, vector<2x64x32xbf16>
    %1 = arith.extf %0 : vector<2x64x32xbf16> to vector<2x64x32xf32>
    %cst = arith.constant 0.000000e+00 : bf16
    %2 = vector.broadcast %cst : bf16 to vector<2x1x12x32xbf16>
    %cst_2 = arith.constant 0.000000e+00 : bf16
    %3 = vector.broadcast %cst_2 : bf16 to vector<2x10x2x32xbf16>
    %c0_3 = arith.constant 0 : index
    %c0_4 = arith.constant 0 : index
    %c0_5 = arith.constant 0 : index
    %c0_6 = arith.constant 0 : index
    %4 = vector.load %arg17[%c0_3, %c0_4, %c0_5, %c0_6] : memref<2x10x12x32xbf16, #tpu.memory_space<vmem>>, vector<2x1x12x32xbf16>
    tpu.vector_store %arg17[%c0_3, %c0_4, %c0_5, %c0_6], %2 {strides = array<i32>} : memref<2x10x12x32xbf16, #tpu.memory_space<vmem>>, vector<2x1x12x32xbf16>,
    %c0_7 = arith.constant 0 : index
    %c9 = arith.constant 9 : index
    %c0_8 = arith.constant 0 : index
    %c0_9 = arith.constant 0 : index
    %5 = vector.load %arg17[%c0_7, %c9, %c0_8, %c0_9] : memref<2x10x12x32xbf16, #tpu.memory_space<vmem>>, vector<2x1x12x32xbf16>
    tpu.vector_store %arg17[%c0_7, %c9, %c0_8, %c0_9], %2 {strides = array<i32>} : memref<2x10x12x32xbf16, #tpu.memory_space<vmem>>, vector<2x1x12x32xbf16>,
    %c0_10 = arith.constant 0 : index
    %c0_11 = arith.constant 0 : index
    %c0_12 = arith.constant 0 : index
    %c0_13 = arith.constant 0 : index
    %6 = vector.load %arg17[%c0_10, %c0_11, %c0_12, %c0_13] : memref<2x10x12x32xbf16, #tpu.memory_space<vmem>>, vector<2x10x2x32xbf16>
    tpu.vector_store %arg17[%c0_10, %c0_11, %c0_12, %c0_13], %3 {strides = array<i32>} : memref<2x10x12x32xbf16, #tpu.memory_space<vmem>>, vector<2x10x2x32xbf16>,
    %c0_14 = arith.constant 0 : index
    %c0_15 = arith.constant 0 : index
    %c10 = arith.constant 10 : index
    %c0_16 = arith.constant 0 : index
    %7 = vector.load %arg17[%c0_14, %c0_15, %c10, %c0_16] : memref<2x10x12x32xbf16, #tpu.memory_space<vmem>>, vector<2x10x2x32xbf16>
    tpu.vector_store %arg17[%c0_14, %c0_15, %c10, %c0_16], %3 {strides = array<i32>} : memref<2x10x12x32xbf16, #tpu.memory_space<vmem>>, vector<2x10x2x32xbf16>,
    %cst_17 = arith.constant 0.000000e+00 : bf16
    %8 = vector.broadcast %cst_17 : bf16 to vector<2x1x12x64xbf16>
    %cst_18 = arith.constant 0.000000e+00 : bf16
    %9 = vector.broadcast %cst_18 : bf16 to vector<2x10x2x64xbf16>
    %c0_19 = arith.constant 0 : index
    %c0_20 = arith.constant 0 : index
    %c0_21 = arith.constant 0 : index
    %c0_22 = arith.constant 0 : index
    %10 = vector.load %arg18[%c0_19, %c0_20, %c0_21, %c0_22] : memref<2x10x12x64xbf16, #tpu.memory_space<vmem>>, vector<2x1x12x64xbf16>
    tpu.vector_store %arg18[%c0_19, %c0_20, %c0_21, %c0_22], %8 {strides = array<i32>} : memref<2x10x12x64xbf16, #tpu.memory_space<vmem>>, vector<2x1x12x64xbf16>,
    %c0_23 = arith.constant 0 : index
    %c9_24 = arith.constant 9 : index
    %c0_25 = arith.constant 0 : index
    %c0_26 = arith.constant 0 : index
    %11 = vector.load %arg18[%c0_23, %c9_24, %c0_25, %c0_26] : memref<2x10x12x64xbf16, #tpu.memory_space<vmem>>, vector<2x1x12x64xbf16>
    tpu.vector_store %arg18[%c0_23, %c9_24, %c0_25, %c0_26], %8 {strides = array<i32>} : memref<2x10x12x64xbf16, #tpu.memory_space<vmem>>, vector<2x1x12x64xbf16>,
    %c0_27 = arith.constant 0 : index
    %c0_28 = arith.constant 0 : index
    %c0_29 = arith.constant 0 : index
    %c0_30 = arith.constant 0 : index
    %12 = vector.load %arg18[%c0_27, %c0_28, %c0_29, %c0_30] : memref<2x10x12x64xbf16, #tpu.memory_space<vmem>>, vector<2x10x2x64xbf16>
    tpu.vector_store %arg18[%c0_27, %c0_28, %c0_29, %c0_30], %9 {strides = array<i32>} : memref<2x10x12x64xbf16, #tpu.memory_space<vmem>>, vector<2x10x2x64xbf16>,
    %c0_31 = arith.constant 0 : index
    %c0_32 = arith.constant 0 : index
    %c10_33 = arith.constant 10 : index
    %c0_34 = arith.constant 0 : index
    %13 = vector.load %arg18[%c0_31, %c0_32, %c10_33, %c0_34] : memref<2x10x12x64xbf16, #tpu.memory_space<vmem>>, vector<2x10x2x64xbf16>
    tpu.vector_store %arg18[%c0_31, %c0_32, %c10_33, %c0_34], %9 {strides = array<i32>} : memref<2x10x12x64xbf16, #tpu.memory_space<vmem>>, vector<2x10x2x64xbf16>,
    %cst_35 = arith.constant dense<0.000000e+00> : vector<2x32xf32>
    %14 = vector.multi_reduction <add>, %1, %cst_35 [1] : vector<2x64x32xf32> to vector<2x32xf32>
    %15 = arith.mulf %1, %1 : vector<2x64x32xf32>
    %cst_36 = arith.constant dense<0.000000e+00> : vector<2x32xf32>
    %16 = vector.multi_reduction <add>, %15, %cst_36 [1] : vector<2x64x32xf32> to vector<2x32xf32>
    %c0_37 = arith.constant 0 : index
    %c0_38 = arith.constant 0 : index
    %17 = vector.load %arg5[%c0_37, %c0_38] : memref<32x32xf32, #tpu.memory_space<vmem>>, vector<32x32xf32>
    %cst_39 = arith.constant dense<0.000000e+00> : vector<2x32xf32>
    %18 = tpu.matmul %14, %17, %cst_39 {dimension_numbers = #tpu.dot_dimension_numbers<[1], [0], [0], [1], [0, 0, 1, 1], [], []>} : vector<2x32xf32>, vector<32x32xf32>, vector<2x32xf32> -> vector<2x32xf32>
    %c0_40 = arith.constant 0 : index
    %c0_41 = arith.constant 0 : index
    %19 = vector.load %arg5[%c0_40, %c0_41] : memref<32x32xf32, #tpu.memory_space<vmem>>, vector<32x32xf32>
    %cst_42 = arith.constant dense<0.000000e+00> : vector<2x32xf32>
    %20 = tpu.matmul %16, %19, %cst_42 {dimension_numbers = #tpu.dot_dimension_numbers<[1], [0], [0], [1], [0, 0, 1, 1], [], []>} : vector<2x32xf32>, vector<32x32xf32>, vector<2x32xf32> -> vector<2x32xf32>
    %cst_43 = arith.constant 6.400000e+01 : f32
    %21 = vector.broadcast %cst_43 : f32 to vector<2x32xf32>
    %22 = arith.divf %18, %21 : vector<2x32xf32>
    %cst_44 = arith.constant 6.400000e+01 : f32
    %23 = vector.broadcast %cst_44 : f32 to vector<2x32xf32>
    %24 = arith.divf %20, %23 : vector<2x32xf32>
    %25 = arith.mulf %22, %22 : vector<2x32xf32>
    %26 = arith.subf %24, %25 : vector<2x32xf32>
    %cst_45 = arith.constant 0.000000e+00 : f32
    %27 = vector.broadcast %cst_45 : f32 to vector<2x32xf32>
    %28 = arith.maximumf %26, %27 : vector<2x32xf32>
    %cst_46 = arith.constant 9.99999974E-6 : f32
    %29 = vector.broadcast %cst_46 : f32 to vector<2x32xf32>
    %30 = arith.addf %28, %29 : vector<2x32xf32>
    %31 = math.rsqrt %30 : vector<2x32xf32>
    %c0_47 = arith.constant 0 : index
    %c0_48 = arith.constant 0 : index
    %32 = vector.load %arg6[%c0_47, %c0_48] : memref<32x32xf32, #tpu.memory_space<vmem>>, vector<32x32xf32>
    %cst_49 = arith.constant dense<0.000000e+00> : vector<2x32xf32>
    %33 = tpu.matmul %22, %32, %cst_49 {dimension_numbers = #tpu.dot_dimension_numbers<[1], [0], [0], [1], [0, 0, 1, 1], [], []>} : vector<2x32xf32>, vector<32x32xf32>, vector<2x32xf32> -> vector<2x32xf32>
    %c0_50 = arith.constant 0 : index
    %c0_51 = arith.constant 0 : index
    %34 = vector.load %arg6[%c0_50, %c0_51] : memref<32x32xf32, #tpu.memory_space<vmem>>, vector<32x32xf32>
    %cst_52 = arith.constant dense<0.000000e+00> : vector<2x32xf32>
    %35 = tpu.matmul %31, %34, %cst_52 {dimension_numbers = #tpu.dot_dimension_numbers<[1], [0], [0], [1], [0, 0, 1, 1], [], []>} : vector<2x32xf32>, vector<32x32xf32>, vector<2x32xf32> -> vector<2x32xf32>
    %36 = vector.shape_cast %33 : vector<2x32xf32> to vector<2x1x32xf32>
    %37 = vector.broadcast %36 : vector<2x1x32xf32> to vector<2x64x32xf32>
    %38 = arith.subf %1, %37 : vector<2x64x32xf32>
    %39 = vector.shape_cast %35 : vector<2x32xf32> to vector<2x1x32xf32>
    %40 = vector.broadcast %39 : vector<2x1x32xf32> to vector<2x64x32xf32>
    %41 = arith.mulf %38, %40 : vector<2x64x32xf32>
    %c0_53 = arith.constant 0 : index
    %c0_54 = arith.constant 0 : index
    %42 = vector.load %arg3[%c0_53, %c0_54] : memref<1x32xf32, #tpu.memory_space<vmem>>, vector<1x32xf32>
    %43 = vector.shape_cast %42 : vector<1x32xf32> to vector<1x1x32xf32>
    %44 = vector.broadcast %43 : vector<1x1x32xf32> to vector<2x64x32xf32>
    %45 = arith.mulf %41, %44 : vector<2x64x32xf32>
    %c0_55 = arith.constant 0 : index
    %c0_56 = arith.constant 0 : index
    %46 = vector.load %arg4[%c0_55, %c0_56] : memref<1x32xf32, #tpu.memory_space<vmem>>, vector<1x32xf32>
    %47 = vector.shape_cast %46 : vector<1x32xf32> to vector<1x1x32xf32>
    %48 = vector.broadcast %47 : vector<1x1x32xf32> to vector<2x64x32xf32>
    %49 = arith.addf %45, %48 : vector<2x64x32xf32>
    %cst_57 = arith.constant 5.000000e-01 : f32
    %50 = vector.broadcast %cst_57 : f32 to vector<2x64x32xf32>
    %51 = arith.mulf %50, %49 : vector<2x64x32xf32>
    %52 = math.tanh %51 : vector<2x64x32xf32>
    %cst_58 = arith.constant 5.000000e-01 : f32
    %53 = vector.broadcast %cst_58 : f32 to vector<2x64x32xf32>
    %54 = arith.mulf %53, %52 : vector<2x64x32xf32>
    %cst_59 = arith.constant 5.000000e-01 : f32
    %55 = vector.broadcast %cst_59 : f32 to vector<2x64x32xf32>
    %56 = arith.addf %54, %55 : vector<2x64x32xf32>
    %57 = arith.mulf %49, %56 : vector<2x64x32xf32>
    %58 = vector.shape_cast %57 : vector<2x64x32xf32> to vector<2x8x8x32xf32>
    %59 = arith.truncf %58 : vector<2x8x8x32xf32> to vector<2x8x8x32xbf16>
    %c0_60 = arith.constant 0 : index
    %c1 = arith.constant 1 : index
    %c2 = arith.constant 2 : index
    %c0_61 = arith.constant 0 : index
    %60 = vector.load %arg17[%c0_60, %c1, %c2, %c0_61] : memref<2x10x12x32xbf16, #tpu.memory_space<vmem>>, vector<2x8x8x32xbf16>
    tpu.vector_store %arg17[%c0_60, %c1, %c2, %c0_61], %59 {strides = array<i32>} : memref<2x10x12x32xbf16, #tpu.memory_space<vmem>>, vector<2x8x8x32xbf16>,
    %c0_62 = arith.constant 0 : index
    %c0_63 = arith.constant 0 : index
    %c1_64 = arith.constant 1 : index
    %c0_65 = arith.constant 0 : index
    %61 = vector.load %arg17[%c0_62, %c0_63, %c1_64, %c0_65] : memref<2x10x12x32xbf16, #tpu.memory_space<vmem>>, vector<2x8x8x32xbf16>
    %62 = vector.shape_cast %61 : vector<2x8x8x32xbf16> to vector<128x32xbf16>
    %c0_66 = arith.constant 0 : index
    %c0_67 = arith.constant 0 : index
    %63 = vector.load %arg7[%c0_66, %c0_67] : memref<288x64xbf16, #tpu.memory_space<vmem>>, vector<32x64xbf16>
    %cst_68 = arith.constant dense<0.000000e+00> : vector<128x64xf32>
    %64 = tpu.matmul %62, %63, %cst_68 {dimension_numbers = #tpu.dot_dimension_numbers<[1], [0], [0], [1], [0, 0, 1, 1], [], []>} : vector<128x32xbf16>, vector<32x64xbf16>, vector<128x64xf32> -> vector<128x64xf32>
    %c0_69 = arith.constant 0 : index
    %c0_70 = arith.constant 0 : index
    %c2_71 = arith.constant 2 : index
    %c0_72 = arith.constant 0 : index
    %65 = vector.load %arg17[%c0_69, %c0_70, %c2_71, %c0_72] : memref<2x10x12x32xbf16, #tpu.memory_space<vmem>>, vector<2x8x8x32xbf16>
    %66 = vector.shape_cast %65 : vector<2x8x8x32xbf16> to vector<128x32xbf16>
    %c32 = arith.constant 32 : index
    %c0_73 = arith.constant 0 : index
    %67 = vector.load %arg7[%c32, %c0_73] : memref<288x64xbf16, #tpu.memory_space<vmem>>, vector<32x64xbf16>
    %cst_74 = arith.constant dense<0.000000e+00> : vector<128x64xf32>
    %68 = tpu.matmul %66, %67, %cst_74 {dimension_numbers = #tpu.dot_dimension_numbers<[1], [0], [0], [1], [0, 0, 1, 1], [], []>} : vector<128x32xbf16>, vector<32x64xbf16>, vector<128x64xf32> -> vector<128x64xf32>
    %69 = arith.addf %64, %68 : vector<128x64xf32>
    %c0_75 = arith.constant 0 : index
    %c0_76 = arith.constant 0 : index
    %c3 = arith.constant 3 : index
    %c0_77 = arith.constant 0 : index
    %70 = vector.load %arg17[%c0_75, %c0_76, %c3, %c0_77] : memref<2x10x12x32xbf16, #tpu.memory_space<vmem>>, vector<2x8x8x32xbf16>
    %71 = vector.shape_cast %70 : vector<2x8x8x32xbf16> to vector<128x32xbf16>
    %c64 = arith.constant 64 : index
    %c0_78 = arith.constant 0 : index
    %72 = vector.load %arg7[%c64, %c0_78] : memref<288x64xbf16, #tpu.memory_space<vmem>>, vector<32x64xbf16>
    %cst_79 = arith.constant dense<0.000000e+00> : vector<128x64xf32>
    %73 = tpu.matmul %71, %72, %cst_79 {dimension_numbers = #tpu.dot_dimension_numbers<[1], [0], [0], [1], [0, 0, 1, 1], [], []>} : vector<128x32xbf16>, vector<32x64xbf16>, vector<128x64xf32> -> vector<128x64xf32>
    %74 = arith.addf %69, %73 : vector<128x64xf32>
    %c0_80 = arith.constant 0 : index
    %c1_81 = arith.constant 1 : index
    %c1_82 = arith.constant 1 : index
    %c0_83 = arith.constant 0 : index
    %75 = vector.load %arg17[%c0_80, %c1_81, %c1_82, %c0_83] : memref<2x10x12x32xbf16, #tpu.memory_space<vmem>>, vector<2x8x8x32xbf16>
    %76 = vector.shape_cast %75 : vector<2x8x8x32xbf16> to vector<128x32xbf16>
    %c96 = arith.constant 96 : index
    %c0_84 = arith.constant 0 : index
    %77 = vector.load %arg7[%c96, %c0_84] : memref<288x64xbf16, #tpu.memory_space<vmem>>, vector<32x64xbf16>
    %cst_85 = arith.constant dense<0.000000e+00> : vector<128x64xf32>
    %78 = tpu.matmul %76, %77, %cst_85 {dimension_numbers = #tpu.dot_dimension_numbers<[1], [0], [0], [1], [0, 0, 1, 1], [], []>} : vector<128x32xbf16>, vector<32x64xbf16>, vector<128x64xf32> -> vector<128x64xf32>
    %79 = arith.addf %74, %78 : vector<128x64xf32>
    %c0_86 = arith.constant 0 : index
    %c1_87 = arith.constant 1 : index
    %c2_88 = arith.constant 2 : index
    %c0_89 = arith.constant 0 : index
    %80 = vector.load %arg17[%c0_86, %c1_87, %c2_88, %c0_89] : memref<2x10x12x32xbf16, #tpu.memory_space<vmem>>, vector<2x8x8x32xbf16>
    %81 = vector.shape_cast %80 : vector<2x8x8x32xbf16> to vector<128x32xbf16>
    %c128 = arith.constant 128 : index
    %c0_90 = arith.constant 0 : index
    %82 = vector.load %arg7[%c128, %c0_90] : memref<288x64xbf16, #tpu.memory_space<vmem>>, vector<32x64xbf16>
    %cst_91 = arith.constant dense<0.000000e+00> : vector<128x64xf32>
    %83 = tpu.matmul %81, %82, %cst_91 {dimension_numbers = #tpu.dot_dimension_numbers<[1], [0], [0], [1], [0, 0, 1, 1], [], []>} : vector<128x32xbf16>, vector<32x64xbf16>, vector<128x64xf32> -> vector<128x64xf32>
    %84 = arith.addf %79, %83 : vector<128x64xf32>
    %c0_92 = arith.constant 0 : index
    %c1_93 = arith.constant 1 : index
    %c3_94 = arith.constant 3 : index
    %c0_95 = arith.constant 0 : index
    %85 = vector.load %arg17[%c0_92, %c1_93, %c3_94, %c0_95] : memref<2x10x12x32xbf16, #tpu.memory_space<vmem>>, vector<2x8x8x32xbf16>
    %86 = vector.shape_cast %85 : vector<2x8x8x32xbf16> to vector<128x32xbf16>
    %c160 = arith.constant 160 : index
    %c0_96 = arith.constant 0 : index
    %87 = vector.load %arg7[%c160, %c0_96] : memref<288x64xbf16, #tpu.memory_space<vmem>>, vector<32x64xbf16>
    %cst_97 = arith.constant dense<0.000000e+00> : vector<128x64xf32>
    %88 = tpu.matmul %86, %87, %cst_97 {dimension_numbers = #tpu.dot_dimension_numbers<[1], [0], [0], [1], [0, 0, 1, 1], [], []>} : vector<128x32xbf16>, vector<32x64xbf16>, vector<128x64xf32> -> vector<128x64xf32>
    %89 = arith.addf %84, %88 : vector<128x64xf32>
    %c0_98 = arith.constant 0 : index
    %c2_99 = arith.constant 2 : index
    %c1_100 = arith.constant 1 : index
    %c0_101 = arith.constant 0 : index
    %90 = vector.load %arg17[%c0_98, %c2_99, %c1_100, %c0_101] : memref<2x10x12x32xbf16, #tpu.memory_space<vmem>>, vector<2x8x8x32xbf16>
    %91 = vector.shape_cast %90 : vector<2x8x8x32xbf16> to vector<128x32xbf16>
    %c192 = arith.constant 192 : index
    %c0_102 = arith.constant 0 : index
    %92 = vector.load %arg7[%c192, %c0_102] : memref<288x64xbf16, #tpu.memory_space<vmem>>, vector<32x64xbf16>
    %cst_103 = arith.constant dense<0.000000e+00> : vector<128x64xf32>
    %93 = tpu.matmul %91, %92, %cst_103 {dimension_numbers = #tpu.dot_dimension_numbers<[1], [0], [0], [1], [0, 0, 1, 1], [], []>} : vector<128x32xbf16>, vector<32x64xbf16>, vector<128x64xf32> -> vector<128x64xf32>
    %94 = arith.addf %89, %93 : vector<128x64xf32>
    %c0_104 = arith.constant 0 : index
    %c2_105 = arith.constant 2 : index
    %c2_106 = arith.constant 2 : index
    %c0_107 = arith.constant 0 : index
    %95 = vector.load %arg17[%c0_104, %c2_105, %c2_106, %c0_107] : memref<2x10x12x32xbf16, #tpu.memory_space<vmem>>, vector<2x8x8x32xbf16>
    %96 = vector.shape_cast %95 : vector<2x8x8x32xbf16> to vector<128x32xbf16>
    %c224 = arith.constant 224 : index
    %c0_108 = arith.constant 0 : index
    %97 = vector.load %arg7[%c224, %c0_108] : memref<288x64xbf16, #tpu.memory_space<vmem>>, vector<32x64xbf16>
    %cst_109 = arith.constant dense<0.000000e+00> : vector<128x64xf32>
    %98 = tpu.matmul %96, %97, %cst_109 {dimension_numbers = #tpu.dot_dimension_numbers<[1], [0], [0], [1], [0, 0, 1, 1], [], []>} : vector<128x32xbf16>, vector<32x64xbf16>, vector<128x64xf32> -> vector<128x64xf32>
    %99 = arith.addf %94, %98 : vector<128x64xf32>
    %c0_110 = arith.constant 0 : index
    %c2_111 = arith.constant 2 : index
    %c3_112 = arith.constant 3 : index
    %c0_113 = arith.constant 0 : index
    %100 = vector.load %arg17[%c0_110, %c2_111, %c3_112, %c0_113] : memref<2x10x12x32xbf16, #tpu.memory_space<vmem>>, vector<2x8x8x32xbf16>
    %101 = vector.shape_cast %100 : vector<2x8x8x32xbf16> to vector<128x32xbf16>
    %c256 = arith.constant 256 : index
    %c0_114 = arith.constant 0 : index
    %102 = vector.load %arg7[%c256, %c0_114] : memref<288x64xbf16, #tpu.memory_space<vmem>>, vector<32x64xbf16>
    %cst_115 = arith.constant dense<0.000000e+00> : vector<128x64xf32>
    %103 = tpu.matmul %101, %102, %cst_115 {dimension_numbers = #tpu.dot_dimension_numbers<[1], [0], [0], [1], [0, 0, 1, 1], [], []>} : vector<128x32xbf16>, vector<32x64xbf16>, vector<128x64xf32> -> vector<128x64xf32>
    %104 = arith.addf %99, %103 : vector<128x64xf32>
    %105 = vector.shape_cast %104 : vector<128x64xf32> to vector<2x64x64xf32>
    %c0_116 = arith.constant 0 : index
    %c0_117 = arith.constant 0 : index
    %c0_118 = arith.constant 0 : index
    %106 = vector.load %arg2[%c0_116, %c0_117, %c0_118] : memref<2x1x64xf32, #tpu.memory_space<vmem>>, vector<2x1x64xf32>
    %107 = vector.broadcast %106 : vector<2x1x64xf32> to vector<2x64x64xf32>
    %108 = arith.addf %105, %107 : vector<2x64x64xf32>
    %cst_119 = arith.constant dense<0.000000e+00> : vector<2x64xf32>
    %109 = vector.multi_reduction <add>, %108, %cst_119 [1] : vector<2x64x64xf32> to vector<2x64xf32>
    %110 = arith.mulf %108, %108 : vector<2x64x64xf32>
    %cst_120 = arith.constant dense<0.000000e+00> : vector<2x64xf32>
    %111 = vector.multi_reduction <add>, %110, %cst_120 [1] : vector<2x64x64xf32> to vector<2x64xf32>
    %c0_121 = arith.constant 0 : index
    %c0_122 = arith.constant 0 : index
    %112 = vector.load %arg10[%c0_121, %c0_122] : memref<64x32xf32, #tpu.memory_space<vmem>>, vector<64x32xf32>
    %cst_123 = arith.constant dense<0.000000e+00> : vector<2x32xf32>
    %113 = tpu.matmul %109, %112, %cst_123 {dimension_numbers = #tpu.dot_dimension_numbers<[1], [0], [0], [1], [0, 0, 1, 1], [], []>} : vector<2x64xf32>, vector<64x32xf32>, vector<2x32xf32> -> vector<2x32xf32>
    %c0_124 = arith.constant 0 : index
    %c0_125 = arith.constant 0 : index
    %114 = vector.load %arg10[%c0_124, %c0_125] : memref<64x32xf32, #tpu.memory_space<vmem>>, vector<64x32xf32>
    %cst_126 = arith.constant dense<0.000000e+00> : vector<2x32xf32>
    %115 = tpu.matmul %111, %114, %cst_126 {dimension_numbers = #tpu.dot_dimension_numbers<[1], [0], [0], [1], [0, 0, 1, 1], [], []>} : vector<2x64xf32>, vector<64x32xf32>, vector<2x32xf32> -> vector<2x32xf32>
    %cst_127 = arith.constant 1.280000e+02 : f32
    %116 = vector.broadcast %cst_127 : f32 to vector<2x32xf32>
    %117 = arith.divf %113, %116 : vector<2x32xf32>
    %cst_128 = arith.constant 1.280000e+02 : f32
    %118 = vector.broadcast %cst_128 : f32 to vector<2x32xf32>
    %119 = arith.divf %115, %118 : vector<2x32xf32>
    %120 = arith.mulf %117, %117 : vector<2x32xf32>
    %121 = arith.subf %119, %120 : vector<2x32xf32>
    %cst_129 = arith.constant 0.000000e+00 : f32
    %122 = vector.broadcast %cst_129 : f32 to vector<2x32xf32>
    %123 = arith.maximumf %121, %122 : vector<2x32xf32>
    %cst_130 = arith.constant 9.99999974E-6 : f32
    %124 = vector.broadcast %cst_130 : f32 to vector<2x32xf32>
    %125 = arith.addf %123, %124 : vector<2x32xf32>
    %126 = math.rsqrt %125 : vector<2x32xf32>
    %c0_131 = arith.constant 0 : index
    %c0_132 = arith.constant 0 : index
    %127 = vector.load %arg11[%c0_131, %c0_132] : memref<32x64xf32, #tpu.memory_space<vmem>>, vector<32x64xf32>
    %cst_133 = arith.constant dense<0.000000e+00> : vector<2x64xf32>
    %128 = tpu.matmul %117, %127, %cst_133 {dimension_numbers = #tpu.dot_dimension_numbers<[1], [0], [0], [1], [0, 0, 1, 1], [], []>} : vector<2x32xf32>, vector<32x64xf32>, vector<2x64xf32> -> vector<2x64xf32>
    %c0_134 = arith.constant 0 : index
    %c0_135 = arith.constant 0 : index
    %129 = vector.load %arg11[%c0_134, %c0_135] : memref<32x64xf32, #tpu.memory_space<vmem>>, vector<32x64xf32>
    %cst_136 = arith.constant dense<0.000000e+00> : vector<2x64xf32>
    %130 = tpu.matmul %126, %129, %cst_136 {dimension_numbers = #tpu.dot_dimension_numbers<[1], [0], [0], [1], [0, 0, 1, 1], [], []>} : vector<2x32xf32>, vector<32x64xf32>, vector<2x64xf32> -> vector<2x64xf32>
    %131 = vector.shape_cast %128 : vector<2x64xf32> to vector<2x1x64xf32>
    %132 = vector.broadcast %131 : vector<2x1x64xf32> to vector<2x64x64xf32>
    %133 = arith.subf %108, %132 : vector<2x64x64xf32>
    %134 = vector.shape_cast %130 : vector<2x64xf32> to vector<2x1x64xf32>
    %135 = vector.broadcast %134 : vector<2x1x64xf32> to vector<2x64x64xf32>
    %136 = arith.mulf %133, %135 : vector<2x64x64xf32>
    %c0_137 = arith.constant 0 : index
    %c0_138 = arith.constant 0 : index
    %137 = vector.load %arg8[%c0_137, %c0_138] : memref<1x64xf32, #tpu.memory_space<vmem>>, vector<1x64xf32>
    %138 = vector.shape_cast %137 : vector<1x64xf32> to vector<1x1x64xf32>
    %139 = vector.broadcast %138 : vector<1x1x64xf32> to vector<2x64x64xf32>
    %140 = arith.mulf %136, %139 : vector<2x64x64xf32>
    %c0_139 = arith.constant 0 : index
    %c0_140 = arith.constant 0 : index
    %141 = vector.load %arg9[%c0_139, %c0_140] : memref<1x64xf32, #tpu.memory_space<vmem>>, vector<1x64xf32>
    %142 = vector.shape_cast %141 : vector<1x64xf32> to vector<1x1x64xf32>
    %143 = vector.broadcast %142 : vector<1x1x64xf32> to vector<2x64x64xf32>
    %144 = arith.addf %140, %143 : vector<2x64x64xf32>
    %cst_141 = arith.constant 5.000000e-01 : f32
    %145 = vector.broadcast %cst_141 : f32 to vector<2x64x64xf32>
    %146 = arith.mulf %145, %144 : vector<2x64x64xf32>
    %147 = math.tanh %146 : vector<2x64x64xf32>
    %cst_142 = arith.constant 5.000000e-01 : f32
    %148 = vector.broadcast %cst_142 : f32 to vector<2x64x64xf32>
    %149 = arith.mulf %148, %147 : vector<2x64x64xf32>
    %cst_143 = arith.constant 5.000000e-01 : f32
    %150 = vector.broadcast %cst_143 : f32 to vector<2x64x64xf32>
    %151 = arith.addf %149, %150 : vector<2x64x64xf32>
    %152 = arith.mulf %144, %151 : vector<2x64x64xf32>
    %153 = vector.shape_cast %152 : vector<2x64x64xf32> to vector<2x8x8x64xf32>
    %154 = arith.truncf %153 : vector<2x8x8x64xf32> to vector<2x8x8x64xbf16>
    %c0_144 = arith.constant 0 : index
    %c1_145 = arith.constant 1 : index
    %c2_146 = arith.constant 2 : index
    %c0_147 = arith.constant 0 : index
    %155 = vector.load %arg18[%c0_144, %c1_145, %c2_146, %c0_147] : memref<2x10x12x64xbf16, #tpu.memory_space<vmem>>, vector<2x8x8x64xbf16>
    tpu.vector_store %arg18[%c0_144, %c1_145, %c2_146, %c0_147], %154 {strides = array<i32>} : memref<2x10x12x64xbf16, #tpu.memory_space<vmem>>, vector<2x8x8x64xbf16>,
    %c0_148 = arith.constant 0 : index
    %c0_149 = arith.constant 0 : index
    %c1_150 = arith.constant 1 : index
    %c0_151 = arith.constant 0 : index
    %156 = vector.load %arg18[%c0_148, %c0_149, %c1_150, %c0_151] : memref<2x10x12x64xbf16, #tpu.memory_space<vmem>>, vector<2x8x8x64xbf16>
    %157 = vector.shape_cast %156 : vector<2x8x8x64xbf16> to vector<128x64xbf16>
    %c0_152 = arith.constant 0 : index
    %c0_153 = arith.constant 0 : index
    %158 = vector.load %arg12[%c0_152, %c0_153] : memref<576x64xbf16, #tpu.memory_space<vmem>>, vector<64x64xbf16>
    %cst_154 = arith.constant dense<0.000000e+00> : vector<128x64xf32>
    %159 = tpu.matmul %157, %158, %cst_154 {dimension_numbers = #tpu.dot_dimension_numbers<[1], [0], [0], [1], [0, 0, 1, 1], [], []>} : vector<128x64xbf16>, vector<64x64xbf16>, vector<128x64xf32> -> vector<128x64xf32>
    %c0_155 = arith.constant 0 : index
    %c0_156 = arith.constant 0 : index
    %c2_157 = arith.constant 2 : index
    %c0_158 = arith.constant 0 : index
    %160 = vector.load %arg18[%c0_155, %c0_156, %c2_157, %c0_158] : memref<2x10x12x64xbf16, #tpu.memory_space<vmem>>, vector<2x8x8x64xbf16>
    %161 = vector.shape_cast %160 : vector<2x8x8x64xbf16> to vector<128x64xbf16>
    %c64_159 = arith.constant 64 : index
    %c0_160 = arith.constant 0 : index
    %162 = vector.load %arg12[%c64_159, %c0_160] : memref<576x64xbf16, #tpu.memory_space<vmem>>, vector<64x64xbf16>
    %cst_161 = arith.constant dense<0.000000e+00> : vector<128x64xf32>
    %163 = tpu.matmul %161, %162, %cst_161 {dimension_numbers = #tpu.dot_dimension_numbers<[1], [0], [0], [1], [0, 0, 1, 1], [], []>} : vector<128x64xbf16>, vector<64x64xbf16>, vector<128x64xf32> -> vector<128x64xf32>
    %164 = arith.addf %159, %163 : vector<128x64xf32>
    %c0_162 = arith.constant 0 : index
    %c0_163 = arith.constant 0 : index
    %c3_164 = arith.constant 3 : index
    %c0_165 = arith.constant 0 : index
    %165 = vector.load %arg18[%c0_162, %c0_163, %c3_164, %c0_165] : memref<2x10x12x64xbf16, #tpu.memory_space<vmem>>, vector<2x8x8x64xbf16>
    %166 = vector.shape_cast %165 : vector<2x8x8x64xbf16> to vector<128x64xbf16>
    %c128_166 = arith.constant 128 : index
    %c0_167 = arith.constant 0 : index
    %167 = vector.load %arg12[%c128_166, %c0_167] : memref<576x64xbf16, #tpu.memory_space<vmem>>, vector<64x64xbf16>
    %cst_168 = arith.constant dense<0.000000e+00> : vector<128x64xf32>
    %168 = tpu.matmul %166, %167, %cst_168 {dimension_numbers = #tpu.dot_dimension_numbers<[1], [0], [0], [1], [0, 0, 1, 1], [], []>} : vector<128x64xbf16>, vector<64x64xbf16>, vector<128x64xf32> -> vector<128x64xf32>
    %169 = arith.addf %164, %168 : vector<128x64xf32>
    %c0_169 = arith.constant 0 : index
    %c1_170 = arith.constant 1 : index
    %c1_171 = arith.constant 1 : index
    %c0_172 = arith.constant 0 : index
    %170 = vector.load %arg18[%c0_169, %c1_170, %c1_171, %c0_172] : memref<2x10x12x64xbf16, #tpu.memory_space<vmem>>, vector<2x8x8x64xbf16>
    %171 = vector.shape_cast %170 : vector<2x8x8x64xbf16> to vector<128x64xbf16>
    %c192_173 = arith.constant 192 : index
    %c0_174 = arith.constant 0 : index
    %172 = vector.load %arg12[%c192_173, %c0_174] : memref<576x64xbf16, #tpu.memory_space<vmem>>, vector<64x64xbf16>
    %cst_175 = arith.constant dense<0.000000e+00> : vector<128x64xf32>
    %173 = tpu.matmul %171, %172, %cst_175 {dimension_numbers = #tpu.dot_dimension_numbers<[1], [0], [0], [1], [0, 0, 1, 1], [], []>} : vector<128x64xbf16>, vector<64x64xbf16>, vector<128x64xf32> -> vector<128x64xf32>
    %174 = arith.addf %169, %173 : vector<128x64xf32>
    %c0_176 = arith.constant 0 : index
    %c1_177 = arith.constant 1 : index
    %c2_178 = arith.constant 2 : index
    %c0_179 = arith.constant 0 : index
    %175 = vector.load %arg18[%c0_176, %c1_177, %c2_178, %c0_179] : memref<2x10x12x64xbf16, #tpu.memory_space<vmem>>, vector<2x8x8x64xbf16>
    %176 = vector.shape_cast %175 : vector<2x8x8x64xbf16> to vector<128x64xbf16>
    %c256_180 = arith.constant 256 : index
    %c0_181 = arith.constant 0 : index
    %177 = vector.load %arg12[%c256_180, %c0_181] : memref<576x64xbf16, #tpu.memory_space<vmem>>, vector<64x64xbf16>
    %cst_182 = arith.constant dense<0.000000e+00> : vector<128x64xf32>
    %178 = tpu.matmul %176, %177, %cst_182 {dimension_numbers = #tpu.dot_dimension_numbers<[1], [0], [0], [1], [0, 0, 1, 1], [], []>} : vector<128x64xbf16>, vector<64x64xbf16>, vector<128x64xf32> -> vector<128x64xf32>
    %179 = arith.addf %174, %178 : vector<128x64xf32>
    %c0_183 = arith.constant 0 : index
    %c1_184 = arith.constant 1 : index
    %c3_185 = arith.constant 3 : index
    %c0_186 = arith.constant 0 : index
    %180 = vector.load %arg18[%c0_183, %c1_184, %c3_185, %c0_186] : memref<2x10x12x64xbf16, #tpu.memory_space<vmem>>, vector<2x8x8x64xbf16>
    %181 = vector.shape_cast %180 : vector<2x8x8x64xbf16> to vector<128x64xbf16>
    %c320 = arith.constant 320 : index
    %c0_187 = arith.constant 0 : index
    %182 = vector.load %arg12[%c320, %c0_187] : memref<576x64xbf16, #tpu.memory_space<vmem>>, vector<64x64xbf16>
    %cst_188 = arith.constant dense<0.000000e+00> : vector<128x64xf32>
    %183 = tpu.matmul %181, %182, %cst_188 {dimension_numbers = #tpu.dot_dimension_numbers<[1], [0], [0], [1], [0, 0, 1, 1], [], []>} : vector<128x64xbf16>, vector<64x64xbf16>, vector<128x64xf32> -> vector<128x64xf32>
    %184 = arith.addf %179, %183 : vector<128x64xf32>
    %c0_189 = arith.constant 0 : index
    %c2_190 = arith.constant 2 : index
    %c1_191 = arith.constant 1 : index
    %c0_192 = arith.constant 0 : index
    %185 = vector.load %arg18[%c0_189, %c2_190, %c1_191, %c0_192] : memref<2x10x12x64xbf16, #tpu.memory_space<vmem>>, vector<2x8x8x64xbf16>
    %186 = vector.shape_cast %185 : vector<2x8x8x64xbf16> to vector<128x64xbf16>
    %c384 = arith.constant 384 : index
    %c0_193 = arith.constant 0 : index
    %187 = vector.load %arg12[%c384, %c0_193] : memref<576x64xbf16, #tpu.memory_space<vmem>>, vector<64x64xbf16>
    %cst_194 = arith.constant dense<0.000000e+00> : vector<128x64xf32>
    %188 = tpu.matmul %186, %187, %cst_194 {dimension_numbers = #tpu.dot_dimension_numbers<[1], [0], [0], [1], [0, 0, 1, 1], [], []>} : vector<128x64xbf16>, vector<64x64xbf16>, vector<128x64xf32> -> vector<128x64xf32>
    %189 = arith.addf %184, %188 : vector<128x64xf32>
    %c0_195 = arith.constant 0 : index
    %c2_196 = arith.constant 2 : index
    %c2_197 = arith.constant 2 : index
    %c0_198 = arith.constant 0 : index
    %190 = vector.load %arg18[%c0_195, %c2_196, %c2_197, %c0_198] : memref<2x10x12x64xbf16, #tpu.memory_space<vmem>>, vector<2x8x8x64xbf16>
    %191 = vector.shape_cast %190 : vector<2x8x8x64xbf16> to vector<128x64xbf16>
    %c448 = arith.constant 448 : index
    %c0_199 = arith.constant 0 : index
    %192 = vector.load %arg12[%c448, %c0_199] : memref<576x64xbf16, #tpu.memory_space<vmem>>, vector<64x64xbf16>
    %cst_200 = arith.constant dense<0.000000e+00> : vector<128x64xf32>
    %193 = tpu.matmul %191, %192, %cst_200 {dimension_numbers = #tpu.dot_dimension_numbers<[1], [0], [0], [1], [0, 0, 1, 1], [], []>} : vector<128x64xbf16>, vector<64x64xbf16>, vector<128x64xf32> -> vector<128x64xf32>
    %194 = arith.addf %189, %193 : vector<128x64xf32>
    %c0_201 = arith.constant 0 : index
    %c2_202 = arith.constant 2 : index
    %c3_203 = arith.constant 3 : index
    %c0_204 = arith.constant 0 : index
    %195 = vector.load %arg18[%c0_201, %c2_202, %c3_203, %c0_204] : memref<2x10x12x64xbf16, #tpu.memory_space<vmem>>, vector<2x8x8x64xbf16>
    %196 = vector.shape_cast %195 : vector<2x8x8x64xbf16> to vector<128x64xbf16>
    %c512 = arith.constant 512 : index
    %c0_205 = arith.constant 0 : index
    %197 = vector.load %arg12[%c512, %c0_205] : memref<576x64xbf16, #tpu.memory_space<vmem>>, vector<64x64xbf16>
    %cst_206 = arith.constant dense<0.000000e+00> : vector<128x64xf32>
    %198 = tpu.matmul %196, %197, %cst_206 {dimension_numbers = #tpu.dot_dimension_numbers<[1], [0], [0], [1], [0, 0, 1, 1], [], []>} : vector<128x64xbf16>, vector<64x64xbf16>, vector<128x64xf32> -> vector<128x64xf32>
    %199 = arith.addf %194, %198 : vector<128x64xf32>
    %200 = vector.shape_cast %199 : vector<128x64xf32> to vector<2x64x64xf32>
    %c0_207 = arith.constant 0 : index
    %c0_208 = arith.constant 0 : index
    %201 = vector.load %arg13[%c0_207, %c0_208] : memref<1x64xf32, #tpu.memory_space<vmem>>, vector<1x64xf32>
    %202 = vector.shape_cast %201 : vector<1x64xf32> to vector<1x1x64xf32>
    %203 = vector.broadcast %202 : vector<1x1x64xf32> to vector<2x64x64xf32>
    %204 = arith.addf %200, %203 : vector<2x64x64xf32>
    %205 = vector.shape_cast %0 : vector<2x64x32xbf16> to vector<128x32xbf16>
    %c0_209 = arith.constant 0 : index
    %c0_210 = arith.constant 0 : index
    %206 = vector.load %arg14[%c0_209, %c0_210] : memref<32x64xbf16, #tpu.memory_space<vmem>>, vector<32x64xbf16>
    %cst_211 = arith.constant dense<0.000000e+00> : vector<128x64xf32>
    %207 = tpu.matmul %205, %206, %cst_211 {dimension_numbers = #tpu.dot_dimension_numbers<[1], [0], [0], [1], [0, 0, 1, 1], [], []>} : vector<128x32xbf16>, vector<32x64xbf16>, vector<128x64xf32> -> vector<128x64xf32>
    %208 = vector.shape_cast %207 : vector<128x64xf32> to vector<2x64x64xf32>
    %c0_212 = arith.constant 0 : index
    %c0_213 = arith.constant 0 : index
    %209 = vector.load %arg15[%c0_212, %c0_213] : memref<1x64xf32, #tpu.memory_space<vmem>>, vector<1x64xf32>
    %210 = vector.shape_cast %209 : vector<1x64xf32> to vector<1x1x64xf32>
    %211 = vector.broadcast %210 : vector<1x1x64xf32> to vector<2x64x64xf32>
    %212 = arith.addf %208, %211 : vector<2x64x64xf32>
    %213 = arith.addf %212, %204 : vector<2x64x64xf32>
    %c0_214 = arith.constant 0 : index
    %c0_215 = arith.constant 0 : index
    %c0_216 = arith.constant 0 : index
    %214 = vector.load %arg16[%c0_214, %c0_215, %c0_216] : memref<2x64x64xf32, #tpu.memory_space<vmem>>, vector<2x64x64xf32>
    tpu.vector_store %arg16[%c0_214, %c0_215, %c0_216], %213 {strides = array<i32>} : memref<2x64x64xf32, #tpu.memory_space<vmem>>, vector<2x64x64xf32>,
    return
  }
  func.func @transform_0(%arg0: i32) -> (i32, i32, i32) {
    %c0_i32 = arith.constant 0 : i32
    %c0_i32_0 = arith.constant 0 : i32
    %c0_i32_1 = arith.constant 0 : i32
    return %arg0, %c0_i32, %c0_i32_0 : i32, i32, i32
  }
  func.func @transform_1(%arg0: i32) -> (i32, i32, i32) {
    %c0_i32 = arith.constant 0 : i32
    %c0_i32_0 = arith.constant 0 : i32
    %c0_i32_1 = arith.constant 0 : i32
    return %arg0, %c0_i32, %c0_i32_0 : i32, i32, i32
  }
  func.func @transform_2(%arg0: i32) -> (i32, i32) {
    %c0_i32 = arith.constant 0 : i32
    %c0_i32_0 = arith.constant 0 : i32
    %c0_i32_1 = arith.constant 0 : i32
    return %c0_i32, %c0_i32_0 : i32, i32
  }
  func.func @transform_3(%arg0: i32) -> (i32, i32) {
    %c0_i32 = arith.constant 0 : i32
    %c0_i32_0 = arith.constant 0 : i32
    %c0_i32_1 = arith.constant 0 : i32
    return %c0_i32, %c0_i32_0 : i32, i32
  }
  func.func @transform_4(%arg0: i32) -> (i32, i32) {
    %c0_i32 = arith.constant 0 : i32
    %c0_i32_0 = arith.constant 0 : i32
    %c0_i32_1 = arith.constant 0 : i32
    return %c0_i32, %c0_i32_0 : i32, i32
  }
  func.func @transform_5(%arg0: i32) -> (i32, i32) {
    %c0_i32 = arith.constant 0 : i32
    %c0_i32_0 = arith.constant 0 : i32
    %c0_i32_1 = arith.constant 0 : i32
    return %c0_i32, %c0_i32_0 : i32, i32
  }
  func.func @transform_6(%arg0: i32) -> (i32, i32) {
    %c0_i32 = arith.constant 0 : i32
    %c0_i32_0 = arith.constant 0 : i32
    %c0_i32_1 = arith.constant 0 : i32
    return %c0_i32, %c0_i32_0 : i32, i32
  }
  func.func @transform_7(%arg0: i32) -> (i32, i32) {
    %c0_i32 = arith.constant 0 : i32
    %c0_i32_0 = arith.constant 0 : i32
    %c0_i32_1 = arith.constant 0 : i32
    return %c0_i32, %c0_i32_0 : i32, i32
  }
  func.func @transform_8(%arg0: i32) -> (i32, i32) {
    %c0_i32 = arith.constant 0 : i32
    %c0_i32_0 = arith.constant 0 : i32
    %c0_i32_1 = arith.constant 0 : i32
    return %c0_i32, %c0_i32_0 : i32, i32
  }
  func.func @transform_9(%arg0: i32) -> (i32, i32) {
    %c0_i32 = arith.constant 0 : i32
    %c0_i32_0 = arith.constant 0 : i32
    %c0_i32_1 = arith.constant 0 : i32
    return %c0_i32, %c0_i32_0 : i32, i32
  }
  func.func @transform_10(%arg0: i32) -> (i32, i32) {
    %c0_i32 = arith.constant 0 : i32
    %c0_i32_0 = arith.constant 0 : i32
    %c0_i32_1 = arith.constant 0 : i32
    return %c0_i32, %c0_i32_0 : i32, i32
  }
  func.func @transform_11(%arg0: i32) -> (i32, i32) {
    %c0_i32 = arith.constant 0 : i32
    %c0_i32_0 = arith.constant 0 : i32
    %c0_i32_1 = arith.constant 0 : i32
    return %c0_i32, %c0_i32_0 : i32, i32
  }
  func.func @transform_12(%arg0: i32) -> (i32, i32) {
    %c0_i32 = arith.constant 0 : i32
    %c0_i32_0 = arith.constant 0 : i32
    %c0_i32_1 = arith.constant 0 : i32
    return %c0_i32, %c0_i32_0 : i32, i32
  }
  func.func @transform_13(%arg0: i32) -> (i32, i32) {
    %c0_i32 = arith.constant 0 : i32
    %c0_i32_0 = arith.constant 0 : i32
    %c0_i32_1 = arith.constant 0 : i32
    return %c0_i32, %c0_i32_0 : i32, i32
  }
  func.func @transform_14(%arg0: i32) -> (i32, i32) {
    %c0_i32 = arith.constant 0 : i32
    %c0_i32_0 = arith.constant 0 : i32
    %c0_i32_1 = arith.constant 0 : i32
    return %c0_i32, %c0_i32_0 : i32, i32
  }
  func.func @transform_15(%arg0: i32) -> (i32, i32, i32) {
    %c0_i32 = arith.constant 0 : i32
    %c0_i32_0 = arith.constant 0 : i32
    %c0_i32_1 = arith.constant 0 : i32
    return %arg0, %c0_i32, %c0_i32_0 : i32, i32, i32
  }
}

</mosaic_0001>

<llo_original>
// kernel: tpu_custom_call.1
$region0: #{tpu_custom_call.1}
  #allocation0 [shape = 'u32[]', space=smem, size = 0x4, offset = 0x4, fixed_abs, tag = 'smem constant byte address 0x4 - core index']
  #allocation1 [shape = 'u32[144,128]{1,0:T(1,128)}', space=vmem, size = 0x12000, scoped, tag = 'internal scratch']
  #allocation2 [shape = 'bf16[2,10,12,32]{3,2,1,0:T(8,128)(2,1)}', space=vmem, size = 0x14000, scoped, tag = 'scratch operand']
  #allocation3 [shape = 'bf16[2,10,12,64]{3,2,1,0:T(8,128)(2,1)}', space=vmem, size = 0x14000, scoped, tag = 'scratch operand']
  %s0 = inlined_call_operand.vmem [shape: bf16[2,64,32], index: 0, kind: input, shape index: {}]
  %s1 = inlined_call_operand.vmem [shape: f32[2,1,64], index: 1, kind: input, shape index: {}]
  %s2 = inlined_call_operand.vmem [shape: f32[1,32], index: 2, kind: input, shape index: {}]
  %s3 = inlined_call_operand.vmem [shape: f32[1,32], index: 3, kind: input, shape index: {}]
  %s4 = inlined_call_operand.vmem [shape: f32[32,32], index: 4, kind: input, shape index: {}]
  %s5 = inlined_call_operand.vmem [shape: f32[32,32], index: 5, kind: input, shape index: {}]
  %s6 = inlined_call_operand.vmem [shape: bf16[288,64], index: 6, kind: input, shape index: {}]
  %s7 = inlined_call_operand.vmem [shape: f32[1,64], index: 7, kind: input, shape index: {}]
  %s8 = inlined_call_operand.vmem [shape: f32[1,64], index: 8, kind: input, shape index: {}]
  %s9 = inlined_call_operand.vmem [shape: f32[64,32], index: 9, kind: input, shape index: {}]
  %s10 = inlined_call_operand.vmem [shape: f32[32,64], index: 10, kind: input, shape index: {}]
  %s11 = inlined_call_operand.vmem [shape: bf16[576,64], index: 11, kind: input, shape index: {}]
  %s12 = inlined_call_operand.vmem [shape: f32[1,64], index: 12, kind: input, shape index: {}]
  %s13 = inlined_call_operand.vmem [shape: bf16[32,64], index: 13, kind: input, shape index: {}]
  %s14 = inlined_call_operand.vmem [shape: f32[1,64], index: 14, kind: input, shape index: {}]
  %s15 = inlined_call_operand.hbm [shape: f32[2,64,64], index: 15, kind: output, shape index: {}]
  %s16 = sld [smem:[#allocation0]]
  $region70: #{tpu_custom_call.1} parent=0
    _
  %s18 = ssub.s32 1, %s16
  %s19 = scalar_select 0, %s18, %s16
  $region1: #{tpu_custom_call.1} parent=0
    #allocation4 [shape = 'u8[65536]{0}', space=vmem, size = 0x10000, scoped, tag = 'output window, operand 0, single buffered']
    #allocation5 [shape = 's32[1]{0}', space=sflag, size = 0x4, scoped, tag = 'scoped memory for tpu_custom_call.1']
    %20 = vsyncpa [#allocation5], 0
    // Predicated region
    $region2: #{tpu_custom_call.1} parent=1 // pred_check
      _
    $region3: #{tpu_custom_call.1} parent=1 // pred_check_branch
      %22 = sbr.rel (0) target = $region5
    $region4: #{tpu_custom_call.1} parent=1 // pred_region
      _
    $region5: #{tpu_custom_call.1} parent=1 // pred_fallthru
      _
    // Predicated region
    $region6: #{tpu_custom_call.1} parent=1 // pred_check
      _
    $region7: #{tpu_custom_call.1} parent=1 // pred_check_branch
      %24 = sbr.rel (0) target = $region9
    $region8: #{tpu_custom_call.1} parent=1 // pred_region
      _
    $region9: #{tpu_custom_call.1} parent=1 // pred_fallthru
      _
    // Predicated region
    $region10: #{tpu_custom_call.1} parent=1 // pred_check
      _
    $region11: #{tpu_custom_call.1} parent=1 // pred_check_branch
      %26 = sbr.rel (0) target = $region13
    $region12: #{tpu_custom_call.1} parent=1 // pred_region
      _
    $region13: #{tpu_custom_call.1} parent=1 // pred_fallthru
      _
    // Predicated region
    $region14: #{tpu_custom_call.1} parent=1 // pred_check
      _
    $region15: #{tpu_custom_call.1} parent=1 // pred_check_branch
      %28 = sbr.rel (0) target = $region17
    $region16: #{tpu_custom_call.1} parent=1 // pred_region
      _
    $region17: #{tpu_custom_call.1} parent=1 // pred_fallthru
      _
    // Predicated region
    $region18: #{tpu_custom_call.1} parent=1 // pred_check
      _
    $region19: #{tpu_custom_call.1} parent=1 // pred_check_branch
      %30 = sbr.rel (0) target = $region21
    $region20: #{tpu_custom_call.1} parent=1 // pred_region
      _
    $region21: #{tpu_custom_call.1} parent=1 // pred_fallthru
      _
    // Predicated region
    $region22: #{tpu_custom_call.1} parent=1 // pred_check
      _
    $region23: #{tpu_custom_call.1} parent=1 // pred_check_branch
      %32 = sbr.rel (0) target = $region25
    $region24: #{tpu_custom_call.1} parent=1 // pred_region
      _
    $region25: #{tpu_custom_call.1} parent=1 // pred_fallthru
      _
    // Predicated region
    $region26: #{tpu_custom_call.1} parent=1 // pred_check
      _
    $region27: #{tpu_custom_call.1} parent=1 // pred_check_branch
      %34 = sbr.rel (0) target = $region29
    $region28: #{tpu_custom_call.1} parent=1 // pred_region
      _
    $region29: #{tpu_custom_call.1} parent=1 // pred_fallthru
      _
    // Predicated region
    $region30: #{tpu_custom_call.1} parent=1 // pred_check
      _
    $region31: #{tpu_custom_call.1} parent=1 // pred_check_branch
      %36 = sbr.rel (0) target = $region33
    $region32: #{tpu_custom_call.1} parent=1 // pred_region
      _
    $region33: #{tpu_custom_call.1} parent=1 // pred_fallthru
      _
    // Predicated region
    $region34: #{tpu_custom_call.1} parent=1 // pred_check
      _
    $region35: #{tpu_custom_call.1} parent=1 // pred_check_branch
      %38 = sbr.rel (0) target = $region37
    $region36: #{tpu_custom_call.1} parent=1 // pred_region
      _
    $region37: #{tpu_custom_call.1} parent=1 // pred_fallthru
      _
    // Predicated region
    $region38: #{tpu_custom_call.1} parent=1 // pred_check
      _
    $region39: #{tpu_custom_call.1} parent=1 // pred_check_branch
      %40 = sbr.rel (0) target = $region41
    $region40: #{tpu_custom_call.1} parent=1 // pred_region
      _
    $region41: #{tpu_custom_call.1} parent=1 // pred_fallthru
      _
    // Predicated region
    $region42: #{tpu_custom_call.1} parent=1 // pred_check
      _
    $region43: #{tpu_custom_call.1} parent=1 // pred_check_branch
      %42 = sbr.rel (0) target = $region45
    $region44: #{tpu_custom_call.1} parent=1 // pred_region
      _
    $region45: #{tpu_custom_call.1} parent=1 // pred_fallthru
      _
    // Predicated region
    $region46: #{tpu_custom_call.1} parent=1 // pred_check
      _
    $region47: #{tpu_custom_call.1} parent=1 // pred_check_branch
      %44 = sbr.rel (0) target = $region49
    $region48: #{tpu_custom_call.1} parent=1 // pred_region
      _
    $region49: #{tpu_custom_call.1} parent=1 // pred_fallthru
      _
    // Predicated region
    $region50: #{tpu_custom_call.1} parent=1 // pred_check
      _
    $region51: #{tpu_custom_call.1} parent=1 // pred_check_branch
      %46 = sbr.rel (0) target = $region53
    $region52: #{tpu_custom_call.1} parent=1 // pred_region
      _
    $region53: #{tpu_custom_call.1} parent=1 // pred_fallthru
      _
    // Predicated region
    $region54: #{tpu_custom_call.1} parent=1 // pred_check
      _
    $region55: #{tpu_custom_call.1} parent=1 // pred_check_branch
      %48 = sbr.rel (0) target = $region57
    $region56: #{tpu_custom_call.1} parent=1 // pred_region
      _
    $region57: #{tpu_custom_call.1} parent=1 // pred_fallthru
      _
    // Predicated region
    $region58: #{tpu_custom_call.1} parent=1 // pred_check
      _
    $region59: #{tpu_custom_call.1} parent=1 // pred_check_branch
      %50 = sbr.rel (0) target = $region61
    $region60: #{tpu_custom_call.1} parent=1 // pred_region
      _
    $region61: #{tpu_custom_call.1} parent=1 // pred_fallthru
      _
    %v52 = vld [vmem:[%s0] sm:$0xf]
    %v53 = vld [vmem:[%s0 + $0x4] sm:$0xf]
    %v54 = vld [vmem:[%s0 + $0x8] sm:$0xf]
    %v55 = vld [vmem:[%s0 + $0xc] sm:$0xf]
    %v56 = vld [vmem:[%s0 + $0x10] sm:$0xf]
    %v57 = vld [vmem:[%s0 + $0x14] sm:$0xf]
    %v58 = vld [vmem:[%s0 + $0x18] sm:$0xf]
    %v59 = vld [vmem:[%s0 + $0x1c] sm:$0xf]
    %v60 = vld [vmem:[%s0 + $0x20] sm:$0xf]
    %v61 = vld [vmem:[%s0 + $0x24] sm:$0xf]
    %v62 = vld [vmem:[%s0 + $0x28] sm:$0xf]
    %v63 = vld [vmem:[%s0 + $0x2c] sm:$0xf]
    %v64 = vld [vmem:[%s0 + $0x30] sm:$0xf]
    %v65 = vld [vmem:[%s0 + $0x34] sm:$0xf]
    %v66 = vld [vmem:[%s0 + $0x38] sm:$0xf]
    %v67 = vld [vmem:[%s0 + $0x3c] sm:$0xf]
    %v68 = vunpack.c.l.bf16 %v52
    %v69 = vunpack.c.l.bf16 %v53
    %v70 = vunpack.c.l.bf16 %v54
    %v71 = vunpack.c.l.bf16 %v55
    %v72 = vunpack.c.l.bf16 %v56
    %v73 = vunpack.c.l.bf16 %v57
    %v74 = vunpack.c.l.bf16 %v58
    %v75 = vunpack.c.l.bf16 %v59
    %v76 = vunpack.c.l.bf16 %v60
    %v77 = vunpack.c.l.bf16 %v61
    %v78 = vunpack.c.l.bf16 %v62
    %v79 = vunpack.c.l.bf16 %v63
    %v80 = vunpack.c.l.bf16 %v64
    %v81 = vunpack.c.l.bf16 %v65
    %v82 = vunpack.c.l.bf16 %v66
    %v83 = vunpack.c.l.bf16 %v67
    %vm84 = vcmask 257024
    %85 = vst.msk [vmem:[#allocation2] sm:$0xf] %vm84, 0
    %vm86 = vcmask 254976
    %87 = vst.msk [vmem:[#allocation2 + $0x4] sm:$0x3] %vm86, 0
    %88 = vst.msk [vmem:[#allocation2 + $0x50] sm:$0xf] %vm84, 0
    %89 = vst.msk [vmem:[#allocation2 + $0x54] sm:$0x3] %vm86, 0
    %s90 = scalar_lea.vmem [#allocation2], 72
    %91 = vst.msk [vmem:[%s90] sm:$0xf] %vm84, 0
    %92 = vst.msk [vmem:[%s90 + $0x4] sm:$0x3] %vm86, 0
    %93 = vst.msk [vmem:[%s90 + $0x50] sm:$0xf] %vm84, 0
    %94 = vst.msk [vmem:[%s90 + $0x54] sm:$0x3] %vm86, 0
    %vm95 = vcmask 253952
    %96 = vst.msk [vmem:[#allocation2] sm:$0x1] %vm95, 0
    %97 = vst.msk [vmem:[#allocation2 + $0x8] sm:$0x1] %vm95, 0
    %98 = vst.msk [vmem:[#allocation2 + $0x10] sm:$0x1] %vm95, 0
    %99 = vst.msk [vmem:[#allocation2 + $0x18] sm:$0x1] %vm95, 0
    %100 = vst.msk [vmem:[#allocation2 + $0x20] sm:$0x1] %vm95, 0
    %101 = vst.msk [vmem:[#allocation2 + $0x28] sm:$0x1] %vm95, 0
    %102 = vst.msk [vmem:[#allocation2 + $0x30] sm:$0x1] %vm95, 0
    %103 = vst.msk [vmem:[#allocation2 + $0x38] sm:$0x1] %vm95, 0
    %104 = vst.msk [vmem:[#allocation2 + $0x40] sm:$0x1] %vm95, 0
    %105 = vst.msk [vmem:[#allocation2 + $0x48] sm:$0x1] %vm95, 0
    %106 = vst.msk [vmem:[#allocation2 + $0x50] sm:$0x1] %vm95, 0
    %107 = vst.msk [vmem:[#allocation2 + $0x58] sm:$0x1] %vm95, 0
    %108 = vst.msk [vmem:[#allocation2 + $0x60] sm:$0x1] %vm95, 0
    %109 = vst.msk [vmem:[#allocation2 + $0x68] sm:$0x1] %vm95, 0
    %110 = vst.msk [vmem:[#allocation2 + $0x70] sm:$0x1] %vm95, 0
    %111 = vst.msk [vmem:[#allocation2 + $0x78] sm:$0x1] %vm95, 0
    %112 = vst.msk [vmem:[#allocation2 + $0x80] sm:$0x1] %vm95, 0
    %113 = vst.msk [vmem:[#allocation2 + $0x88] sm:$0x1] %vm95, 0
    %114 = vst.msk [vmem:[#allocation2 + $0x90] sm:$0x1] %vm95, 0
    %115 = vst.msk [vmem:[#allocation2 + $0x98] sm:$0x1] %vm95, 0
    %vm116 = vcmask 254977
    %117 = vst.msk [vmem:[#allocation2 + $0x4] sm:$0x2] %vm116, 0
    %118 = vst.msk [vmem:[#allocation2 + $0xc] sm:$0x2] %vm116, 0
    %119 = vst.msk [vmem:[#allocation2 + $0x14] sm:$0x2] %vm116, 0
    %120 = vst.msk [vmem:[#allocation2 + $0x1c] sm:$0x2] %vm116, 0
    %121 = vst.msk [vmem:[#allocation2 + $0x24] sm:$0x2] %vm116, 0
    %122 = vst.msk [vmem:[#allocation2 + $0x2c] sm:$0x2] %vm116, 0
    %123 = vst.msk [vmem:[#allocation2 + $0x34] sm:$0x2] %vm116, 0
    %124 = vst.msk [vmem:[#allocation2 + $0x3c] sm:$0x2] %vm116, 0
    %125 = vst.msk [vmem:[#allocation2 + $0x44] sm:$0x2] %vm116, 0
    %126 = vst.msk [vmem:[#allocation2 + $0x4c] sm:$0x2] %vm116, 0
    %127 = vst.msk [vmem:[#allocation2 + $0x54] sm:$0x2] %vm116, 0
    %128 = vst.msk [vmem:[#allocation2 + $0x5c] sm:$0x2] %vm116, 0
    %129 = vst.msk [vmem:[#allocation2 + $0x64] sm:$0x2] %vm116, 0
    %130 = vst.msk [vmem:[#allocation2 + $0x6c] sm:$0x2] %vm116, 0
    %131 = vst.msk [vmem:[#allocation2 + $0x74] sm:$0x2] %vm116, 0
    %132 = vst.msk [vmem:[#allocation2 + $0x7c] sm:$0x2] %vm116, 0
    %133 = vst.msk [vmem:[#allocation2 + $0x84] sm:$0x2] %vm116, 0
    %134 = vst.msk [vmem:[#allocation2 + $0x8c] sm:$0x2] %vm116, 0
    %135 = vst.msk [vmem:[#allocation2 + $0x94] sm:$0x2] %vm116, 0
    %136 = vst.msk [vmem:[#allocation2 + $0x9c] sm:$0x2] %vm116, 0
    %vm137 = vcmask 519168
    %138 = vst.msk [vmem:[#allocation3] sm:$0xf] %vm137, 0
    %vm139 = vcmask 517120
    %140 = vst.msk [vmem:[#allocation3 + $0x4] sm:$0x3] %vm139, 0
    %141 = vst.msk [vmem:[#allocation3 + $0x50] sm:$0xf] %vm137, 0
    %142 = vst.msk [vmem:[#allocation3 + $0x54] sm:$0x3] %vm139, 0
    %s143 = scalar_lea.vmem [#allocation3], 72
    %144 = vst.msk [vmem:[%s143] sm:$0xf] %vm137, 0
    %145 = vst.msk [vmem:[%s143 + $0x4] sm:$0x3] %vm139, 0
    %146 = vst.msk [vmem:[%s143 + $0x50] sm:$0xf] %vm137, 0
    %147 = vst.msk [vmem:[%s143 + $0x54] sm:$0x3] %vm139, 0
    %vm148 = vcmask 516096
    %149 = vst.msk [vmem:[#allocation3] sm:$0x1] %vm148, 0
    %150 = vst.msk [vmem:[#allocation3 + $0x8] sm:$0x1] %vm148, 0
    %151 = vst.msk [vmem:[#allocation3 + $0x10] sm:$0x1] %vm148, 0
    %152 = vst.msk [vmem:[#allocation3 + $0x18] sm:$0x1] %vm148, 0
    %153 = vst.msk [vmem:[#allocation3 + $0x20] sm:$0x1] %vm148, 0
    %154 = vst.msk [vmem:[#allocation3 + $0x28] sm:$0x1] %vm148, 0
    %155 = vst.msk [vmem:[#allocation3 + $0x30] sm:$0x1] %vm148, 0
    %156 = vst.msk [vmem:[#allocation3 + $0x38] sm:$0x1] %vm148, 0
    %157 = vst.msk [vmem:[#allocation3 + $0x40] sm:$0x1] %vm148, 0
    %158 = vst.msk [vmem:[#allocation3 + $0x48] sm:$0x1] %vm148, 0
    %159 = vst.msk [vmem:[#allocation3 + $0x50] sm:$0x1] %vm148, 0
    %160 = vst.msk [vmem:[#allocation3 + $0x58] sm:$0x1] %vm148, 0
    %161 = vst.msk [vmem:[#allocation3 + $0x60] sm:$0x1] %vm148, 0
    %162 = vst.msk [vmem:[#allocation3 + $0x68] sm:$0x1] %vm148, 0
    %163 = vst.msk [vmem:[#allocation3 + $0x70] sm:$0x1] %vm148, 0
    %164 = vst.msk [vmem:[#allocation3 + $0x78] sm:$0x1] %vm148, 0
    %165 = vst.msk [vmem:[#allocation3 + $0x80] sm:$0x1] %vm148, 0
    %166 = vst.msk [vmem:[#allocation3 + $0x88] sm:$0x1] %vm148, 0
    %167 = vst.msk [vmem:[#allocation3 + $0x90] sm:$0x1] %vm148, 0
    %168 = vst.msk [vmem:[#allocation3 + $0x98] sm:$0x1] %vm148, 0
    %vm169 = vcmask 517121
    %170 = vst.msk [vmem:[#allocation3 + $0x4] sm:$0x2] %vm169, 0
    %171 = vst.msk [vmem:[#allocation3 + $0xc] sm:$0x2] %vm169, 0
    %172 = vst.msk [vmem:[#allocation3 + $0x14] sm:$0x2] %vm169, 0
    %173 = vst.msk [vmem:[#allocation3 + $0x1c] sm:$0x2] %vm169, 0
    %174 = vst.msk [vmem:[#allocation3 + $0x24] sm:$0x2] %vm169, 0
    %175 = vst.msk [vmem:[#allocation3 + $0x2c] sm:$0x2] %vm169, 0
    %176 = vst.msk [vmem:[#allocation3 + $0x34] sm:$0x2] %vm169, 0
    %177 = vst.msk [vmem:[#allocation3 + $0x3c] sm:$0x2] %vm169, 0
    %178 = vst.msk [vmem:[#allocation3 + $0x44] sm:$0x2] %vm169, 0
    %179 = vst.msk [vmem:[#allocation3 + $0x4c] sm:$0x2] %vm169, 0
    %180 = vst.msk [vmem:[#allocation3 + $0x54] sm:$0x2] %vm169, 0
    %181 = vst.msk [vmem:[#allocation3 + $0x5c] sm:$0x2] %vm169, 0
    %182 = vst.msk [vmem:[#allocation3 + $0x64] sm:$0x2] %vm169, 0
    %183 = vst.msk [vmem:[#allocation3 + $0x6c] sm:$0x2] %vm169, 0
    %184 = vst.msk [vmem:[#allocation3 + $0x74] sm:$0x2] %vm169, 0
    %185 = vst.msk [vmem:[#allocation3 + $0x7c] sm:$0x2] %vm169, 0
    %186 = vst.msk [vmem:[#allocation3 + $0x84] sm:$0x2] %vm169, 0
    %187 = vst.msk [vmem:[#allocation3 + $0x8c] sm:$0x2] %vm169, 0
    %188 = vst.msk [vmem:[#allocation3 + $0x94] sm:$0x2] %vm169, 0
    %189 = vst.msk [vmem:[#allocation3 + $0x9c] sm:$0x2] %vm169, 0
    %vm190 = vcmask 261120
    %v191 = vsel %vm190, %v68, 0.0
    %v192 = vsel %vm190, %v69, 0.0
    %v193 = vadd.f32 %v191, %v192
    %v194 = vsel %vm190, %v70, 0.0
    %v195 = vadd.f32 %v193, %v194
    %v196 = vsel %vm190, %v71, 0.0
    %v197 = vadd.f32 %v195, %v196
    %v198 = vsel %vm190, %v72, 0.0
    %v199 = vadd.f32 %v197, %v198
    %v200 = vsel %vm190, %v73, 0.0
    %v201 = vadd.f32 %v199, %v200
    %v202 = vsel %vm190, %v74, 0.0
    %v203 = vadd.f32 %v201, %v202
    %v204 = vsel %vm190, %v75, 0.0
    %v205 = vadd.f32 %v203, %v204
    %v206 = vrot.slane %v205, 4
    %v207 = vadd.f32 %v205, %v206
    %v208 = vrot.slane %v207, 2
    %v209 = vadd.f32 %v207, %v208
    %v210 = vrot.slane %v209, 1
    %v211 = vadd.f32 %v209, %v210
    %v212 = vsel %vm190, %v76, 0.0
    %v213 = vsel %vm190, %v77, 0.0
    %v214 = vadd.f32 %v212, %v213
    %v215 = vsel %vm190, %v78, 0.0
    %v216 = vadd.f32 %v214, %v215
    %v217 = vsel %vm190, %v79, 0.0
    %v218 = vadd.f32 %v216, %v217
    %v219 = vsel %vm190, %v80, 0.0
    %v220 = vadd.f32 %v218, %v219
    %v221 = vsel %vm190, %v81, 0.0
    %v222 = vadd.f32 %v220, %v221
    %v223 = vsel %vm190, %v82, 0.0
    %v224 = vadd.f32 %v222, %v223
    %v225 = vsel %vm190, %v83, 0.0
    %v226 = vadd.f32 %v224, %v225
    %v227 = vrot.slane %v226, 4
    %v228 = vadd.f32 %v226, %v227
    %v229 = vrot.slane %v228, 2
    %v230 = vadd.f32 %v228, %v229
    %v231 = vrot.slane %v230, 1
    %v232 = vadd.f32 %v230, %v231
    %v233 = vmul.f32 %v68, %v68
    %v234 = vmul.f32 %v69, %v69
    %v235 = vmul.f32 %v70, %v70
    %v236 = vmul.f32 %v71, %v71
    %v237 = vmul.f32 %v72, %v72
    %v238 = vmul.f32 %v73, %v73
    %v239 = vmul.f32 %v74, %v74
    %v240 = vmul.f32 %v75, %v75
    %v241 = vmul.f32 %v76, %v76
    %v242 = vmul.f32 %v77, %v77
    %v243 = vmul.f32 %v78, %v78
    %v244 = vmul.f32 %v79, %v79
    %v245 = vmul.f32 %v80, %v80
    %v246 = vmul.f32 %v81, %v81
    %v247 = vmul.f32 %v82, %v82
    %v248 = vmul.f32 %v83, %v83
    %v249 = vsel %vm190, %v233, 0.0
    %v250 = vsel %vm190, %v234, 0.0
    %v251 = vadd.f32 %v249, %v250
    %v252 = vsel %vm190, %v235, 0.0
    %v253 = vadd.f32 %v251, %v252
    %v254 = vsel %vm190, %v236, 0.0
    %v255 = vadd.f32 %v253, %v254
    %v256 = vsel %vm190, %v237, 0.0
    %v257 = vadd.f32 %v255, %v256
    %v258 = vsel %vm190, %v238, 0.0
    %v259 = vadd.f32 %v257, %v258
    %v260 = vsel %vm190, %v239, 0.0
    %v261 = vadd.f32 %v259, %v260
    %v262 = vsel %vm190, %v240, 0.0
    %v263 = vadd.f32 %v261, %v262
    %v264 = vrot.slane %v263, 4
    %v265 = vadd.f32 %v263, %v264
    %v266 = vrot.slane %v265, 2
    %v267 = vadd.f32 %v265, %v266
    %v268 = vrot.slane %v267, 1
    %v269 = vadd.f32 %v267, %v268
    %v270 = vsel %vm190, %v241, 0.0
    %v271 = vsel %vm190, %v242, 0.0
    %v272 = vadd.f32 %v270, %v271
    %v273 = vsel %vm190, %v243, 0.0
    %v274 = vadd.f32 %v272, %v273
    %v275 = vsel %vm190, %v244, 0.0
    %v276 = vadd.f32 %v274, %v275
    %v277 = vsel %vm190, %v245, 0.0
    %v278 = vadd.f32 %v276, %v277
    %v279 = vsel %vm190, %v246, 0.0
    %v280 = vadd.f32 %v278, %v279
    %v281 = vsel %vm190, %v247, 0.0
    %v282 = vadd.f32 %v280, %v281
    %v283 = vsel %vm190, %v248, 0.0
    %v284 = vadd.f32 %v282, %v283
    %v285 = vrot.slane %v284, 4
    %v286 = vadd.f32 %v284, %v285
    %v287 = vrot.slane %v286, 2
    %v288 = vadd.f32 %v286, %v287
    %v289 = vrot.slane %v288, 1
    %v290 = vadd.f32 %v288, %v289
    %v291 = vld [vmem:[%s4] sm:$0xff]
    %v292 = vld [vmem:[%s4 + $0x8] sm:$0xff]
    %v293 = vld [vmem:[%s4 + $0x10] sm:$0xff]
    %v294 = vld [vmem:[%s4 + $0x18] sm:$0xff]
    %vm297 = vcmask 1041409
    %v298 = vsel %vm297, %v232, %v211
    %v299 = vsel %vm190, %v298, 0
    %301 = vmatprep.subr.mxu0 0.0
    %302 = vmatpush1.msra.mxu0 0.0
    %303 = vmatprep.subr.mxu0 0.0
    %304 = vmatpush1.msra.mxu0 0.0
    %305 = vmatprep.subr.mxu0 0.0
    %306 = vmatpush1.msra.mxu0 0.0
    %307 = vmatprep.subr.mxu0 0.0
    %308 = vmatpush1.msra.mxu0 0.0
    %309 = vmatprep.subr.mxu0 0.0
    %310 = vmatpush1.msra.mxu0 0.0
    %311 = vmatprep.subr.mxu0 0.0
    %312 = vmatpush1.msra.mxu0 0.0
    %313 = vmatprep.subr.mxu0 0.0
    %314 = vmatpush1.msra.mxu0 0.0
    %315 = vmatprep.subr.mxu0 0.0
    %316 = vmatpush1.msra.mxu0 0.0
    %317 = vmatprep.subr.mxu0 0.0
    %318 = vmatpush1.msra.mxu0 0.0
    %319 = vmatprep.subr.mxu0 0.0
    %320 = vmatpush1.msra.mxu0 0.0
    %321 = vmatprep.subr.mxu0 0.0
    %322 = vmatpush1.msra.mxu0 0.0
    %323 = vmatprep.subr.mxu0 0.0
    %324 = vmatpush1.msra.mxu0 0.0
    %325 = vmatprep.subr.mxu0 0.0
    %326 = vmatpush1.msra.mxu0 %v294
    %327 = vmatprep.subr.mxu0 0.0
    %328 = vmatpush1.msra.mxu0 %v293
    %329 = vmatprep.subr.mxu0 0.0
    %330 = vmatpush1.msra.mxu0 %v292
    %331 = vmatprep.subr.mxu0 0.0
    %332 = vmatpush1.msra.mxu0 %v291
    %333 = vmatprep.subr.mxu0 0.0
    %334 = vmatpush2.msra.mxu0 0.0
    %335 = vmatprep.subr.mxu0 0.0
    %336 = vmatpush2.msra.mxu0 0.0
    %337 = vmatprep.subr.mxu0 0.0
    %338 = vmatpush2.msra.mxu0 0.0
    %339 = vmatprep.subr.mxu0 0.0
    %340 = vmatpush2.msra.mxu0 0.0
    %341 = vmatprep.subr.mxu0 0.0
    %342 = vmatpush2.msra.mxu0 0.0
    %343 = vmatprep.subr.mxu0 0.0
    %344 = vmatpush2.msra.mxu0 0.0
    %345 = vmatprep.subr.mxu0 0.0
    %346 = vmatpush2.msra.mxu0 0.0
    %347 = vmatprep.subr.mxu0 0.0
    %348 = vmatpush2.msra.mxu0 0.0
    %349 = vmatprep.subr.mxu0 0.0
    %350 = vmatpush2.msra.mxu0 0.0
    %351 = vmatprep.subr.mxu0 0.0
    %352 = vmatpush2.msra.mxu0 0.0
    %353 = vmatprep.subr.mxu0 0.0
    %354 = vmatpush2.msra.mxu0 0.0
    %355 = vmatprep.subr.mxu0 0.0
    %356 = vmatpush2.msra.mxu0 0.0
    %357 = vmatprep.subr.mxu0 0.0
    %358 = vmatpush2.msra.mxu0 0.0
    %359 = vmatprep.subr.mxu0 0.0
    %360 = vmatpush2.msra.mxu0 0.0
    %361 = vmatprep.subr.mxu0 0.0
    %362 = vmatpush2.msra.mxu0 0.0
    %363 = vmatprep.subr.mxu0 0.0
    %364 = vmatpush2.msra.mxu0 0.0
    %365 = vmatprep.mubr.f32.mxu0 0.0
    %366 = vmatmul.mubr.f32.gmra.mxu0 %v299
    %v367 = vpop.f32.mrf.mxu0
    %v368 = vadd.f32 0.0, %v367
    %v369 = vpop.f32.mrf.mxu0
    %370 = vdwg.mxu0
    %v373 = vsel %vm297, %v290, %v269
    %v374 = vsel %vm190, %v373, 0
    %376 = vmatprep.subr.mxu0 0.0
    %377 = vmatpush1.msra.mxu0 0.0
    %378 = vmatprep.subr.mxu0 0.0
    %379 = vmatpush1.msra.mxu0 0.0
    %380 = vmatprep.subr.mxu0 0.0
    %381 = vmatpush1.msra.mxu0 0.0
    %382 = vmatprep.subr.mxu0 0.0
    %383 = vmatpush1.msra.mxu0 0.0
    %384 = vmatprep.subr.mxu0 0.0
    %385 = vmatpush1.msra.mxu0 0.0
    %386 = vmatprep.subr.mxu0 0.0
    %387 = vmatpush1.msra.mxu0 0.0
    %388 = vmatprep.subr.mxu0 0.0
    %389 = vmatpush1.msra.mxu0 0.0
    %390 = vmatprep.subr.mxu0 0.0
    %391 = vmatpush1.msra.mxu0 0.0
    %392 = vmatprep.subr.mxu0 0.0
    %393 = vmatpush1.msra.mxu0 0.0
    %394 = vmatprep.subr.mxu0 0.0
    %395 = vmatpush1.msra.mxu0 0.0
    %396 = vmatprep.subr.mxu0 0.0
    %397 = vmatpush1.msra.mxu0 0.0
    %398 = vmatprep.subr.mxu0 0.0
    %399 = vmatpush1.msra.mxu0 0.0
    %400 = vmatprep.subr.mxu0 0.0
    %401 = vmatpush1.msra.mxu0 %v294
    %402 = vmatprep.subr.mxu0 0.0
    %403 = vmatpush1.msra.mxu0 %v293
    %404 = vmatprep.subr.mxu0 0.0
    %405 = vmatpush1.msra.mxu0 %v292
    %406 = vmatprep.subr.mxu0 0.0
    %407 = vmatpush1.msra.mxu0 %v291
    %408 = vmatprep.subr.mxu0 0.0
    %409 = vmatpush2.msra.mxu0 0.0
    %410 = vmatprep.subr.mxu0 0.0
    %411 = vmatpush2.msra.mxu0 0.0
    %412 = vmatprep.subr.mxu0 0.0
    %413 = vmatpush2.msra.mxu0 0.0
    %414 = vmatprep.subr.mxu0 0.0
    %415 = vmatpush2.msra.mxu0 0.0
    %416 = vmatprep.subr.mxu0 0.0
    %417 = vmatpush2.msra.mxu0 0.0
    %418 = vmatprep.subr.mxu0 0.0
    %419 = vmatpush2.msra.mxu0 0.0
    %420 = vmatprep.subr.mxu0 0.0
    %421 = vmatpush2.msra.mxu0 0.0
    %422 = vmatprep.subr.mxu0 0.0
    %423 = vmatpush2.msra.mxu0 0.0
    %424 = vmatprep.subr.mxu0 0.0
    %425 = vmatpush2.msra.mxu0 0.0
    %426 = vmatprep.subr.mxu0 0.0
    %427 = vmatpush2.msra.mxu0 0.0
    %428 = vmatprep.subr.mxu0 0.0
    %429 = vmatpush2.msra.mxu0 0.0
    %430 = vmatprep.subr.mxu0 0.0
    %431 = vmatpush2.msra.mxu0 0.0
    %432 = vmatprep.subr.mxu0 0.0
    %433 = vmatpush2.msra.mxu0 0.0
    %434 = vmatprep.subr.mxu0 0.0
    %435 = vmatpush2.msra.mxu0 0.0
    %436 = vmatprep.subr.mxu0 0.0
    %437 = vmatpush2.msra.mxu0 0.0
    %438 = vmatprep.subr.mxu0 0.0
    %439 = vmatpush2.msra.mxu0 0.0
    %440 = vmatprep.mubr.f32.mxu0 0.0
    %441 = vmatmul.mubr.f32.gmra.mxu0 %v374
    %v442 = vpop.f32.mrf.mxu0
    %v443 = vadd.f32 0.0, %v442
    %v444 = vpop.f32.mrf.mxu0
    %445 = vdwg.mxu0
    %v446 = vrcp.pop 64.0
    %v447 = vmul.f32 %v368, %v446
    %v448 = vmul.f32 %v443, %v446
    %v449 = vmul.f32 %v447, %v447
    %v450 = vsub.f32 %v448, %v449
    %v451 = vmax.f32 %v450, 0.0
    %v452 = vadd.f32 %v451, 1e-05
    %v453 = vrsqrt.pop %v452
    %v454 = vld [vmem:[%s5] sm:$0xff]
    %v455 = vld [vmem:[%s5 + $0x8] sm:$0xff]
    %v456 = vld [vmem:[%s5 + $0x10] sm:$0xff]
    %v457 = vld [vmem:[%s5 + $0x18] sm:$0xff]
    %v459 = vsel %vm190, %v447, 0
    %461 = vmatprep.subr.mxu0 0.0
    %462 = vmatpush1.msra.mxu0 0.0
    %463 = vmatprep.subr.mxu0 0.0
    %464 = vmatpush1.msra.mxu0 0.0
    %465 = vmatprep.subr.mxu0 0.0
    %466 = vmatpush1.msra.mxu0 0.0
    %467 = vmatprep.subr.mxu0 0.0
    %468 = vmatpush1.msra.mxu0 0.0
    %469 = vmatprep.subr.mxu0 0.0
    %470 = vmatpush1.msra.mxu0 0.0
    %471 = vmatprep.subr.mxu0 0.0
    %472 = vmatpush1.msra.mxu0 0.0
    %473 = vmatprep.subr.mxu0 0.0
    %474 = vmatpush1.msra.mxu0 0.0
    %475 = vmatprep.subr.mxu0 0.0
    %476 = vmatpush1.msra.mxu0 0.0
    %477 = vmatprep.subr.mxu0 0.0
    %478 = vmatpush1.msra.mxu0 0.0
    %479 = vmatprep.subr.mxu0 0.0
    %480 = vmatpush1.msra.mxu0 0.0
    %481 = vmatprep.subr.mxu0 0.0
    %482 = vmatpush1.msra.mxu0 0.0
    %483 = vmatprep.subr.mxu0 0.0
    %484 = vmatpush1.msra.mxu0 0.0
    %485 = vmatprep.subr.mxu0 0.0
    %486 = vmatpush1.msra.mxu0 %v457
    %487 = vmatprep.subr.mxu0 0.0
    %488 = vmatpush1.msra.mxu0 %v456
    %489 = vmatprep.subr.mxu0 0.0
    %490 = vmatpush1.msra.mxu0 %v455
    %491 = vmatprep.subr.mxu0 0.0
    %492 = vmatpush1.msra.mxu0 %v454
    %493 = vmatprep.subr.mxu0 0.0
    %494 = vmatpush2.msra.mxu0 0.0
    %495 = vmatprep.subr.mxu0 0.0
    %496 = vmatpush2.msra.mxu0 0.0
    %497 = vmatprep.subr.mxu0 0.0
    %498 = vmatpush2.msra.mxu0 0.0
    %499 = vmatprep.subr.mxu0 0.0
    %500 = vmatpush2.msra.mxu0 0.0
    %501 = vmatprep.subr.mxu0 0.0
    %502 = vmatpush2.msra.mxu0 0.0
    %503 = vmatprep.subr.mxu0 0.0
    %504 = vmatpush2.msra.mxu0 0.0
    %505 = vmatprep.subr.mxu0 0.0
    %506 = vmatpush2.msra.mxu0 0.0
    %507 = vmatprep.subr.mxu0 0.0
    %508 = vmatpush2.msra.mxu0 0.0
    %509 = vmatprep.subr.mxu0 0.0
    %510 = vmatpush2.msra.mxu0 0.0
    %511 = vmatprep.subr.mxu0 0.0
    %512 = vmatpush2.msra.mxu0 0.0
    %513 = vmatprep.subr.mxu0 0.0
    %514 = vmatpush2.msra.mxu0 0.0
    %515 = vmatprep.subr.mxu0 0.0
    %516 = vmatpush2.msra.mxu0 0.0
    %517 = vmatprep.subr.mxu0 0.0
    %518 = vmatpush2.msra.mxu0 0.0
    %519 = vmatprep.subr.mxu0 0.0
    %520 = vmatpush2.msra.mxu0 0.0
    %521 = vmatprep.subr.mxu0 0.0
    %522 = vmatpush2.msra.mxu0 0.0
    %523 = vmatprep.subr.mxu0 0.0
    %524 = vmatpush2.msra.mxu0 0.0
    %525 = vmatprep.mubr.f32.mxu0 0.0
    %526 = vmatmul.mubr.f32.gmra.mxu0 %v459
    %v527 = vpop.f32.mrf.mxu0
    %v528 = vadd.f32 0.0, %v527
    %v529 = vpop.f32.mrf.mxu0
    %530 = vdwg.mxu0
    %v532 = vsel %vm190, %v453, 0
    %534 = vmatprep.subr.mxu0 0.0
    %535 = vmatpush1.msra.mxu0 0.0
    %536 = vmatprep.subr.mxu0 0.0
    %537 = vmatpush1.msra.mxu0 0.0
    %538 = vmatprep.subr.mxu0 0.0
    %539 = vmatpush1.msra.mxu0 0.0
    %540 = vmatprep.subr.mxu0 0.0
    %541 = vmatpush1.msra.mxu0 0.0
    %542 = vmatprep.subr.mxu0 0.0
    %543 = vmatpush1.msra.mxu0 0.0
    %544 = vmatprep.subr.mxu0 0.0
    %545 = vmatpush1.msra.mxu0 0.0
    %546 = vmatprep.subr.mxu0 0.0
    %547 = vmatpush1.msra.mxu0 0.0
    %548 = vmatprep.subr.mxu0 0.0
    %549 = vmatpush1.msra.mxu0 0.0
    %550 = vmatprep.subr.mxu0 0.0
    %551 = vmatpush1.msra.mxu0 0.0
    %552 = vmatprep.subr.mxu0 0.0
    %553 = vmatpush1.msra.mxu0 0.0
    %554 = vmatprep.subr.mxu0 0.0
    %555 = vmatpush1.msra.mxu0 0.0
    %556 = vmatprep.subr.mxu0 0.0
    %557 = vmatpush1.msra.mxu0 0.0
    %558 = vmatprep.subr.mxu0 0.0
    %559 = vmatpush1.msra.mxu0 %v457
    %560 = vmatprep.subr.mxu0 0.0
    %561 = vmatpush1.msra.mxu0 %v456
    %562 = vmatprep.subr.mxu0 0.0
    %563 = vmatpush1.msra.mxu0 %v455
    %564 = vmatprep.subr.mxu0 0.0
    %565 = vmatpush1.msra.mxu0 %v454
    %566 = vmatprep.subr.mxu0 0.0
    %567 = vmatpush2.msra.mxu0 0.0
    %568 = vmatprep.subr.mxu0 0.0
    %569 = vmatpush2.msra.mxu0 0.0
    %570 = vmatprep.subr.mxu0 0.0
    %571 = vmatpush2.msra.mxu0 0.0
    %572 = vmatprep.subr.mxu0 0.0
    %573 = vmatpush2.msra.mxu0 0.0
    %574 = vmatprep.subr.mxu0 0.0
    %575 = vmatpush2.msra.mxu0 0.0
    %576 = vmatprep.subr.mxu0 0.0
    %577 = vmatpush2.msra.mxu0 0.0
    %578 = vmatprep.subr.mxu0 0.0
    %579 = vmatpush2.msra.mxu0 0.0
    %580 = vmatprep.subr.mxu0 0.0
    %581 = vmatpush2.msra.mxu0 0.0
    %582 = vmatprep.subr.mxu0 0.0
    %583 = vmatpush2.msra.mxu0 0.0
    %584 = vmatprep.subr.mxu0 0.0
    %585 = vmatpush2.msra.mxu0 0.0
    %586 = vmatprep.subr.mxu0 0.0
    %587 = vmatpush2.msra.mxu0 0.0
    %588 = vmatprep.subr.mxu0 0.0
    %589 = vmatpush2.msra.mxu0 0.0
    %590 = vmatprep.subr.mxu0 0.0
    %591 = vmatpush2.msra.mxu0 0.0
    %592 = vmatprep.subr.mxu0 0.0
    %593 = vmatpush2.msra.mxu0 0.0
    %594 = vmatprep.subr.mxu0 0.0
    %595 = vmatpush2.msra.mxu0 0.0
    %596 = vmatprep.subr.mxu0 0.0
    %597 = vmatpush2.msra.mxu0 0.0
    %598 = vmatprep.mubr.f32.mxu0 0.0
    %599 = vmatmul.mubr.f32.gmra.mxu0 %v532
    %v600 = vpop.f32.mrf.mxu0
    %v601 = vadd.f32 0.0, %v600
    %v602 = vpop.f32.mrf.mxu0
    %603 = vdwg.mxu0
    %v606 = vunpack.c.l.s4 1966171168
    %v607 = vunpack.c.0.s8 %v606
    %v608 = vlaneseq
    %v609 = vshrl.u32 %v608, 7
    %v610 = vsub.s32 %v607, %v609
    %v611 = vrot.slane %v528, %v610
    %v612 = vcombine.high %v611, %v611
    %v614 = vunpack.c.l.s4 1966171168
    %v615 = vunpack.c.0.s8 %v614
    %v616 = vlaneseq
    %v617 = vshrl.u32 %v616, 7
    %v618 = vsub.s32 %v615, %v617
    %v619 = vrot.slane %v611, %v618
    %v621 = vunpack.c.l.s4 1966171168
    %v622 = vunpack.c.0.s8 %v621
    %v623 = vlaneseq
    %v624 = vshrl.u32 %v623, 7
    %v625 = vsub.s32 %v622, %v624
    %v626 = vrot.slane %v612, %v625
    %v627 = vlaneseq
    %v628 = vshrl.u32 %v627, 7
    %v629 = vsub.s32 0, %v628
    %v630 = vrot.slane %v619, %v629
    %v631 = vlaneseq
    %v632 = vshrl.u32 %v631, 7
    %v633 = vsub.s32 0, %v632
    %v634 = vrot.slane %v626, %v633
    %v637 = vsub.f32 %v68, %v630
    %v638 = vsub.f32 %v69, %v630
    %v639 = vsub.f32 %v70, %v630
    %v640 = vsub.f32 %v71, %v630
    %v641 = vsub.f32 %v72, %v630
    %v642 = vsub.f32 %v73, %v630
    %v643 = vsub.f32 %v74, %v630
    %v644 = vsub.f32 %v75, %v630
    %v645 = vsub.f32 %v76, %v634
    %v646 = vsub.f32 %v77, %v634
    %v647 = vsub.f32 %v78, %v634
    %v648 = vsub.f32 %v79, %v634
    %v649 = vsub.f32 %v80, %v634
    %v650 = vsub.f32 %v81, %v634
    %v651 = vsub.f32 %v82, %v634
    %v652 = vsub.f32 %v83, %v634
    %v655 = vunpack.c.l.s4 1966171168
    %v656 = vunpack.c.0.s8 %v655
    %v657 = vlaneseq
    %v658 = vshrl.u32 %v657, 7
    %v659 = vsub.s32 %v656, %v658
    %v660 = vrot.slane %v601, %v659
    %v661 = vcombine.high %v660, %v660
    %v663 = vunpack.c.l.s4 1966171168
    %v664 = vunpack.c.0.s8 %v663
    %v665 = vlaneseq
    %v666 = vshrl.u32 %v665, 7
    %v667 = vsub.s32 %v664, %v666
    %v668 = vrot.slane %v660, %v667
    %v670 = vunpack.c.l.s4 1966171168
    %v671 = vunpack.c.0.s8 %v670
    %v672 = vlaneseq
    %v673 = vshrl.u32 %v672, 7
    %v674 = vsub.s32 %v671, %v673
    %v675 = vrot.slane %v661, %v674
    %v676 = vlaneseq
    %v677 = vshrl.u32 %v676, 7
    %v678 = vsub.s32 0, %v677
    %v679 = vrot.slane %v668, %v678
    %v680 = vlaneseq
    %v681 = vshrl.u32 %v680, 7
    %v682 = vsub.s32 0, %v681
    %v683 = vrot.slane %v675, %v682
    %v686 = vmul.f32 %v637, %v679
    %v687 = vmul.f32 %v638, %v679
    %v688 = vmul.f32 %v639, %v679
    %v689 = vmul.f32 %v640, %v679
    %v690 = vmul.f32 %v641, %v679
    %v691 = vmul.f32 %v642, %v679
    %v692 = vmul.f32 %v643, %v679
    %v693 = vmul.f32 %v644, %v679
    %v694 = vmul.f32 %v645, %v683
    %v695 = vmul.f32 %v646, %v683
    %v696 = vmul.f32 %v647, %v683
    %v697 = vmul.f32 %v648, %v683
    %v698 = vmul.f32 %v649, %v683
    %v699 = vmul.f32 %v650, %v683
    %v700 = vmul.f32 %v651, %v683
    %v701 = vmul.f32 %v652, %v683
    %v702 = vld [vmem:[%s2] sm:$0x1]
    %v704 = vlaneseq
    %v705 = vshrl.u32 %v704, 7
    %v706 = vsub.s32 0, %v705
    %v707 = vrot.slane %v702, %v706
    %v709 = vmul.f32 %v686, %v707
    %v710 = vmul.f32 %v687, %v707
    %v711 = vmul.f32 %v688, %v707
    %v712 = vmul.f32 %v689, %v707
    %v713 = vmul.f32 %v690, %v707
    %v714 = vmul.f32 %v691, %v707
    %v715 = vmul.f32 %v692, %v707
    %v716 = vmul.f32 %v693, %v707
    %v717 = vmul.f32 %v694, %v707
    %v718 = vmul.f32 %v695, %v707
    %v719 = vmul.f32 %v696, %v707
    %v720 = vmul.f32 %v697, %v707
    %v721 = vmul.f32 %v698, %v707
    %v722 = vmul.f32 %v699, %v707
    %v723 = vmul.f32 %v700, %v707
    %v724 = vmul.f32 %v701, %v707
    %v725 = vld [vmem:[%s3] sm:$0x1]
    %v727 = vlaneseq
    %v728 = vshrl.u32 %v727, 7
    %v729 = vsub.s32 0, %v728
    %v730 = vrot.slane %v725, %v729
    %v732 = vadd.f32 %v709, %v730
    %v733 = vadd.f32 %v710, %v730
    %v734 = vadd.f32 %v711, %v730
    %v735 = vadd.f32 %v712, %v730
    %v736 = vadd.f32 %v713, %v730
    %v737 = vadd.f32 %v714, %v730
    %v738 = vadd.f32 %v715, %v730
    %v739 = vadd.f32 %v716, %v730
    %v740 = vadd.f32 %v717, %v730
    %v741 = vadd.f32 %v718, %v730
    %v742 = vadd.f32 %v719, %v730
    %v743 = vadd.f32 %v720, %v730
    %v744 = vadd.f32 %v721, %v730
    %v745 = vadd.f32 %v722, %v730
    %v746 = vadd.f32 %v723, %v730
    %v747 = vadd.f32 %v724, %v730
    %v748 = vmul.f32 %v732, 0.5
    %v749 = vmul.f32 %v733, 0.5
    %v750 = vmul.f32 %v734, 0.5
    %v751 = vmul.f32 %v735, 0.5
    %v752 = vmul.f32 %v736, 0.5
    %v753 = vmul.f32 %v737, 0.5
    %v754 = vmul.f32 %v738, 0.5
    %v755 = vmul.f32 %v739, 0.5
    %v756 = vmul.f32 %v740, 0.5
    %v757 = vmul.f32 %v741, 0.5
    %v758 = vmul.f32 %v742, 0.5
    %v759 = vmul.f32 %v743, 0.5
    %v760 = vmul.f32 %v744, 0.5
    %v761 = vmul.f32 %v745, 0.5
    %v762 = vmul.f32 %v746, 0.5
    %v763 = vmul.f32 %v747, 0.5
    %v764 = vtanh.pop %v748
    %v765 = vtanh.pop %v749
    %v766 = vtanh.pop %v750
    %v767 = vtanh.pop %v751
    %v768 = vtanh.pop %v752
    %v769 = vtanh.pop %v753
    %v770 = vtanh.pop %v754
    %v771 = vtanh.pop %v755
    %v772 = vtanh.pop %v756
    %v773 = vtanh.pop %v757
    %v774 = vtanh.pop %v758
    %v775 = vtanh.pop %v759
    %v776 = vtanh.pop %v760
    %v777 = vtanh.pop %v761
    %v778 = vtanh.pop %v762
    %v779 = vtanh.pop %v763
    %v780 = vmul.f32 %v764, 0.5
    %v781 = vmul.f32 %v765, 0.5
    %v782 = vmul.f32 %v766, 0.5
    %v783 = vmul.f32 %v767, 0.5
    %v784 = vmul.f32 %v768, 0.5
    %v785 = vmul.f32 %v769, 0.5
    %v786 = vmul.f32 %v770, 0.5
    %v787 = vmul.f32 %v771, 0.5
    %v788 = vmul.f32 %v772, 0.5
    %v789 = vmul.f32 %v773, 0.5
    %v790 = vmul.f32 %v774, 0.5
    %v791 = vmul.f32 %v775, 0.5
    %v792 = vmul.f32 %v776, 0.5
    %v793 = vmul.f32 %v777, 0.5
    %v794 = vmul.f32 %v778, 0.5
    %v795 = vmul.f32 %v779, 0.5
    %v796 = vadd.f32 %v780, 0.5
    %v797 = vadd.f32 %v781, 0.5
    %v798 = vadd.f32 %v782, 0.5
    %v799 = vadd.f32 %v783, 0.5
    %v800 = vadd.f32 %v784, 0.5
    %v801 = vadd.f32 %v785, 0.5
    %v802 = vadd.f32 %v786, 0.5
    %v803 = vadd.f32 %v787, 0.5
    %v804 = vadd.f32 %v788, 0.5
    %v805 = vadd.f32 %v789, 0.5
    %v806 = vadd.f32 %v790, 0.5
    %v807 = vadd.f32 %v791, 0.5
    %v808 = vadd.f32 %v792, 0.5
    %v809 = vadd.f32 %v793, 0.5
    %v810 = vadd.f32 %v794, 0.5
    %v811 = vadd.f32 %v795, 0.5
    %v812 = vmul.f32 %v732, %v796
    %v813 = vmul.f32 %v733, %v797
    %v814 = vmul.f32 %v734, %v798
    %v815 = vmul.f32 %v735, %v799
    %v816 = vmul.f32 %v736, %v800
    %v817 = vmul.f32 %v737, %v801
    %v818 = vmul.f32 %v738, %v802
    %v819 = vmul.f32 %v739, %v803
    %v820 = vmul.f32 %v740, %v804
    %v821 = vmul.f32 %v741, %v805
    %v822 = vmul.f32 %v742, %v806
    %v823 = vmul.f32 %v743, %v807
    %v824 = vmul.f32 %v744, %v808
    %v825 = vmul.f32 %v745, %v809
    %v826 = vmul.f32 %v746, %v810
    %v827 = vmul.f32 %v747, %v811
    %v828 = vpack.c.bf16 %v812, %v812
    %v829 = vpack.c.bf16 %v813, %v813
    %v830 = vpack.c.bf16 %v814, %v814
    %v831 = vpack.c.bf16 %v815, %v815
    %v832 = vpack.c.bf16 %v816, %v816
    %v833 = vpack.c.bf16 %v817, %v817
    %v834 = vpack.c.bf16 %v818, %v818
    %v835 = vpack.c.bf16 %v819, %v819
    %v836 = vpack.c.bf16 %v820, %v820
    %v837 = vpack.c.bf16 %v821, %v821
    %v838 = vpack.c.bf16 %v822, %v822
    %v839 = vpack.c.bf16 %v823, %v823
    %v840 = vpack.c.bf16 %v824, %v824
    %v841 = vpack.c.bf16 %v825, %v825
    %v842 = vpack.c.bf16 %v826, %v826
    %v843 = vpack.c.bf16 %v827, %v827
    %v860 = vunpack.c.l.b16 %v828
    %v861 = vunpack.c.l.b16 %v829
    %v862 = vunpack.c.l.b16 %v830
    %v863 = vunpack.c.l.b16 %v831
    %v864 = vunpack.c.l.b16 %v832
    %v865 = vunpack.c.l.b16 %v833
    %v866 = vunpack.c.l.b16 %v834
    %v867 = vunpack.c.l.b16 %v835
    %v868 = vunpack.c.l.b16 %v836
    %v869 = vunpack.c.l.b16 %v837
    %v870 = vunpack.c.l.b16 %v838
    %v871 = vunpack.c.l.b16 %v839
    %v872 = vunpack.c.l.b16 %v840
    %v873 = vunpack.c.l.b16 %v841
    %v874 = vunpack.c.l.b16 %v842
    %v875 = vunpack.c.l.b16 %v843
    %v876 = vpack.c.b16 %v860, %v860
    %v877 = vpack.c.b16 %v861, %v861
    %v878 = vpack.c.b16 %v862, %v862
    %v879 = vpack.c.b16 %v863, %v863
    %v880 = vpack.c.b16 %v864, %v864
    %v881 = vpack.c.b16 %v865, %v865
    %v882 = vpack.c.b16 %v866, %v866
    %v883 = vpack.c.b16 %v867, %v867
    %v884 = vpack.c.b16 %v868, %v868
    %v885 = vpack.c.b16 %v869, %v869
    %v886 = vpack.c.b16 %v870, %v870
    %v887 = vpack.c.b16 %v871, %v871
    %v888 = vpack.c.b16 %v872, %v872
    %v889 = vpack.c.b16 %v873, %v873
    %v890 = vpack.c.b16 %v874, %v874
    %v891 = vpack.c.b16 %v875, %v875
    %v892 = vrot.slane %v876, 7
    %v893 = vrot.slane %v892, 4
    %v894 = vrot.slane %v877, 7
    %v895 = vrot.slane %v894, 4
    %v896 = vrot.slane %v878, 7
    %v897 = vrot.slane %v896, 4
    %v898 = vrot.slane %v879, 7
    %v899 = vrot.slane %v898, 4
    %v900 = vrot.slane %v880, 7
    %v901 = vrot.slane %v900, 4
    %v902 = vrot.slane %v881, 7
    %v903 = vrot.slane %v902, 4
    %v904 = vrot.slane %v882, 7
    %v905 = vrot.slane %v904, 4
    %v906 = vrot.slane %v883, 7
    %v907 = vrot.slane %v906, 4
    %v908 = vrot.slane %v884, 7
    %v909 = vrot.slane %v908, 4
    %v910 = vrot.slane %v885, 7
    %v911 = vrot.slane %v910, 4
    %v912 = vrot.slane %v886, 7
    %v913 = vrot.slane %v912, 4
    %v914 = vrot.slane %v887, 7
    %v915 = vrot.slane %v914, 4
    %v916 = vrot.slane %v888, 7
    %v917 = vrot.slane %v916, 4
    %v918 = vrot.slane %v889, 7
    %v919 = vrot.slane %v918, 4
    %v920 = vrot.slane %v890, 7
    %v921 = vrot.slane %v920, 4
    %v922 = vrot.slane %v891, 7
    %v923 = vrot.slane %v922, 4
    %s956 = scalar_lea.vmem [#allocation2], 8
    %vm957 = vcmask 257025
    %958 = vst.msk [vmem:[%s956] sm:$0xe] %vm957, %v892
    %959 = vst.msk [vmem:[%s956 + $0x4] sm:$0x1] %vm95, %v893
    %960 = vst.msk [vmem:[%s956 + $0x8] sm:$0xe] %vm957, %v894
    %961 = vst.msk [vmem:[%s956 + $0xc] sm:$0x1] %vm95, %v895
    %962 = vst.msk [vmem:[%s956 + $0x10] sm:$0xe] %vm957, %v896
    %963 = vst.msk [vmem:[%s956 + $0x14] sm:$0x1] %vm95, %v897
    %964 = vst.msk [vmem:[%s956 + $0x18] sm:$0xe] %vm957, %v898
    %965 = vst.msk [vmem:[%s956 + $0x1c] sm:$0x1] %vm95, %v899
    %966 = vst.msk [vmem:[%s956 + $0x20] sm:$0xe] %vm957, %v900
    %967 = vst.msk [vmem:[%s956 + $0x24] sm:$0x1] %vm95, %v901
    %968 = vst.msk [vmem:[%s956 + $0x28] sm:$0xe] %vm957, %v902
    %969 = vst.msk [vmem:[%s956 + $0x2c] sm:$0x1] %vm95, %v903
    %970 = vst.msk [vmem:[%s956 + $0x30] sm:$0xe] %vm957, %v904
    %971 = vst.msk [vmem:[%s956 + $0x34] sm:$0x1] %vm95, %v905
    %972 = vst.msk [vmem:[%s956 + $0x38] sm:$0xe] %vm957, %v906
    %973 = vst.msk [vmem:[%s956 + $0x3c] sm:$0x1] %vm95, %v907
    %974 = vst.msk [vmem:[%s956 + $0x50] sm:$0xe] %vm957, %v908
    %975 = vst.msk [vmem:[%s956 + $0x54] sm:$0x1] %vm95, %v909
    %976 = vst.msk [vmem:[%s956 + $0x58] sm:$0xe] %vm957, %v910
    %977 = vst.msk [vmem:[%s956 + $0x5c] sm:$0x1] %vm95, %v911
    %978 = vst.msk [vmem:[%s956 + $0x60] sm:$0xe] %vm957, %v912
    %979 = vst.msk [vmem:[%s956 + $0x64] sm:$0x1] %vm95, %v913
    %980 = vst.msk [vmem:[%s956 + $0x68] sm:$0xe] %vm957, %v914
    %981 = vst.msk [vmem:[%s956 + $0x6c] sm:$0x1] %vm95, %v915
    %982 = vst.msk [vmem:[%s956 + $0x70] sm:$0xe] %vm957, %v916
    %983 = vst.msk [vmem:[%s956 + $0x74] sm:$0x1] %vm95, %v917
    %984 = vst.msk [vmem:[%s956 + $0x78] sm:$0xe] %vm957, %v918
    %985 = vst.msk [vmem:[%s956 + $0x7c] sm:$0x1] %vm95, %v919
    %986 = vst.msk [vmem:[%s956 + $0x80] sm:$0xe] %vm957, %v920
    %987 = vst.msk [vmem:[%s956 + $0x84] sm:$0x1] %vm95, %v921
    %988 = vst.msk [vmem:[%s956 + $0x88] sm:$0xe] %vm957, %v922
    %989 = vst.msk [vmem:[%s956 + $0x8c] sm:$0x1] %vm95, %v923
    %v990 = vld [vmem:[#allocation2] sm:$0xf]
    %v991 = vld [vmem:[#allocation2 + $0x4] sm:$0x1]
    %v992 = vld [vmem:[#allocation2 + $0x8] sm:$0xf]
    %v993 = vld [vmem:[#allocation2 + $0xc] sm:$0x1]
    %v994 = vld [vmem:[#allocation2 + $0x10] sm:$0xf]
    %v995 = vld [vmem:[#allocation2 + $0x14] sm:$0x1]
    %v996 = vld [vmem:[#allocation2 + $0x18] sm:$0xf]
    %v997 = vld [vmem:[#allocation2 + $0x1c] sm:$0x1]
    %v998 = vld [vmem:[#allocation2 + $0x20] sm:$0xf]
    %v999 = vld [vmem:[#allocation2 + $0x24] sm:$0x1]
    %v1000 = vld [vmem:[#allocation2 + $0x28] sm:$0xf]
    %v1001 = vld [vmem:[#allocation2 + $0x2c] sm:$0x1]
    %v1002 = vld [vmem:[#allocation2 + $0x30] sm:$0xf]
    %v1003 = vld [vmem:[#allocation2 + $0x34] sm:$0x1]
    %v1004 = vld [vmem:[#allocation2 + $0x38] sm:$0xf]
    %v1005 = vld [vmem:[#allocation2 + $0x3c] sm:$0x1]
    %v1006 = vld [vmem:[#allocation2 + $0x50] sm:$0xf]
    %v1007 = vld [vmem:[#allocation2 + $0x54] sm:$0x1]
    %v1008 = vld [vmem:[#allocation2 + $0x58] sm:$0xf]
    %v1009 = vld [vmem:[#allocation2 + $0x5c] sm:$0x1]
    %v1010 = vld [vmem:[#allocation2 + $0x60] sm:$0xf]
    %v1011 = vld [vmem:[#allocation2 + $0x64] sm:$0x1]
    %v1012 = vld [vmem:[#allocation2 + $0x68] sm:$0xf]
    %v1013 = vld [vmem:[#allocation2 + $0x6c] sm:$0x1]
    %v1014 = vld [vmem:[#allocation2 + $0x70] sm:$0xf]
    %v1015 = vld [vmem:[#allocation2 + $0x74] sm:$0x1]
    %v1016 = vld [vmem:[#allocation2 + $0x78] sm:$0xf]
    %v1017 = vld [vmem:[#allocation2 + $0x7c] sm:$0x1]
    %v1018 = vld [vmem:[#allocation2 + $0x80] sm:$0xf]
    %v1019 = vld [vmem:[#allocation2 + $0x84] sm:$0x1]
    %v1020 = vld [vmem:[#allocation2 + $0x88] sm:$0xf]
    %v1021 = vld [vmem:[#allocation2 + $0x8c] sm:$0x1]
    %vm1022 = vsmask.f32 3328
    %vm1023 = vsmask.f32 7440
    %vm1024 = vmor %vm1022, %vm1023
    %v1026 = vshrl.u32 %v990, 16
    %v1028 = vrot.slane %v1026, 4
    %v1029 = vshll.u32 %v990, 16
    %v1031 = vrot.slane %v1029, 5
    %v1032 = vor.u32 %v1028, %v1031
    %v1033 = vrot.slane %v1032, 4
    %v1035 = vshll.u32 %v991, 16
    %v1037 = vrot.slane %v1035, 5
    %v1038 = vsel %vm1024, %v1033, %v1037
    %v1040 = vshrl.u32 %v992, 16
    %v1042 = vrot.slane %v1040, 4
    %v1043 = vshll.u32 %v992, 16
    %v1045 = vrot.slane %v1043, 5
    %v1046 = vor.u32 %v1042, %v1045
    %v1047 = vrot.slane %v1046, 4
    %v1049 = vshll.u32 %v993, 16
    %v1051 = vrot.slane %v1049, 5
    %v1052 = vsel %vm1024, %v1047, %v1051
    %v1054 = vshrl.u32 %v994, 16
    %v1056 = vrot.slane %v1054, 4
    %v1057 = vshll.u32 %v994, 16
    %v1059 = vrot.slane %v1057, 5
    %v1060 = vor.u32 %v1056, %v1059
    %v1061 = vrot.slane %v1060, 4
    %v1063 = vshll.u32 %v995, 16
    %v1065 = vrot.slane %v1063, 5
    %v1066 = vsel %vm1024, %v1061, %v1065
    %v1068 = vshrl.u32 %v996, 16
    %v1070 = vrot.slane %v1068, 4
    %v1071 = vshll.u32 %v996, 16
    %v1073 = vrot.slane %v1071, 5
    %v1074 = vor.u32 %v1070, %v1073
    %v1075 = vrot.slane %v1074, 4
    %v1077 = vshll.u32 %v997, 16
    %v1079 = vrot.slane %v1077, 5
    %v1080 = vsel %vm1024, %v1075, %v1079
    %v1082 = vshrl.u32 %v998, 16
    %v1084 = vrot.slane %v1082, 4
    %v1085 = vshll.u32 %v998, 16
    %v1087 = vrot.slane %v1085, 5
    %v1088 = vor.u32 %v1084, %v1087
    %v1089 = vrot.slane %v1088, 4
    %v1091 = vshll.u32 %v999, 16
    %v1093 = vrot.slane %v1091, 5
    %v1094 = vsel %vm1024, %v1089, %v1093
    %v1096 = vshrl.u32 %v1000, 16
    %v1098 = vrot.slane %v1096, 4
    %v1099 = vshll.u32 %v1000, 16
    %v1101 = vrot.slane %v1099, 5
    %v1102 = vor.u32 %v1098, %v1101
    %v1103 = vrot.slane %v1102, 4
    %v1105 = vshll.u32 %v1001, 16
    %v1107 = vrot.slane %v1105, 5
    %v1108 = vsel %vm1024, %v1103, %v1107
    %v1110 = vshrl.u32 %v1002, 16
    %v1112 = vrot.slane %v1110, 4
    %v1113 = vshll.u32 %v1002, 16
    %v1115 = vrot.slane %v1113, 5
    %v1116 = vor.u32 %v1112, %v1115
    %v1117 = vrot.slane %v1116, 4
    %v1119 = vshll.u32 %v1003, 16
    %v1121 = vrot.slane %v1119, 5
    %v1122 = vsel %vm1024, %v1117, %v1121
    %v1124 = vshrl.u32 %v1004, 16
    %v1126 = vrot.slane %v1124, 4
    %v1127 = vshll.u32 %v1004, 16
    %v1129 = vrot.slane %v1127, 5
    %v1130 = vor.u32 %v1126, %v1129
    %v1131 = vrot.slane %v1130, 4
    %v1133 = vshll.u32 %v1005, 16
    %v1135 = vrot.slane %v1133, 5
    %v1136 = vsel %vm1024, %v1131, %v1135
    %v1138 = vshrl.u32 %v1006, 16
    %v1140 = vrot.slane %v1138, 4
    %v1141 = vshll.u32 %v1006, 16
    %v1143 = vrot.slane %v1141, 5
    %v1144 = vor.u32 %v1140, %v1143
    %v1145 = vrot.slane %v1144, 4
    %v1147 = vshll.u32 %v1007, 16
    %v1149 = vrot.slane %v1147, 5
    %v1150 = vsel %vm1024, %v1145, %v1149
    %v1152 = vshrl.u32 %v1008, 16
    %v1154 = vrot.slane %v1152, 4
    %v1155 = vshll.u32 %v1008, 16
    %v1157 = vrot.slane %v1155, 5
    %v1158 = vor.u32 %v1154, %v1157
    %v1159 = vrot.slane %v1158, 4
    %v1161 = vshll.u32 %v1009, 16
    %v1163 = vrot.slane %v1161, 5
    %v1164 = vsel %vm1024, %v1159, %v1163
    %v1166 = vshrl.u32 %v1010, 16
    %v1168 = vrot.slane %v1166, 4
    %v1169 = vshll.u32 %v1010, 16
    %v1171 = vrot.slane %v1169, 5
    %v1172 = vor.u32 %v1168, %v1171
    %v1173 = vrot.slane %v1172, 4
    %v1175 = vshll.u32 %v1011, 16
    %v1177 = vrot.slane %v1175, 5
    %v1178 = vsel %vm1024, %v1173, %v1177
    %v1180 = vshrl.u32 %v1012, 16
    %v1182 = vrot.slane %v1180, 4
    %v1183 = vshll.u32 %v1012, 16
    %v1185 = vrot.slane %v1183, 5
    %v1186 = vor.u32 %v1182, %v1185
    %v1187 = vrot.slane %v1186, 4
    %v1189 = vshll.u32 %v1013, 16
    %v1191 = vrot.slane %v1189, 5
    %v1192 = vsel %vm1024, %v1187, %v1191
    %v1194 = vshrl.u32 %v1014, 16
    %v1196 = vrot.slane %v1194, 4
    %v1197 = vshll.u32 %v1014, 16
    %v1199 = vrot.slane %v1197, 5
    %v1200 = vor.u32 %v1196, %v1199
    %v1201 = vrot.slane %v1200, 4
    %v1203 = vshll.u32 %v1015, 16
    %v1205 = vrot.slane %v1203, 5
    %v1206 = vsel %vm1024, %v1201, %v1205
    %v1208 = vshrl.u32 %v1016, 16
    %v1210 = vrot.slane %v1208, 4
    %v1211 = vshll.u32 %v1016, 16
    %v1213 = vrot.slane %v1211, 5
    %v1214 = vor.u32 %v1210, %v1213
    %v1215 = vrot.slane %v1214, 4
    %v1217 = vshll.u32 %v1017, 16
    %v1219 = vrot.slane %v1217, 5
    %v1220 = vsel %vm1024, %v1215, %v1219
    %v1222 = vshrl.u32 %v1018, 16
    %v1224 = vrot.slane %v1222, 4
    %v1225 = vshll.u32 %v1018, 16
    %v1227 = vrot.slane %v1225, 5
    %v1228 = vor.u32 %v1224, %v1227
    %v1229 = vrot.slane %v1228, 4
    %v1231 = vshll.u32 %v1019, 16
    %v1233 = vrot.slane %v1231, 5
    %v1234 = vsel %vm1024, %v1229, %v1233
    %v1236 = vshrl.u32 %v1020, 16
    %v1238 = vrot.slane %v1236, 4
    %v1239 = vshll.u32 %v1020, 16
    %v1241 = vrot.slane %v1239, 5
    %v1242 = vor.u32 %v1238, %v1241
    %v1243 = vrot.slane %v1242, 4
    %v1245 = vshll.u32 %v1021, 16
    %v1247 = vrot.slane %v1245, 5
    %v1248 = vsel %vm1024, %v1243, %v1247
    %v1249 = vld [vmem:[%s6] sm:$0xf]
    %v1250 = vld [vmem:[%s6 + $0x4] sm:$0xf]
    %v1251 = vld [vmem:[%s6 + $0x8] sm:$0xf]
    %v1252 = vld [vmem:[%s6 + $0xc] sm:$0xf]
    %v1253 = vld [vmem:[#allocation2] sm:$0xe]
    %v1254 = vld [vmem:[#allocation2 + $0x8] sm:$0xe]
    %v1255 = vld [vmem:[#allocation2 + $0x10] sm:$0xe]
    %v1256 = vld [vmem:[#allocation2 + $0x18] sm:$0xe]
    %v1257 = vld [vmem:[#allocation2 + $0x20] sm:$0xe]
    %v1258 = vld [vmem:[#allocation2 + $0x28] sm:$0xe]
    %v1259 = vld [vmem:[#allocation2 + $0x30] sm:$0xe]
    %v1260 = vld [vmem:[#allocation2 + $0x38] sm:$0xe]
    %v1261 = vld [vmem:[#allocation2 + $0x50] sm:$0xe]
    %v1262 = vld [vmem:[#allocation2 + $0x58] sm:$0xe]
    %v1263 = vld [vmem:[#allocation2 + $0x60] sm:$0xe]
    %v1264 = vld [vmem:[#allocation2 + $0x68] sm:$0xe]
    %v1265 = vld [vmem:[#allocation2 + $0x70] sm:$0xe]
    %v1266 = vld [vmem:[#allocation2 + $0x78] sm:$0xe]
    %v1267 = vld [vmem:[#allocation2 + $0x80] sm:$0xe]
    %v1268 = vld [vmem:[#allocation2 + $0x88] sm:$0xe]
    %vm1301 = vcmask 1042432
    %vm1302 = vcmask 1046532
    %vm1303 = vmor %vm1301, %vm1302
    %v1304 = vrot.slane %v1253, 5
    %v1305 = vrot.slane %v1304, 4
    %v1306 = vrot.slane %v991, 5
    %v1307 = vsel %vm1303, %v1305, %v1306
    %v1308 = vrot.slane %v1254, 5
    %v1309 = vrot.slane %v1308, 4
    %v1310 = vrot.slane %v993, 5
    %v1311 = vsel %vm1303, %v1309, %v1310
    %v1312 = vrot.slane %v1255, 5
    %v1313 = vrot.slane %v1312, 4
    %v1314 = vrot.slane %v995, 5
    %v1315 = vsel %vm1303, %v1313, %v1314
    %v1316 = vrot.slane %v1256, 5
    %v1317 = vrot.slane %v1316, 4
    %v1318 = vrot.slane %v997, 5
    %v1319 = vsel %vm1303, %v1317, %v1318
    %v1320 = vrot.slane %v1257, 5
    %v1321 = vrot.slane %v1320, 4
    %v1322 = vrot.slane %v999, 5
    %v1323 = vsel %vm1303, %v1321, %v1322
    %v1324 = vrot.slane %v1258, 5
    %v1325 = vrot.slane %v1324, 4
    %v1326 = vrot.slane %v1001, 5
    %v1327 = vsel %vm1303, %v1325, %v1326
    %v1328 = vrot.slane %v1259, 5
    %v1329 = vrot.slane %v1328, 4
    %v1330 = vrot.slane %v1003, 5
    %v1331 = vsel %vm1303, %v1329, %v1330
    %v1332 = vrot.slane %v1260, 5
    %v1333 = vrot.slane %v1332, 4
    %v1334 = vrot.slane %v1005, 5
    %v1335 = vsel %vm1303, %v1333, %v1334
    %v1336 = vrot.slane %v1261, 5
    %v1337 = vrot.slane %v1336, 4
    %v1338 = vrot.slane %v1007, 5
    %v1339 = vsel %vm1303, %v1337, %v1338
    %v1340 = vrot.slane %v1262, 5
    %v1341 = vrot.slane %v1340, 4
    %v1342 = vrot.slane %v1009, 5
    %v1343 = vsel %vm1303, %v1341, %v1342
    %v1344 = vrot.slane %v1263, 5
    %v1345 = vrot.slane %v1344, 4
    %v1346 = vrot.slane %v1011, 5
    %v1347 = vsel %vm1303, %v1345, %v1346
    %v1348 = vrot.slane %v1264, 5
    %v1349 = vrot.slane %v1348, 4
    %v1350 = vrot.slane %v1013, 5
    %v1351 = vsel %vm1303, %v1349, %v1350
    %v1352 = vrot.slane %v1265, 5
    %v1353 = vrot.slane %v1352, 4
    %v1354 = vrot.slane %v1015, 5
    %v1355 = vsel %vm1303, %v1353, %v1354
    %v1356 = vrot.slane %v1266, 5
    %v1357 = vrot.slane %v1356, 4
    %v1358 = vrot.slane %v1017, 5
    %v1359 = vsel %vm1303, %v1357, %v1358
    %v1360 = vrot.slane %v1267, 5
    %v1361 = vrot.slane %v1360, 4
    %v1362 = vrot.slane %v1019, 5
    %v1363 = vsel %vm1303, %v1361, %v1362
    %v1364 = vrot.slane %v1268, 5
    %v1365 = vrot.slane %v1364, 4
    %v1366 = vrot.slane %v1021, 5
    %v1367 = vsel %vm1303, %v1365, %v1366
    %v1368 = vld [vmem:[%s6 + $0x10] sm:$0xf]
    %v1369 = vld [vmem:[%s6 + $0x14] sm:$0xf]
    %v1370 = vld [vmem:[%s6 + $0x18] sm:$0xf]
    %v1371 = vld [vmem:[%s6 + $0x1c] sm:$0xf]
    %v1372 = vunpack.c.l.b16 %v1307
    %v1373 = vunpack.c.l.b16 %v1311
    %v1374 = vunpack.c.l.b16 %v1315
    %v1375 = vunpack.c.l.b16 %v1319
    %v1376 = vunpack.c.l.b16 %v1323
    %v1377 = vunpack.c.l.b16 %v1327
    %v1378 = vunpack.c.l.b16 %v1331
    %v1379 = vunpack.c.l.b16 %v1335
    %v1380 = vunpack.c.l.b16 %v1339
    %v1381 = vunpack.c.l.b16 %v1343
    %v1382 = vunpack.c.l.b16 %v1347
    %v1383 = vunpack.c.l.b16 %v1351
    %v1384 = vunpack.c.l.b16 %v1355
    %v1385 = vunpack.c.l.b16 %v1359
    %v1386 = vunpack.c.l.b16 %v1363
    %v1387 = vunpack.c.l.b16 %v1367
    %v1388 = vpack.c.b16 %v1373, %v1372
    %v1389 = vpack.c.b16 %v1375, %v1374
    %v1390 = vpack.c.b16 %v1377, %v1376
    %v1391 = vpack.c.b16 %v1379, %v1378
    %v1392 = vpack.c.b16 %v1381, %v1380
    %v1393 = vpack.c.b16 %v1383, %v1382
    %v1394 = vpack.c.b16 %v1385, %v1384
    %v1395 = vpack.c.b16 %v1387, %v1386
    %v1400 = vunpack.c.l.b16 %v1368
    %v1401 = vunpack.c.l.b16 %v1369
    %v1402 = vunpack.c.l.b16 %v1370
    %v1403 = vunpack.c.l.b16 %v1371
    %v1404 = vpack.c.b16 %v1401, %v1400
    %v1405 = vpack.c.b16 %v1403, %v1402
    %v1409 = vsel %vm190, %v1388, 0
    %v1412 = vsel %vm190, %v1389, 0
    %v1415 = vsel %vm190, %v1390, 0
    %v1418 = vsel %vm190, %v1391, 0
    %v1421 = vsel %vm190, %v1392, 0
    %v1424 = vsel %vm190, %v1393, 0
    %v1427 = vsel %vm190, %v1394, 0
    %v1430 = vsel %vm190, %v1395, 0
    %1432 = vmatprep.subr.bf16.mxu0 0
    %1433 = vmatpush1.bf16.msra.mxu0 0
    %1434 = vmatprep.subr.bf16.mxu0 0
    %1435 = vmatpush1.bf16.msra.mxu0 0
    %1436 = vmatprep.subr.bf16.mxu0 0
    %1437 = vmatpush1.bf16.msra.mxu0 0
    %1438 = vmatprep.subr.bf16.mxu0 0
    %1439 = vmatpush1.bf16.msra.mxu0 0
    %1440 = vmatprep.subr.bf16.mxu0 0
    %1441 = vmatpush1.bf16.msra.mxu0 0
    %1442 = vmatprep.subr.bf16.mxu0 0
    %1443 = vmatpush1.bf16.msra.mxu0 0
    %1444 = vmatprep.subr.bf16.mxu0 0
    %1445 = vmatpush1.bf16.msra.mxu0 %v1405
    %1446 = vmatprep.subr.bf16.mxu0 0
    %1447 = vmatpush1.bf16.msra.mxu0 %v1404
    %1448 = vmatprep.subr.bf16.mxu0 0
    %1449 = vmatpush2.bf16.msra.mxu0 0
    %1450 = vmatprep.subr.bf16.mxu0 0
    %1451 = vmatpush2.bf16.msra.mxu0 0
    %1452 = vmatprep.subr.bf16.mxu0 0
    %1453 = vmatpush2.bf16.msra.mxu0 0
    %1454 = vmatprep.subr.bf16.mxu0 0
    %1455 = vmatpush2.bf16.msra.mxu0 0
    %1456 = vmatprep.subr.bf16.mxu0 0
    %1457 = vmatpush2.bf16.msra.mxu0 0
    %1458 = vmatprep.subr.bf16.mxu0 0
    %1459 = vmatpush2.bf16.msra.mxu0 0
    %1460 = vmatprep.subr.bf16.mxu0 0
    %1461 = vmatpush2.bf16.msra.mxu0 0
    %1462 = vmatprep.subr.bf16.mxu0 0
    %1463 = vmatpush2.bf16.msra.mxu0 0
    %1464 = vmatprep.mubr.bf16.mxu0 0
    %1465 = vmatmul.mubr.bf16.gmra.mxu0 %v1409
    %v1466 = vpop.f32.mrf.mxu0
    %v1467 = vadd.f32 0.0, %v1466
    %v1468 = vpop.f32.mrf.mxu0
    %v1469 = vpop.f32.mrf.mxu0
    %v1470 = vadd.f32 0.0, %v1469
    %v1471 = vpop.f32.mrf.mxu0
    %1472 = vmatprep.mubr.bf16.mxu0 0
    %1473 = vmatmul.mubr.bf16.gmra.mxu0 %v1412
    %v1474 = vpop.f32.mrf.mxu0
    %v1475 = vadd.f32 0.0, %v1474
    %v1476 = vpop.f32.mrf.mxu0
    %v1477 = vpop.f32.mrf.mxu0
    %v1478 = vadd.f32 0.0, %v1477
    %v1479 = vpop.f32.mrf.mxu0
    %1480 = vmatprep.mubr.bf16.mxu0 0
    %1481 = vmatmul.mubr.bf16.gmra.mxu0 %v1415
    %v1482 = vpop.f32.mrf.mxu0
    %v1483 = vadd.f32 0.0, %v1482
    %v1484 = vpop.f32.mrf.mxu0
    %v1485 = vpop.f32.mrf.mxu0
    %v1486 = vadd.f32 0.0, %v1485
    %v1487 = vpop.f32.mrf.mxu0
    %1488 = vmatprep.mubr.bf16.mxu0 0
    %1489 = vmatmul.mubr.bf16.gmra.mxu0 %v1418
    %v1490 = vpop.f32.mrf.mxu0
    %v1491 = vadd.f32 0.0, %v1490
    %v1492 = vpop.f32.mrf.mxu0
    %v1493 = vpop.f32.mrf.mxu0
    %v1494 = vadd.f32 0.0, %v1493
    %v1495 = vpop.f32.mrf.mxu0
    %1496 = vmatprep.mubr.bf16.mxu0 0
    %1497 = vmatmul.mubr.bf16.gmra.mxu0 %v1421
    %v1498 = vpop.f32.mrf.mxu0
    %v1499 = vadd.f32 0.0, %v1498
    %v1500 = vpop.f32.mrf.mxu0
    %v1501 = vpop.f32.mrf.mxu0
    %v1502 = vadd.f32 0.0, %v1501
    %v1503 = vpop.f32.mrf.mxu0
    %1504 = vmatprep.mubr.bf16.mxu0 0
    %1505 = vmatmul.mubr.bf16.gmra.mxu0 %v1424
    %v1506 = vpop.f32.mrf.mxu0
    %v1507 = vadd.f32 0.0, %v1506
    %v1508 = vpop.f32.mrf.mxu0
    %v1509 = vpop.f32.mrf.mxu0
    %v1510 = vadd.f32 0.0, %v1509
    %v1511 = vpop.f32.mrf.mxu0
    %1512 = vmatprep.mubr.bf16.mxu0 0
    %1513 = vmatmul.mubr.bf16.gmra.mxu0 %v1427
    %v1514 = vpop.f32.mrf.mxu0
    %v1515 = vadd.f32 0.0, %v1514
    %v1516 = vpop.f32.mrf.mxu0
    %v1517 = vpop.f32.mrf.mxu0
    %v1518 = vadd.f32 0.0, %v1517
    %v1519 = vpop.f32.mrf.mxu0
    %1520 = vmatprep.mubr.bf16.mxu0 0
    %1521 = vmatmul.mubr.bf16.gmra.mxu0 %v1430
    %v1522 = vpop.f32.mrf.mxu0
    %v1523 = vadd.f32 0.0, %v1522
    %v1524 = vpop.f32.mrf.mxu0
    %v1525 = vpop.f32.mrf.mxu0
    %v1526 = vadd.f32 0.0, %v1525
    %v1527 = vpop.f32.mrf.mxu0
    %1528 = vdwg.mxu0
    %v1529 = vunpack.c.l.b16 %v1038
    %v1530 = vunpack.c.l.b16 %v1052
    %v1531 = vunpack.c.l.b16 %v1066
    %v1532 = vunpack.c.l.b16 %v1080
    %v1533 = vunpack.c.l.b16 %v1094
    %v1534 = vunpack.c.l.b16 %v1108
    %v1535 = vunpack.c.l.b16 %v1122
    %v1536 = vunpack.c.l.b16 %v1136
    %v1537 = vunpack.c.l.b16 %v1150
    %v1538 = vunpack.c.l.b16 %v1164
    %v1539 = vunpack.c.l.b16 %v1178
    %v1540 = vunpack.c.l.b16 %v1192
    %v1541 = vunpack.c.l.b16 %v1206
    %v1542 = vunpack.c.l.b16 %v1220
    %v1543 = vunpack.c.l.b16 %v1234
    %v1544 = vunpack.c.l.b16 %v1248
    %v1545 = vpack.c.b16 %v1530, %v1529
    %v1546 = vpack.c.b16 %v1532, %v1531
    %v1547 = vpack.c.b16 %v1534, %v1533
    %v1548 = vpack.c.b16 %v1536, %v1535
    %v1549 = vpack.c.b16 %v1538, %v1537
    %v1550 = vpack.c.b16 %v1540, %v1539
    %v1551 = vpack.c.b16 %v1542, %v1541
    %v1552 = vpack.c.b16 %v1544, %v1543
    %v1557 = vunpack.c.l.b16 %v1249
    %v1558 = vunpack.c.l.b16 %v1250
    %v1559 = vunpack.c.l.b16 %v1251
    %v1560 = vunpack.c.l.b16 %v1252
    %v1561 = vpack.c.b16 %v1558, %v1557
    %v1562 = vpack.c.b16 %v1560, %v1559
    %v1566 = vsel %vm190, %v1545, 0
    %v1569 = vsel %vm190, %v1546, 0
    %v1572 = vsel %vm190, %v1547, 0
    %v1575 = vsel %vm190, %v1548, 0
    %v1578 = vsel %vm190, %v1549, 0
    %v1581 = vsel %vm190, %v1550, 0
    %v1584 = vsel %vm190, %v1551, 0
    %v1587 = vsel %vm190, %v1552, 0
    %1589 = vmatprep.subr.bf16.mxu0 0
    %1590 = vmatpush1.bf16.msra.mxu0 0
    %1591 = vmatprep.subr.bf16.mxu0 0
    %1592 = vmatpush1.bf16.msra.mxu0 0
    %1593 = vmatprep.subr.bf16.mxu0 0
    %1594 = vmatpush1.bf16.msra.mxu0 0
    %1595 = vmatprep.subr.bf16.mxu0 0
    %1596 = vmatpush1.bf16.msra.mxu0 0
    %1597 = vmatprep.subr.bf16.mxu0 0
    %1598 = vmatpush1.bf16.msra.mxu0 0
    %1599 = vmatprep.subr.bf16.mxu0 0
    %1600 = vmatpush1.bf16.msra.mxu0 0
    %1601 = vmatprep.subr.bf16.mxu0 0
    %1602 = vmatpush1.bf16.msra.mxu0 %v1562
    %1603 = vmatprep.subr.bf16.mxu0 0
    %1604 = vmatpush1.bf16.msra.mxu0 %v1561
    %1605 = vmatprep.subr.bf16.mxu0 0
    %1606 = vmatpush2.bf16.msra.mxu0 0
    %1607 = vmatprep.subr.bf16.mxu0 0
    %1608 = vmatpush2.bf16.msra.mxu0 0
    %1609 = vmatprep.subr.bf16.mxu0 0
    %1610 = vmatpush2.bf16.msra.mxu0 0
    %1611 = vmatprep.subr.bf16.mxu0 0
    %1612 = vmatpush2.bf16.msra.mxu0 0
    %1613 = vmatprep.subr.bf16.mxu0 0
    %1614 = vmatpush2.bf16.msra.mxu0 0
    %1615 = vmatprep.subr.bf16.mxu0 0
    %1616 = vmatpush2.bf16.msra.mxu0 0
    %1617 = vmatprep.subr.bf16.mxu0 0
    %1618 = vmatpush2.bf16.msra.mxu0 0
    %1619 = vmatprep.subr.bf16.mxu0 0
    %1620 = vmatpush2.bf16.msra.mxu0 0
    %1621 = vmatprep.mubr.bf16.mxu0 0
    %1622 = vmatmul.mubr.bf16.gmra.mxu0 %v1566
    %v1623 = vpop.f32.mrf.mxu0
    %v1624 = vadd.f32 %v1467, %v1623
    %v1625 = vpop.f32.mrf.mxu0
    %v1626 = vpop.f32.mrf.mxu0
    %v1627 = vadd.f32 %v1470, %v1626
    %v1628 = vpop.f32.mrf.mxu0
    %1629 = vmatprep.mubr.bf16.mxu0 0
    %1630 = vmatmul.mubr.bf16.gmra.mxu0 %v1569
    %v1631 = vpop.f32.mrf.mxu0
    %v1632 = vadd.f32 %v1475, %v1631
    %v1633 = vpop.f32.mrf.mxu0
    %v1634 = vpop.f32.mrf.mxu0
    %v1635 = vadd.f32 %v1478, %v1634
    %v1636 = vpop.f32.mrf.mxu0
    %1637 = vmatprep.mubr.bf16.mxu0 0
    %1638 = vmatmul.mubr.bf16.gmra.mxu0 %v1572
    %v1639 = vpop.f32.mrf.mxu0
    %v1640 = vadd.f32 %v1483, %v1639
    %v1641 = vpop.f32.mrf.mxu0
    %v1642 = vpop.f32.mrf.mxu0
    %v1643 = vadd.f32 %v1486, %v1642
    %v1644 = vpop.f32.mrf.mxu0
    %1645 = vmatprep.mubr.bf16.mxu0 0
    %1646 = vmatmul.mubr.bf16.gmra.mxu0 %v1575
    %v1647 = vpop.f32.mrf.mxu0
    %v1648 = vadd.f32 %v1491, %v1647
    %v1649 = vpop.f32.mrf.mxu0
    %v1650 = vpop.f32.mrf.mxu0
    %v1651 = vadd.f32 %v1494, %v1650
    %v1652 = vpop.f32.mrf.mxu0
    %1653 = vmatprep.mubr.bf16.mxu0 0
    %1654 = vmatmul.mubr.bf16.gmra.mxu0 %v1578
    %v1655 = vpop.f32.mrf.mxu0
    %v1656 = vadd.f32 %v1499, %v1655
    %v1657 = vpop.f32.mrf.mxu0
    %v1658 = vpop.f32.mrf.mxu0
    %v1659 = vadd.f32 %v1502, %v1658
    %v1660 = vpop.f32.mrf.mxu0
    %1661 = vmatprep.mubr.bf16.mxu0 0
    %1662 = vmatmul.mubr.bf16.gmra.mxu0 %v1581
    %v1663 = vpop.f32.mrf.mxu0
    %v1664 = vadd.f32 %v1507, %v1663
    %v1665 = vpop.f32.mrf.mxu0
    %v1666 = vpop.f32.mrf.mxu0
    %v1667 = vadd.f32 %v1510, %v1666
    %v1668 = vpop.f32.mrf.mxu0
    %1669 = vmatprep.mubr.bf16.mxu0 0
    %1670 = vmatmul.mubr.bf16.gmra.mxu0 %v1584
    %v1671 = vpop.f32.mrf.mxu0
    %v1672 = vadd.f32 %v1515, %v1671
    %v1673 = vpop.f32.mrf.mxu0
    %v1674 = vpop.f32.mrf.mxu0
    %v1675 = vadd.f32 %v1518, %v1674
    %v1676 = vpop.f32.mrf.mxu0
    %1677 = vmatprep.mubr.bf16.mxu0 0
    %1678 = vmatmul.mubr.bf16.gmra.mxu0 %v1587
    %v1679 = vpop.f32.mrf.mxu0
    %v1680 = vadd.f32 %v1523, %v1679
    %v1681 = vpop.f32.mrf.mxu0
    %v1682 = vpop.f32.mrf.mxu0
    %v1683 = vadd.f32 %v1526, %v1682
    %v1684 = vpop.f32.mrf.mxu0
    %1685 = vdwg.mxu0
    %v1686 = vld [vmem:[#allocation2 + $0x4] sm:$0x3]
    %v1687 = vld [vmem:[#allocation2 + $0xc] sm:$0x3]
    %v1688 = vld [vmem:[#allocation2 + $0x14] sm:$0x3]
    %v1689 = vld [vmem:[#allocation2 + $0x1c] sm:$0x3]
    %v1690 = vld [vmem:[#allocation2 + $0x24] sm:$0x3]
    %v1691 = vld [vmem:[#allocation2 + $0x2c] sm:$0x3]
    %v1692 = vld [vmem:[#allocation2 + $0x34] sm:$0x3]
    %v1693 = vld [vmem:[#allocation2 + $0x3c] sm:$0x3]
    %v1694 = vld [vmem:[#allocation2 + $0x54] sm:$0x3]
    %v1695 = vld [vmem:[#allocation2 + $0x5c] sm:$0x3]
    %v1696 = vld [vmem:[#allocation2 + $0x64] sm:$0x3]
    %v1697 = vld [vmem:[#allocation2 + $0x6c] sm:$0x3]
    %v1698 = vld [vmem:[#allocation2 + $0x74] sm:$0x3]
    %v1699 = vld [vmem:[#allocation2 + $0x7c] sm:$0x3]
    %v1700 = vld [vmem:[#allocation2 + $0x84] sm:$0x3]
    %v1701 = vld [vmem:[#allocation2 + $0x8c] sm:$0x3]
    %vm1702 = vsmask.f32 2304
    %vm1703 = vsmask.f32 6416
    %vm1704 = vmor %vm1702, %vm1703
    %v1706 = vshrl.u32 %v1253, 16
    %v1708 = vrot.slane %v1706, 5
    %v1709 = vshll.u32 %v1253, 16
    %v1711 = vrot.slane %v1709, 6
    %v1712 = vor.u32 %v1708, %v1711
    %v1713 = vrot.slane %v1712, 4
    %v1715 = vshrl.u32 %v1686, 16
    %v1717 = vrot.slane %v1715, 5
    %v1718 = vshll.u32 %v1686, 16
    %v1720 = vrot.slane %v1718, 6
    %v1721 = vor.u32 %v1717, %v1720
    %v1722 = vsel %vm1704, %v1713, %v1721
    %v1724 = vshrl.u32 %v1254, 16
    %v1726 = vrot.slane %v1724, 5
    %v1727 = vshll.u32 %v1254, 16
    %v1729 = vrot.slane %v1727, 6
    %v1730 = vor.u32 %v1726, %v1729
    %v1731 = vrot.slane %v1730, 4
    %v1733 = vshrl.u32 %v1687, 16
    %v1735 = vrot.slane %v1733, 5
    %v1736 = vshll.u32 %v1687, 16
    %v1738 = vrot.slane %v1736, 6
    %v1739 = vor.u32 %v1735, %v1738
    %v1740 = vsel %vm1704, %v1731, %v1739
    %v1742 = vshrl.u32 %v1255, 16
    %v1744 = vrot.slane %v1742, 5
    %v1745 = vshll.u32 %v1255, 16
    %v1747 = vrot.slane %v1745, 6
    %v1748 = vor.u32 %v1744, %v1747
    %v1749 = vrot.slane %v1748, 4
    %v1751 = vshrl.u32 %v1688, 16
    %v1753 = vrot.slane %v1751, 5
    %v1754 = vshll.u32 %v1688, 16
    %v1756 = vrot.slane %v1754, 6
    %v1757 = vor.u32 %v1753, %v1756
    %v1758 = vsel %vm1704, %v1749, %v1757
    %v1760 = vshrl.u32 %v1256, 16
    %v1762 = vrot.slane %v1760, 5
    %v1763 = vshll.u32 %v1256, 16
    %v1765 = vrot.slane %v1763, 6
    %v1766 = vor.u32 %v1762, %v1765
    %v1767 = vrot.slane %v1766, 4
    %v1769 = vshrl.u32 %v1689, 16
    %v1771 = vrot.slane %v1769, 5
    %v1772 = vshll.u32 %v1689, 16
    %v1774 = vrot.slane %v1772, 6
    %v1775 = vor.u32 %v1771, %v1774
    %v1776 = vsel %vm1704, %v1767, %v1775
    %v1778 = vshrl.u32 %v1257, 16
    %v1780 = vrot.slane %v1778, 5
    %v1781 = vshll.u32 %v1257, 16
    %v1783 = vrot.slane %v1781, 6
    %v1784 = vor.u32 %v1780, %v1783
    %v1785 = vrot.slane %v1784, 4
    %v1787 = vshrl.u32 %v1690, 16
    %v1789 = vrot.slane %v1787, 5
    %v1790 = vshll.u32 %v1690, 16
    %v1792 = vrot.slane %v1790, 6
    %v1793 = vor.u32 %v1789, %v1792
    %v1794 = vsel %vm1704, %v1785, %v1793
    %v1796 = vshrl.u32 %v1258, 16
    %v1798 = vrot.slane %v1796, 5
    %v1799 = vshll.u32 %v1258, 16
    %v1801 = vrot.slane %v1799, 6
    %v1802 = vor.u32 %v1798, %v1801
    %v1803 = vrot.slane %v1802, 4
    %v1805 = vshrl.u32 %v1691, 16
    %v1807 = vrot.slane %v1805, 5
    %v1808 = vshll.u32 %v1691, 16
    %v1810 = vrot.slane %v1808, 6
    %v1811 = vor.u32 %v1807, %v1810
    %v1812 = vsel %vm1704, %v1803, %v1811
    %v1814 = vshrl.u32 %v1259, 16
    %v1816 = vrot.slane %v1814, 5
    %v1817 = vshll.u32 %v1259, 16
    %v1819 = vrot.slane %v1817, 6
    %v1820 = vor.u32 %v1816, %v1819
    %v1821 = vrot.slane %v1820, 4
    %v1823 = vshrl.u32 %v1692, 16
    %v1825 = vrot.slane %v1823, 5
    %v1826 = vshll.u32 %v1692, 16
    %v1828 = vrot.slane %v1826, 6
    %v1829 = vor.u32 %v1825, %v1828
    %v1830 = vsel %vm1704, %v1821, %v1829
    %v1832 = vshrl.u32 %v1260, 16
    %v1834 = vrot.slane %v1832, 5
    %v1835 = vshll.u32 %v1260, 16
    %v1837 = vrot.slane %v1835, 6
    %v1838 = vor.u32 %v1834, %v1837
    %v1839 = vrot.slane %v1838, 4
    %v1841 = vshrl.u32 %v1693, 16
    %v1843 = vrot.slane %v1841, 5
    %v1844 = vshll.u32 %v1693, 16
    %v1846 = vrot.slane %v1844, 6
    %v1847 = vor.u32 %v1843, %v1846
    %v1848 = vsel %vm1704, %v1839, %v1847
    %v1850 = vshrl.u32 %v1261, 16
    %v1852 = vrot.slane %v1850, 5
    %v1853 = vshll.u32 %v1261, 16
    %v1855 = vrot.slane %v1853, 6
    %v1856 = vor.u32 %v1852, %v1855
    %v1857 = vrot.slane %v1856, 4
    %v1859 = vshrl.u32 %v1694, 16
    %v1861 = vrot.slane %v1859, 5
    %v1862 = vshll.u32 %v1694, 16
    %v1864 = vrot.slane %v1862, 6
    %v1865 = vor.u32 %v1861, %v1864
    %v1866 = vsel %vm1704, %v1857, %v1865
    %v1868 = vshrl.u32 %v1262, 16
    %v1870 = vrot.slane %v1868, 5
    %v1871 = vshll.u32 %v1262, 16
    %v1873 = vrot.slane %v1871, 6
    %v1874 = vor.u32 %v1870, %v1873
    %v1875 = vrot.slane %v1874, 4
    %v1877 = vshrl.u32 %v1695, 16
    %v1879 = vrot.slane %v1877, 5
    %v1880 = vshll.u32 %v1695, 16
    %v1882 = vrot.slane %v1880, 6
    %v1883 = vor.u32 %v1879, %v1882
    %v1884 = vsel %vm1704, %v1875, %v1883
    %v1886 = vshrl.u32 %v1263, 16
    %v1888 = vrot.slane %v1886, 5
    %v1889 = vshll.u32 %v1263, 16
    %v1891 = vrot.slane %v1889, 6
    %v1892 = vor.u32 %v1888, %v1891
    %v1893 = vrot.slane %v1892, 4
    %v1895 = vshrl.u32 %v1696, 16
    %v1897 = vrot.slane %v1895, 5
    %v1898 = vshll.u32 %v1696, 16
    %v1900 = vrot.slane %v1898, 6
    %v1901 = vor.u32 %v1897, %v1900
    %v1902 = vsel %vm1704, %v1893, %v1901
    %v1904 = vshrl.u32 %v1264, 16
    %v1906 = vrot.slane %v1904, 5
    %v1907 = vshll.u32 %v1264, 16
    %v1909 = vrot.slane %v1907, 6
    %v1910 = vor.u32 %v1906, %v1909
    %v1911 = vrot.slane %v1910, 4
    %v1913 = vshrl.u32 %v1697, 16
    %v1915 = vrot.slane %v1913, 5
    %v1916 = vshll.u32 %v1697, 16
    %v1918 = vrot.slane %v1916, 6
    %v1919 = vor.u32 %v1915, %v1918
    %v1920 = vsel %vm1704, %v1911, %v1919
    %v1922 = vshrl.u32 %v1265, 16
    %v1924 = vrot.slane %v1922, 5
    %v1925 = vshll.u32 %v1265, 16
    %v1927 = vrot.slane %v1925, 6
    %v1928 = vor.u32 %v1924, %v1927
    %v1929 = vrot.slane %v1928, 4
    %v1931 = vshrl.u32 %v1698, 16
    %v1933 = vrot.slane %v1931, 5
    %v1934 = vshll.u32 %v1698, 16
    %v1936 = vrot.slane %v1934, 6
    %v1937 = vor.u32 %v1933, %v1936
    %v1938 = vsel %vm1704, %v1929, %v1937
    %v1940 = vshrl.u32 %v1266, 16
    %v1942 = vrot.slane %v1940, 5
    %v1943 = vshll.u32 %v1266, 16
    %v1945 = vrot.slane %v1943, 6
    %v1946 = vor.u32 %v1942, %v1945
    %v1947 = vrot.slane %v1946, 4
    %v1949 = vshrl.u32 %v1699, 16
    %v1951 = vrot.slane %v1949, 5
    %v1952 = vshll.u32 %v1699, 16
    %v1954 = vrot.slane %v1952, 6
    %v1955 = vor.u32 %v1951, %v1954
    %v1956 = vsel %vm1704, %v1947, %v1955
    %v1958 = vshrl.u32 %v1267, 16
    %v1960 = vrot.slane %v1958, 5
    %v1961 = vshll.u32 %v1267, 16
    %v1963 = vrot.slane %v1961, 6
    %v1964 = vor.u32 %v1960, %v1963
    %v1965 = vrot.slane %v1964, 4
    %v1967 = vshrl.u32 %v1700, 16
    %v1969 = vrot.slane %v1967, 5
    %v1970 = vshll.u32 %v1700, 16
    %v1972 = vrot.slane %v1970, 6
    %v1973 = vor.u32 %v1969, %v1972
    %v1974 = vsel %vm1704, %v1965, %v1973
    %v1976 = vshrl.u32 %v1268, 16
    %v1978 = vrot.slane %v1976, 5
    %v1979 = vshll.u32 %v1268, 16
    %v1981 = vrot.slane %v1979, 6
    %v1982 = vor.u32 %v1978, %v1981
    %v1983 = vrot.slane %v1982, 4
    %v1985 = vshrl.u32 %v1701, 16
    %v1987 = vrot.slane %v1985, 5
    %v1988 = vshll.u32 %v1701, 16
    %v1990 = vrot.slane %v1988, 6
    %v1991 = vor.u32 %v1987, %v1990
    %v1992 = vsel %vm1704, %v1983, %v1991
    %v1993 = vld [vmem:[%s6 + $0x20] sm:$0xf]
    %v1994 = vld [vmem:[%s6 + $0x24] sm:$0xf]
    %v1995 = vld [vmem:[%s6 + $0x28] sm:$0xf]
    %v1996 = vld [vmem:[%s6 + $0x2c] sm:$0xf]
    %v1997 = vunpack.c.l.b16 %v1722
    %v1998 = vunpack.c.l.b16 %v1740
    %v1999 = vunpack.c.l.b16 %v1758
    %v2000 = vunpack.c.l.b16 %v1776
    %v2001 = vunpack.c.l.b16 %v1794
    %v2002 = vunpack.c.l.b16 %v1812
    %v2003 = vunpack.c.l.b16 %v1830
    %v2004 = vunpack.c.l.b16 %v1848
    %v2005 = vunpack.c.l.b16 %v1866
    %v2006 = vunpack.c.l.b16 %v1884
    %v2007 = vunpack.c.l.b16 %v1902
    %v2008 = vunpack.c.l.b16 %v1920
    %v2009 = vunpack.c.l.b16 %v1938
    %v2010 = vunpack.c.l.b16 %v1956
    %v2011 = vunpack.c.l.b16 %v1974
    %v2012 = vunpack.c.l.b16 %v1992
    %v2013 = vpack.c.b16 %v1998, %v1997
    %v2014 = vpack.c.b16 %v2000, %v1999
    %v2015 = vpack.c.b16 %v2002, %v2001
    %v2016 = vpack.c.b16 %v2004, %v2003
    %v2017 = vpack.c.b16 %v2006, %v2005
    %v2018 = vpack.c.b16 %v2008, %v2007
    %v2019 = vpack.c.b16 %v2010, %v2009
    %v2020 = vpack.c.b16 %v2012, %v2011
    %v2025 = vunpack.c.l.b16 %v1993
    %v2026 = vunpack.c.l.b16 %v1994
    %v2027 = vunpack.c.l.b16 %v1995
    %v2028 = vunpack.c.l.b16 %v1996
    %v2029 = vpack.c.b16 %v2026, %v2025
    %v2030 = vpack.c.b16 %v2028, %v2027
    %v2034 = vsel %vm190, %v2013, 0
    %v2037 = vsel %vm190, %v2014, 0
    %v2040 = vsel %vm190, %v2015, 0
    %v2043 = vsel %vm190, %v2016, 0
    %v2046 = vsel %vm190, %v2017, 0
    %v2049 = vsel %vm190, %v2018, 0
    %v2052 = vsel %vm190, %v2019, 0
    %v2055 = vsel %vm190, %v2020, 0
    %2057 = vmatprep.subr.bf16.mxu0 0
    %2058 = vmatpush1.bf16.msra.mxu0 0
    %2059 = vmatprep.subr.bf16.mxu0 0
    %2060 = vmatpush1.bf16.msra.mxu0 0
    %2061 = vmatprep.subr.bf16.mxu0 0
    %2062 = vmatpush1.bf16.msra.mxu0 0
    %2063 = vmatprep.subr.bf16.mxu0 0
    %2064 = vmatpush1.bf16.msra.mxu0 0
    %2065 = vmatprep.subr.bf16.mxu0 0
    %2066 = vmatpush1.bf16.msra.mxu0 0
    %2067 = vmatprep.subr.bf16.mxu0 0
    %2068 = vmatpush1.bf16.msra.mxu0 0
    %2069 = vmatprep.subr.bf16.mxu0 0
    %2070 = vmatpush1.bf16.msra.mxu0 %v2030
    %2071 = vmatprep.subr.bf16.mxu0 0
    %2072 = vmatpush1.bf16.msra.mxu0 %v2029
    %2073 = vmatprep.subr.bf16.mxu0 0
    %2074 = vmatpush2.bf16.msra.mxu0 0
    %2075 = vmatprep.subr.bf16.mxu0 0
    %2076 = vmatpush2.bf16.msra.mxu0 0
    %2077 = vmatprep.subr.bf16.mxu0 0
    %2078 = vmatpush2.bf16.msra.mxu0 0
    %2079 = vmatprep.subr.bf16.mxu0 0
    %2080 = vmatpush2.bf16.msra.mxu0 0
    %2081 = vmatprep.subr.bf16.mxu0 0
    %2082 = vmatpush2.bf16.msra.mxu0 0
    %2083 = vmatprep.subr.bf16.mxu0 0
    %2084 = vmatpush2.bf16.msra.mxu0 0
    %2085 = vmatprep.subr.bf16.mxu0 0
    %2086 = vmatpush2.bf16.msra.mxu0 0
    %2087 = vmatprep.subr.bf16.mxu0 0
    %2088 = vmatpush2.bf16.msra.mxu0 0
    %2089 = vmatprep.mubr.bf16.mxu0 0
    %2090 = vmatmul.mubr.bf16.gmra.mxu0 %v2034
    %v2091 = vpop.f32.mrf.mxu0
    %v2092 = vadd.f32 0.0, %v2091
    %v2093 = vpop.f32.mrf.mxu0
    %v2094 = vpop.f32.mrf.mxu0
    %v2095 = vadd.f32 0.0, %v2094
    %v2096 = vpop.f32.mrf.mxu0
    %2097 = vmatprep.mubr.bf16.mxu0 0
    %2098 = vmatmul.mubr.bf16.gmra.mxu0 %v2037
    %v2099 = vpop.f32.mrf.mxu0
    %v2100 = vadd.f32 0.0, %v2099
    %v2101 = vpop.f32.mrf.mxu0
    %v2102 = vpop.f32.mrf.mxu0
    %v2103 = vadd.f32 0.0, %v2102
    %v2104 = vpop.f32.mrf.mxu0
    %2105 = vmatprep.mubr.bf16.mxu0 0
    %2106 = vmatmul.mubr.bf16.gmra.mxu0 %v2040
    %v2107 = vpop.f32.mrf.mxu0
    %v2108 = vadd.f32 0.0, %v2107
    %v2109 = vpop.f32.mrf.mxu0
    %v2110 = vpop.f32.mrf.mxu0
    %v2111 = vadd.f32 0.0, %v2110
    %v2112 = vpop.f32.mrf.mxu0
    %2113 = vmatprep.mubr.bf16.mxu0 0
    %2114 = vmatmul.mubr.bf16.gmra.mxu0 %v2043
    %v2115 = vpop.f32.mrf.mxu0
    %v2116 = vadd.f32 0.0, %v2115
    %v2117 = vpop.f32.mrf.mxu0
    %v2118 = vpop.f32.mrf.mxu0
    %v2119 = vadd.f32 0.0, %v2118
    %v2120 = vpop.f32.mrf.mxu0
    %2121 = vmatprep.mubr.bf16.mxu0 0
    %2122 = vmatmul.mubr.bf16.gmra.mxu0 %v2046
    %v2123 = vpop.f32.mrf.mxu0
    %v2124 = vadd.f32 0.0, %v2123
    %v2125 = vpop.f32.mrf.mxu0
    %v2126 = vpop.f32.mrf.mxu0
    %v2127 = vadd.f32 0.0, %v2126
    %v2128 = vpop.f32.mrf.mxu0
    %2129 = vmatprep.mubr.bf16.mxu0 0
    %2130 = vmatmul.mubr.bf16.gmra.mxu0 %v2049
    %v2131 = vpop.f32.mrf.mxu0
    %v2132 = vadd.f32 0.0, %v2131
    %v2133 = vpop.f32.mrf.mxu0
    %v2134 = vpop.f32.mrf.mxu0
    %v2135 = vadd.f32 0.0, %v2134
    %v2136 = vpop.f32.mrf.mxu0
    %2137 = vmatprep.mubr.bf16.mxu0 0
    %2138 = vmatmul.mubr.bf16.gmra.mxu0 %v2052
    %v2139 = vpop.f32.mrf.mxu0
    %v2140 = vadd.f32 0.0, %v2139
    %v2141 = vpop.f32.mrf.mxu0
    %v2142 = vpop.f32.mrf.mxu0
    %v2143 = vadd.f32 0.0, %v2142
    %v2144 = vpop.f32.mrf.mxu0
    %2145 = vmatprep.mubr.bf16.mxu0 0
    %2146 = vmatmul.mubr.bf16.gmra.mxu0 %v2055
    %v2147 = vpop.f32.mrf.mxu0
    %v2148 = vadd.f32 0.0, %v2147
    %v2149 = vpop.f32.mrf.mxu0
    %v2150 = vpop.f32.mrf.mxu0
    %v2151 = vadd.f32 0.0, %v2150
    %v2152 = vpop.f32.mrf.mxu0
    %2153 = vdwg.mxu0
    %v2154 = vadd.f32 %v1624, %v2092
    %v2155 = vadd.f32 %v1627, %v2095
    %v2156 = vadd.f32 %v1632, %v2100
    %v2157 = vadd.f32 %v1635, %v2103
    %v2158 = vadd.f32 %v1640, %v2108
    %v2159 = vadd.f32 %v1643, %v2111
    %v2160 = vadd.f32 %v1648, %v2116
    %v2161 = vadd.f32 %v1651, %v2119
    %v2162 = vadd.f32 %v1656, %v2124
    %v2163 = vadd.f32 %v1659, %v2127
    %v2164 = vadd.f32 %v1664, %v2132
    %v2165 = vadd.f32 %v1667, %v2135
    %v2166 = vadd.f32 %v1672, %v2140
    %v2167 = vadd.f32 %v1675, %v2143
    %v2168 = vadd.f32 %v1680, %v2148
    %v2169 = vadd.f32 %v1683, %v2151
    %v2170 = vld [vmem:[%s956] sm:$0xf]
    %v2171 = vld [vmem:[%s956 + $0x4] sm:$0x1]
    %v2172 = vld [vmem:[%s956 + $0x8] sm:$0xf]
    %v2173 = vld [vmem:[%s956 + $0xc] sm:$0x1]
    %v2174 = vld [vmem:[%s956 + $0x10] sm:$0xf]
    %v2175 = vld [vmem:[%s956 + $0x14] sm:$0x1]
    %v2176 = vld [vmem:[%s956 + $0x18] sm:$0xf]
    %v2177 = vld [vmem:[%s956 + $0x1c] sm:$0x1]
    %v2178 = vld [vmem:[%s956 + $0x20] sm:$0xf]
    %v2179 = vld [vmem:[%s956 + $0x24] sm:$0x1]
    %v2180 = vld [vmem:[%s956 + $0x28] sm:$0xf]
    %v2181 = vld [vmem:[%s956 + $0x2c] sm:$0x1]
    %v2182 = vld [vmem:[%s956 + $0x30] sm:$0xf]
    %v2183 = vld [vmem:[%s956 + $0x34] sm:$0x1]
    %v2184 = vld [vmem:[%s956 + $0x38] sm:$0xf]
    %v2185 = vld [vmem:[%s956 + $0x3c] sm:$0x1]
    %v2186 = vld [vmem:[%s956 + $0x50] sm:$0xf]
    %v2187 = vld [vmem:[%s956 + $0x54] sm:$0x1]
    %v2188 = vld [vmem:[%s956 + $0x58] sm:$0xf]
    %v2189 = vld [vmem:[%s956 + $0x5c] sm:$0x1]
    %v2190 = vld [vmem:[%s956 + $0x60] sm:$0xf]
    %v2191 = vld [vmem:[%s956 + $0x64] sm:$0x1]
    %v2192 = vld [vmem:[%s956 + $0x68] sm:$0xf]
    %v2193 = vld [vmem:[%s956 + $0x6c] sm:$0x1]
    %v2194 = vld [vmem:[%s956 + $0x70] sm:$0xf]
    %v2195 = vld [vmem:[%s956 + $0x74] sm:$0x1]
    %v2196 = vld [vmem:[%s956 + $0x78] sm:$0xf]
    %v2197 = vld [vmem:[%s956 + $0x7c] sm:$0x1]
    %v2198 = vld [vmem:[%s956 + $0x80] sm:$0xf]
    %v2199 = vld [vmem:[%s956 + $0x84] sm:$0x1]
    %v2200 = vld [vmem:[%s956 + $0x88] sm:$0xf]
    %v2201 = vld [vmem:[%s956 + $0x8c] sm:$0x1]
    %v2203 = vshrl.u32 %v2170, 16
    %v2205 = vrot.slane %v2203, 4
    %v2206 = vshll.u32 %v2170, 16
    %v2208 = vrot.slane %v2206, 5
    %v2209 = vor.u32 %v2205, %v2208
    %v2210 = vrot.slane %v2209, 4
    %v2212 = vshll.u32 %v2171, 16
    %v2214 = vrot.slane %v2212, 5
    %v2215 = vsel %vm1024, %v2210, %v2214
    %v2217 = vshrl.u32 %v2172, 16
    %v2219 = vrot.slane %v2217, 4
    %v2220 = vshll.u32 %v2172, 16
    %v2222 = vrot.slane %v2220, 5
    %v2223 = vor.u32 %v2219, %v2222
    %v2224 = vrot.slane %v2223, 4
    %v2226 = vshll.u32 %v2173, 16
    %v2228 = vrot.slane %v2226, 5
    %v2229 = vsel %vm1024, %v2224, %v2228
    %v2231 = vshrl.u32 %v2174, 16
    %v2233 = vrot.slane %v2231, 4
    %v2234 = vshll.u32 %v2174, 16
    %v2236 = vrot.slane %v2234, 5
    %v2237 = vor.u32 %v2233, %v2236
    %v2238 = vrot.slane %v2237, 4
    %v2240 = vshll.u32 %v2175, 16
    %v2242 = vrot.slane %v2240, 5
    %v2243 = vsel %vm1024, %v2238, %v2242
    %v2245 = vshrl.u32 %v2176, 16
    %v2247 = vrot.slane %v2245, 4
    %v2248 = vshll.u32 %v2176, 16
    %v2250 = vrot.slane %v2248, 5
    %v2251 = vor.u32 %v2247, %v2250
    %v2252 = vrot.slane %v2251, 4
    %v2254 = vshll.u32 %v2177, 16
    %v2256 = vrot.slane %v2254, 5
    %v2257 = vsel %vm1024, %v2252, %v2256
    %v2259 = vshrl.u32 %v2178, 16
    %v2261 = vrot.slane %v2259, 4
    %v2262 = vshll.u32 %v2178, 16
    %v2264 = vrot.slane %v2262, 5
    %v2265 = vor.u32 %v2261, %v2264
    %v2266 = vrot.slane %v2265, 4
    %v2268 = vshll.u32 %v2179, 16
    %v2270 = vrot.slane %v2268, 5
    %v2271 = vsel %vm1024, %v2266, %v2270
    %v2273 = vshrl.u32 %v2180, 16
    %v2275 = vrot.slane %v2273, 4
    %v2276 = vshll.u32 %v2180, 16
    %v2278 = vrot.slane %v2276, 5
    %v2279 = vor.u32 %v2275, %v2278
    %v2280 = vrot.slane %v2279, 4
    %v2282 = vshll.u32 %v2181, 16
    %v2284 = vrot.slane %v2282, 5
    %v2285 = vsel %vm1024, %v2280, %v2284
    %v2287 = vshrl.u32 %v2182, 16
    %v2289 = vrot.slane %v2287, 4
    %v2290 = vshll.u32 %v2182, 16
    %v2292 = vrot.slane %v2290, 5
    %v2293 = vor.u32 %v2289, %v2292
    %v2294 = vrot.slane %v2293, 4
    %v2296 = vshll.u32 %v2183, 16
    %v2298 = vrot.slane %v2296, 5
    %v2299 = vsel %vm1024, %v2294, %v2298
    %v2301 = vshrl.u32 %v2184, 16
    %v2303 = vrot.slane %v2301, 4
    %v2304 = vshll.u32 %v2184, 16
    %v2306 = vrot.slane %v2304, 5
    %v2307 = vor.u32 %v2303, %v2306
    %v2308 = vrot.slane %v2307, 4
    %v2310 = vshll.u32 %v2185, 16
    %v2312 = vrot.slane %v2310, 5
    %v2313 = vsel %vm1024, %v2308, %v2312
    %v2315 = vshrl.u32 %v2186, 16
    %v2317 = vrot.slane %v2315, 4
    %v2318 = vshll.u32 %v2186, 16
    %v2320 = vrot.slane %v2318, 5
    %v2321 = vor.u32 %v2317, %v2320
    %v2322 = vrot.slane %v2321, 4
    %v2324 = vshll.u32 %v2187, 16
    %v2326 = vrot.slane %v2324, 5
    %v2327 = vsel %vm1024, %v2322, %v2326
    %v2329 = vshrl.u32 %v2188, 16
    %v2331 = vrot.slane %v2329, 4
    %v2332 = vshll.u32 %v2188, 16
    %v2334 = vrot.slane %v2332, 5
    %v2335 = vor.u32 %v2331, %v2334
    %v2336 = vrot.slane %v2335, 4
    %v2338 = vshll.u32 %v2189, 16
    %v2340 = vrot.slane %v2338, 5
    %v2341 = vsel %vm1024, %v2336, %v2340
    %v2343 = vshrl.u32 %v2190, 16
    %v2345 = vrot.slane %v2343, 4
    %v2346 = vshll.u32 %v2190, 16
    %v2348 = vrot.slane %v2346, 5
    %v2349 = vor.u32 %v2345, %v2348
    %v2350 = vrot.slane %v2349, 4
    %v2352 = vshll.u32 %v2191, 16
    %v2354 = vrot.slane %v2352, 5
    %v2355 = vsel %vm1024, %v2350, %v2354
    %v2357 = vshrl.u32 %v2192, 16
    %v2359 = vrot.slane %v2357, 4
    %v2360 = vshll.u32 %v2192, 16
    %v2362 = vrot.slane %v2360, 5
    %v2363 = vor.u32 %v2359, %v2362
    %v2364 = vrot.slane %v2363, 4
    %v2366 = vshll.u32 %v2193, 16
    %v2368 = vrot.slane %v2366, 5
    %v2369 = vsel %vm1024, %v2364, %v2368
    %v2371 = vshrl.u32 %v2194, 16
    %v2373 = vrot.slane %v2371, 4
    %v2374 = vshll.u32 %v2194, 16
    %v2376 = vrot.slane %v2374, 5
    %v2377 = vor.u32 %v2373, %v2376
    %v2378 = vrot.slane %v2377, 4
    %v2380 = vshll.u32 %v2195, 16
    %v2382 = vrot.slane %v2380, 5
    %v2383 = vsel %vm1024, %v2378, %v2382
    %v2385 = vshrl.u32 %v2196, 16
    %v2387 = vrot.slane %v2385, 4
    %v2388 = vshll.u32 %v2196, 16
    %v2390 = vrot.slane %v2388, 5
    %v2391 = vor.u32 %v2387, %v2390
    %v2392 = vrot.slane %v2391, 4
    %v2394 = vshll.u32 %v2197, 16
    %v2396 = vrot.slane %v2394, 5
    %v2397 = vsel %vm1024, %v2392, %v2396
    %v2399 = vshrl.u32 %v2198, 16
    %v2401 = vrot.slane %v2399, 4
    %v2402 = vshll.u32 %v2198, 16
    %v2404 = vrot.slane %v2402, 5
    %v2405 = vor.u32 %v2401, %v2404
    %v2406 = vrot.slane %v2405, 4
    %v2408 = vshll.u32 %v2199, 16
    %v2410 = vrot.slane %v2408, 5
    %v2411 = vsel %vm1024, %v2406, %v2410
    %v2413 = vshrl.u32 %v2200, 16
    %v2415 = vrot.slane %v2413, 4
    %v2416 = vshll.u32 %v2200, 16
    %v2418 = vrot.slane %v2416, 5
    %v2419 = vor.u32 %v2415, %v2418
    %v2420 = vrot.slane %v2419, 4
    %v2422 = vshll.u32 %v2201, 16
    %v2424 = vrot.slane %v2422, 5
    %v2425 = vsel %vm1024, %v2420, %v2424
    %v2426 = vld [vmem:[%s6 + $0x30] sm:$0xf]
    %v2427 = vld [vmem:[%s6 + $0x34] sm:$0xf]
    %v2428 = vld [vmem:[%s6 + $0x38] sm:$0xf]
    %v2429 = vld [vmem:[%s6 + $0x3c] sm:$0xf]
    %v2430 = vunpack.c.l.b16 %v2215
    %v2431 = vunpack.c.l.b16 %v2229
    %v2432 = vunpack.c.l.b16 %v2243
    %v2433 = vunpack.c.l.b16 %v2257
    %v2434 = vunpack.c.l.b16 %v2271
    %v2435 = vunpack.c.l.b16 %v2285
    %v2436 = vunpack.c.l.b16 %v2299
    %v2437 = vunpack.c.l.b16 %v2313
    %v2438 = vunpack.c.l.b16 %v2327
    %v2439 = vunpack.c.l.b16 %v2341
    %v2440 = vunpack.c.l.b16 %v2355
    %v2441 = vunpack.c.l.b16 %v2369
    %v2442 = vunpack.c.l.b16 %v2383
    %v2443 = vunpack.c.l.b16 %v2397
    %v2444 = vunpack.c.l.b16 %v2411
    %v2445 = vunpack.c.l.b16 %v2425
    %v2446 = vpack.c.b16 %v2431, %v2430
    %v2447 = vpack.c.b16 %v2433, %v2432
    %v2448 = vpack.c.b16 %v2435, %v2434
    %v2449 = vpack.c.b16 %v2437, %v2436
    %v2450 = vpack.c.b16 %v2439, %v2438
    %v2451 = vpack.c.b16 %v2441, %v2440
    %v2452 = vpack.c.b16 %v2443, %v2442
    %v2453 = vpack.c.b16 %v2445, %v2444
    %v2458 = vunpack.c.l.b16 %v2426
    %v2459 = vunpack.c.l.b16 %v2427
    %v2460 = vunpack.c.l.b16 %v2428
    %v2461 = vunpack.c.l.b16 %v2429
    %v2462 = vpack.c.b16 %v2459, %v2458
    %v2463 = vpack.c.b16 %v2461, %v2460
    %v2467 = vsel %vm190, %v2446, 0
    %v2470 = vsel %vm190, %v2447, 0
    %v2473 = vsel %vm190, %v2448, 0
    %v2476 = vsel %vm190, %v2449, 0
    %v2479 = vsel %vm190, %v2450, 0
    %v2482 = vsel %vm190, %v2451, 0
    %v2485 = vsel %vm190, %v2452, 0
    %v2488 = vsel %vm190, %v2453, 0
    %2490 = vmatprep.subr.bf16.mxu0 0
    %2491 = vmatpush1.bf16.msra.mxu0 0
    %2492 = vmatprep.subr.bf16.mxu0 0
    %2493 = vmatpush1.bf16.msra.mxu0 0
    %2494 = vmatprep.subr.bf16.mxu0 0
    %2495 = vmatpush1.bf16.msra.mxu0 0
    %2496 = vmatprep.subr.bf16.mxu0 0
    %2497 = vmatpush1.bf16.msra.mxu0 0
    %2498 = vmatprep.subr.bf16.mxu0 0
    %2499 = vmatpush1.bf16.msra.mxu0 0
    %2500 = vmatprep.subr.bf16.mxu0 0
    %2501 = vmatpush1.bf16.msra.mxu0 0
    %2502 = vmatprep.subr.bf16.mxu0 0
    %2503 = vmatpush1.bf16.msra.mxu0 %v2463
    %2504 = vmatprep.subr.bf16.mxu0 0
    %2505 = vmatpush1.bf16.msra.mxu0 %v2462
    %2506 = vmatprep.subr.bf16.mxu0 0
    %2507 = vmatpush2.bf16.msra.mxu0 0
    %2508 = vmatprep.subr.bf16.mxu0 0
    %2509 = vmatpush2.bf16.msra.mxu0 0
    %2510 = vmatprep.subr.bf16.mxu0 0
    %2511 = vmatpush2.bf16.msra.mxu0 0
    %2512 = vmatprep.subr.bf16.mxu0 0
    %2513 = vmatpush2.bf16.msra.mxu0 0
    %2514 = vmatprep.subr.bf16.mxu0 0
    %2515 = vmatpush2.bf16.msra.mxu0 0
    %2516 = vmatprep.subr.bf16.mxu0 0
    %2517 = vmatpush2.bf16.msra.mxu0 0
    %2518 = vmatprep.subr.bf16.mxu0 0
    %2519 = vmatpush2.bf16.msra.mxu0 0
    %2520 = vmatprep.subr.bf16.mxu0 0
    %2521 = vmatpush2.bf16.msra.mxu0 0
    %2522 = vmatprep.mubr.bf16.mxu0 0
    %2523 = vmatmul.mubr.bf16.gmra.mxu0 %v2467
    %v2524 = vpop.f32.mrf.mxu0
    %v2525 = vadd.f32 0.0, %v2524
    %v2526 = vpop.f32.mrf.mxu0
    %v2527 = vpop.f32.mrf.mxu0
    %v2528 = vadd.f32 0.0, %v2527
    %v2529 = vpop.f32.mrf.mxu0
    %2530 = vmatprep.mubr.bf16.mxu0 0
    %2531 = vmatmul.mubr.bf16.gmra.mxu0 %v2470
    %v2532 = vpop.f32.mrf.mxu0
    %v2533 = vadd.f32 0.0, %v2532
    %v2534 = vpop.f32.mrf.mxu0
    %v2535 = vpop.f32.mrf.mxu0
    %v2536 = vadd.f32 0.0, %v2535
    %v2537 = vpop.f32.mrf.mxu0
    %2538 = vmatprep.mubr.bf16.mxu0 0
    %2539 = vmatmul.mubr.bf16.gmra.mxu0 %v2473
    %v2540 = vpop.f32.mrf.mxu0
    %v2541 = vadd.f32 0.0, %v2540
    %v2542 = vpop.f32.mrf.mxu0
    %v2543 = vpop.f32.mrf.mxu0
    %v2544 = vadd.f32 0.0, %v2543
    %v2545 = vpop.f32.mrf.mxu0
    %2546 = vmatprep.mubr.bf16.mxu0 0
    %2547 = vmatmul.mubr.bf16.gmra.mxu0 %v2476
    %v2548 = vpop.f32.mrf.mxu0
    %v2549 = vadd.f32 0.0, %v2548
    %v2550 = vpop.f32.mrf.mxu0
    %v2551 = vpop.f32.mrf.mxu0
    %v2552 = vadd.f32 0.0, %v2551
    %v2553 = vpop.f32.mrf.mxu0
    %2554 = vmatprep.mubr.bf16.mxu0 0
    %2555 = vmatmul.mubr.bf16.gmra.mxu0 %v2479
    %v2556 = vpop.f32.mrf.mxu0
    %v2557 = vadd.f32 0.0, %v2556
    %v2558 = vpop.f32.mrf.mxu0
    %v2559 = vpop.f32.mrf.mxu0
    %v2560 = vadd.f32 0.0, %v2559
    %v2561 = vpop.f32.mrf.mxu0
    %2562 = vmatprep.mubr.bf16.mxu0 0
    %2563 = vmatmul.mubr.bf16.gmra.mxu0 %v2482
    %v2564 = vpop.f32.mrf.mxu0
    %v2565 = vadd.f32 0.0, %v2564
    %v2566 = vpop.f32.mrf.mxu0
    %v2567 = vpop.f32.mrf.mxu0
    %v2568 = vadd.f32 0.0, %v2567
    %v2569 = vpop.f32.mrf.mxu0
    %2570 = vmatprep.mubr.bf16.mxu0 0
    %2571 = vmatmul.mubr.bf16.gmra.mxu0 %v2485
    %v2572 = vpop.f32.mrf.mxu0
    %v2573 = vadd.f32 0.0, %v2572
    %v2574 = vpop.f32.mrf.mxu0
    %v2575 = vpop.f32.mrf.mxu0
    %v2576 = vadd.f32 0.0, %v2575
    %v2577 = vpop.f32.mrf.mxu0
    %2578 = vmatprep.mubr.bf16.mxu0 0
    %2579 = vmatmul.mubr.bf16.gmra.mxu0 %v2488
    %v2580 = vpop.f32.mrf.mxu0
    %v2581 = vadd.f32 0.0, %v2580
    %v2582 = vpop.f32.mrf.mxu0
    %v2583 = vpop.f32.mrf.mxu0
    %v2584 = vadd.f32 0.0, %v2583
    %v2585 = vpop.f32.mrf.mxu0
    %2586 = vdwg.mxu0
    %v2587 = vadd.f32 %v2154, %v2525
    %v2588 = vadd.f32 %v2155, %v2528
    %v2589 = vadd.f32 %v2156, %v2533
    %v2590 = vadd.f32 %v2157, %v2536
    %v2591 = vadd.f32 %v2158, %v2541
    %v2592 = vadd.f32 %v2159, %v2544
    %v2593 = vadd.f32 %v2160, %v2549
    %v2594 = vadd.f32 %v2161, %v2552
    %v2595 = vadd.f32 %v2162, %v2557
    %v2596 = vadd.f32 %v2163, %v2560
    %v2597 = vadd.f32 %v2164, %v2565
    %v2598 = vadd.f32 %v2165, %v2568
    %v2599 = vadd.f32 %v2166, %v2573
    %v2600 = vadd.f32 %v2167, %v2576
    %v2601 = vadd.f32 %v2168, %v2581
    %v2602 = vadd.f32 %v2169, %v2584
    %v2603 = vld [vmem:[%s956] sm:$0xe]
    %v2604 = vld [vmem:[%s956 + $0x8] sm:$0xe]
    %v2605 = vld [vmem:[%s956 + $0x10] sm:$0xe]
    %v2606 = vld [vmem:[%s956 + $0x18] sm:$0xe]
    %v2607 = vld [vmem:[%s956 + $0x20] sm:$0xe]
    %v2608 = vld [vmem:[%s956 + $0x28] sm:$0xe]
    %v2609 = vld [vmem:[%s956 + $0x30] sm:$0xe]
    %v2610 = vld [vmem:[%s956 + $0x38] sm:$0xe]
    %v2611 = vld [vmem:[%s956 + $0x50] sm:$0xe]
    %v2612 = vld [vmem:[%s956 + $0x58] sm:$0xe]
    %v2613 = vld [vmem:[%s956 + $0x60] sm:$0xe]
    %v2614 = vld [vmem:[%s956 + $0x68] sm:$0xe]
    %v2615 = vld [vmem:[%s956 + $0x70] sm:$0xe]
    %v2616 = vld [vmem:[%s956 + $0x78] sm:$0xe]
    %v2617 = vld [vmem:[%s956 + $0x80] sm:$0xe]
    %v2618 = vld [vmem:[%s956 + $0x88] sm:$0xe]
    %v2651 = vrot.slane %v2603, 5
    %v2652 = vrot.slane %v2651, 4
    %v2653 = vrot.slane %v2171, 5
    %v2654 = vsel %vm1303, %v2652, %v2653
    %v2655 = vrot.slane %v2604, 5
    %v2656 = vrot.slane %v2655, 4
    %v2657 = vrot.slane %v2173, 5
    %v2658 = vsel %vm1303, %v2656, %v2657
    %v2659 = vrot.slane %v2605, 5
    %v2660 = vrot.slane %v2659, 4
    %v2661 = vrot.slane %v2175, 5
    %v2662 = vsel %vm1303, %v2660, %v2661
    %v2663 = vrot.slane %v2606, 5
    %v2664 = vrot.slane %v2663, 4
    %v2665 = vrot.slane %v2177, 5
    %v2666 = vsel %vm1303, %v2664, %v2665
    %v2667 = vrot.slane %v2607, 5
    %v2668 = vrot.slane %v2667, 4
    %v2669 = vrot.slane %v2179, 5
    %v2670 = vsel %vm1303, %v2668, %v2669
    %v2671 = vrot.slane %v2608, 5
    %v2672 = vrot.slane %v2671, 4
    %v2673 = vrot.slane %v2181, 5
    %v2674 = vsel %vm1303, %v2672, %v2673
    %v2675 = vrot.slane %v2609, 5
    %v2676 = vrot.slane %v2675, 4
    %v2677 = vrot.slane %v2183, 5
    %v2678 = vsel %vm1303, %v2676, %v2677
    %v2679 = vrot.slane %v2610, 5
    %v2680 = vrot.slane %v2679, 4
    %v2681 = vrot.slane %v2185, 5
    %v2682 = vsel %vm1303, %v2680, %v2681
    %v2683 = vrot.slane %v2611, 5
    %v2684 = vrot.slane %v2683, 4
    %v2685 = vrot.slane %v2187, 5
    %v2686 = vsel %vm1303, %v2684, %v2685
    %v2687 = vrot.slane %v2612, 5
    %v2688 = vrot.slane %v2687, 4
    %v2689 = vrot.slane %v2189, 5
    %v2690 = vsel %vm1303, %v2688, %v2689
    %v2691 = vrot.slane %v2613, 5
    %v2692 = vrot.slane %v2691, 4
    %v2693 = vrot.slane %v2191, 5
    %v2694 = vsel %vm1303, %v2692, %v2693
    %v2695 = vrot.slane %v2614, 5
    %v2696 = vrot.slane %v2695, 4
    %v2697 = vrot.slane %v2193, 5
    %v2698 = vsel %vm1303, %v2696, %v2697
    %v2699 = vrot.slane %v2615, 5
    %v2700 = vrot.slane %v2699, 4
    %v2701 = vrot.slane %v2195, 5
    %v2702 = vsel %vm1303, %v2700, %v2701
    %v2703 = vrot.slane %v2616, 5
    %v2704 = vrot.slane %v2703, 4
    %v2705 = vrot.slane %v2197, 5
    %v2706 = vsel %vm1303, %v2704, %v2705
    %v2707 = vrot.slane %v2617, 5
    %v2708 = vrot.slane %v2707, 4
    %v2709 = vrot.slane %v2199, 5
    %v2710 = vsel %vm1303, %v2708, %v2709
    %v2711 = vrot.slane %v2618, 5
    %v2712 = vrot.slane %v2711, 4
    %v2713 = vrot.slane %v2201, 5
    %v2714 = vsel %vm1303, %v2712, %v2713
    %v2715 = vld [vmem:[%s6 + $0x40] sm:$0xf]
    %v2716 = vld [vmem:[%s6 + $0x44] sm:$0xf]
    %v2717 = vld [vmem:[%s6 + $0x48] sm:$0xf]
    %v2718 = vld [vmem:[%s6 + $0x4c] sm:$0xf]
    %v2719 = vunpack.c.l.b16 %v2654
    %v2720 = vunpack.c.l.b16 %v2658
    %v2721 = vunpack.c.l.b16 %v2662
    %v2722 = vunpack.c.l.b16 %v2666
    %v2723 = vunpack.c.l.b16 %v2670
    %v2724 = vunpack.c.l.b16 %v2674
    %v2725 = vunpack.c.l.b16 %v2678
    %v2726 = vunpack.c.l.b16 %v2682
    %v2727 = vunpack.c.l.b16 %v2686
    %v2728 = vunpack.c.l.b16 %v2690
    %v2729 = vunpack.c.l.b16 %v2694
    %v2730 = vunpack.c.l.b16 %v2698
    %v2731 = vunpack.c.l.b16 %v2702
    %v2732 = vunpack.c.l.b16 %v2706
    %v2733 = vunpack.c.l.b16 %v2710
    %v2734 = vunpack.c.l.b16 %v2714
    %v2735 = vpack.c.b16 %v2720, %v2719
    %v2736 = vpack.c.b16 %v2722, %v2721
    %v2737 = vpack.c.b16 %v2724, %v2723
    %v2738 = vpack.c.b16 %v2726, %v2725
    %v2739 = vpack.c.b16 %v2728, %v2727
    %v2740 = vpack.c.b16 %v2730, %v2729
    %v2741 = vpack.c.b16 %v2732, %v2731
    %v2742 = vpack.c.b16 %v2734, %v2733
    %v2747 = vunpack.c.l.b16 %v2715
    %v2748 = vunpack.c.l.b16 %v2716
    %v2749 = vunpack.c.l.b16 %v2717
    %v2750 = vunpack.c.l.b16 %v2718
    %v2751 = vpack.c.b16 %v2748, %v2747
    %v2752 = vpack.c.b16 %v2750, %v2749
    %v2756 = vsel %vm190, %v2735, 0
    %v2759 = vsel %vm190, %v2736, 0
    %v2762 = vsel %vm190, %v2737, 0
    %v2765 = vsel %vm190, %v2738, 0
    %v2768 = vsel %vm190, %v2739, 0
    %v2771 = vsel %vm190, %v2740, 0
    %v2774 = vsel %vm190, %v2741, 0
    %v2777 = vsel %vm190, %v2742, 0
    %2779 = vmatprep.subr.bf16.mxu0 0
    %2780 = vmatpush1.bf16.msra.mxu0 0
    %2781 = vmatprep.subr.bf16.mxu0 0
    %2782 = vmatpush1.bf16.msra.mxu0 0
    %2783 = vmatprep.subr.bf16.mxu0 0
    %2784 = vmatpush1.bf16.msra.mxu0 0
    %2785 = vmatprep.subr.bf16.mxu0 0
    %2786 = vmatpush1.bf16.msra.mxu0 0
    %2787 = vmatprep.subr.bf16.mxu0 0
    %2788 = vmatpush1.bf16.msra.mxu0 0
    %2789 = vmatprep.subr.bf16.mxu0 0
    %2790 = vmatpush1.bf16.msra.mxu0 0
    %2791 = vmatprep.subr.bf16.mxu0 0
    %2792 = vmatpush1.bf16.msra.mxu0 %v2752
    %2793 = vmatprep.subr.bf16.mxu0 0
    %2794 = vmatpush1.bf16.msra.mxu0 %v2751
    %2795 = vmatprep.subr.bf16.mxu0 0
    %2796 = vmatpush2.bf16.msra.mxu0 0
    %2797 = vmatprep.subr.bf16.mxu0 0
    %2798 = vmatpush2.bf16.msra.mxu0 0
    %2799 = vmatprep.subr.bf16.mxu0 0
    %2800 = vmatpush2.bf16.msra.mxu0 0
    %2801 = vmatprep.subr.bf16.mxu0 0
    %2802 = vmatpush2.bf16.msra.mxu0 0
    %2803 = vmatprep.subr.bf16.mxu0 0
    %2804 = vmatpush2.bf16.msra.mxu0 0
    %2805 = vmatprep.subr.bf16.mxu0 0
    %2806 = vmatpush2.bf16.msra.mxu0 0
    %2807 = vmatprep.subr.bf16.mxu0 0
    %2808 = vmatpush2.bf16.msra.mxu0 0
    %2809 = vmatprep.subr.bf16.mxu0 0
    %2810 = vmatpush2.bf16.msra.mxu0 0
    %2811 = vmatprep.mubr.bf16.mxu0 0
    %2812 = vmatmul.mubr.bf16.gmra.mxu0 %v2756
    %v2813 = vpop.f32.mrf.mxu0
    %v2814 = vadd.f32 0.0, %v2813
    %v2815 = vpop.f32.mrf.mxu0
    %v2816 = vpop.f32.mrf.mxu0
    %v2817 = vadd.f32 0.0, %v2816
    %v2818 = vpop.f32.mrf.mxu0
    %2819 = vmatprep.mubr.bf16.mxu0 0
    %2820 = vmatmul.mubr.bf16.gmra.mxu0 %v2759
    %v2821 = vpop.f32.mrf.mxu0
    %v2822 = vadd.f32 0.0, %v2821
    %v2823 = vpop.f32.mrf.mxu0
    %v2824 = vpop.f32.mrf.mxu0
    %v2825 = vadd.f32 0.0, %v2824
    %v2826 = vpop.f32.mrf.mxu0
    %2827 = vmatprep.mubr.bf16.mxu0 0
    %2828 = vmatmul.mubr.bf16.gmra.mxu0 %v2762
    %v2829 = vpop.f32.mrf.mxu0
    %v2830 = vadd.f32 0.0, %v2829
    %v2831 = vpop.f32.mrf.mxu0
    %v2832 = vpop.f32.mrf.mxu0
    %v2833 = vadd.f32 0.0, %v2832
    %v2834 = vpop.f32.mrf.mxu0
    %2835 = vmatprep.mubr.bf16.mxu0 0
    %2836 = vmatmul.mubr.bf16.gmra.mxu0 %v2765
    %v2837 = vpop.f32.mrf.mxu0
    %v2838 = vadd.f32 0.0, %v2837
    %v2839 = vpop.f32.mrf.mxu0
    %v2840 = vpop.f32.mrf.mxu0
    %v2841 = vadd.f32 0.0, %v2840
    %v2842 = vpop.f32.mrf.mxu0
    %2843 = vmatprep.mubr.bf16.mxu0 0
    %2844 = vmatmul.mubr.bf16.gmra.mxu0 %v2768
    %v2845 = vpop.f32.mrf.mxu0
    %v2846 = vadd.f32 0.0, %v2845
    %v2847 = vpop.f32.mrf.mxu0
    %v2848 = vpop.f32.mrf.mxu0
    %v2849 = vadd.f32 0.0, %v2848
    %v2850 = vpop.f32.mrf.mxu0
    %2851 = vmatprep.mubr.bf16.mxu0 0
    %2852 = vmatmul.mubr.bf16.gmra.mxu0 %v2771
    %v2853 = vpop.f32.mrf.mxu0
    %v2854 = vadd.f32 0.0, %v2853
    %v2855 = vpop.f32.mrf.mxu0
    %v2856 = vpop.f32.mrf.mxu0
    %v2857 = vadd.f32 0.0, %v2856
    %v2858 = vpop.f32.mrf.mxu0
    %2859 = vmatprep.mubr.bf16.mxu0 0
    %2860 = vmatmul.mubr.bf16.gmra.mxu0 %v2774
    %v2861 = vpop.f32.mrf.mxu0
    %v2862 = vadd.f32 0.0, %v2861
    %v2863 = vpop.f32.mrf.mxu0
    %v2864 = vpop.f32.mrf.mxu0
    %v2865 = vadd.f32 0.0, %v2864
    %v2866 = vpop.f32.mrf.mxu0
    %2867 = vmatprep.mubr.bf16.mxu0 0
    %2868 = vmatmul.mubr.bf16.gmra.mxu0 %v2777
    %v2869 = vpop.f32.mrf.mxu0
    %v2870 = vadd.f32 0.0, %v2869
    %v2871 = vpop.f32.mrf.mxu0
    %v2872 = vpop.f32.mrf.mxu0
    %v2873 = vadd.f32 0.0, %v2872
    %v2874 = vpop.f32.mrf.mxu0
    %2875 = vdwg.mxu0
    %v2876 = vadd.f32 %v2587, %v2814
    %v2877 = vadd.f32 %v2588, %v2817
    %v2878 = vadd.f32 %v2589, %v2822
    %v2879 = vadd.f32 %v2590, %v2825
    %v2880 = vadd.f32 %v2591, %v2830
    %v2881 = vadd.f32 %v2592, %v2833
    %v2882 = vadd.f32 %v2593, %v2838
    %v2883 = vadd.f32 %v2594, %v2841
    %v2884 = vadd.f32 %v2595, %v2846
    %v2885 = vadd.f32 %v2596, %v2849
    %v2886 = vadd.f32 %v2597, %v2854
    %v2887 = vadd.f32 %v2598, %v2857
    %v2888 = vadd.f32 %v2599, %v2862
    %v2889 = vadd.f32 %v2600, %v2865
    %v2890 = vadd.f32 %v2601, %v2870
    %v2891 = vadd.f32 %v2602, %v2873
    %v2892 = vld [vmem:[%s956 + $0x4] sm:$0x3]
    %v2893 = vld [vmem:[%s956 + $0xc] sm:$0x3]
    %v2894 = vld [vmem:[%s956 + $0x14] sm:$0x3]
    %v2895 = vld [vmem:[%s956 + $0x1c] sm:$0x3]
    %v2896 = vld [vmem:[%s956 + $0x24] sm:$0x3]
    %v2897 = vld [vmem:[%s956 + $0x2c] sm:$0x3]
    %v2898 = vld [vmem:[%s956 + $0x34] sm:$0x3]
    %v2899 = vld [vmem:[%s956 + $0x3c] sm:$0x3]
    %v2900 = vld [vmem:[%s956 + $0x54] sm:$0x3]
    %v2901 = vld [vmem:[%s956 + $0x5c] sm:$0x3]
    %v2902 = vld [vmem:[%s956 + $0x64] sm:$0x3]
    %v2903 = vld [vmem:[%s956 + $0x6c] sm:$0x3]
    %v2904 = vld [vmem:[%s956 + $0x74] sm:$0x3]
    %v2905 = vld [vmem:[%s956 + $0x7c] sm:$0x3]
    %v2906 = vld [vmem:[%s956 + $0x84] sm:$0x3]
    %v2907 = vld [vmem:[%s956 + $0x8c] sm:$0x3]
    %v2909 = vshrl.u32 %v2603, 16
    %v2911 = vrot.slane %v2909, 5
    %v2912 = vshll.u32 %v2603, 16
    %v2914 = vrot.slane %v2912, 6
    %v2915 = vor.u32 %v2911, %v2914
    %v2916 = vrot.slane %v2915, 4
    %v2918 = vshrl.u32 %v2892, 16
    %v2920 = vrot.slane %v2918, 5
    %v2921 = vshll.u32 %v2892, 16
    %v2923 = vrot.slane %v2921, 6
    %v2924 = vor.u32 %v2920, %v2923
    %v2925 = vsel %vm1704, %v2916, %v2924
    %v2927 = vshrl.u32 %v2604, 16
    %v2929 = vrot.slane %v2927, 5
    %v2930 = vshll.u32 %v2604, 16
    %v2932 = vrot.slane %v2930, 6
    %v2933 = vor.u32 %v2929, %v2932
    %v2934 = vrot.slane %v2933, 4
    %v2936 = vshrl.u32 %v2893, 16
    %v2938 = vrot.slane %v2936, 5
    %v2939 = vshll.u32 %v2893, 16
    %v2941 = vrot.slane %v2939, 6
    %v2942 = vor.u32 %v2938, %v2941
    %v2943 = vsel %vm1704, %v2934, %v2942
    %v2945 = vshrl.u32 %v2605, 16
    %v2947 = vrot.slane %v2945, 5
    %v2948 = vshll.u32 %v2605, 16
    %v2950 = vrot.slane %v2948, 6
    %v2951 = vor.u32 %v2947, %v2950
    %v2952 = vrot.slane %v2951, 4
    %v2954 = vshrl.u32 %v2894, 16
    %v2956 = vrot.slane %v2954, 5
    %v2957 = vshll.u32 %v2894, 16
    %v2959 = vrot.slane %v2957, 6
    %v2960 = vor.u32 %v2956, %v2959
    %v2961 = vsel %vm1704, %v2952, %v2960
    %v2963 = vshrl.u32 %v2606, 16
    %v2965 = vrot.slane %v2963, 5
    %v2966 = vshll.u32 %v2606, 16
    %v2968 = vrot.slane %v2966, 6
    %v2969 = vor.u32 %v2965, %v2968
    %v2970 = vrot.slane %v2969, 4
    %v2972 = vshrl.u32 %v2895, 16
    %v2974 = vrot.slane %v2972, 5
    %v2975 = vshll.u32 %v2895, 16
    %v2977 = vrot.slane %v2975, 6
    %v2978 = vor.u32 %v2974, %v2977
    %v2979 = vsel %vm1704, %v2970, %v2978
    %v2981 = vshrl.u32 %v2607, 16
    %v2983 = vrot.slane %v2981, 5
    %v2984 = vshll.u32 %v2607, 16
    %v2986 = vrot.slane %v2984, 6
    %v2987 = vor.u32 %v2983, %v2986
    %v2988 = vrot.slane %v2987, 4
    %v2990 = vshrl.u32 %v2896, 16
    %v2992 = vrot.slane %v2990, 5
    %v2993 = vshll.u32 %v2896, 16
    %v2995 = vrot.slane %v2993, 6
    %v2996 = vor.u32 %v2992, %v2995
    %v2997 = vsel %vm1704, %v2988, %v2996
    %v2999 = vshrl.u32 %v2608, 16
    %v3001 = vrot.slane %v2999, 5
    %v3002 = vshll.u32 %v2608, 16
    %v3004 = vrot.slane %v3002, 6
    %v3005 = vor.u32 %v3001, %v3004
    %v3006 = vrot.slane %v3005, 4
    %v3008 = vshrl.u32 %v2897, 16
    %v3010 = vrot.slane %v3008, 5
    %v3011 = vshll.u32 %v2897, 16
    %v3013 = vrot.slane %v3011, 6
    %v3014 = vor.u32 %v3010, %v3013
    %v3015 = vsel %vm1704, %v3006, %v3014
    %v3017 = vshrl.u32 %v2609, 16
    %v3019 = vrot.slane %v3017, 5
    %v3020 = vshll.u32 %v2609, 16
    %v3022 = vrot.slane %v3020, 6
    %v3023 = vor.u32 %v3019, %v3022
    %v3024 = vrot.slane %v3023, 4
    %v3026 = vshrl.u32 %v2898, 16
    %v3028 = vrot.slane %v3026, 5
    %v3029 = vshll.u32 %v2898, 16
    %v3031 = vrot.slane %v3029, 6
    %v3032 = vor.u32 %v3028, %v3031
    %v3033 = vsel %vm1704, %v3024, %v3032
    %v3035 = vshrl.u32 %v2610, 16
    %v3037 = vrot.slane %v3035, 5
    %v3038 = vshll.u32 %v2610, 16
    %v3040 = vrot.slane %v3038, 6
    %v3041 = vor.u32 %v3037, %v3040
    %v3042 = vrot.slane %v3041, 4
    %v3044 = vshrl.u32 %v2899, 16
    %v3046 = vrot.slane %v3044, 5
    %v3047 = vshll.u32 %v2899, 16
    %v3049 = vrot.slane %v3047, 6
    %v3050 = vor.u32 %v3046, %v3049
    %v3051 = vsel %vm1704, %v3042, %v3050
    %v3053 = vshrl.u32 %v2611, 16
    %v3055 = vrot.slane %v3053, 5
    %v3056 = vshll.u32 %v2611, 16
    %v3058 = vrot.slane %v3056, 6
    %v3059 = vor.u32 %v3055, %v3058
    %v3060 = vrot.slane %v3059, 4
    %v3062 = vshrl.u32 %v2900, 16
    %v3064 = vrot.slane %v3062, 5
    %v3065 = vshll.u32 %v2900, 16
    %v3067 = vrot.slane %v3065, 6
    %v3068 = vor.u32 %v3064, %v3067
    %v3069 = vsel %vm1704, %v3060, %v3068
    %v3071 = vshrl.u32 %v2612, 16
    %v3073 = vrot.slane %v3071, 5
    %v3074 = vshll.u32 %v2612, 16
    %v3076 = vrot.slane %v3074, 6
    %v3077 = vor.u32 %v3073, %v3076
    %v3078 = vrot.slane %v3077, 4
    %v3080 = vshrl.u32 %v2901, 16
    %v3082 = vrot.slane %v3080, 5
    %v3083 = vshll.u32 %v2901, 16
    %v3085 = vrot.slane %v3083, 6
    %v3086 = vor.u32 %v3082, %v3085
    %v3087 = vsel %vm1704, %v3078, %v3086
    %v3089 = vshrl.u32 %v2613, 16
    %v3091 = vrot.slane %v3089, 5
    %v3092 = vshll.u32 %v2613, 16
    %v3094 = vrot.slane %v3092, 6
    %v3095 = vor.u32 %v3091, %v3094
    %v3096 = vrot.slane %v3095, 4
    %v3098 = vshrl.u32 %v2902, 16
    %v3100 = vrot.slane %v3098, 5
    %v3101 = vshll.u32 %v2902, 16
    %v3103 = vrot.slane %v3101, 6
    %v3104 = vor.u32 %v3100, %v3103
    %v3105 = vsel %vm1704, %v3096, %v3104
    %v3107 = vshrl.u32 %v2614, 16
    %v3109 = vrot.slane %v3107, 5
    %v3110 = vshll.u32 %v2614, 16
    %v3112 = vrot.slane %v3110, 6
    %v3113 = vor.u32 %v3109, %v3112
    %v3114 = vrot.slane %v3113, 4
    %v3116 = vshrl.u32 %v2903, 16
    %v3118 = vrot.slane %v3116, 5
    %v3119 = vshll.u32 %v2903, 16
    %v3121 = vrot.slane %v3119, 6
    %v3122 = vor.u32 %v3118, %v3121
    %v3123 = vsel %vm1704, %v3114, %v3122
    %v3125 = vshrl.u32 %v2615, 16
    %v3127 = vrot.slane %v3125, 5
    %v3128 = vshll.u32 %v2615, 16
    %v3130 = vrot.slane %v3128, 6
    %v3131 = vor.u32 %v3127, %v3130
    %v3132 = vrot.slane %v3131, 4
    %v3134 = vshrl.u32 %v2904, 16
    %v3136 = vrot.slane %v3134, 5
    %v3137 = vshll.u32 %v2904, 16
    %v3139 = vrot.slane %v3137, 6
    %v3140 = vor.u32 %v3136, %v3139
    %v3141 = vsel %vm1704, %v3132, %v3140
    %v3143 = vshrl.u32 %v2616, 16
    %v3145 = vrot.slane %v3143, 5
    %v3146 = vshll.u32 %v2616, 16
    %v3148 = vrot.slane %v3146, 6
    %v3149 = vor.u32 %v3145, %v3148
    %v3150 = vrot.slane %v3149, 4
    %v3152 = vshrl.u32 %v2905, 16
    %v3154 = vrot.slane %v3152, 5
    %v3155 = vshll.u32 %v2905, 16
    %v3157 = vrot.slane %v3155, 6
    %v3158 = vor.u32 %v3154, %v3157
    %v3159 = vsel %vm1704, %v3150, %v3158
    %v3161 = vshrl.u32 %v2617, 16
    %v3163 = vrot.slane %v3161, 5
    %v3164 = vshll.u32 %v2617, 16
    %v3166 = vrot.slane %v3164, 6
    %v3167 = vor.u32 %v3163, %v3166
    %v3168 = vrot.slane %v3167, 4
    %v3170 = vshrl.u32 %v2906, 16
    %v3172 = vrot.slane %v3170, 5
    %v3173 = vshll.u32 %v2906, 16
    %v3175 = vrot.slane %v3173, 6
    %v3176 = vor.u32 %v3172, %v3175
    %v3177 = vsel %vm1704, %v3168, %v3176
    %v3179 = vshrl.u32 %v2618, 16
    %v3181 = vrot.slane %v3179, 5
    %v3182 = vshll.u32 %v2618, 16
    %v3184 = vrot.slane %v3182, 6
    %v3185 = vor.u32 %v3181, %v3184
    %v3186 = vrot.slane %v3185, 4
    %v3188 = vshrl.u32 %v2907, 16
    %v3190 = vrot.slane %v3188, 5
    %v3191 = vshll.u32 %v2907, 16
    %v3193 = vrot.slane %v3191, 6
    %v3194 = vor.u32 %v3190, %v3193
    %v3195 = vsel %vm1704, %v3186, %v3194
    %v3196 = vld [vmem:[%s6 + $0x50] sm:$0xf]
    %v3197 = vld [vmem:[%s6 + $0x54] sm:$0xf]
    %v3198 = vld [vmem:[%s6 + $0x58] sm:$0xf]
    %v3199 = vld [vmem:[%s6 + $0x5c] sm:$0xf]
    %v3200 = vunpack.c.l.b16 %v2925
    %v3201 = vunpack.c.l.b16 %v2943
    %v3202 = vunpack.c.l.b16 %v2961
    %v3203 = vunpack.c.l.b16 %v2979
    %v3204 = vunpack.c.l.b16 %v2997
    %v3205 = vunpack.c.l.b16 %v3015
    %v3206 = vunpack.c.l.b16 %v3033
    %v3207 = vunpack.c.l.b16 %v3051
    %v3208 = vunpack.c.l.b16 %v3069
    %v3209 = vunpack.c.l.b16 %v3087
    %v3210 = vunpack.c.l.b16 %v3105
    %v3211 = vunpack.c.l.b16 %v3123
    %v3212 = vunpack.c.l.b16 %v3141
    %v3213 = vunpack.c.l.b16 %v3159
    %v3214 = vunpack.c.l.b16 %v3177
    %v3215 = vunpack.c.l.b16 %v3195
    %v3216 = vpack.c.b16 %v3201, %v3200
    %v3217 = vpack.c.b16 %v3203, %v3202
    %v3218 = vpack.c.b16 %v3205, %v3204
    %v3219 = vpack.c.b16 %v3207, %v3206
    %v3220 = vpack.c.b16 %v3209, %v3208
    %v3221 = vpack.c.b16 %v3211, %v3210
    %v3222 = vpack.c.b16 %v3213, %v3212
    %v3223 = vpack.c.b16 %v3215, %v3214
    %v3228 = vunpack.c.l.b16 %v3196
    %v3229 = vunpack.c.l.b16 %v3197
    %v3230 = vunpack.c.l.b16 %v3198
    %v3231 = vunpack.c.l.b16 %v3199
    %v3232 = vpack.c.b16 %v3229, %v3228
    %v3233 = vpack.c.b16 %v3231, %v3230
    %v3237 = vsel %vm190, %v3216, 0
    %v3240 = vsel %vm190, %v3217, 0
    %v3243 = vsel %vm190, %v3218, 0
    %v3246 = vsel %vm190, %v3219, 0
    %v3249 = vsel %vm190, %v3220, 0
    %v3252 = vsel %vm190, %v3221, 0
    %v3255 = vsel %vm190, %v3222, 0
    %v3258 = vsel %vm190, %v3223, 0
    %3260 = vmatprep.subr.bf16.mxu0 0
    %3261 = vmatpush1.bf16.msra.mxu0 0
    %3262 = vmatprep.subr.bf16.mxu0 0
    %3263 = vmatpush1.bf16.msra.mxu0 0
    %3264 = vmatprep.subr.bf16.mxu0 0
    %3265 = vmatpush1.bf16.msra.mxu0 0
    %3266 = vmatprep.subr.bf16.mxu0 0
    %3267 = vmatpush1.bf16.msra.mxu0 0
    %3268 = vmatprep.subr.bf16.mxu0 0
    %3269 = vmatpush1.bf16.msra.mxu0 0
    %3270 = vmatprep.subr.bf16.mxu0 0
    %3271 = vmatpush1.bf16.msra.mxu0 0
    %3272 = vmatprep.subr.bf16.mxu0 0
    %3273 = vmatpush1.bf16.msra.mxu0 %v3233
    %3274 = vmatprep.subr.bf16.mxu0 0
    %3275 = vmatpush1.bf16.msra.mxu0 %v3232
    %3276 = vmatprep.subr.bf16.mxu0 0
    %3277 = vmatpush2.bf16.msra.mxu0 0
    %3278 = vmatprep.subr.bf16.mxu0 0
    %3279 = vmatpush2.bf16.msra.mxu0 0
    %3280 = vmatprep.subr.bf16.mxu0 0
    %3281 = vmatpush2.bf16.msra.mxu0 0
    %3282 = vmatprep.subr.bf16.mxu0 0
    %3283 = vmatpush2.bf16.msra.mxu0 0
    %3284 = vmatprep.subr.bf16.mxu0 0
    %3285 = vmatpush2.bf16.msra.mxu0 0
    %3286 = vmatprep.subr.bf16.mxu0 0
    %3287 = vmatpush2.bf16.msra.mxu0 0
    %3288 = vmatprep.subr.bf16.mxu0 0
    %3289 = vmatpush2.bf16.msra.mxu0 0
    %3290 = vmatprep.subr.bf16.mxu0 0
    %3291 = vmatpush2.bf16.msra.mxu0 0
    %3292 = vmatprep.mubr.bf16.mxu0 0
    %3293 = vmatmul.mubr.bf16.gmra.mxu0 %v3237
    %v3294 = vpop.f32.mrf.mxu0
    %v3295 = vadd.f32 0.0, %v3294
    %v3296 = vpop.f32.mrf.mxu0
    %v3297 = vpop.f32.mrf.mxu0
    %v3298 = vadd.f32 0.0, %v3297
    %v3299 = vpop.f32.mrf.mxu0
    %3300 = vmatprep.mubr.bf16.mxu0 0
    %3301 = vmatmul.mubr.bf16.gmra.mxu0 %v3240
    %v3302 = vpop.f32.mrf.mxu0
    %v3303 = vadd.f32 0.0, %v3302
    %v3304 = vpop.f32.mrf.mxu0
    %v3305 = vpop.f32.mrf.mxu0
    %v3306 = vadd.f32 0.0, %v3305
    %v3307 = vpop.f32.mrf.mxu0
    %3308 = vmatprep.mubr.bf16.mxu0 0
    %3309 = vmatmul.mubr.bf16.gmra.mxu0 %v3243
    %v3310 = vpop.f32.mrf.mxu0
    %v3311 = vadd.f32 0.0, %v3310
    %v3312 = vpop.f32.mrf.mxu0
    %v3313 = vpop.f32.mrf.mxu0
    %v3314 = vadd.f32 0.0, %v3313
    %v3315 = vpop.f32.mrf.mxu0
    %3316 = vmatprep.mubr.bf16.mxu0 0
    %3317 = vmatmul.mubr.bf16.gmra.mxu0 %v3246
    %v3318 = vpop.f32.mrf.mxu0
    %v3319 = vadd.f32 0.0, %v3318
    %v3320 = vpop.f32.mrf.mxu0
    %v3321 = vpop.f32.mrf.mxu0
    %v3322 = vadd.f32 0.0, %v3321
    %v3323 = vpop.f32.mrf.mxu0
    %3324 = vmatprep.mubr.bf16.mxu0 0
    %3325 = vmatmul.mubr.bf16.gmra.mxu0 %v3249
    %v3326 = vpop.f32.mrf.mxu0
    %v3327 = vadd.f32 0.0, %v3326
    %v3328 = vpop.f32.mrf.mxu0
    %v3329 = vpop.f32.mrf.mxu0
    %v3330 = vadd.f32 0.0, %v3329
    %v3331 = vpop.f32.mrf.mxu0
    %3332 = vmatprep.mubr.bf16.mxu0 0
    %3333 = vmatmul.mubr.bf16.gmra.mxu0 %v3252
    %v3334 = vpop.f32.mrf.mxu0
    %v3335 = vadd.f32 0.0, %v3334
    %v3336 = vpop.f32.mrf.mxu0
    %v3337 = vpop.f32.mrf.mxu0
    %v3338 = vadd.f32 0.0, %v3337
    %v3339 = vpop.f32.mrf.mxu0
    %3340 = vmatprep.mubr.bf16.mxu0 0
    %3341 = vmatmul.mubr.bf16.gmra.mxu0 %v3255
    %v3342 = vpop.f32.mrf.mxu0
    %v3343 = vadd.f32 0.0, %v3342
    %v3344 = vpop.f32.mrf.mxu0
    %v3345 = vpop.f32.mrf.mxu0
    %v3346 = vadd.f32 0.0, %v3345
    %v3347 = vpop.f32.mrf.mxu0
    %3348 = vmatprep.mubr.bf16.mxu0 0
    %3349 = vmatmul.mubr.bf16.gmra.mxu0 %v3258
    %v3350 = vpop.f32.mrf.mxu0
    %v3351 = vadd.f32 0.0, %v3350
    %v3352 = vpop.f32.mrf.mxu0
    %v3353 = vpop.f32.mrf.mxu0
    %v3354 = vadd.f32 0.0, %v3353
    %v3355 = vpop.f32.mrf.mxu0
    %3356 = vdwg.mxu0
    %v3357 = vadd.f32 %v2876, %v3295
    %v3358 = vadd.f32 %v2877, %v3298
    %v3359 = vadd.f32 %v2878, %v3303
    %v3360 = vadd.f32 %v2879, %v3306
    %v3361 = vadd.f32 %v2880, %v3311
    %v3362 = vadd.f32 %v2881, %v3314
    %v3363 = vadd.f32 %v2882, %v3319
    %v3364 = vadd.f32 %v2883, %v3322
    %v3365 = vadd.f32 %v2884, %v3327
    %v3366 = vadd.f32 %v2885, %v3330
    %v3367 = vadd.f32 %v2886, %v3335
    %v3368 = vadd.f32 %v2887, %v3338
    %v3369 = vadd.f32 %v2888, %v3343
    %v3370 = vadd.f32 %v2889, %v3346
    %v3371 = vadd.f32 %v2890, %v3351
    %v3372 = vadd.f32 %v2891, %v3354
    %s3373 = scalar_lea.vmem [#allocation2], 16
    %v3374 = vld [vmem:[%s3373] sm:$0xf]
    %v3375 = vld [vmem:[%s3373 + $0x4] sm:$0x1]
    %v3376 = vld [vmem:[%s3373 + $0x8] sm:$0xf]
    %v3377 = vld [vmem:[%s3373 + $0xc] sm:$0x1]
    %v3378 = vld [vmem:[%s3373 + $0x10] sm:$0xf]
    %v3379 = vld [vmem:[%s3373 + $0x14] sm:$0x1]
    %v3380 = vld [vmem:[%s3373 + $0x18] sm:$0xf]
    %v3381 = vld [vmem:[%s3373 + $0x1c] sm:$0x1]
    %v3382 = vld [vmem:[%s3373 + $0x20] sm:$0xf]
    %v3383 = vld [vmem:[%s3373 + $0x24] sm:$0x1]
    %v3384 = vld [vmem:[%s3373 + $0x28] sm:$0xf]
    %v3385 = vld [vmem:[%s3373 + $0x2c] sm:$0x1]
    %v3386 = vld [vmem:[%s3373 + $0x30] sm:$0xf]
    %v3387 = vld [vmem:[%s3373 + $0x34] sm:$0x1]
    %v3388 = vld [vmem:[%s3373 + $0x38] sm:$0xf]
    %v3389 = vld [vmem:[%s3373 + $0x3c] sm:$0x1]
    %v3390 = vld [vmem:[%s3373 + $0x50] sm:$0xf]
    %v3391 = vld [vmem:[%s3373 + $0x54] sm:$0x1]
    %v3392 = vld [vmem:[%s3373 + $0x58] sm:$0xf]
    %v3393 = vld [vmem:[%s3373 + $0x5c] sm:$0x1]
    %v3394 = vld [vmem:[%s3373 + $0x60] sm:$0xf]
    %v3395 = vld [vmem:[%s3373 + $0x64] sm:$0x1]
    %v3396 = vld [vmem:[%s3373 + $0x68] sm:$0xf]
    %v3397 = vld [vmem:[%s3373 + $0x6c] sm:$0x1]
    %v3398 = vld [vmem:[%s3373 + $0x70] sm:$0xf]
    %v3399 = vld [vmem:[%s3373 + $0x74] sm:$0x1]
    %v3400 = vld [vmem:[%s3373 + $0x78] sm:$0xf]
    %v3401 = vld [vmem:[%s3373 + $0x7c] sm:$0x1]
    %v3402 = vld [vmem:[%s3373 + $0x80] sm:$0xf]
    %v3403 = vld [vmem:[%s3373 + $0x84] sm:$0x1]
    %v3404 = vld [vmem:[%s3373 + $0x88] sm:$0xf]
    %v3405 = vld [vmem:[%s3373 + $0x8c] sm:$0x1]
    %v3407 = vshrl.u32 %v3374, 16
    %v3409 = vrot.slane %v3407, 4
    %v3410 = vshll.u32 %v3374, 16
    %v3412 = vrot.slane %v3410, 5
    %v3413 = vor.u32 %v3409, %v3412
    %v3414 = vrot.slane %v3413, 4
    %v3416 = vshll.u32 %v3375, 16
    %v3418 = vrot.slane %v3416, 5
    %v3419 = vsel %vm1024, %v3414, %v3418
    %v3421 = vshrl.u32 %v3376, 16
    %v3423 = vrot.slane %v3421, 4
    %v3424 = vshll.u32 %v3376, 16
    %v3426 = vrot.slane %v3424, 5
    %v3427 = vor.u32 %v3423, %v3426
    %v3428 = vrot.slane %v3427, 4
    %v3430 = vshll.u32 %v3377, 16
    %v3432 = vrot.slane %v3430, 5
    %v3433 = vsel %vm1024, %v3428, %v3432
    %v3435 = vshrl.u32 %v3378, 16
    %v3437 = vrot.slane %v3435, 4
    %v3438 = vshll.u32 %v3378, 16
    %v3440 = vrot.slane %v3438, 5
    %v3441 = vor.u32 %v3437, %v3440
    %v3442 = vrot.slane %v3441, 4
    %v3444 = vshll.u32 %v3379, 16
    %v3446 = vrot.slane %v3444, 5
    %v3447 = vsel %vm1024, %v3442, %v3446
    %v3449 = vshrl.u32 %v3380, 16
    %v3451 = vrot.slane %v3449, 4
    %v3452 = vshll.u32 %v3380, 16
    %v3454 = vrot.slane %v3452, 5
    %v3455 = vor.u32 %v3451, %v3454
    %v3456 = vrot.slane %v3455, 4
    %v3458 = vshll.u32 %v3381, 16
    %v3460 = vrot.slane %v3458, 5
    %v3461 = vsel %vm1024, %v3456, %v3460
    %v3463 = vshrl.u32 %v3382, 16
    %v3465 = vrot.slane %v3463, 4
    %v3466 = vshll.u32 %v3382, 16
    %v3468 = vrot.slane %v3466, 5
    %v3469 = vor.u32 %v3465, %v3468
    %v3470 = vrot.slane %v3469, 4
    %v3472 = vshll.u32 %v3383, 16
    %v3474 = vrot.slane %v3472, 5
    %v3475 = vsel %vm1024, %v3470, %v3474
    %v3477 = vshrl.u32 %v3384, 16
    %v3479 = vrot.slane %v3477, 4
    %v3480 = vshll.u32 %v3384, 16
    %v3482 = vrot.slane %v3480, 5
    %v3483 = vor.u32 %v3479, %v3482
    %v3484 = vrot.slane %v3483, 4
    %v3486 = vshll.u32 %v3385, 16
    %v3488 = vrot.slane %v3486, 5
    %v3489 = vsel %vm1024, %v3484, %v3488
    %v3491 = vshrl.u32 %v3386, 16
    %v3493 = vrot.slane %v3491, 4
    %v3494 = vshll.u32 %v3386, 16
    %v3496 = vrot.slane %v3494, 5
    %v3497 = vor.u32 %v3493, %v3496
    %v3498 = vrot.slane %v3497, 4
    %v3500 = vshll.u32 %v3387, 16
    %v3502 = vrot.slane %v3500, 5
    %v3503 = vsel %vm1024, %v3498, %v3502
    %v3505 = vshrl.u32 %v3388, 16
    %v3507 = vrot.slane %v3505, 4
    %v3508 = vshll.u32 %v3388, 16
    %v3510 = vrot.slane %v3508, 5
    %v3511 = vor.u32 %v3507, %v3510
    %v3512 = vrot.slane %v3511, 4
    %v3514 = vshll.u32 %v3389, 16
    %v3516 = vrot.slane %v3514, 5
    %v3517 = vsel %vm1024, %v3512, %v3516
    %v3519 = vshrl.u32 %v3390, 16
    %v3521 = vrot.slane %v3519, 4
    %v3522 = vshll.u32 %v3390, 16
    %v3524 = vrot.slane %v3522, 5
    %v3525 = vor.u32 %v3521, %v3524
    %v3526 = vrot.slane %v3525, 4
    %v3528 = vshll.u32 %v3391, 16
    %v3530 = vrot.slane %v3528, 5
    %v3531 = vsel %vm1024, %v3526, %v3530
    %v3533 = vshrl.u32 %v3392, 16
    %v3535 = vrot.slane %v3533, 4
    %v3536 = vshll.u32 %v3392, 16
    %v3538 = vrot.slane %v3536, 5
    %v3539 = vor.u32 %v3535, %v3538
    %v3540 = vrot.slane %v3539, 4
    %v3542 = vshll.u32 %v3393, 16
    %v3544 = vrot.slane %v3542, 5
    %v3545 = vsel %vm1024, %v3540, %v3544
    %v3547 = vshrl.u32 %v3394, 16
    %v3549 = vrot.slane %v3547, 4
    %v3550 = vshll.u32 %v3394, 16
    %v3552 = vrot.slane %v3550, 5
    %v3553 = vor.u32 %v3549, %v3552
    %v3554 = vrot.slane %v3553, 4
    %v3556 = vshll.u32 %v3395, 16
    %v3558 = vrot.slane %v3556, 5
    %v3559 = vsel %vm1024, %v3554, %v3558
    %v3561 = vshrl.u32 %v3396, 16
    %v3563 = vrot.slane %v3561, 4
    %v3564 = vshll.u32 %v3396, 16
    %v3566 = vrot.slane %v3564, 5
    %v3567 = vor.u32 %v3563, %v3566
    %v3568 = vrot.slane %v3567, 4
    %v3570 = vshll.u32 %v3397, 16
    %v3572 = vrot.slane %v3570, 5
    %v3573 = vsel %vm1024, %v3568, %v3572
    %v3575 = vshrl.u32 %v3398, 16
    %v3577 = vrot.slane %v3575, 4
    %v3578 = vshll.u32 %v3398, 16
    %v3580 = vrot.slane %v3578, 5
    %v3581 = vor.u32 %v3577, %v3580
    %v3582 = vrot.slane %v3581, 4
    %v3584 = vshll.u32 %v3399, 16
    %v3586 = vrot.slane %v3584, 5
    %v3587 = vsel %vm1024, %v3582, %v3586
    %v3589 = vshrl.u32 %v3400, 16
    %v3591 = vrot.slane %v3589, 4
    %v3592 = vshll.u32 %v3400, 16
    %v3594 = vrot.slane %v3592, 5
    %v3595 = vor.u32 %v3591, %v3594
    %v3596 = vrot.slane %v3595, 4
    %v3598 = vshll.u32 %v3401, 16
    %v3600 = vrot.slane %v3598, 5
    %v3601 = vsel %vm1024, %v3596, %v3600
    %v3603 = vshrl.u32 %v3402, 16
    %v3605 = vrot.slane %v3603, 4
    %v3606 = vshll.u32 %v3402, 16
    %v3608 = vrot.slane %v3606, 5
    %v3609 = vor.u32 %v3605, %v3608
    %v3610 = vrot.slane %v3609, 4
    %v3612 = vshll.u32 %v3403, 16
    %v3614 = vrot.slane %v3612, 5
    %v3615 = vsel %vm1024, %v3610, %v3614
    %v3617 = vshrl.u32 %v3404, 16
    %v3619 = vrot.slane %v3617, 4
    %v3620 = vshll.u32 %v3404, 16
    %v3622 = vrot.slane %v3620, 5
    %v3623 = vor.u32 %v3619, %v3622
    %v3624 = vrot.slane %v3623, 4
    %v3626 = vshll.u32 %v3405, 16
    %v3628 = vrot.slane %v3626, 5
    %v3629 = vsel %vm1024, %v3624, %v3628
    %v3630 = vld [vmem:[%s6 + $0x60] sm:$0xf]
    %v3631 = vld [vmem:[%s6 + $0x64] sm:$0xf]
    %v3632 = vld [vmem:[%s6 + $0x68] sm:$0xf]
    %v3633 = vld [vmem:[%s6 + $0x6c] sm:$0xf]
    %v3634 = vunpack.c.l.b16 %v3419
    %v3635 = vunpack.c.l.b16 %v3433
    %v3636 = vunpack.c.l.b16 %v3447
    %v3637 = vunpack.c.l.b16 %v3461
    %v3638 = vunpack.c.l.b16 %v3475
    %v3639 = vunpack.c.l.b16 %v3489
    %v3640 = vunpack.c.l.b16 %v3503
    %v3641 = vunpack.c.l.b16 %v3517
    %v3642 = vunpack.c.l.b16 %v3531
    %v3643 = vunpack.c.l.b16 %v3545
    %v3644 = vunpack.c.l.b16 %v3559
    %v3645 = vunpack.c.l.b16 %v3573
    %v3646 = vunpack.c.l.b16 %v3587
    %v3647 = vunpack.c.l.b16 %v3601
    %v3648 = vunpack.c.l.b16 %v3615
    %v3649 = vunpack.c.l.b16 %v3629
    %v3650 = vpack.c.b16 %v3635, %v3634
    %v3651 = vpack.c.b16 %v3637, %v3636
    %v3652 = vpack.c.b16 %v3639, %v3638
    %v3653 = vpack.c.b16 %v3641, %v3640
    %v3654 = vpack.c.b16 %v3643, %v3642
    %v3655 = vpack.c.b16 %v3645, %v3644
    %v3656 = vpack.c.b16 %v3647, %v3646
    %v3657 = vpack.c.b16 %v3649, %v3648
    %v3662 = vunpack.c.l.b16 %v3630
    %v3663 = vunpack.c.l.b16 %v3631
    %v3664 = vunpack.c.l.b16 %v3632
    %v3665 = vunpack.c.l.b16 %v3633
    %v3666 = vpack.c.b16 %v3663, %v3662
    %v3667 = vpack.c.b16 %v3665, %v3664
    %v3671 = vsel %vm190, %v3650, 0
    %v3674 = vsel %vm190, %v3651, 0
    %v3677 = vsel %vm190, %v3652, 0
    %v3680 = vsel %vm190, %v3653, 0
    %v3683 = vsel %vm190, %v3654, 0
    %v3686 = vsel %vm190, %v3655, 0
    %v3689 = vsel %vm190, %v3656, 0
    %v3692 = vsel %vm190, %v3657, 0
    %3694 = vmatprep.subr.bf16.mxu0 0
    %3695 = vmatpush1.bf16.msra.mxu0 0
    %3696 = vmatprep.subr.bf16.mxu0 0
    %3697 = vmatpush1.bf16.msra.mxu0 0
    %3698 = vmatprep.subr.bf16.mxu0 0
    %3699 = vmatpush1.bf16.msra.mxu0 0
    %3700 = vmatprep.subr.bf16.mxu0 0
    %3701 = vmatpush1.bf16.msra.mxu0 0
    %3702 = vmatprep.subr.bf16.mxu0 0
    %3703 = vmatpush1.bf16.msra.mxu0 0
    %3704 = vmatprep.subr.bf16.mxu0 0
    %3705 = vmatpush1.bf16.msra.mxu0 0
    %3706 = vmatprep.subr.bf16.mxu0 0
    %3707 = vmatpush1.bf16.msra.mxu0 %v3667
    %3708 = vmatprep.subr.bf16.mxu0 0
    %3709 = vmatpush1.bf16.msra.mxu0 %v3666
    %3710 = vmatprep.subr.bf16.mxu0 0
    %3711 = vmatpush2.bf16.msra.mxu0 0
    %3712 = vmatprep.subr.bf16.mxu0 0
    %3713 = vmatpush2.bf16.msra.mxu0 0
    %3714 = vmatprep.subr.bf16.mxu0 0
    %3715 = vmatpush2.bf16.msra.mxu0 0
    %3716 = vmatprep.subr.bf16.mxu0 0
    %3717 = vmatpush2.bf16.msra.mxu0 0
    %3718 = vmatprep.subr.bf16.mxu0 0
    %3719 = vmatpush2.bf16.msra.mxu0 0
    %3720 = vmatprep.subr.bf16.mxu0 0
    %3721 = vmatpush2.bf16.msra.mxu0 0
    %3722 = vmatprep.subr.bf16.mxu0 0
    %3723 = vmatpush2.bf16.msra.mxu0 0
    %3724 = vmatprep.subr.bf16.mxu0 0
    %3725 = vmatpush2.bf16.msra.mxu0 0
    %3726 = vmatprep.mubr.bf16.mxu0 0
    %3727 = vmatmul.mubr.bf16.gmra.mxu0 %v3671
    %v3728 = vpop.f32.mrf.mxu0
    %v3729 = vadd.f32 0.0, %v3728
    %v3730 = vpop.f32.mrf.mxu0
    %v3731 = vpop.f32.mrf.mxu0
    %v3732 = vadd.f32 0.0, %v3731
    %v3733 = vpop.f32.mrf.mxu0
    %3734 = vmatprep.mubr.bf16.mxu0 0
    %3735 = vmatmul.mubr.bf16.gmra.mxu0 %v3674
    %v3736 = vpop.f32.mrf.mxu0
    %v3737 = vadd.f32 0.0, %v3736
    %v3738 = vpop.f32.mrf.mxu0
    %v3739 = vpop.f32.mrf.mxu0
    %v3740 = vadd.f32 0.0, %v3739
    %v3741 = vpop.f32.mrf.mxu0
    %3742 = vmatprep.mubr.bf16.mxu0 0
    %3743 = vmatmul.mubr.bf16.gmra.mxu0 %v3677
    %v3744 = vpop.f32.mrf.mxu0
    %v3745 = vadd.f32 0.0, %v3744
    %v3746 = vpop.f32.mrf.mxu0
    %v3747 = vpop.f32.mrf.mxu0
    %v3748 = vadd.f32 0.0, %v3747
    %v3749 = vpop.f32.mrf.mxu0
    %3750 = vmatprep.mubr.bf16.mxu0 0
    %3751 = vmatmul.mubr.bf16.gmra.mxu0 %v3680
    %v3752 = vpop.f32.mrf.mxu0
    %v3753 = vadd.f32 0.0, %v3752
    %v3754 = vpop.f32.mrf.mxu0
    %v3755 = vpop.f32.mrf.mxu0
    %v3756 = vadd.f32 0.0, %v3755
    %v3757 = vpop.f32.mrf.mxu0
    %3758 = vmatprep.mubr.bf16.mxu0 0
    %3759 = vmatmul.mubr.bf16.gmra.mxu0 %v3683
    %v3760 = vpop.f32.mrf.mxu0
    %v3761 = vadd.f32 0.0, %v3760
    %v3762 = vpop.f32.mrf.mxu0
    %v3763 = vpop.f32.mrf.mxu0
    %v3764 = vadd.f32 0.0, %v3763
    %v3765 = vpop.f32.mrf.mxu0
    %3766 = vmatprep.mubr.bf16.mxu0 0
    %3767 = vmatmul.mubr.bf16.gmra.mxu0 %v3686
    %v3768 = vpop.f32.mrf.mxu0
    %v3769 = vadd.f32 0.0, %v3768
    %v3770 = vpop.f32.mrf.mxu0
    %v3771 = vpop.f32.mrf.mxu0
    %v3772 = vadd.f32 0.0, %v3771
    %v3773 = vpop.f32.mrf.mxu0
    %3774 = vmatprep.mubr.bf16.mxu0 0
    %3775 = vmatmul.mubr.bf16.gmra.mxu0 %v3689
    %v3776 = vpop.f32.mrf.mxu0
    %v3777 = vadd.f32 0.0, %v3776
    %v3778 = vpop.f32.mrf.mxu0
    %v3779 = vpop.f32.mrf.mxu0
    %v3780 = vadd.f32 0.0, %v3779
    %v3781 = vpop.f32.mrf.mxu0
    %3782 = vmatprep.mubr.bf16.mxu0 0
    %3783 = vmatmul.mubr.bf16.gmra.mxu0 %v3692
    %v3784 = vpop.f32.mrf.mxu0
    %v3785 = vadd.f32 0.0, %v3784
    %v3786 = vpop.f32.mrf.mxu0
    %v3787 = vpop.f32.mrf.mxu0
    %v3788 = vadd.f32 0.0, %v3787
    %v3789 = vpop.f32.mrf.mxu0
    %3790 = vdwg.mxu0
    %v3791 = vadd.f32 %v3357, %v3729
    %v3792 = vadd.f32 %v3358, %v3732
    %v3793 = vadd.f32 %v3359, %v3737
    %v3794 = vadd.f32 %v3360, %v3740
    %v3795 = vadd.f32 %v3361, %v3745
    %v3796 = vadd.f32 %v3362, %v3748
    %v3797 = vadd.f32 %v3363, %v3753
    %v3798 = vadd.f32 %v3364, %v3756
    %v3799 = vadd.f32 %v3365, %v3761
    %v3800 = vadd.f32 %v3366, %v3764
    %v3801 = vadd.f32 %v3367, %v3769
    %v3802 = vadd.f32 %v3368, %v3772
    %v3803 = vadd.f32 %v3369, %v3777
    %v3804 = vadd.f32 %v3370, %v3780
    %v3805 = vadd.f32 %v3371, %v3785
    %v3806 = vadd.f32 %v3372, %v3788
    %v3807 = vld [vmem:[%s3373] sm:$0xe]
    %v3808 = vld [vmem:[%s3373 + $0x8] sm:$0xe]
    %v3809 = vld [vmem:[%s3373 + $0x10] sm:$0xe]
    %v3810 = vld [vmem:[%s3373 + $0x18] sm:$0xe]
    %v3811 = vld [vmem:[%s3373 + $0x20] sm:$0xe]
    %v3812 = vld [vmem:[%s3373 + $0x28] sm:$0xe]
    %v3813 = vld [vmem:[%s3373 + $0x30] sm:$0xe]
    %v3814 = vld [vmem:[%s3373 + $0x38] sm:$0xe]
    %v3815 = vld [vmem:[%s3373 + $0x50] sm:$0xe]
    %v3816 = vld [vmem:[%s3373 + $0x58] sm:$0xe]
    %v3817 = vld [vmem:[%s3373 + $0x60] sm:$0xe]
    %v3818 = vld [vmem:[%s3373 + $0x68] sm:$0xe]
    %v3819 = vld [vmem:[%s3373 + $0x70] sm:$0xe]
    %v3820 = vld [vmem:[%s3373 + $0x78] sm:$0xe]
    %v3821 = vld [vmem:[%s3373 + $0x80] sm:$0xe]
    %v3822 = vld [vmem:[%s3373 + $0x88] sm:$0xe]
    %v3855 = vrot.slane %v3807, 5
    %v3856 = vrot.slane %v3855, 4
    %v3857 = vrot.slane %v3375, 5
    %v3858 = vsel %vm1303, %v3856, %v3857
    %v3859 = vrot.slane %v3808, 5
    %v3860 = vrot.slane %v3859, 4
    %v3861 = vrot.slane %v3377, 5
    %v3862 = vsel %vm1303, %v3860, %v3861
    %v3863 = vrot.slane %v3809, 5
    %v3864 = vrot.slane %v3863, 4
    %v3865 = vrot.slane %v3379, 5
    %v3866 = vsel %vm1303, %v3864, %v3865
    %v3867 = vrot.slane %v3810, 5
    %v3868 = vrot.slane %v3867, 4
    %v3869 = vrot.slane %v3381, 5
    %v3870 = vsel %vm1303, %v3868, %v3869
    %v3871 = vrot.slane %v3811, 5
    %v3872 = vrot.slane %v3871, 4
    %v3873 = vrot.slane %v3383, 5
    %v3874 = vsel %vm1303, %v3872, %v3873
    %v3875 = vrot.slane %v3812, 5
    %v3876 = vrot.slane %v3875, 4
    %v3877 = vrot.slane %v3385, 5
    %v3878 = vsel %vm1303, %v3876, %v3877
    %v3879 = vrot.slane %v3813, 5
    %v3880 = vrot.slane %v3879, 4
    %v3881 = vrot.slane %v3387, 5
    %v3882 = vsel %vm1303, %v3880, %v3881
    %v3883 = vrot.slane %v3814, 5
    %v3884 = vrot.slane %v3883, 4
    %v3885 = vrot.slane %v3389, 5
    %v3886 = vsel %vm1303, %v3884, %v3885
    %v3887 = vrot.slane %v3815, 5
    %v3888 = vrot.slane %v3887, 4
    %v3889 = vrot.slane %v3391, 5
    %v3890 = vsel %vm1303, %v3888, %v3889
    %v3891 = vrot.slane %v3816, 5
    %v3892 = vrot.slane %v3891, 4
    %v3893 = vrot.slane %v3393, 5
    %v3894 = vsel %vm1303, %v3892, %v3893
    %v3895 = vrot.slane %v3817, 5
    %v3896 = vrot.slane %v3895, 4
    %v3897 = vrot.slane %v3395, 5
    %v3898 = vsel %vm1303, %v3896, %v3897
    %v3899 = vrot.slane %v3818, 5
    %v3900 = vrot.slane %v3899, 4
    %v3901 = vrot.slane %v3397, 5
    %v3902 = vsel %vm1303, %v3900, %v3901
    %v3903 = vrot.slane %v3819, 5
    %v3904 = vrot.slane %v3903, 4
    %v3905 = vrot.slane %v3399, 5
    %v3906 = vsel %vm1303, %v3904, %v3905
    %v3907 = vrot.slane %v3820, 5
    %v3908 = vrot.slane %v3907, 4
    %v3909 = vrot.slane %v3401, 5
    %v3910 = vsel %vm1303, %v3908, %v3909
    %v3911 = vrot.slane %v3821, 5
    %v3912 = vrot.slane %v3911, 4
    %v3913 = vrot.slane %v3403, 5
    %v3914 = vsel %vm1303, %v3912, %v3913
    %v3915 = vrot.slane %v3822, 5
    %v3916 = vrot.slane %v3915, 4
    %v3917 = vrot.slane %v3405, 5
    %v3918 = vsel %vm1303, %v3916, %v3917
    %v3919 = vld [vmem:[%s6 + $0x70] sm:$0xf]
    %v3920 = vld [vmem:[%s6 + $0x74] sm:$0xf]
    %v3921 = vld [vmem:[%s6 + $0x78] sm:$0xf]
    %v3922 = vld [vmem:[%s6 + $0x7c] sm:$0xf]
    %v3923 = vunpack.c.l.b16 %v3858
    %v3924 = vunpack.c.l.b16 %v3862
    %v3925 = vunpack.c.l.b16 %v3866
    %v3926 = vunpack.c.l.b16 %v3870
    %v3927 = vunpack.c.l.b16 %v3874
    %v3928 = vunpack.c.l.b16 %v3878
    %v3929 = vunpack.c.l.b16 %v3882
    %v3930 = vunpack.c.l.b16 %v3886
    %v3931 = vunpack.c.l.b16 %v3890
    %v3932 = vunpack.c.l.b16 %v3894
    %v3933 = vunpack.c.l.b16 %v3898
    %v3934 = vunpack.c.l.b16 %v3902
    %v3935 = vunpack.c.l.b16 %v3906
    %v3936 = vunpack.c.l.b16 %v3910
    %v3937 = vunpack.c.l.b16 %v3914
    %v3938 = vunpack.c.l.b16 %v3918
    %v3939 = vpack.c.b16 %v3924, %v3923
    %v3940 = vpack.c.b16 %v3926, %v3925
    %v3941 = vpack.c.b16 %v3928, %v3927
    %v3942 = vpack.c.b16 %v3930, %v3929
    %v3943 = vpack.c.b16 %v3932, %v3931
    %v3944 = vpack.c.b16 %v3934, %v3933
    %v3945 = vpack.c.b16 %v3936, %v3935
    %v3946 = vpack.c.b16 %v3938, %v3937
    %v3951 = vunpack.c.l.b16 %v3919
    %v3952 = vunpack.c.l.b16 %v3920
    %v3953 = vunpack.c.l.b16 %v3921
    %v3954 = vunpack.c.l.b16 %v3922
    %v3955 = vpack.c.b16 %v3952, %v3951
    %v3956 = vpack.c.b16 %v3954, %v3953
    %v3960 = vsel %vm190, %v3939, 0
    %v3963 = vsel %vm190, %v3940, 0
    %v3966 = vsel %vm190, %v3941, 0
    %v3969 = vsel %vm190, %v3942, 0
    %v3972 = vsel %vm190, %v3943, 0
    %v3975 = vsel %vm190, %v3944, 0
    %v3978 = vsel %vm190, %v3945, 0
    %v3981 = vsel %vm190, %v3946, 0
    %3983 = vmatprep.subr.bf16.mxu0 0
    %3984 = vmatpush1.bf16.msra.mxu0 0
    %3985 = vmatprep.subr.bf16.mxu0 0
    %3986 = vmatpush1.bf16.msra.mxu0 0
    %3987 = vmatprep.subr.bf16.mxu0 0
    %3988 = vmatpush1.bf16.msra.mxu0 0
    %3989 = vmatprep.subr.bf16.mxu0 0
    %3990 = vmatpush1.bf16.msra.mxu0 0
    %3991 = vmatprep.subr.bf16.mxu0 0
    %3992 = vmatpush1.bf16.msra.mxu0 0
    %3993 = vmatprep.subr.bf16.mxu0 0
    %3994 = vmatpush1.bf16.msra.mxu0 0
    %3995 = vmatprep.subr.bf16.mxu0 0
    %3996 = vmatpush1.bf16.msra.mxu0 %v3956
    %3997 = vmatprep.subr.bf16.mxu0 0
    %3998 = vmatpush1.bf16.msra.mxu0 %v3955
    %3999 = vmatprep.subr.bf16.mxu0 0
    %4000 = vmatpush2.bf16.msra.mxu0 0
    %4001 = vmatprep.subr.bf16.mxu0 0
    %4002 = vmatpush2.bf16.msra.mxu0 0
    %4003 = vmatprep.subr.bf16.mxu0 0
    %4004 = vmatpush2.bf16.msra.mxu0 0
    %4005 = vmatprep.subr.bf16.mxu0 0
    %4006 = vmatpush2.bf16.msra.mxu0 0
    %4007 = vmatprep.subr.bf16.mxu0 0
    %4008 = vmatpush2.bf16.msra.mxu0 0
    %4009 = vmatprep.subr.bf16.mxu0 0
    %4010 = vmatpush2.bf16.msra.mxu0 0
    %4011 = vmatprep.subr.bf16.mxu0 0
    %4012 = vmatpush2.bf16.msra.mxu0 0
    %4013 = vmatprep.subr.bf16.mxu0 0
    %4014 = vmatpush2.bf16.msra.mxu0 0
    %4015 = vmatprep.mubr.bf16.mxu0 0
    %4016 = vmatmul.mubr.bf16.gmra.mxu0 %v3960
    %v4017 = vpop.f32.mrf.mxu0
    %v4018 = vadd.f32 0.0, %v4017
    %v4019 = vpop.f32.mrf.mxu0
    %v4020 = vpop.f32.mrf.mxu0
    %v4021 = vadd.f32 0.0, %v4020
    %v4022 = vpop.f32.mrf.mxu0
    %4023 = vmatprep.mubr.bf16.mxu0 0
    %4024 = vmatmul.mubr.bf16.gmra.mxu0 %v3963
    %v4025 = vpop.f32.mrf.mxu0
    %v4026 = vadd.f32 0.0, %v4025
    %v4027 = vpop.f32.mrf.mxu0
    %v4028 = vpop.f32.mrf.mxu0
    %v4029 = vadd.f32 0.0, %v4028
    %v4030 = vpop.f32.mrf.mxu0
    %4031 = vmatprep.mubr.bf16.mxu0 0
    %4032 = vmatmul.mubr.bf16.gmra.mxu0 %v3966
    %v4033 = vpop.f32.mrf.mxu0
    %v4034 = vadd.f32 0.0, %v4033
    %v4035 = vpop.f32.mrf.mxu0
    %v4036 = vpop.f32.mrf.mxu0
    %v4037 = vadd.f32 0.0, %v4036
    %v4038 = vpop.f32.mrf.mxu0
    %4039 = vmatprep.mubr.bf16.mxu0 0
    %4040 = vmatmul.mubr.bf16.gmra.mxu0 %v3969
    %v4041 = vpop.f32.mrf.mxu0
    %v4042 = vadd.f32 0.0, %v4041
    %v4043 = vpop.f32.mrf.mxu0
    %v4044 = vpop.f32.mrf.mxu0
    %v4045 = vadd.f32 0.0, %v4044
    %v4046 = vpop.f32.mrf.mxu0
    %4047 = vmatprep.mubr.bf16.mxu0 0
    %4048 = vmatmul.mubr.bf16.gmra.mxu0 %v3972
    %v4049 = vpop.f32.mrf.mxu0
    %v4050 = vadd.f32 0.0, %v4049
    %v4051 = vpop.f32.mrf.mxu0
    %v4052 = vpop.f32.mrf.mxu0
    %v4053 = vadd.f32 0.0, %v4052
    %v4054 = vpop.f32.mrf.mxu0
    %4055 = vmatprep.mubr.bf16.mxu0 0
    %4056 = vmatmul.mubr.bf16.gmra.mxu0 %v3975
    %v4057 = vpop.f32.mrf.mxu0
    %v4058 = vadd.f32 0.0, %v4057
    %v4059 = vpop.f32.mrf.mxu0
    %v4060 = vpop.f32.mrf.mxu0
    %v4061 = vadd.f32 0.0, %v4060
    %v4062 = vpop.f32.mrf.mxu0
    %4063 = vmatprep.mubr.bf16.mxu0 0
    %4064 = vmatmul.mubr.bf16.gmra.mxu0 %v3978
    %v4065 = vpop.f32.mrf.mxu0
    %v4066 = vadd.f32 0.0, %v4065
    %v4067 = vpop.f32.mrf.mxu0
    %v4068 = vpop.f32.mrf.mxu0
    %v4069 = vadd.f32 0.0, %v4068
    %v4070 = vpop.f32.mrf.mxu0
    %4071 = vmatprep.mubr.bf16.mxu0 0
    %4072 = vmatmul.mubr.bf16.gmra.mxu0 %v3981
    %v4073 = vpop.f32.mrf.mxu0
    %v4074 = vadd.f32 0.0, %v4073
    %v4075 = vpop.f32.mrf.mxu0
    %v4076 = vpop.f32.mrf.mxu0
    %v4077 = vadd.f32 0.0, %v4076
    %v4078 = vpop.f32.mrf.mxu0
    %4079 = vdwg.mxu0
    %v4080 = vadd.f32 %v3791, %v4018
    %v4081 = vadd.f32 %v3792, %v4021
    %v4082 = vadd.f32 %v3793, %v4026
    %v4083 = vadd.f32 %v3794, %v4029
    %v4084 = vadd.f32 %v3795, %v4034
    %v4085 = vadd.f32 %v3796, %v4037
    %v4086 = vadd.f32 %v3797, %v4042
    %v4087 = vadd.f32 %v3798, %v4045
    %v4088 = vadd.f32 %v3799, %v4050
    %v4089 = vadd.f32 %v3800, %v4053
    %v4090 = vadd.f32 %v3801, %v4058
    %v4091 = vadd.f32 %v3802, %v4061
    %v4092 = vadd.f32 %v3803, %v4066
    %v4093 = vadd.f32 %v3804, %v4069
    %v4094 = vadd.f32 %v3805, %v4074
    %v4095 = vadd.f32 %v3806, %v4077
    %v4096 = vld [vmem:[%s3373 + $0x4] sm:$0x3]
    %v4097 = vld [vmem:[%s3373 + $0xc] sm:$0x3]
    %v4098 = vld [vmem:[%s3373 + $0x14] sm:$0x3]
    %v4099 = vld [vmem:[%s3373 + $0x1c] sm:$0x3]
    %v4100 = vld [vmem:[%s3373 + $0x24] sm:$0x3]
    %v4101 = vld [vmem:[%s3373 + $0x2c] sm:$0x3]
    %v4102 = vld [vmem:[%s3373 + $0x34] sm:$0x3]
    %v4103 = vld [vmem:[%s3373 + $0x3c] sm:$0x3]
    %v4104 = vld [vmem:[%s3373 + $0x54] sm:$0x3]
    %v4105 = vld [vmem:[%s3373 + $0x5c] sm:$0x3]
    %v4106 = vld [vmem:[%s3373 + $0x64] sm:$0x3]
    %v4107 = vld [vmem:[%s3373 + $0x6c] sm:$0x3]
    %v4108 = vld [vmem:[%s3373 + $0x74] sm:$0x3]
    %v4109 = vld [vmem:[%s3373 + $0x7c] sm:$0x3]
    %v4110 = vld [vmem:[%s3373 + $0x84] sm:$0x3]
    %v4111 = vld [vmem:[%s3373 + $0x8c] sm:$0x3]
    %v4113 = vshrl.u32 %v3807, 16
    %v4115 = vrot.slane %v4113, 5
    %v4116 = vshll.u32 %v3807, 16
    %v4118 = vrot.slane %v4116, 6
    %v4119 = vor.u32 %v4115, %v4118
    %v4120 = vrot.slane %v4119, 4
    %v4122 = vshrl.u32 %v4096, 16
    %v4124 = vrot.slane %v4122, 5
    %v4125 = vshll.u32 %v4096, 16
    %v4127 = vrot.slane %v4125, 6
    %v4128 = vor.u32 %v4124, %v4127
    %v4129 = vsel %vm1704, %v4120, %v4128
    %v4131 = vshrl.u32 %v3808, 16
    %v4133 = vrot.slane %v4131, 5
    %v4134 = vshll.u32 %v3808, 16
    %v4136 = vrot.slane %v4134, 6
    %v4137 = vor.u32 %v4133, %v4136
    %v4138 = vrot.slane %v4137, 4
    %v4140 = vshrl.u32 %v4097, 16
    %v4142 = vrot.slane %v4140, 5
    %v4143 = vshll.u32 %v4097, 16
    %v4145 = vrot.slane %v4143, 6
    %v4146 = vor.u32 %v4142, %v4145
    %v4147 = vsel %vm1704, %v4138, %v4146
    %v4149 = vshrl.u32 %v3809, 16
    %v4151 = vrot.slane %v4149, 5
    %v4152 = vshll.u32 %v3809, 16
    %v4154 = vrot.slane %v4152, 6
    %v4155 = vor.u32 %v4151, %v4154
    %v4156 = vrot.slane %v4155, 4
    %v4158 = vshrl.u32 %v4098, 16
    %v4160 = vrot.slane %v4158, 5
    %v4161 = vshll.u32 %v4098, 16
    %v4163 = vrot.slane %v4161, 6
    %v4164 = vor.u32 %v4160, %v4163
    %v4165 = vsel %vm1704, %v4156, %v4164
    %v4167 = vshrl.u32 %v3810, 16
    %v4169 = vrot.slane %v4167, 5
    %v4170 = vshll.u32 %v3810, 16
    %v4172 = vrot.slane %v4170, 6
    %v4173 = vor.u32 %v4169, %v4172
    %v4174 = vrot.slane %v4173, 4
    %v4176 = vshrl.u32 %v4099, 16
    %v4178 = vrot.slane %v4176, 5
    %v4179 = vshll.u32 %v4099, 16
    %v4181 = vrot.slane %v4179, 6
    %v4182 = vor.u32 %v4178, %v4181
    %v4183 = vsel %vm1704, %v4174, %v4182
    %v4185 = vshrl.u32 %v3811, 16
    %v4187 = vrot.slane %v4185, 5
    %v4188 = vshll.u32 %v3811, 16
    %v4190 = vrot.slane %v4188, 6
    %v4191 = vor.u32 %v4187, %v4190
    %v4192 = vrot.slane %v4191, 4
    %v4194 = vshrl.u32 %v4100, 16
    %v4196 = vrot.slane %v4194, 5
    %v4197 = vshll.u32 %v4100, 16
    %v4199 = vrot.slane %v4197, 6
    %v4200 = vor.u32 %v4196, %v4199
    %v4201 = vsel %vm1704, %v4192, %v4200
    %v4203 = vshrl.u32 %v3812, 16
    %v4205 = vrot.slane %v4203, 5
    %v4206 = vshll.u32 %v3812, 16
    %v4208 = vrot.slane %v4206, 6
    %v4209 = vor.u32 %v4205, %v4208
    %v4210 = vrot.slane %v4209, 4
    %v4212 = vshrl.u32 %v4101, 16
    %v4214 = vrot.slane %v4212, 5
    %v4215 = vshll.u32 %v4101, 16
    %v4217 = vrot.slane %v4215, 6
    %v4218 = vor.u32 %v4214, %v4217
    %v4219 = vsel %vm1704, %v4210, %v4218
    %v4221 = vshrl.u32 %v3813, 16
    %v4223 = vrot.slane %v4221, 5
    %v4224 = vshll.u32 %v3813, 16
    %v4226 = vrot.slane %v4224, 6
    %v4227 = vor.u32 %v4223, %v4226
    %v4228 = vrot.slane %v4227, 4
    %v4230 = vshrl.u32 %v4102, 16
    %v4232 = vrot.slane %v4230, 5
    %v4233 = vshll.u32 %v4102, 16
    %v4235 = vrot.slane %v4233, 6
    %v4236 = vor.u32 %v4232, %v4235
    %v4237 = vsel %vm1704, %v4228, %v4236
    %v4239 = vshrl.u32 %v3814, 16
    %v4241 = vrot.slane %v4239, 5
    %v4242 = vshll.u32 %v3814, 16
    %v4244 = vrot.slane %v4242, 6
    %v4245 = vor.u32 %v4241, %v4244
    %v4246 = vrot.slane %v4245, 4
    %v4248 = vshrl.u32 %v4103, 16
    %v4250 = vrot.slane %v4248, 5
    %v4251 = vshll.u32 %v4103, 16
    %v4253 = vrot.slane %v4251, 6
    %v4254 = vor.u32 %v4250, %v4253
    %v4255 = vsel %vm1704, %v4246, %v4254
    %v4257 = vshrl.u32 %v3815, 16
    %v4259 = vrot.slane %v4257, 5
    %v4260 = vshll.u32 %v3815, 16
    %v4262 = vrot.slane %v4260, 6
    %v4263 = vor.u32 %v4259, %v4262
    %v4264 = vrot.slane %v4263, 4
    %v4266 = vshrl.u32 %v4104, 16
    %v4268 = vrot.slane %v4266, 5
    %v4269 = vshll.u32 %v4104, 16
    %v4271 = vrot.slane %v4269, 6
    %v4272 = vor.u32 %v4268, %v4271
    %v4273 = vsel %vm1704, %v4264, %v4272
    %v4275 = vshrl.u32 %v3816, 16
    %v4277 = vrot.slane %v4275, 5
    %v4278 = vshll.u32 %v3816, 16
    %v4280 = vrot.slane %v4278, 6
    %v4281 = vor.u32 %v4277, %v4280
    %v4282 = vrot.slane %v4281, 4
    %v4284 = vshrl.u32 %v4105, 16
    %v4286 = vrot.slane %v4284, 5
    %v4287 = vshll.u32 %v4105, 16
    %v4289 = vrot.slane %v4287, 6
    %v4290 = vor.u32 %v4286, %v4289
    %v4291 = vsel %vm1704, %v4282, %v4290
    %v4293 = vshrl.u32 %v3817, 16
    %v4295 = vrot.slane %v4293, 5
    %v4296 = vshll.u32 %v3817, 16
    %v4298 = vrot.slane %v4296, 6
    %v4299 = vor.u32 %v4295, %v4298
    %v4300 = vrot.slane %v4299, 4
    %v4302 = vshrl.u32 %v4106, 16
    %v4304 = vrot.slane %v4302, 5
    %v4305 = vshll.u32 %v4106, 16
    %v4307 = vrot.slane %v4305, 6
    %v4308 = vor.u32 %v4304, %v4307
    %v4309 = vsel %vm1704, %v4300, %v4308
    %v4311 = vshrl.u32 %v3818, 16
    %v4313 = vrot.slane %v4311, 5
    %v4314 = vshll.u32 %v3818, 16
    %v4316 = vrot.slane %v4314, 6
    %v4317 = vor.u32 %v4313, %v4316
    %v4318 = vrot.slane %v4317, 4
    %v4320 = vshrl.u32 %v4107, 16
    %v4322 = vrot.slane %v4320, 5
    %v4323 = vshll.u32 %v4107, 16
    %v4325 = vrot.slane %v4323, 6
    %v4326 = vor.u32 %v4322, %v4325
    %v4327 = vsel %vm1704, %v4318, %v4326
    %v4329 = vshrl.u32 %v3819, 16
    %v4331 = vrot.slane %v4329, 5
    %v4332 = vshll.u32 %v3819, 16
    %v4334 = vrot.slane %v4332, 6
    %v4335 = vor.u32 %v4331, %v4334
    %v4336 = vrot.slane %v4335, 4
    %v4338 = vshrl.u32 %v4108, 16
    %v4340 = vrot.slane %v4338, 5
    %v4341 = vshll.u32 %v4108, 16
    %v4343 = vrot.slane %v4341, 6
    %v4344 = vor.u32 %v4340, %v4343
    %v4345 = vsel %vm1704, %v4336, %v4344
    %v4347 = vshrl.u32 %v3820, 16
    %v4349 = vrot.slane %v4347, 5
    %v4350 = vshll.u32 %v3820, 16
    %v4352 = vrot.slane %v4350, 6
    %v4353 = vor.u32 %v4349, %v4352
    %v4354 = vrot.slane %v4353, 4
    %v4356 = vshrl.u32 %v4109, 16
    %v4358 = vrot.slane %v4356, 5
    %v4359 = vshll.u32 %v4109, 16
    %v4361 = vrot.slane %v4359, 6
    %v4362 = vor.u32 %v4358, %v4361
    %v4363 = vsel %vm1704, %v4354, %v4362
    %v4365 = vshrl.u32 %v3821, 16
    %v4367 = vrot.slane %v4365, 5
    %v4368 = vshll.u32 %v3821, 16
    %v4370 = vrot.slane %v4368, 6
    %v4371 = vor.u32 %v4367, %v4370
    %v4372 = vrot.slane %v4371, 4
    %v4374 = vshrl.u32 %v4110, 16
    %v4376 = vrot.slane %v4374, 5
    %v4377 = vshll.u32 %v4110, 16
    %v4379 = vrot.slane %v4377, 6
    %v4380 = vor.u32 %v4376, %v4379
    %v4381 = vsel %vm1704, %v4372, %v4380
    %v4383 = vshrl.u32 %v3822, 16
    %v4385 = vrot.slane %v4383, 5
    %v4386 = vshll.u32 %v3822, 16
    %v4388 = vrot.slane %v4386, 6
    %v4389 = vor.u32 %v4385, %v4388
    %v4390 = vrot.slane %v4389, 4
    %v4392 = vshrl.u32 %v4111, 16
    %v4394 = vrot.slane %v4392, 5
    %v4395 = vshll.u32 %v4111, 16
    %v4397 = vrot.slane %v4395, 6
    %v4398 = vor.u32 %v4394, %v4397
    %v4399 = vsel %vm1704, %v4390, %v4398
    %v4400 = vld [vmem:[%s6 + $0x80] sm:$0xf]
    %v4401 = vld [vmem:[%s6 + $0x84] sm:$0xf]
    %v4402 = vld [vmem:[%s6 + $0x88] sm:$0xf]
    %v4403 = vld [vmem:[%s6 + $0x8c] sm:$0xf]
    %v4404 = vunpack.c.l.b16 %v4129
    %v4405 = vunpack.c.l.b16 %v4147
    %v4406 = vunpack.c.l.b16 %v4165
    %v4407 = vunpack.c.l.b16 %v4183
    %v4408 = vunpack.c.l.b16 %v4201
    %v4409 = vunpack.c.l.b16 %v4219
    %v4410 = vunpack.c.l.b16 %v4237
    %v4411 = vunpack.c.l.b16 %v4255
    %v4412 = vunpack.c.l.b16 %v4273
    %v4413 = vunpack.c.l.b16 %v4291
    %v4414 = vunpack.c.l.b16 %v4309
    %v4415 = vunpack.c.l.b16 %v4327
    %v4416 = vunpack.c.l.b16 %v4345
    %v4417 = vunpack.c.l.b16 %v4363
    %v4418 = vunpack.c.l.b16 %v4381
    %v4419 = vunpack.c.l.b16 %v4399
    %v4420 = vpack.c.b16 %v4405, %v4404
    %v4421 = vpack.c.b16 %v4407, %v4406
    %v4422 = vpack.c.b16 %v4409, %v4408
    %v4423 = vpack.c.b16 %v4411, %v4410
    %v4424 = vpack.c.b16 %v4413, %v4412
    %v4425 = vpack.c.b16 %v4415, %v4414
    %v4426 = vpack.c.b16 %v4417, %v4416
    %v4427 = vpack.c.b16 %v4419, %v4418
    %v4432 = vunpack.c.l.b16 %v4400
    %v4433 = vunpack.c.l.b16 %v4401
    %v4434 = vunpack.c.l.b16 %v4402
    %v4435 = vunpack.c.l.b16 %v4403
    %v4436 = vpack.c.b16 %v4433, %v4432
    %v4437 = vpack.c.b16 %v4435, %v4434
    %v4441 = vsel %vm190, %v4420, 0
    %v4444 = vsel %vm190, %v4421, 0
    %v4447 = vsel %vm190, %v4422, 0
    %v4450 = vsel %vm190, %v4423, 0
    %v4453 = vsel %vm190, %v4424, 0
    %v4456 = vsel %vm190, %v4425, 0
    %v4459 = vsel %vm190, %v4426, 0
    %v4462 = vsel %vm190, %v4427, 0
    %4464 = vmatprep.subr.bf16.mxu0 0
    %4465 = vmatpush1.bf16.msra.mxu0 0
    %4466 = vmatprep.subr.bf16.mxu0 0
    %4467 = vmatpush1.bf16.msra.mxu0 0
    %4468 = vmatprep.subr.bf16.mxu0 0
    %4469 = vmatpush1.bf16.msra.mxu0 0
    %4470 = vmatprep.subr.bf16.mxu0 0
    %4471 = vmatpush1.bf16.msra.mxu0 0
    %4472 = vmatprep.subr.bf16.mxu0 0
    %4473 = vmatpush1.bf16.msra.mxu0 0
    %4474 = vmatprep.subr.bf16.mxu0 0
    %4475 = vmatpush1.bf16.msra.mxu0 0
    %4476 = vmatprep.subr.bf16.mxu0 0
    %4477 = vmatpush1.bf16.msra.mxu0 %v4437
    %4478 = vmatprep.subr.bf16.mxu0 0
    %4479 = vmatpush1.bf16.msra.mxu0 %v4436
    %4480 = vmatprep.subr.bf16.mxu0 0
    %4481 = vmatpush2.bf16.msra.mxu0 0
    %4482 = vmatprep.subr.bf16.mxu0 0
    %4483 = vmatpush2.bf16.msra.mxu0 0
    %4484 = vmatprep.subr.bf16.mxu0 0
    %4485 = vmatpush2.bf16.msra.mxu0 0
    %4486 = vmatprep.subr.bf16.mxu0 0
    %4487 = vmatpush2.bf16.msra.mxu0 0
    %4488 = vmatprep.subr.bf16.mxu0 0
    %4489 = vmatpush2.bf16.msra.mxu0 0
    %4490 = vmatprep.subr.bf16.mxu0 0
    %4491 = vmatpush2.bf16.msra.mxu0 0
    %4492 = vmatprep.subr.bf16.mxu0 0
    %4493 = vmatpush2.bf16.msra.mxu0 0
    %4494 = vmatprep.subr.bf16.mxu0 0
    %4495 = vmatpush2.bf16.msra.mxu0 0
    %4496 = vmatprep.mubr.bf16.mxu0 0
    %4497 = vmatmul.mubr.bf16.gmra.mxu0 %v4441
    %v4498 = vpop.f32.mrf.mxu0
    %v4499 = vadd.f32 0.0, %v4498
    %v4500 = vpop.f32.mrf.mxu0
    %v4501 = vpop.f32.mrf.mxu0
    %v4502 = vadd.f32 0.0, %v4501
    %v4503 = vpop.f32.mrf.mxu0
    %4504 = vmatprep.mubr.bf16.mxu0 0
    %4505 = vmatmul.mubr.bf16.gmra.mxu0 %v4444
    %v4506 = vpop.f32.mrf.mxu0
    %v4507 = vadd.f32 0.0, %v4506
    %v4508 = vpop.f32.mrf.mxu0
    %v4509 = vpop.f32.mrf.mxu0
    %v4510 = vadd.f32 0.0, %v4509
    %v4511 = vpop.f32.mrf.mxu0
    %4512 = vmatprep.mubr.bf16.mxu0 0
    %4513 = vmatmul.mubr.bf16.gmra.mxu0 %v4447
    %v4514 = vpop.f32.mrf.mxu0
    %v4515 = vadd.f32 0.0, %v4514
    %v4516 = vpop.f32.mrf.mxu0
    %v4517 = vpop.f32.mrf.mxu0
    %v4518 = vadd.f32 0.0, %v4517
    %v4519 = vpop.f32.mrf.mxu0
    %4520 = vmatprep.mubr.bf16.mxu0 0
    %4521 = vmatmul.mubr.bf16.gmra.mxu0 %v4450
    %v4522 = vpop.f32.mrf.mxu0
    %v4523 = vadd.f32 0.0, %v4522
    %v4524 = vpop.f32.mrf.mxu0
    %v4525 = vpop.f32.mrf.mxu0
    %v4526 = vadd.f32 0.0, %v4525
    %v4527 = vpop.f32.mrf.mxu0
    %4528 = vmatprep.mubr.bf16.mxu0 0
    %4529 = vmatmul.mubr.bf16.gmra.mxu0 %v4453
    %v4530 = vpop.f32.mrf.mxu0
    %v4531 = vadd.f32 0.0, %v4530
    %v4532 = vpop.f32.mrf.mxu0
    %v4533 = vpop.f32.mrf.mxu0
    %v4534 = vadd.f32 0.0, %v4533
    %v4535 = vpop.f32.mrf.mxu0
    %4536 = vmatprep.mubr.bf16.mxu0 0
    %4537 = vmatmul.mubr.bf16.gmra.mxu0 %v4456
    %v4538 = vpop.f32.mrf.mxu0
    %v4539 = vadd.f32 0.0, %v4538
    %v4540 = vpop.f32.mrf.mxu0
    %v4541 = vpop.f32.mrf.mxu0
    %v4542 = vadd.f32 0.0, %v4541
    %v4543 = vpop.f32.mrf.mxu0
    %4544 = vmatprep.mubr.bf16.mxu0 0
    %4545 = vmatmul.mubr.bf16.gmra.mxu0 %v4459
    %v4546 = vpop.f32.mrf.mxu0
    %v4547 = vadd.f32 0.0, %v4546
    %v4548 = vpop.f32.mrf.mxu0
    %v4549 = vpop.f32.mrf.mxu0
    %v4550 = vadd.f32 0.0, %v4549
    %v4551 = vpop.f32.mrf.mxu0
    %4552 = vmatprep.mubr.bf16.mxu0 0
    %4553 = vmatmul.mubr.bf16.gmra.mxu0 %v4462
    %v4554 = vpop.f32.mrf.mxu0
    %v4555 = vadd.f32 0.0, %v4554
    %v4556 = vpop.f32.mrf.mxu0
    %v4557 = vpop.f32.mrf.mxu0
    %v4558 = vadd.f32 0.0, %v4557
    %v4559 = vpop.f32.mrf.mxu0
    %4560 = vdwg.mxu0
    %v4561 = vadd.f32 %v4080, %v4499
    %v4562 = vadd.f32 %v4081, %v4502
    %v4563 = vadd.f32 %v4082, %v4507
    %v4564 = vadd.f32 %v4083, %v4510
    %v4565 = vadd.f32 %v4084, %v4515
    %v4566 = vadd.f32 %v4085, %v4518
    %v4567 = vadd.f32 %v4086, %v4523
    %v4568 = vadd.f32 %v4087, %v4526
    %v4569 = vadd.f32 %v4088, %v4531
    %v4570 = vadd.f32 %v4089, %v4534
    %v4571 = vadd.f32 %v4090, %v4539
    %v4572 = vadd.f32 %v4091, %v4542
    %v4573 = vadd.f32 %v4092, %v4547
    %v4574 = vadd.f32 %v4093, %v4550
    %v4575 = vadd.f32 %v4094, %v4555
    %v4576 = vadd.f32 %v4095, %v4558
    %v4577 = vld [vmem:[%s1] sm:$0x1]
    %v4578 = vld [vmem:[%s1 + $0x1] sm:$0x1]
    %v4581 = vlaneseq
    %v4582 = vshrl.u32 %v4581, 7
    %v4583 = vsub.s32 0, %v4582
    %v4584 = vrot.slane %v4577, %v4583
    %v4585 = vlaneseq
    %v4586 = vshrl.u32 %v4585, 7
    %v4587 = vsub.s32 0, %v4586
    %v4588 = vrot.slane %v4578, %v4587
    %v4591 = vadd.f32 %v4561, %v4584
    %v4592 = vadd.f32 %v4562, %v4584
    %v4593 = vadd.f32 %v4563, %v4584
    %v4594 = vadd.f32 %v4564, %v4584
    %v4595 = vadd.f32 %v4565, %v4584
    %v4596 = vadd.f32 %v4566, %v4584
    %v4597 = vadd.f32 %v4567, %v4584
    %v4598 = vadd.f32 %v4568, %v4584
    %v4599 = vadd.f32 %v4569, %v4588
    %v4600 = vadd.f32 %v4570, %v4588
    %v4601 = vadd.f32 %v4571, %v4588
    %v4602 = vadd.f32 %v4572, %v4588
    %v4603 = vadd.f32 %v4573, %v4588
    %v4604 = vadd.f32 %v4574, %v4588
    %v4605 = vadd.f32 %v4575, %v4588
    %v4606 = vadd.f32 %v4576, %v4588
    %vm4607 = vcmask 523264
    %v4608 = vsel %vm4607, %v4591, 0.0
    %v4609 = vsel %vm4607, %v4592, 0.0
    %v4610 = vadd.f32 %v4608, %v4609
    %v4611 = vsel %vm4607, %v4593, 0.0
    %v4612 = vadd.f32 %v4610, %v4611
    %v4613 = vsel %vm4607, %v4594, 0.0
    %v4614 = vadd.f32 %v4612, %v4613
    %v4615 = vsel %vm4607, %v4595, 0.0
    %v4616 = vadd.f32 %v4614, %v4615
    %v4617 = vsel %vm4607, %v4596, 0.0
    %v4618 = vadd.f32 %v4616, %v4617
    %v4619 = vsel %vm4607, %v4597, 0.0
    %v4620 = vadd.f32 %v4618, %v4619
    %v4621 = vsel %vm4607, %v4598, 0.0
    %v4622 = vadd.f32 %v4620, %v4621
    %v4623 = vrot.slane %v4622, 4
    %v4624 = vadd.f32 %v4622, %v4623
    %v4625 = vrot.slane %v4624, 2
    %v4626 = vadd.f32 %v4624, %v4625
    %v4627 = vrot.slane %v4626, 1
    %v4628 = vadd.f32 %v4626, %v4627
    %v4629 = vsel %vm4607, %v4599, 0.0
    %v4630 = vsel %vm4607, %v4600, 0.0
    %v4631 = vadd.f32 %v4629, %v4630
    %v4632 = vsel %vm4607, %v4601, 0.0
    %v4633 = vadd.f32 %v4631, %v4632
    %v4634 = vsel %vm4607, %v4602, 0.0
    %v4635 = vadd.f32 %v4633, %v4634
    %v4636 = vsel %vm4607, %v4603, 0.0
    %v4637 = vadd.f32 %v4635, %v4636
    %v4638 = vsel %vm4607, %v4604, 0.0
    %v4639 = vadd.f32 %v4637, %v4638
    %v4640 = vsel %vm4607, %v4605, 0.0
    %v4641 = vadd.f32 %v4639, %v4640
    %v4642 = vsel %vm4607, %v4606, 0.0
    %v4643 = vadd.f32 %v4641, %v4642
    %v4644 = vrot.slane %v4643, 4
    %v4645 = vadd.f32 %v4643, %v4644
    %v4646 = vrot.slane %v4645, 2
    %v4647 = vadd.f32 %v4645, %v4646
    %v4648 = vrot.slane %v4647, 1
    %v4649 = vadd.f32 %v4647, %v4648
    %v4650 = vmul.f32 %v4591, %v4591
    %v4651 = vmul.f32 %v4592, %v4592
    %v4652 = vmul.f32 %v4593, %v4593
    %v4653 = vmul.f32 %v4594, %v4594
    %v4654 = vmul.f32 %v4595, %v4595
    %v4655 = vmul.f32 %v4596, %v4596
    %v4656 = vmul.f32 %v4597, %v4597
    %v4657 = vmul.f32 %v4598, %v4598
    %v4658 = vmul.f32 %v4599, %v4599
    %v4659 = vmul.f32 %v4600, %v4600
    %v4660 = vmul.f32 %v4601, %v4601
    %v4661 = vmul.f32 %v4602, %v4602
    %v4662 = vmul.f32 %v4603, %v4603
    %v4663 = vmul.f32 %v4604, %v4604
    %v4664 = vmul.f32 %v4605, %v4605
    %v4665 = vmul.f32 %v4606, %v4606
    %v4666 = vsel %vm4607, %v4650, 0.0
    %v4667 = vsel %vm4607, %v4651, 0.0
    %v4668 = vadd.f32 %v4666, %v4667
    %v4669 = vsel %vm4607, %v4652, 0.0
    %v4670 = vadd.f32 %v4668, %v4669
    %v4671 = vsel %vm4607, %v4653, 0.0
    %v4672 = vadd.f32 %v4670, %v4671
    %v4673 = vsel %vm4607, %v4654, 0.0
    %v4674 = vadd.f32 %v4672, %v4673
    %v4675 = vsel %vm4607, %v4655, 0.0
    %v4676 = vadd.f32 %v4674, %v4675
    %v4677 = vsel %vm4607, %v4656, 0.0
    %v4678 = vadd.f32 %v4676, %v4677
    %v4679 = vsel %vm4607, %v4657, 0.0
    %v4680 = vadd.f32 %v4678, %v4679
    %v4681 = vrot.slane %v4680, 4
    %v4682 = vadd.f32 %v4680, %v4681
    %v4683 = vrot.slane %v4682, 2
    %v4684 = vadd.f32 %v4682, %v4683
    %v4685 = vrot.slane %v4684, 1
    %v4686 = vadd.f32 %v4684, %v4685
    %v4687 = vsel %vm4607, %v4658, 0.0
    %v4688 = vsel %vm4607, %v4659, 0.0
    %v4689 = vadd.f32 %v4687, %v4688
    %v4690 = vsel %vm4607, %v4660, 0.0
    %v4691 = vadd.f32 %v4689, %v4690
    %v4692 = vsel %vm4607, %v4661, 0.0
    %v4693 = vadd.f32 %v4691, %v4692
    %v4694 = vsel %vm4607, %v4662, 0.0
    %v4695 = vadd.f32 %v4693, %v4694
    %v4696 = vsel %vm4607, %v4663, 0.0
    %v4697 = vadd.f32 %v4695, %v4696
    %v4698 = vsel %vm4607, %v4664, 0.0
    %v4699 = vadd.f32 %v4697, %v4698
    %v4700 = vsel %vm4607, %v4665, 0.0
    %v4701 = vadd.f32 %v4699, %v4700
    %v4702 = vrot.slane %v4701, 4
    %v4703 = vadd.f32 %v4701, %v4702
    %v4704 = vrot.slane %v4703, 2
    %v4705 = vadd.f32 %v4703, %v4704
    %v4706 = vrot.slane %v4705, 1
    %v4707 = vadd.f32 %v4705, %v4706
    %v4708 = vld [vmem:[%s9] sm:$0xff]
    %v4709 = vld [vmem:[%s9 + $0x8] sm:$0xff]
    %v4710 = vld [vmem:[%s9 + $0x10] sm:$0xff]
    %v4711 = vld [vmem:[%s9 + $0x18] sm:$0xff]
    %v4712 = vld [vmem:[%s9 + $0x20] sm:$0xff]
    %v4713 = vld [vmem:[%s9 + $0x28] sm:$0xff]
    %v4714 = vld [vmem:[%s9 + $0x30] sm:$0xff]
    %v4715 = vld [vmem:[%s9 + $0x38] sm:$0xff]
    %v4718 = vsel %vm297, %v4649, %v4628
    %v4719 = vsel %vm4607, %v4718, 0
    %4721 = vmatprep.subr.mxu0 0.0
    %4722 = vmatpush1.msra.mxu0 0.0
    %4723 = vmatprep.subr.mxu0 0.0
    %4724 = vmatpush1.msra.mxu0 0.0
    %4725 = vmatprep.subr.mxu0 0.0
    %4726 = vmatpush1.msra.mxu0 0.0
    %4727 = vmatprep.subr.mxu0 0.0
    %4728 = vmatpush1.msra.mxu0 0.0
    %4729 = vmatprep.subr.mxu0 0.0
    %4730 = vmatpush1.msra.mxu0 0.0
    %4731 = vmatprep.subr.mxu0 0.0
    %4732 = vmatpush1.msra.mxu0 0.0
    %4733 = vmatprep.subr.mxu0 0.0
    %4734 = vmatpush1.msra.mxu0 0.0
    %4735 = vmatprep.subr.mxu0 0.0
    %4736 = vmatpush1.msra.mxu0 0.0
    %4737 = vmatprep.subr.mxu0 0.0
    %4738 = vmatpush1.msra.mxu0 %v4715
    %4739 = vmatprep.subr.mxu0 0.0
    %4740 = vmatpush1.msra.mxu0 %v4714
    %4741 = vmatprep.subr.mxu0 0.0
    %4742 = vmatpush1.msra.mxu0 %v4713
    %4743 = vmatprep.subr.mxu0 0.0
    %4744 = vmatpush1.msra.mxu0 %v4712
    %4745 = vmatprep.subr.mxu0 0.0
    %4746 = vmatpush1.msra.mxu0 %v4711
    %4747 = vmatprep.subr.mxu0 0.0
    %4748 = vmatpush1.msra.mxu0 %v4710
    %4749 = vmatprep.subr.mxu0 0.0
    %4750 = vmatpush1.msra.mxu0 %v4709
    %4751 = vmatprep.subr.mxu0 0.0
    %4752 = vmatpush1.msra.mxu0 %v4708
    %4753 = vmatprep.subr.mxu0 0.0
    %4754 = vmatpush2.msra.mxu0 0.0
    %4755 = vmatprep.subr.mxu0 0.0
    %4756 = vmatpush2.msra.mxu0 0.0
    %4757 = vmatprep.subr.mxu0 0.0
    %4758 = vmatpush2.msra.mxu0 0.0
    %4759 = vmatprep.subr.mxu0 0.0
    %4760 = vmatpush2.msra.mxu0 0.0
    %4761 = vmatprep.subr.mxu0 0.0
    %4762 = vmatpush2.msra.mxu0 0.0
    %4763 = vmatprep.subr.mxu0 0.0
    %4764 = vmatpush2.msra.mxu0 0.0
    %4765 = vmatprep.subr.mxu0 0.0
    %4766 = vmatpush2.msra.mxu0 0.0
    %4767 = vmatprep.subr.mxu0 0.0
    %4768 = vmatpush2.msra.mxu0 0.0
    %4769 = vmatprep.subr.mxu0 0.0
    %4770 = vmatpush2.msra.mxu0 0.0
    %4771 = vmatprep.subr.mxu0 0.0
    %4772 = vmatpush2.msra.mxu0 0.0
    %4773 = vmatprep.subr.mxu0 0.0
    %4774 = vmatpush2.msra.mxu0 0.0
    %4775 = vmatprep.subr.mxu0 0.0
    %4776 = vmatpush2.msra.mxu0 0.0
    %4777 = vmatprep.subr.mxu0 0.0
    %4778 = vmatpush2.msra.mxu0 0.0
    %4779 = vmatprep.subr.mxu0 0.0
    %4780 = vmatpush2.msra.mxu0 0.0
    %4781 = vmatprep.subr.mxu0 0.0
    %4782 = vmatpush2.msra.mxu0 0.0
    %4783 = vmatprep.subr.mxu0 0.0
    %4784 = vmatpush2.msra.mxu0 0.0
    %4785 = vmatprep.mubr.f32.mxu0 0.0
    %4786 = vmatmul.mubr.f32.gmra.mxu0 %v4719
    %v4787 = vpop.f32.mrf.mxu0
    %v4788 = vadd.f32 0.0, %v4787
    %v4789 = vpop.f32.mrf.mxu0
    %4790 = vdwg.mxu0
    %v4793 = vsel %vm297, %v4707, %v4686
    %v4794 = vsel %vm4607, %v4793, 0
    %4796 = vmatprep.subr.mxu0 0.0
    %4797 = vmatpush1.msra.mxu0 0.0
    %4798 = vmatprep.subr.mxu0 0.0
    %4799 = vmatpush1.msra.mxu0 0.0
    %4800 = vmatprep.subr.mxu0 0.0
    %4801 = vmatpush1.msra.mxu0 0.0
    %4802 = vmatprep.subr.mxu0 0.0
    %4803 = vmatpush1.msra.mxu0 0.0
    %4804 = vmatprep.subr.mxu0 0.0
    %4805 = vmatpush1.msra.mxu0 0.0
    %4806 = vmatprep.subr.mxu0 0.0
    %4807 = vmatpush1.msra.mxu0 0.0
    %4808 = vmatprep.subr.mxu0 0.0
    %4809 = vmatpush1.msra.mxu0 0.0
    %4810 = vmatprep.subr.mxu0 0.0
    %4811 = vmatpush1.msra.mxu0 0.0
    %4812 = vmatprep.subr.mxu0 0.0
    %4813 = vmatpush1.msra.mxu0 %v4715
    %4814 = vmatprep.subr.mxu0 0.0
    %4815 = vmatpush1.msra.mxu0 %v4714
    %4816 = vmatprep.subr.mxu0 0.0
    %4817 = vmatpush1.msra.mxu0 %v4713
    %4818 = vmatprep.subr.mxu0 0.0
    %4819 = vmatpush1.msra.mxu0 %v4712
    %4820 = vmatprep.subr.mxu0 0.0
    %4821 = vmatpush1.msra.mxu0 %v4711
    %4822 = vmatprep.subr.mxu0 0.0
    %4823 = vmatpush1.msra.mxu0 %v4710
    %4824 = vmatprep.subr.mxu0 0.0
    %4825 = vmatpush1.msra.mxu0 %v4709
    %4826 = vmatprep.subr.mxu0 0.0
    %4827 = vmatpush1.msra.mxu0 %v4708
    %4828 = vmatprep.subr.mxu0 0.0
    %4829 = vmatpush2.msra.mxu0 0.0
    %4830 = vmatprep.subr.mxu0 0.0
    %4831 = vmatpush2.msra.mxu0 0.0
    %4832 = vmatprep.subr.mxu0 0.0
    %4833 = vmatpush2.msra.mxu0 0.0
    %4834 = vmatprep.subr.mxu0 0.0
    %4835 = vmatpush2.msra.mxu0 0.0
    %4836 = vmatprep.subr.mxu0 0.0
    %4837 = vmatpush2.msra.mxu0 0.0
    %4838 = vmatprep.subr.mxu0 0.0
    %4839 = vmatpush2.msra.mxu0 0.0
    %4840 = vmatprep.subr.mxu0 0.0
    %4841 = vmatpush2.msra.mxu0 0.0
    %4842 = vmatprep.subr.mxu0 0.0
    %4843 = vmatpush2.msra.mxu0 0.0
    %4844 = vmatprep.subr.mxu0 0.0
    %4845 = vmatpush2.msra.mxu0 0.0
    %4846 = vmatprep.subr.mxu0 0.0
    %4847 = vmatpush2.msra.mxu0 0.0
    %4848 = vmatprep.subr.mxu0 0.0
    %4849 = vmatpush2.msra.mxu0 0.0
    %4850 = vmatprep.subr.mxu0 0.0
    %4851 = vmatpush2.msra.mxu0 0.0
    %4852 = vmatprep.subr.mxu0 0.0
    %4853 = vmatpush2.msra.mxu0 0.0
    %4854 = vmatprep.subr.mxu0 0.0
    %4855 = vmatpush2.msra.mxu0 0.0
    %4856 = vmatprep.subr.mxu0 0.0
    %4857 = vmatpush2.msra.mxu0 0.0
    %4858 = vmatprep.subr.mxu0 0.0
    %4859 = vmatpush2.msra.mxu0 0.0
    %4860 = vmatprep.mubr.f32.mxu0 0.0
    %4861 = vmatmul.mubr.f32.gmra.mxu0 %v4794
    %v4862 = vpop.f32.mrf.mxu0
    %v4863 = vadd.f32 0.0, %v4862
    %v4864 = vpop.f32.mrf.mxu0
    %4865 = vdwg.mxu0
    %v4866 = vrcp.pop 128.0
    %v4867 = vmul.f32 %v4788, %v4866
    %v4868 = vmul.f32 %v4863, %v4866
    %v4869 = vmul.f32 %v4867, %v4867
    %v4870 = vsub.f32 %v4868, %v4869
    %v4871 = vmax.f32 %v4870, 0.0
    %v4872 = vadd.f32 %v4871, 1e-05
    %v4873 = vrsqrt.pop %v4872
    %v4874 = vld [vmem:[%s10] sm:$0xff]
    %v4875 = vld [vmem:[%s10 + $0x8] sm:$0xff]
    %v4876 = vld [vmem:[%s10 + $0x10] sm:$0xff]
    %v4877 = vld [vmem:[%s10 + $0x18] sm:$0xff]
    %v4879 = vsel %vm190, %v4867, 0
    %4881 = vmatprep.subr.mxu0 0.0
    %4882 = vmatpush1.msra.mxu0 0.0
    %4883 = vmatprep.subr.mxu0 0.0
    %4884 = vmatpush1.msra.mxu0 0.0
    %4885 = vmatprep.subr.mxu0 0.0
    %4886 = vmatpush1.msra.mxu0 0.0
    %4887 = vmatprep.subr.mxu0 0.0
    %4888 = vmatpush1.msra.mxu0 0.0
    %4889 = vmatprep.subr.mxu0 0.0
    %4890 = vmatpush1.msra.mxu0 0.0
    %4891 = vmatprep.subr.mxu0 0.0
    %4892 = vmatpush1.msra.mxu0 0.0
    %4893 = vmatprep.subr.mxu0 0.0
    %4894 = vmatpush1.msra.mxu0 0.0
    %4895 = vmatprep.subr.mxu0 0.0
    %4896 = vmatpush1.msra.mxu0 0.0
    %4897 = vmatprep.subr.mxu0 0.0
    %4898 = vmatpush1.msra.mxu0 0.0
    %4899 = vmatprep.subr.mxu0 0.0
    %4900 = vmatpush1.msra.mxu0 0.0
    %4901 = vmatprep.subr.mxu0 0.0
    %4902 = vmatpush1.msra.mxu0 0.0
    %4903 = vmatprep.subr.mxu0 0.0
    %4904 = vmatpush1.msra.mxu0 0.0
    %4905 = vmatprep.subr.mxu0 0.0
    %4906 = vmatpush1.msra.mxu0 %v4877
    %4907 = vmatprep.subr.mxu0 0.0
    %4908 = vmatpush1.msra.mxu0 %v4876
    %4909 = vmatprep.subr.mxu0 0.0
    %4910 = vmatpush1.msra.mxu0 %v4875
    %4911 = vmatprep.subr.mxu0 0.0
    %4912 = vmatpush1.msra.mxu0 %v4874
    %4913 = vmatprep.subr.mxu0 0.0
    %4914 = vmatpush2.msra.mxu0 0.0
    %4915 = vmatprep.subr.mxu0 0.0
    %4916 = vmatpush2.msra.mxu0 0.0
    %4917 = vmatprep.subr.mxu0 0.0
    %4918 = vmatpush2.msra.mxu0 0.0
    %4919 = vmatprep.subr.mxu0 0.0
    %4920 = vmatpush2.msra.mxu0 0.0
    %4921 = vmatprep.subr.mxu0 0.0
    %4922 = vmatpush2.msra.mxu0 0.0
    %4923 = vmatprep.subr.mxu0 0.0
    %4924 = vmatpush2.msra.mxu0 0.0
    %4925 = vmatprep.subr.mxu0 0.0
    %4926 = vmatpush2.msra.mxu0 0.0
    %4927 = vmatprep.subr.mxu0 0.0
    %4928 = vmatpush2.msra.mxu0 0.0
    %4929 = vmatprep.subr.mxu0 0.0
    %4930 = vmatpush2.msra.mxu0 0.0
    %4931 = vmatprep.subr.mxu0 0.0
    %4932 = vmatpush2.msra.mxu0 0.0
    %4933 = vmatprep.subr.mxu0 0.0
    %4934 = vmatpush2.msra.mxu0 0.0
    %4935 = vmatprep.subr.mxu0 0.0
    %4936 = vmatpush2.msra.mxu0 0.0
    %4937 = vmatprep.subr.mxu0 0.0
    %4938 = vmatpush2.msra.mxu0 0.0
    %4939 = vmatprep.subr.mxu0 0.0
    %4940 = vmatpush2.msra.mxu0 0.0
    %4941 = vmatprep.subr.mxu0 0.0
    %4942 = vmatpush2.msra.mxu0 0.0
    %4943 = vmatprep.subr.mxu0 0.0
    %4944 = vmatpush2.msra.mxu0 0.0
    %4945 = vmatprep.mubr.f32.mxu0 0.0
    %4946 = vmatmul.mubr.f32.gmra.mxu0 %v4879
    %v4947 = vpop.f32.mrf.mxu0
    %v4948 = vadd.f32 0.0, %v4947
    %v4949 = vpop.f32.mrf.mxu0
    %4950 = vdwg.mxu0
    %v4952 = vsel %vm190, %v4873, 0
    %4954 = vmatprep.subr.mxu0 0.0
    %4955 = vmatpush1.msra.mxu0 0.0
    %4956 = vmatprep.subr.mxu0 0.0
    %4957 = vmatpush1.msra.mxu0 0.0
    %4958 = vmatprep.subr.mxu0 0.0
    %4959 = vmatpush1.msra.mxu0 0.0
    %4960 = vmatprep.subr.mxu0 0.0
    %4961 = vmatpush1.msra.mxu0 0.0
    %4962 = vmatprep.subr.mxu0 0.0
    %4963 = vmatpush1.msra.mxu0 0.0
    %4964 = vmatprep.subr.mxu0 0.0
    %4965 = vmatpush1.msra.mxu0 0.0
    %4966 = vmatprep.subr.mxu0 0.0
    %4967 = vmatpush1.msra.mxu0 0.0
    %4968 = vmatprep.subr.mxu0 0.0
    %4969 = vmatpush1.msra.mxu0 0.0
    %4970 = vmatprep.subr.mxu0 0.0
    %4971 = vmatpush1.msra.mxu0 0.0
    %4972 = vmatprep.subr.mxu0 0.0
    %4973 = vmatpush1.msra.mxu0 0.0
    %4974 = vmatprep.subr.mxu0 0.0
    %4975 = vmatpush1.msra.mxu0 0.0
    %4976 = vmatprep.subr.mxu0 0.0
    %4977 = vmatpush1.msra.mxu0 0.0
    %4978 = vmatprep.subr.mxu0 0.0
    %4979 = vmatpush1.msra.mxu0 %v4877
    %4980 = vmatprep.subr.mxu0 0.0
    %4981 = vmatpush1.msra.mxu0 %v4876
    %4982 = vmatprep.subr.mxu0 0.0
    %4983 = vmatpush1.msra.mxu0 %v4875
    %4984 = vmatprep.subr.mxu0 0.0
    %4985 = vmatpush1.msra.mxu0 %v4874
    %4986 = vmatprep.subr.mxu0 0.0
    %4987 = vmatpush2.msra.mxu0 0.0
    %4988 = vmatprep.subr.mxu0 0.0
    %4989 = vmatpush2.msra.mxu0 0.0
    %4990 = vmatprep.subr.mxu0 0.0
    %4991 = vmatpush2.msra.mxu0 0.0
    %4992 = vmatprep.subr.mxu0 0.0
    %4993 = vmatpush2.msra.mxu0 0.0
    %4994 = vmatprep.subr.mxu0 0.0
    %4995 = vmatpush2.msra.mxu0 0.0
    %4996 = vmatprep.subr.mxu0 0.0
    %4997 = vmatpush2.msra.mxu0 0.0
    %4998 = vmatprep.subr.mxu0 0.0
    %4999 = vmatpush2.msra.mxu0 0.0
    %5000 = vmatprep.subr.mxu0 0.0
    %5001 = vmatpush2.msra.mxu0 0.0
    %5002 = vmatprep.subr.mxu0 0.0
    %5003 = vmatpush2.msra.mxu0 0.0
    %5004 = vmatprep.subr.mxu0 0.0
    %5005 = vmatpush2.msra.mxu0 0.0
    %5006 = vmatprep.subr.mxu0 0.0
    %5007 = vmatpush2.msra.mxu0 0.0
    %5008 = vmatprep.subr.mxu0 0.0
    %5009 = vmatpush2.msra.mxu0 0.0
    %5010 = vmatprep.subr.mxu0 0.0
    %5011 = vmatpush2.msra.mxu0 0.0
    %5012 = vmatprep.subr.mxu0 0.0
    %5013 = vmatpush2.msra.mxu0 0.0
    %5014 = vmatprep.subr.mxu0 0.0
    %5015 = vmatpush2.msra.mxu0 0.0
    %5016 = vmatprep.subr.mxu0 0.0
    %5017 = vmatpush2.msra.mxu0 0.0
    %5018 = vmatprep.mubr.f32.mxu0 0.0
    %5019 = vmatmul.mubr.f32.gmra.mxu0 %v4952
    %v5020 = vpop.f32.mrf.mxu0
    %v5021 = vadd.f32 0.0, %v5020
    %v5022 = vpop.f32.mrf.mxu0
    %5023 = vdwg.mxu0
    %v5026 = vunpack.c.l.s4 1966171168
    %v5027 = vunpack.c.0.s8 %v5026
    %v5028 = vlaneseq
    %v5029 = vshrl.u32 %v5028, 7
    %v5030 = vsub.s32 %v5027, %v5029
    %v5031 = vrot.slane %v4948, %v5030
    %v5032 = vcombine.high %v5031, %v5031
    %v5034 = vunpack.c.l.s4 1966171168
    %v5035 = vunpack.c.0.s8 %v5034
    %v5036 = vlaneseq
    %v5037 = vshrl.u32 %v5036, 7
    %v5038 = vsub.s32 %v5035, %v5037
    %v5039 = vrot.slane %v5031, %v5038
    %v5041 = vunpack.c.l.s4 1966171168
    %v5042 = vunpack.c.0.s8 %v5041
    %v5043 = vlaneseq
    %v5044 = vshrl.u32 %v5043, 7
    %v5045 = vsub.s32 %v5042, %v5044
    %v5046 = vrot.slane %v5032, %v5045
    %v5047 = vlaneseq
    %v5048 = vshrl.u32 %v5047, 7
    %v5049 = vsub.s32 0, %v5048
    %v5050 = vrot.slane %v5039, %v5049
    %v5051 = vlaneseq
    %v5052 = vshrl.u32 %v5051, 7
    %v5053 = vsub.s32 0, %v5052
    %v5054 = vrot.slane %v5046, %v5053
    %v5057 = vsub.f32 %v4591, %v5050
    %v5058 = vsub.f32 %v4592, %v5050
    %v5059 = vsub.f32 %v4593, %v5050
    %v5060 = vsub.f32 %v4594, %v5050
    %v5061 = vsub.f32 %v4595, %v5050
    %v5062 = vsub.f32 %v4596, %v5050
    %v5063 = vsub.f32 %v4597, %v5050
    %v5064 = vsub.f32 %v4598, %v5050
    %v5065 = vsub.f32 %v4599, %v5054
    %v5066 = vsub.f32 %v4600, %v5054
    %v5067 = vsub.f32 %v4601, %v5054
    %v5068 = vsub.f32 %v4602, %v5054
    %v5069 = vsub.f32 %v4603, %v5054
    %v5070 = vsub.f32 %v4604, %v5054
    %v5071 = vsub.f32 %v4605, %v5054
    %v5072 = vsub.f32 %v4606, %v5054
    %v5075 = vunpack.c.l.s4 1966171168
    %v5076 = vunpack.c.0.s8 %v5075
    %v5077 = vlaneseq
    %v5078 = vshrl.u32 %v5077, 7
    %v5079 = vsub.s32 %v5076, %v5078
    %v5080 = vrot.slane %v5021, %v5079
    %v5081 = vcombine.high %v5080, %v5080
    %v5083 = vunpack.c.l.s4 1966171168
    %v5084 = vunpack.c.0.s8 %v5083
    %v5085 = vlaneseq
    %v5086 = vshrl.u32 %v5085, 7
    %v5087 = vsub.s32 %v5084, %v5086
    %v5088 = vrot.slane %v5080, %v5087
    %v5090 = vunpack.c.l.s4 1966171168
    %v5091 = vunpack.c.0.s8 %v5090
    %v5092 = vlaneseq
    %v5093 = vshrl.u32 %v5092, 7
    %v5094 = vsub.s32 %v5091, %v5093
    %v5095 = vrot.slane %v5081, %v5094
    %v5096 = vlaneseq
    %v5097 = vshrl.u32 %v5096, 7
    %v5098 = vsub.s32 0, %v5097
    %v5099 = vrot.slane %v5088, %v5098
    %v5100 = vlaneseq
    %v5101 = vshrl.u32 %v5100, 7
    %v5102 = vsub.s32 0, %v5101
    %v5103 = vrot.slane %v5095, %v5102
    %v5106 = vmul.f32 %v5057, %v5099
    %v5107 = vmul.f32 %v5058, %v5099
    %v5108 = vmul.f32 %v5059, %v5099
    %v5109 = vmul.f32 %v5060, %v5099
    %v5110 = vmul.f32 %v5061, %v5099
    %v5111 = vmul.f32 %v5062, %v5099
    %v5112 = vmul.f32 %v5063, %v5099
    %v5113 = vmul.f32 %v5064, %v5099
    %v5114 = vmul.f32 %v5065, %v5103
    %v5115 = vmul.f32 %v5066, %v5103
    %v5116 = vmul.f32 %v5067, %v5103
    %v5117 = vmul.f32 %v5068, %v5103
    %v5118 = vmul.f32 %v5069, %v5103
    %v5119 = vmul.f32 %v5070, %v5103
    %v5120 = vmul.f32 %v5071, %v5103
    %v5121 = vmul.f32 %v5072, %v5103
    %v5122 = vld [vmem:[%s7] sm:$0x1]
    %v5124 = vlaneseq
    %v5125 = vshrl.u32 %v5124, 7
    %v5126 = vsub.s32 0, %v5125
    %v5127 = vrot.slane %v5122, %v5126
    %v5129 = vmul.f32 %v5106, %v5127
    %v5130 = vmul.f32 %v5107, %v5127
    %v5131 = vmul.f32 %v5108, %v5127
    %v5132 = vmul.f32 %v5109, %v5127
    %v5133 = vmul.f32 %v5110, %v5127
    %v5134 = vmul.f32 %v5111, %v5127
    %v5135 = vmul.f32 %v5112, %v5127
    %v5136 = vmul.f32 %v5113, %v5127
    %v5137 = vmul.f32 %v5114, %v5127
    %v5138 = vmul.f32 %v5115, %v5127
    %v5139 = vmul.f32 %v5116, %v5127
    %v5140 = vmul.f32 %v5117, %v5127
    %v5141 = vmul.f32 %v5118, %v5127
    %v5142 = vmul.f32 %v5119, %v5127
    %v5143 = vmul.f32 %v5120, %v5127
    %v5144 = vmul.f32 %v5121, %v5127
    %v5145 = vld [vmem:[%s8] sm:$0x1]
    %v5147 = vlaneseq
    %v5148 = vshrl.u32 %v5147, 7
    %v5149 = vsub.s32 0, %v5148
    %v5150 = vrot.slane %v5145, %v5149
    %v5152 = vadd.f32 %v5129, %v5150
    %v5153 = vadd.f32 %v5130, %v5150
    %v5154 = vadd.f32 %v5131, %v5150
    %v5155 = vadd.f32 %v5132, %v5150
    %v5156 = vadd.f32 %v5133, %v5150
    %v5157 = vadd.f32 %v5134, %v5150
    %v5158 = vadd.f32 %v5135, %v5150
    %v5159 = vadd.f32 %v5136, %v5150
    %v5160 = vadd.f32 %v5137, %v5150
    %v5161 = vadd.f32 %v5138, %v5150
    %v5162 = vadd.f32 %v5139, %v5150
    %v5163 = vadd.f32 %v5140, %v5150
    %v5164 = vadd.f32 %v5141, %v5150
    %v5165 = vadd.f32 %v5142, %v5150
    %v5166 = vadd.f32 %v5143, %v5150
    %v5167 = vadd.f32 %v5144, %v5150
    %v5168 = vmul.f32 %v5152, 0.5
    %v5169 = vmul.f32 %v5153, 0.5
    %v5170 = vmul.f32 %v5154, 0.5
    %v5171 = vmul.f32 %v5155, 0.5
    %v5172 = vmul.f32 %v5156, 0.5
    %v5173 = vmul.f32 %v5157, 0.5
    %v5174 = vmul.f32 %v5158, 0.5
    %v5175 = vmul.f32 %v5159, 0.5
    %v5176 = vmul.f32 %v5160, 0.5
    %v5177 = vmul.f32 %v5161, 0.5
    %v5178 = vmul.f32 %v5162, 0.5
    %v5179 = vmul.f32 %v5163, 0.5
    %v5180 = vmul.f32 %v5164, 0.5
    %v5181 = vmul.f32 %v5165, 0.5
    %v5182 = vmul.f32 %v5166, 0.5
    %v5183 = vmul.f32 %v5167, 0.5
    %v5184 = vtanh.pop %v5168
    %v5185 = vtanh.pop %v5169
    %v5186 = vtanh.pop %v5170
    %v5187 = vtanh.pop %v5171
    %v5188 = vtanh.pop %v5172
    %v5189 = vtanh.pop %v5173
    %v5190 = vtanh.pop %v5174
    %v5191 = vtanh.pop %v5175
    %v5192 = vtanh.pop %v5176
    %v5193 = vtanh.pop %v5177
    %v5194 = vtanh.pop %v5178
    %v5195 = vtanh.pop %v5179
    %v5196 = vtanh.pop %v5180
    %v5197 = vtanh.pop %v5181
    %v5198 = vtanh.pop %v5182
    %v5199 = vtanh.pop %v5183
    %v5200 = vmul.f32 %v5184, 0.5
    %v5201 = vmul.f32 %v5185, 0.5
    %v5202 = vmul.f32 %v5186, 0.5
    %v5203 = vmul.f32 %v5187, 0.5
    %v5204 = vmul.f32 %v5188, 0.5
    %v5205 = vmul.f32 %v5189, 0.5
    %v5206 = vmul.f32 %v5190, 0.5
    %v5207 = vmul.f32 %v5191, 0.5
    %v5208 = vmul.f32 %v5192, 0.5
    %v5209 = vmul.f32 %v5193, 0.5
    %v5210 = vmul.f32 %v5194, 0.5
    %v5211 = vmul.f32 %v5195, 0.5
    %v5212 = vmul.f32 %v5196, 0.5
    %v5213 = vmul.f32 %v5197, 0.5
    %v5214 = vmul.f32 %v5198, 0.5
    %v5215 = vmul.f32 %v5199, 0.5
    %v5216 = vadd.f32 %v5200, 0.5
    %v5217 = vadd.f32 %v5201, 0.5
    %v5218 = vadd.f32 %v5202, 0.5
    %v5219 = vadd.f32 %v5203, 0.5
    %v5220 = vadd.f32 %v5204, 0.5
    %v5221 = vadd.f32 %v5205, 0.5
    %v5222 = vadd.f32 %v5206, 0.5
    %v5223 = vadd.f32 %v5207, 0.5
    %v5224 = vadd.f32 %v5208, 0.5
    %v5225 = vadd.f32 %v5209, 0.5
    %v5226 = vadd.f32 %v5210, 0.5
    %v5227 = vadd.f32 %v5211, 0.5
    %v5228 = vadd.f32 %v5212, 0.5
    %v5229 = vadd.f32 %v5213, 0.5
    %v5230 = vadd.f32 %v5214, 0.5
    %v5231 = vadd.f32 %v5215, 0.5
    %v5232 = vmul.f32 %v5152, %v5216
    %v5233 = vmul.f32 %v5153, %v5217
    %v5234 = vmul.f32 %v5154, %v5218
    %v5235 = vmul.f32 %v5155, %v5219
    %v5236 = vmul.f32 %v5156, %v5220
    %v5237 = vmul.f32 %v5157, %v5221
    %v5238 = vmul.f32 %v5158, %v5222
    %v5239 = vmul.f32 %v5159, %v5223
    %v5240 = vmul.f32 %v5160, %v5224
    %v5241 = vmul.f32 %v5161, %v5225
    %v5242 = vmul.f32 %v5162, %v5226
    %v5243 = vmul.f32 %v5163, %v5227
    %v5244 = vmul.f32 %v5164, %v5228
    %v5245 = vmul.f32 %v5165, %v5229
    %v5246 = vmul.f32 %v5166, %v5230
    %v5247 = vmul.f32 %v5167, %v5231
    %v5248 = vpack.c.bf16 %v5232, %v5232
    %v5249 = vpack.c.bf16 %v5233, %v5233
    %v5250 = vpack.c.bf16 %v5234, %v5234
    %v5251 = vpack.c.bf16 %v5235, %v5235
    %v5252 = vpack.c.bf16 %v5236, %v5236
    %v5253 = vpack.c.bf16 %v5237, %v5237
    %v5254 = vpack.c.bf16 %v5238, %v5238
    %v5255 = vpack.c.bf16 %v5239, %v5239
    %v5256 = vpack.c.bf16 %v5240, %v5240
    %v5257 = vpack.c.bf16 %v5241, %v5241
    %v5258 = vpack.c.bf16 %v5242, %v5242
    %v5259 = vpack.c.bf16 %v5243, %v5243
    %v5260 = vpack.c.bf16 %v5244, %v5244
    %v5261 = vpack.c.bf16 %v5245, %v5245
    %v5262 = vpack.c.bf16 %v5246, %v5246
    %v5263 = vpack.c.bf16 %v5247, %v5247
    %v5280 = vunpack.c.l.b16 %v5248
    %v5281 = vunpack.c.l.b16 %v5249
    %v5282 = vunpack.c.l.b16 %v5250
    %v5283 = vunpack.c.l.b16 %v5251
    %v5284 = vunpack.c.l.b16 %v5252
    %v5285 = vunpack.c.l.b16 %v5253
    %v5286 = vunpack.c.l.b16 %v5254
    %v5287 = vunpack.c.l.b16 %v5255
    %v5288 = vunpack.c.l.b16 %v5256
    %v5289 = vunpack.c.l.b16 %v5257
    %v5290 = vunpack.c.l.b16 %v5258
    %v5291 = vunpack.c.l.b16 %v5259
    %v5292 = vunpack.c.l.b16 %v5260
    %v5293 = vunpack.c.l.b16 %v5261
    %v5294 = vunpack.c.l.b16 %v5262
    %v5295 = vunpack.c.l.b16 %v5263
    %v5296 = vpack.c.b16 %v5280, %v5280
    %v5297 = vpack.c.b16 %v5281, %v5281
    %v5298 = vpack.c.b16 %v5282, %v5282
    %v5299 = vpack.c.b16 %v5283, %v5283
    %v5300 = vpack.c.b16 %v5284, %v5284
    %v5301 = vpack.c.b16 %v5285, %v5285
    %v5302 = vpack.c.b16 %v5286, %v5286
    %v5303 = vpack.c.b16 %v5287, %v5287
    %v5304 = vpack.c.b16 %v5288, %v5288
    %v5305 = vpack.c.b16 %v5289, %v5289
    %v5306 = vpack.c.b16 %v5290, %v5290
    %v5307 = vpack.c.b16 %v5291, %v5291
    %v5308 = vpack.c.b16 %v5292, %v5292
    %v5309 = vpack.c.b16 %v5293, %v5293
    %v5310 = vpack.c.b16 %v5294, %v5294
    %v5311 = vpack.c.b16 %v5295, %v5295
    %v5312 = vrot.slane %v5296, 7
    %v5313 = vrot.slane %v5312, 4
    %v5314 = vrot.slane %v5297, 7
    %v5315 = vrot.slane %v5314, 4
    %v5316 = vrot.slane %v5298, 7
    %v5317 = vrot.slane %v5316, 4
    %v5318 = vrot.slane %v5299, 7
    %v5319 = vrot.slane %v5318, 4
    %v5320 = vrot.slane %v5300, 7
    %v5321 = vrot.slane %v5320, 4
    %v5322 = vrot.slane %v5301, 7
    %v5323 = vrot.slane %v5322, 4
    %v5324 = vrot.slane %v5302, 7
    %v5325 = vrot.slane %v5324, 4
    %v5326 = vrot.slane %v5303, 7
    %v5327 = vrot.slane %v5326, 4
    %v5328 = vrot.slane %v5304, 7
    %v5329 = vrot.slane %v5328, 4
    %v5330 = vrot.slane %v5305, 7
    %v5331 = vrot.slane %v5330, 4
    %v5332 = vrot.slane %v5306, 7
    %v5333 = vrot.slane %v5332, 4
    %v5334 = vrot.slane %v5307, 7
    %v5335 = vrot.slane %v5334, 4
    %v5336 = vrot.slane %v5308, 7
    %v5337 = vrot.slane %v5336, 4
    %v5338 = vrot.slane %v5309, 7
    %v5339 = vrot.slane %v5338, 4
    %v5340 = vrot.slane %v5310, 7
    %v5341 = vrot.slane %v5340, 4
    %v5342 = vrot.slane %v5311, 7
    %v5343 = vrot.slane %v5342, 4
    %s5376 = scalar_lea.vmem [#allocation3], 8
    %vm5377 = vcmask 519169
    %5378 = vst.msk [vmem:[%s5376] sm:$0xe] %vm5377, %v5312
    %5379 = vst.msk [vmem:[%s5376 + $0x4] sm:$0x1] %vm148, %v5313
    %5380 = vst.msk [vmem:[%s5376 + $0x8] sm:$0xe] %vm5377, %v5314
    %5381 = vst.msk [vmem:[%s5376 + $0xc] sm:$0x1] %vm148, %v5315
    %5382 = vst.msk [vmem:[%s5376 + $0x10] sm:$0xe] %vm5377, %v5316
    %5383 = vst.msk [vmem:[%s5376 + $0x14] sm:$0x1] %vm148, %v5317
    %5384 = vst.msk [vmem:[%s5376 + $0x18] sm:$0xe] %vm5377, %v5318
    %5385 = vst.msk [vmem:[%s5376 + $0x1c] sm:$0x1] %vm148, %v5319
    %5386 = vst.msk [vmem:[%s5376 + $0x20] sm:$0xe] %vm5377, %v5320
    %5387 = vst.msk [vmem:[%s5376 + $0x24] sm:$0x1] %vm148, %v5321
    %5388 = vst.msk [vmem:[%s5376 + $0x28] sm:$0xe] %vm5377, %v5322
    %5389 = vst.msk [vmem:[%s5376 + $0x2c] sm:$0x1] %vm148, %v5323
    %5390 = vst.msk [vmem:[%s5376 + $0x30] sm:$0xe] %vm5377, %v5324
    %5391 = vst.msk [vmem:[%s5376 + $0x34] sm:$0x1] %vm148, %v5325
    %5392 = vst.msk [vmem:[%s5376 + $0x38] sm:$0xe] %vm5377, %v5326
    %5393 = vst.msk [vmem:[%s5376 + $0x3c] sm:$0x1] %vm148, %v5327
    %5394 = vst.msk [vmem:[%s5376 + $0x50] sm:$0xe] %vm5377, %v5328
    %5395 = vst.msk [vmem:[%s5376 + $0x54] sm:$0x1] %vm148, %v5329
    %5396 = vst.msk [vmem:[%s5376 + $0x58] sm:$0xe] %vm5377, %v5330
    %5397 = vst.msk [vmem:[%s5376 + $0x5c] sm:$0x1] %vm148, %v5331
    %5398 = vst.msk [vmem:[%s5376 + $0x60] sm:$0xe] %vm5377, %v5332
    %5399 = vst.msk [vmem:[%s5376 + $0x64] sm:$0x1] %vm148, %v5333
    %5400 = vst.msk [vmem:[%s5376 + $0x68] sm:$0xe] %vm5377, %v5334
    %5401 = vst.msk [vmem:[%s5376 + $0x6c] sm:$0x1] %vm148, %v5335
    %5402 = vst.msk [vmem:[%s5376 + $0x70] sm:$0xe] %vm5377, %v5336
    %5403 = vst.msk [vmem:[%s5376 + $0x74] sm:$0x1] %vm148, %v5337
    %5404 = vst.msk [vmem:[%s5376 + $0x78] sm:$0xe] %vm5377, %v5338
    %5405 = vst.msk [vmem:[%s5376 + $0x7c] sm:$0x1] %vm148, %v5339
    %5406 = vst.msk [vmem:[%s5376 + $0x80] sm:$0xe] %vm5377, %v5340
    %5407 = vst.msk [vmem:[%s5376 + $0x84] sm:$0x1] %vm148, %v5341
    %5408 = vst.msk [vmem:[%s5376 + $0x88] sm:$0xe] %vm5377, %v5342
    %5409 = vst.msk [vmem:[%s5376 + $0x8c] sm:$0x1] %vm148, %v5343
    %v5410 = vld [vmem:[#allocation3] sm:$0xf]
    %v5411 = vld [vmem:[#allocation3 + $0x4] sm:$0x1]
    %v5412 = vld [vmem:[#allocation3 + $0x8] sm:$0xf]
    %v5413 = vld [vmem:[#allocation3 + $0xc] sm:$0x1]
    %v5414 = vld [vmem:[#allocation3 + $0x10] sm:$0xf]
    %v5415 = vld [vmem:[#allocation3 + $0x14] sm:$0x1]
    %v5416 = vld [vmem:[#allocation3 + $0x18] sm:$0xf]
    %v5417 = vld [vmem:[#allocation3 + $0x1c] sm:$0x1]
    %v5418 = vld [vmem:[#allocation3 + $0x20] sm:$0xf]
    %v5419 = vld [vmem:[#allocation3 + $0x24] sm:$0x1]
    %v5420 = vld [vmem:[#allocation3 + $0x28] sm:$0xf]
    %v5421 = vld [vmem:[#allocation3 + $0x2c] sm:$0x1]
    %v5422 = vld [vmem:[#allocation3 + $0x30] sm:$0xf]
    %v5423 = vld [vmem:[#allocation3 + $0x34] sm:$0x1]
    %v5424 = vld [vmem:[#allocation3 + $0x38] sm:$0xf]
    %v5425 = vld [vmem:[#allocation3 + $0x3c] sm:$0x1]
    %v5426 = vld [vmem:[#allocation3 + $0x50] sm:$0xf]
    %v5427 = vld [vmem:[#allocation3 + $0x54] sm:$0x1]
    %v5428 = vld [vmem:[#allocation3 + $0x58] sm:$0xf]
    %v5429 = vld [vmem:[#allocation3 + $0x5c] sm:$0x1]
    %v5430 = vld [vmem:[#allocation3 + $0x60] sm:$0xf]
    %v5431 = vld [vmem:[#allocation3 + $0x64] sm:$0x1]
    %v5432 = vld [vmem:[#allocation3 + $0x68] sm:$0xf]
    %v5433 = vld [vmem:[#allocation3 + $0x6c] sm:$0x1]
    %v5434 = vld [vmem:[#allocation3 + $0x70] sm:$0xf]
    %v5435 = vld [vmem:[#allocation3 + $0x74] sm:$0x1]
    %v5436 = vld [vmem:[#allocation3 + $0x78] sm:$0xf]
    %v5437 = vld [vmem:[#allocation3 + $0x7c] sm:$0x1]
    %v5438 = vld [vmem:[#allocation3 + $0x80] sm:$0xf]
    %v5439 = vld [vmem:[#allocation3 + $0x84] sm:$0x1]
    %v5440 = vld [vmem:[#allocation3 + $0x88] sm:$0xf]
    %v5441 = vld [vmem:[#allocation3 + $0x8c] sm:$0x1]
    %v5443 = vshrl.u32 %v5410, 16
    %v5445 = vrot.slane %v5443, 4
    %v5446 = vshll.u32 %v5410, 16
    %v5448 = vrot.slane %v5446, 5
    %v5449 = vor.u32 %v5445, %v5448
    %v5450 = vrot.slane %v5449, 4
    %v5452 = vshll.u32 %v5411, 16
    %v5454 = vrot.slane %v5452, 5
    %v5455 = vsel %vm1024, %v5450, %v5454
    %v5457 = vshrl.u32 %v5412, 16
    %v5459 = vrot.slane %v5457, 4
    %v5460 = vshll.u32 %v5412, 16
    %v5462 = vrot.slane %v5460, 5
    %v5463 = vor.u32 %v5459, %v5462
    %v5464 = vrot.slane %v5463, 4
    %v5466 = vshll.u32 %v5413, 16
    %v5468 = vrot.slane %v5466, 5
    %v5469 = vsel %vm1024, %v5464, %v5468
    %v5471 = vshrl.u32 %v5414, 16
    %v5473 = vrot.slane %v5471, 4
    %v5474 = vshll.u32 %v5414, 16
    %v5476 = vrot.slane %v5474, 5
    %v5477 = vor.u32 %v5473, %v5476
    %v5478 = vrot.slane %v5477, 4
    %v5480 = vshll.u32 %v5415, 16
    %v5482 = vrot.slane %v5480, 5
    %v5483 = vsel %vm1024, %v5478, %v5482
    %v5485 = vshrl.u32 %v5416, 16
    %v5487 = vrot.slane %v5485, 4
    %v5488 = vshll.u32 %v5416, 16
    %v5490 = vrot.slane %v5488, 5
    %v5491 = vor.u32 %v5487, %v5490
    %v5492 = vrot.slane %v5491, 4
    %v5494 = vshll.u32 %v5417, 16
    %v5496 = vrot.slane %v5494, 5
    %v5497 = vsel %vm1024, %v5492, %v5496
    %v5499 = vshrl.u32 %v5418, 16
    %v5501 = vrot.slane %v5499, 4
    %v5502 = vshll.u32 %v5418, 16
    %v5504 = vrot.slane %v5502, 5
    %v5505 = vor.u32 %v5501, %v5504
    %v5506 = vrot.slane %v5505, 4
    %v5508 = vshll.u32 %v5419, 16
    %v5510 = vrot.slane %v5508, 5
    %v5511 = vsel %vm1024, %v5506, %v5510
    %v5513 = vshrl.u32 %v5420, 16
    %v5515 = vrot.slane %v5513, 4
    %v5516 = vshll.u32 %v5420, 16
    %v5518 = vrot.slane %v5516, 5
    %v5519 = vor.u32 %v5515, %v5518
    %v5520 = vrot.slane %v5519, 4
    %v5522 = vshll.u32 %v5421, 16
    %v5524 = vrot.slane %v5522, 5
    %v5525 = vsel %vm1024, %v5520, %v5524
    %v5527 = vshrl.u32 %v5422, 16
    %v5529 = vrot.slane %v5527, 4
    %v5530 = vshll.u32 %v5422, 16
    %v5532 = vrot.slane %v5530, 5
    %v5533 = vor.u32 %v5529, %v5532
    %v5534 = vrot.slane %v5533, 4
    %v5536 = vshll.u32 %v5423, 16
    %v5538 = vrot.slane %v5536, 5
    %v5539 = vsel %vm1024, %v5534, %v5538
    %v5541 = vshrl.u32 %v5424, 16
    %v5543 = vrot.slane %v5541, 4
    %v5544 = vshll.u32 %v5424, 16
    %v5546 = vrot.slane %v5544, 5
    %v5547 = vor.u32 %v5543, %v5546
    %v5548 = vrot.slane %v5547, 4
    %v5550 = vshll.u32 %v5425, 16
    %v5552 = vrot.slane %v5550, 5
    %v5553 = vsel %vm1024, %v5548, %v5552
    %v5555 = vshrl.u32 %v5426, 16
    %v5557 = vrot.slane %v5555, 4
    %v5558 = vshll.u32 %v5426, 16
    %v5560 = vrot.slane %v5558, 5
    %v5561 = vor.u32 %v5557, %v5560
    %v5562 = vrot.slane %v5561, 4
    %v5564 = vshll.u32 %v5427, 16
    %v5566 = vrot.slane %v5564, 5
    %v5567 = vsel %vm1024, %v5562, %v5566
    %v5569 = vshrl.u32 %v5428, 16
    %v5571 = vrot.slane %v5569, 4
    %v5572 = vshll.u32 %v5428, 16
    %v5574 = vrot.slane %v5572, 5
    %v5575 = vor.u32 %v5571, %v5574
    %v5576 = vrot.slane %v5575, 4
    %v5578 = vshll.u32 %v5429, 16
    %v5580 = vrot.slane %v5578, 5
    %v5581 = vsel %vm1024, %v5576, %v5580
    %v5583 = vshrl.u32 %v5430, 16
    %v5585 = vrot.slane %v5583, 4
    %v5586 = vshll.u32 %v5430, 16
    %v5588 = vrot.slane %v5586, 5
    %v5589 = vor.u32 %v5585, %v5588
    %v5590 = vrot.slane %v5589, 4
    %v5592 = vshll.u32 %v5431, 16
    %v5594 = vrot.slane %v5592, 5
    %v5595 = vsel %vm1024, %v5590, %v5594
    %v5597 = vshrl.u32 %v5432, 16
    %v5599 = vrot.slane %v5597, 4
    %v5600 = vshll.u32 %v5432, 16
    %v5602 = vrot.slane %v5600, 5
    %v5603 = vor.u32 %v5599, %v5602
    %v5604 = vrot.slane %v5603, 4
    %v5606 = vshll.u32 %v5433, 16
    %v5608 = vrot.slane %v5606, 5
    %v5609 = vsel %vm1024, %v5604, %v5608
    %v5611 = vshrl.u32 %v5434, 16
    %v5613 = vrot.slane %v5611, 4
    %v5614 = vshll.u32 %v5434, 16
    %v5616 = vrot.slane %v5614, 5
    %v5617 = vor.u32 %v5613, %v5616
    %v5618 = vrot.slane %v5617, 4
    %v5620 = vshll.u32 %v5435, 16
    %v5622 = vrot.slane %v5620, 5
    %v5623 = vsel %vm1024, %v5618, %v5622
    %v5625 = vshrl.u32 %v5436, 16
    %v5627 = vrot.slane %v5625, 4
    %v5628 = vshll.u32 %v5436, 16
    %v5630 = vrot.slane %v5628, 5
    %v5631 = vor.u32 %v5627, %v5630
    %v5632 = vrot.slane %v5631, 4
    %v5634 = vshll.u32 %v5437, 16
    %v5636 = vrot.slane %v5634, 5
    %v5637 = vsel %vm1024, %v5632, %v5636
    %v5639 = vshrl.u32 %v5438, 16
    %v5641 = vrot.slane %v5639, 4
    %v5642 = vshll.u32 %v5438, 16
    %v5644 = vrot.slane %v5642, 5
    %v5645 = vor.u32 %v5641, %v5644
    %v5646 = vrot.slane %v5645, 4
    %v5648 = vshll.u32 %v5439, 16
    %v5650 = vrot.slane %v5648, 5
    %v5651 = vsel %vm1024, %v5646, %v5650
    %v5653 = vshrl.u32 %v5440, 16
    %v5655 = vrot.slane %v5653, 4
    %v5656 = vshll.u32 %v5440, 16
    %v5658 = vrot.slane %v5656, 5
    %v5659 = vor.u32 %v5655, %v5658
    %v5660 = vrot.slane %v5659, 4
    %v5662 = vshll.u32 %v5441, 16
    %v5664 = vrot.slane %v5662, 5
    %v5665 = vsel %vm1024, %v5660, %v5664
    %v5666 = vld [vmem:[%s11] sm:$0xf]
    %v5667 = vld [vmem:[%s11 + $0x4] sm:$0xf]
    %v5668 = vld [vmem:[%s11 + $0x8] sm:$0xf]
    %v5669 = vld [vmem:[%s11 + $0xc] sm:$0xf]
    %v5670 = vld [vmem:[%s11 + $0x10] sm:$0xf]
    %v5671 = vld [vmem:[%s11 + $0x14] sm:$0xf]
    %v5672 = vld [vmem:[%s11 + $0x18] sm:$0xf]
    %v5673 = vld [vmem:[%s11 + $0x1c] sm:$0xf]
    %v5674 = vld [vmem:[#allocation3] sm:$0xe]
    %v5675 = vld [vmem:[#allocation3 + $0x8] sm:$0xe]
    %v5676 = vld [vmem:[#allocation3 + $0x10] sm:$0xe]
    %v5677 = vld [vmem:[#allocation3 + $0x18] sm:$0xe]
    %v5678 = vld [vmem:[#allocation3 + $0x20] sm:$0xe]
    %v5679 = vld [vmem:[#allocation3 + $0x28] sm:$0xe]
    %v5680 = vld [vmem:[#allocation3 + $0x30] sm:$0xe]
    %v5681 = vld [vmem:[#allocation3 + $0x38] sm:$0xe]
    %v5682 = vld [vmem:[#allocation3 + $0x50] sm:$0xe]
    %v5683 = vld [vmem:[#allocation3 + $0x58] sm:$0xe]
    %v5684 = vld [vmem:[#allocation3 + $0x60] sm:$0xe]
    %v5685 = vld [vmem:[#allocation3 + $0x68] sm:$0xe]
    %v5686 = vld [vmem:[#allocation3 + $0x70] sm:$0xe]
    %v5687 = vld [vmem:[#allocation3 + $0x78] sm:$0xe]
    %v5688 = vld [vmem:[#allocation3 + $0x80] sm:$0xe]
    %v5689 = vld [vmem:[#allocation3 + $0x88] sm:$0xe]
    %v5722 = vrot.slane %v5674, 5
    %v5723 = vrot.slane %v5722, 4
    %v5724 = vrot.slane %v5411, 5
    %v5725 = vsel %vm1303, %v5723, %v5724
    %v5726 = vrot.slane %v5675, 5
    %v5727 = vrot.slane %v5726, 4
    %v5728 = vrot.slane %v5413, 5
    %v5729 = vsel %vm1303, %v5727, %v5728
    %v5730 = vrot.slane %v5676, 5
    %v5731 = vrot.slane %v5730, 4
    %v5732 = vrot.slane %v5415, 5
    %v5733 = vsel %vm1303, %v5731, %v5732
    %v5734 = vrot.slane %v5677, 5
    %v5735 = vrot.slane %v5734, 4
    %v5736 = vrot.slane %v5417, 5
    %v5737 = vsel %vm1303, %v5735, %v5736
    %v5738 = vrot.slane %v5678, 5
    %v5739 = vrot.slane %v5738, 4
    %v5740 = vrot.slane %v5419, 5
    %v5741 = vsel %vm1303, %v5739, %v5740
    %v5742 = vrot.slane %v5679, 5
    %v5743 = vrot.slane %v5742, 4
    %v5744 = vrot.slane %v5421, 5
    %v5745 = vsel %vm1303, %v5743, %v5744
    %v5746 = vrot.slane %v5680, 5
    %v5747 = vrot.slane %v5746, 4
    %v5748 = vrot.slane %v5423, 5
    %v5749 = vsel %vm1303, %v5747, %v5748
    %v5750 = vrot.slane %v5681, 5
    %v5751 = vrot.slane %v5750, 4
    %v5752 = vrot.slane %v5425, 5
    %v5753 = vsel %vm1303, %v5751, %v5752
    %v5754 = vrot.slane %v5682, 5
    %v5755 = vrot.slane %v5754, 4
    %v5756 = vrot.slane %v5427, 5
    %v5757 = vsel %vm1303, %v5755, %v5756
    %v5758 = vrot.slane %v5683, 5
    %v5759 = vrot.slane %v5758, 4
    %v5760 = vrot.slane %v5429, 5
    %v5761 = vsel %vm1303, %v5759, %v5760
    %v5762 = vrot.slane %v5684, 5
    %v5763 = vrot.slane %v5762, 4
    %v5764 = vrot.slane %v5431, 5
    %v5765 = vsel %vm1303, %v5763, %v5764
    %v5766 = vrot.slane %v5685, 5
    %v5767 = vrot.slane %v5766, 4
    %v5768 = vrot.slane %v5433, 5
    %v5769 = vsel %vm1303, %v5767, %v5768
    %v5770 = vrot.slane %v5686, 5
    %v5771 = vrot.slane %v5770, 4
    %v5772 = vrot.slane %v5435, 5
    %v5773 = vsel %vm1303, %v5771, %v5772
    %v5774 = vrot.slane %v5687, 5
    %v5775 = vrot.slane %v5774, 4
    %v5776 = vrot.slane %v5437, 5
    %v5777 = vsel %vm1303, %v5775, %v5776
    %v5778 = vrot.slane %v5688, 5
    %v5779 = vrot.slane %v5778, 4
    %v5780 = vrot.slane %v5439, 5
    %v5781 = vsel %vm1303, %v5779, %v5780
    %v5782 = vrot.slane %v5689, 5
    %v5783 = vrot.slane %v5782, 4
    %v5784 = vrot.slane %v5441, 5
    %v5785 = vsel %vm1303, %v5783, %v5784
    %v5786 = vld [vmem:[%s11 + $0x20] sm:$0xf]
    %v5787 = vld [vmem:[%s11 + $0x24] sm:$0xf]
    %v5788 = vld [vmem:[%s11 + $0x28] sm:$0xf]
    %v5789 = vld [vmem:[%s11 + $0x2c] sm:$0xf]
    %v5790 = vld [vmem:[%s11 + $0x30] sm:$0xf]
    %v5791 = vld [vmem:[%s11 + $0x34] sm:$0xf]
    %v5792 = vld [vmem:[%s11 + $0x38] sm:$0xf]
    %v5793 = vld [vmem:[%s11 + $0x3c] sm:$0xf]
    %v5794 = vunpack.c.l.b16 %v5725
    %v5795 = vunpack.c.l.b16 %v5729
    %v5796 = vunpack.c.l.b16 %v5733
    %v5797 = vunpack.c.l.b16 %v5737
    %v5798 = vunpack.c.l.b16 %v5741
    %v5799 = vunpack.c.l.b16 %v5745
    %v5800 = vunpack.c.l.b16 %v5749
    %v5801 = vunpack.c.l.b16 %v5753
    %v5802 = vunpack.c.l.b16 %v5757
    %v5803 = vunpack.c.l.b16 %v5761
    %v5804 = vunpack.c.l.b16 %v5765
    %v5805 = vunpack.c.l.b16 %v5769
    %v5806 = vunpack.c.l.b16 %v5773
    %v5807 = vunpack.c.l.b16 %v5777
    %v5808 = vunpack.c.l.b16 %v5781
    %v5809 = vunpack.c.l.b16 %v5785
    %v5810 = vpack.c.b16 %v5795, %v5794
    %v5811 = vpack.c.b16 %v5797, %v5796
    %v5812 = vpack.c.b16 %v5799, %v5798
    %v5813 = vpack.c.b16 %v5801, %v5800
    %v5814 = vpack.c.b16 %v5803, %v5802
    %v5815 = vpack.c.b16 %v5805, %v5804
    %v5816 = vpack.c.b16 %v5807, %v5806
    %v5817 = vpack.c.b16 %v5809, %v5808
    %v5826 = vunpack.c.l.b16 %v5786
    %v5827 = vunpack.c.l.b16 %v5787
    %v5828 = vunpack.c.l.b16 %v5788
    %v5829 = vunpack.c.l.b16 %v5789
    %v5830 = vunpack.c.l.b16 %v5790
    %v5831 = vunpack.c.l.b16 %v5791
    %v5832 = vunpack.c.l.b16 %v5792
    %v5833 = vunpack.c.l.b16 %v5793
    %v5834 = vpack.c.b16 %v5827, %v5826
    %v5835 = vpack.c.b16 %v5829, %v5828
    %v5836 = vpack.c.b16 %v5831, %v5830
    %v5837 = vpack.c.b16 %v5833, %v5832
    %v5843 = vsel %vm4607, %v5810, 0
    %v5846 = vsel %vm4607, %v5811, 0
    %v5849 = vsel %vm4607, %v5812, 0
    %v5852 = vsel %vm4607, %v5813, 0
    %v5855 = vsel %vm4607, %v5814, 0
    %v5858 = vsel %vm4607, %v5815, 0
    %v5861 = vsel %vm4607, %v5816, 0
    %v5864 = vsel %vm4607, %v5817, 0
    %5866 = vmatprep.subr.bf16.mxu0 0
    %5867 = vmatpush1.bf16.msra.mxu0 0
    %5868 = vmatprep.subr.bf16.mxu0 0
    %5869 = vmatpush1.bf16.msra.mxu0 0
    %5870 = vmatprep.subr.bf16.mxu0 0
    %5871 = vmatpush1.bf16.msra.mxu0 0
    %5872 = vmatprep.subr.bf16.mxu0 0
    %5873 = vmatpush1.bf16.msra.mxu0 0
    %5874 = vmatprep.subr.bf16.mxu0 0
    %5875 = vmatpush1.bf16.msra.mxu0 %v5837
    %5876 = vmatprep.subr.bf16.mxu0 0
    %5877 = vmatpush1.bf16.msra.mxu0 %v5836
    %5878 = vmatprep.subr.bf16.mxu0 0
    %5879 = vmatpush1.bf16.msra.mxu0 %v5835
    %5880 = vmatprep.subr.bf16.mxu0 0
    %5881 = vmatpush1.bf16.msra.mxu0 %v5834
    %5882 = vmatprep.subr.bf16.mxu0 0
    %5883 = vmatpush2.bf16.msra.mxu0 0
    %5884 = vmatprep.subr.bf16.mxu0 0
    %5885 = vmatpush2.bf16.msra.mxu0 0
    %5886 = vmatprep.subr.bf16.mxu0 0
    %5887 = vmatpush2.bf16.msra.mxu0 0
    %5888 = vmatprep.subr.bf16.mxu0 0
    %5889 = vmatpush2.bf16.msra.mxu0 0
    %5890 = vmatprep.subr.bf16.mxu0 0
    %5891 = vmatpush2.bf16.msra.mxu0 0
    %5892 = vmatprep.subr.bf16.mxu0 0
    %5893 = vmatpush2.bf16.msra.mxu0 0
    %5894 = vmatprep.subr.bf16.mxu0 0
    %5895 = vmatpush2.bf16.msra.mxu0 0
    %5896 = vmatprep.subr.bf16.mxu0 0
    %5897 = vmatpush2.bf16.msra.mxu0 0
    %5898 = vmatprep.mubr.bf16.mxu0 0
    %5899 = vmatmul.mubr.bf16.gmra.mxu0 %v5843
    %v5900 = vpop.f32.mrf.mxu0
    %v5901 = vadd.f32 0.0, %v5900
    %v5902 = vpop.f32.mrf.mxu0
    %v5903 = vpop.f32.mrf.mxu0
    %v5904 = vadd.f32 0.0, %v5903
    %v5905 = vpop.f32.mrf.mxu0
    %5906 = vmatprep.mubr.bf16.mxu0 0
    %5907 = vmatmul.mubr.bf16.gmra.mxu0 %v5846
    %v5908 = vpop.f32.mrf.mxu0
    %v5909 = vadd.f32 0.0, %v5908
    %v5910 = vpop.f32.mrf.mxu0
    %v5911 = vpop.f32.mrf.mxu0
    %v5912 = vadd.f32 0.0, %v5911
    %v5913 = vpop.f32.mrf.mxu0
    %5914 = vmatprep.mubr.bf16.mxu0 0
    %5915 = vmatmul.mubr.bf16.gmra.mxu0 %v5849
    %v5916 = vpop.f32.mrf.mxu0
    %v5917 = vadd.f32 0.0, %v5916
    %v5918 = vpop.f32.mrf.mxu0
    %v5919 = vpop.f32.mrf.mxu0
    %v5920 = vadd.f32 0.0, %v5919
    %v5921 = vpop.f32.mrf.mxu0
    %5922 = vmatprep.mubr.bf16.mxu0 0
    %5923 = vmatmul.mubr.bf16.gmra.mxu0 %v5852
    %v5924 = vpop.f32.mrf.mxu0
    %v5925 = vadd.f32 0.0, %v5924
    %v5926 = vpop.f32.mrf.mxu0
    %v5927 = vpop.f32.mrf.mxu0
    %v5928 = vadd.f32 0.0, %v5927
    %v5929 = vpop.f32.mrf.mxu0
    %5930 = vmatprep.mubr.bf16.mxu0 0
    %5931 = vmatmul.mubr.bf16.gmra.mxu0 %v5855
    %v5932 = vpop.f32.mrf.mxu0
    %v5933 = vadd.f32 0.0, %v5932
    %v5934 = vpop.f32.mrf.mxu0
    %v5935 = vpop.f32.mrf.mxu0
    %v5936 = vadd.f32 0.0, %v5935
    %v5937 = vpop.f32.mrf.mxu0
    %5938 = vmatprep.mubr.bf16.mxu0 0
    %5939 = vmatmul.mubr.bf16.gmra.mxu0 %v5858
    %v5940 = vpop.f32.mrf.mxu0
    %v5941 = vadd.f32 0.0, %v5940
    %v5942 = vpop.f32.mrf.mxu0
    %v5943 = vpop.f32.mrf.mxu0
    %v5944 = vadd.f32 0.0, %v5943
    %v5945 = vpop.f32.mrf.mxu0
    %5946 = vmatprep.mubr.bf16.mxu0 0
    %5947 = vmatmul.mubr.bf16.gmra.mxu0 %v5861
    %v5948 = vpop.f32.mrf.mxu0
    %v5949 = vadd.f32 0.0, %v5948
    %v5950 = vpop.f32.mrf.mxu0
    %v5951 = vpop.f32.mrf.mxu0
    %v5952 = vadd.f32 0.0, %v5951
    %v5953 = vpop.f32.mrf.mxu0
    %5954 = vmatprep.mubr.bf16.mxu0 0
    %5955 = vmatmul.mubr.bf16.gmra.mxu0 %v5864
    %v5956 = vpop.f32.mrf.mxu0
    %v5957 = vadd.f32 0.0, %v5956
    %v5958 = vpop.f32.mrf.mxu0
    %v5959 = vpop.f32.mrf.mxu0
    %v5960 = vadd.f32 0.0, %v5959
    %v5961 = vpop.f32.mrf.mxu0
    %5962 = vdwg.mxu0
    %v5963 = vunpack.c.l.b16 %v5455
    %v5964 = vunpack.c.l.b16 %v5469
    %v5965 = vunpack.c.l.b16 %v5483
    %v5966 = vunpack.c.l.b16 %v5497
    %v5967 = vunpack.c.l.b16 %v5511
    %v5968 = vunpack.c.l.b16 %v5525
    %v5969 = vunpack.c.l.b16 %v5539
    %v5970 = vunpack.c.l.b16 %v5553
    %v5971 = vunpack.c.l.b16 %v5567
    %v5972 = vunpack.c.l.b16 %v5581
    %v5973 = vunpack.c.l.b16 %v5595
    %v5974 = vunpack.c.l.b16 %v5609
    %v5975 = vunpack.c.l.b16 %v5623
    %v5976 = vunpack.c.l.b16 %v5637
    %v5977 = vunpack.c.l.b16 %v5651
    %v5978 = vunpack.c.l.b16 %v5665
    %v5979 = vpack.c.b16 %v5964, %v5963
    %v5980 = vpack.c.b16 %v5966, %v5965
    %v5981 = vpack.c.b16 %v5968, %v5967
    %v5982 = vpack.c.b16 %v5970, %v5969
    %v5983 = vpack.c.b16 %v5972, %v5971
    %v5984 = vpack.c.b16 %v5974, %v5973
    %v5985 = vpack.c.b16 %v5976, %v5975
    %v5986 = vpack.c.b16 %v5978, %v5977
    %v5995 = vunpack.c.l.b16 %v5666
    %v5996 = vunpack.c.l.b16 %v5667
    %v5997 = vunpack.c.l.b16 %v5668
    %v5998 = vunpack.c.l.b16 %v5669
    %v5999 = vunpack.c.l.b16 %v5670
    %v6000 = vunpack.c.l.b16 %v5671
    %v6001 = vunpack.c.l.b16 %v5672
    %v6002 = vunpack.c.l.b16 %v5673
    %v6003 = vpack.c.b16 %v5996, %v5995
    %v6004 = vpack.c.b16 %v5998, %v5997
    %v6005 = vpack.c.b16 %v6000, %v5999
    %v6006 = vpack.c.b16 %v6002, %v6001
    %v6012 = vsel %vm4607, %v5979, 0
    %v6015 = vsel %vm4607, %v5980, 0
    %v6018 = vsel %vm4607, %v5981, 0
    %v6021 = vsel %vm4607, %v5982, 0
    %v6024 = vsel %vm4607, %v5983, 0
    %v6027 = vsel %vm4607, %v5984, 0
    %v6030 = vsel %vm4607, %v5985, 0
    %v6033 = vsel %vm4607, %v5986, 0
    %6035 = vmatprep.subr.bf16.mxu0 0
    %6036 = vmatpush1.bf16.msra.mxu0 0
    %6037 = vmatprep.subr.bf16.mxu0 0
    %6038 = vmatpush1.bf16.msra.mxu0 0
    %6039 = vmatprep.subr.bf16.mxu0 0
    %6040 = vmatpush1.bf16.msra.mxu0 0
    %6041 = vmatprep.subr.bf16.mxu0 0
    %6042 = vmatpush1.bf16.msra.mxu0 0
    %6043 = vmatprep.subr.bf16.mxu0 0
    %6044 = vmatpush1.bf16.msra.mxu0 %v6006
    %6045 = vmatprep.subr.bf16.mxu0 0
    %6046 = vmatpush1.bf16.msra.mxu0 %v6005
    %6047 = vmatprep.subr.bf16.mxu0 0
    %6048 = vmatpush1.bf16.msra.mxu0 %v6004
    %6049 = vmatprep.subr.bf16.mxu0 0
    %6050 = vmatpush1.bf16.msra.mxu0 %v6003
    %6051 = vmatprep.subr.bf16.mxu0 0
    %6052 = vmatpush2.bf16.msra.mxu0 0
    %6053 = vmatprep.subr.bf16.mxu0 0
    %6054 = vmatpush2.bf16.msra.mxu0 0
    %6055 = vmatprep.subr.bf16.mxu0 0
    %6056 = vmatpush2.bf16.msra.mxu0 0
    %6057 = vmatprep.subr.bf16.mxu0 0
    %6058 = vmatpush2.bf16.msra.mxu0 0
    %6059 = vmatprep.subr.bf16.mxu0 0
    %6060 = vmatpush2.bf16.msra.mxu0 0
    %6061 = vmatprep.subr.bf16.mxu0 0
    %6062 = vmatpush2.bf16.msra.mxu0 0
    %6063 = vmatprep.subr.bf16.mxu0 0
    %6064 = vmatpush2.bf16.msra.mxu0 0
    %6065 = vmatprep.subr.bf16.mxu0 0
    %6066 = vmatpush2.bf16.msra.mxu0 0
    %6067 = vmatprep.mubr.bf16.mxu0 0
    %6068 = vmatmul.mubr.bf16.gmra.mxu0 %v6012
    %v6069 = vpop.f32.mrf.mxu0
    %v6070 = vadd.f32 %v5901, %v6069
    %v6071 = vpop.f32.mrf.mxu0
    %v6072 = vpop.f32.mrf.mxu0
    %v6073 = vadd.f32 %v5904, %v6072
    %v6074 = vpop.f32.mrf.mxu0
    %6075 = vmatprep.mubr.bf16.mxu0 0
    %6076 = vmatmul.mubr.bf16.gmra.mxu0 %v6015
    %v6077 = vpop.f32.mrf.mxu0
    %v6078 = vadd.f32 %v5909, %v6077
    %v6079 = vpop.f32.mrf.mxu0
    %v6080 = vpop.f32.mrf.mxu0
    %v6081 = vadd.f32 %v5912, %v6080
    %v6082 = vpop.f32.mrf.mxu0
    %6083 = vmatprep.mubr.bf16.mxu0 0
    %6084 = vmatmul.mubr.bf16.gmra.mxu0 %v6018
    %v6085 = vpop.f32.mrf.mxu0
    %v6086 = vadd.f32 %v5917, %v6085
    %v6087 = vpop.f32.mrf.mxu0
    %v6088 = vpop.f32.mrf.mxu0
    %v6089 = vadd.f32 %v5920, %v6088
    %v6090 = vpop.f32.mrf.mxu0
    %6091 = vmatprep.mubr.bf16.mxu0 0
    %6092 = vmatmul.mubr.bf16.gmra.mxu0 %v6021
    %v6093 = vpop.f32.mrf.mxu0
    %v6094 = vadd.f32 %v5925, %v6093
    %v6095 = vpop.f32.mrf.mxu0
    %v6096 = vpop.f32.mrf.mxu0
    %v6097 = vadd.f32 %v5928, %v6096
    %v6098 = vpop.f32.mrf.mxu0
    %6099 = vmatprep.mubr.bf16.mxu0 0
    %6100 = vmatmul.mubr.bf16.gmra.mxu0 %v6024
    %v6101 = vpop.f32.mrf.mxu0
    %v6102 = vadd.f32 %v5933, %v6101
    %v6103 = vpop.f32.mrf.mxu0
    %v6104 = vpop.f32.mrf.mxu0
    %v6105 = vadd.f32 %v5936, %v6104
    %v6106 = vpop.f32.mrf.mxu0
    %6107 = vmatprep.mubr.bf16.mxu0 0
    %6108 = vmatmul.mubr.bf16.gmra.mxu0 %v6027
    %v6109 = vpop.f32.mrf.mxu0
    %v6110 = vadd.f32 %v5941, %v6109
    %v6111 = vpop.f32.mrf.mxu0
    %v6112 = vpop.f32.mrf.mxu0
    %v6113 = vadd.f32 %v5944, %v6112
    %v6114 = vpop.f32.mrf.mxu0
    %6115 = vmatprep.mubr.bf16.mxu0 0
    %6116 = vmatmul.mubr.bf16.gmra.mxu0 %v6030
    %v6117 = vpop.f32.mrf.mxu0
    %v6118 = vadd.f32 %v5949, %v6117
    %v6119 = vpop.f32.mrf.mxu0
    %v6120 = vpop.f32.mrf.mxu0
    %v6121 = vadd.f32 %v5952, %v6120
    %v6122 = vpop.f32.mrf.mxu0
    %6123 = vmatprep.mubr.bf16.mxu0 0
    %6124 = vmatmul.mubr.bf16.gmra.mxu0 %v6033
    %v6125 = vpop.f32.mrf.mxu0
    %v6126 = vadd.f32 %v5957, %v6125
    %v6127 = vpop.f32.mrf.mxu0
    %v6128 = vpop.f32.mrf.mxu0
    %v6129 = vadd.f32 %v5960, %v6128
    %v6130 = vpop.f32.mrf.mxu0
    %6131 = vdwg.mxu0
    %v6132 = vld [vmem:[#allocation3 + $0x4] sm:$0x3]
    %v6133 = vld [vmem:[#allocation3 + $0xc] sm:$0x3]
    %v6134 = vld [vmem:[#allocation3 + $0x14] sm:$0x3]
    %v6135 = vld [vmem:[#allocation3 + $0x1c] sm:$0x3]
    %v6136 = vld [vmem:[#allocation3 + $0x24] sm:$0x3]
    %v6137 = vld [vmem:[#allocation3 + $0x2c] sm:$0x3]
    %v6138 = vld [vmem:[#allocation3 + $0x34] sm:$0x3]
    %v6139 = vld [vmem:[#allocation3 + $0x3c] sm:$0x3]
    %v6140 = vld [vmem:[#allocation3 + $0x54] sm:$0x3]
    %v6141 = vld [vmem:[#allocation3 + $0x5c] sm:$0x3]
    %v6142 = vld [vmem:[#allocation3 + $0x64] sm:$0x3]
    %v6143 = vld [vmem:[#allocation3 + $0x6c] sm:$0x3]
    %v6144 = vld [vmem:[#allocation3 + $0x74] sm:$0x3]
    %v6145 = vld [vmem:[#allocation3 + $0x7c] sm:$0x3]
    %v6146 = vld [vmem:[#allocation3 + $0x84] sm:$0x3]
    %v6147 = vld [vmem:[#allocation3 + $0x8c] sm:$0x3]
    %v6149 = vshrl.u32 %v5674, 16
    %v6151 = vrot.slane %v6149, 5
    %v6152 = vshll.u32 %v5674, 16
    %v6154 = vrot.slane %v6152, 6
    %v6155 = vor.u32 %v6151, %v6154
    %v6156 = vrot.slane %v6155, 4
    %v6158 = vshrl.u32 %v6132, 16
    %v6160 = vrot.slane %v6158, 5
    %v6161 = vshll.u32 %v6132, 16
    %v6163 = vrot.slane %v6161, 6
    %v6164 = vor.u32 %v6160, %v6163
    %v6165 = vsel %vm1704, %v6156, %v6164
    %v6167 = vshrl.u32 %v5675, 16
    %v6169 = vrot.slane %v6167, 5
    %v6170 = vshll.u32 %v5675, 16
    %v6172 = vrot.slane %v6170, 6
    %v6173 = vor.u32 %v6169, %v6172
    %v6174 = vrot.slane %v6173, 4
    %v6176 = vshrl.u32 %v6133, 16
    %v6178 = vrot.slane %v6176, 5
    %v6179 = vshll.u32 %v6133, 16
    %v6181 = vrot.slane %v6179, 6
    %v6182 = vor.u32 %v6178, %v6181
    %v6183 = vsel %vm1704, %v6174, %v6182
    %v6185 = vshrl.u32 %v5676, 16
    %v6187 = vrot.slane %v6185, 5
    %v6188 = vshll.u32 %v5676, 16
    %v6190 = vrot.slane %v6188, 6
    %v6191 = vor.u32 %v6187, %v6190
    %v6192 = vrot.slane %v6191, 4
    %v6194 = vshrl.u32 %v6134, 16
    %v6196 = vrot.slane %v6194, 5
    %v6197 = vshll.u32 %v6134, 16
    %v6199 = vrot.slane %v6197, 6
    %v6200 = vor.u32 %v6196, %v6199
    %v6201 = vsel %vm1704, %v6192, %v6200
    %v6203 = vshrl.u32 %v5677, 16
    %v6205 = vrot.slane %v6203, 5
    %v6206 = vshll.u32 %v5677, 16
    %v6208 = vrot.slane %v6206, 6
    %v6209 = vor.u32 %v6205, %v6208
    %v6210 = vrot.slane %v6209, 4
    %v6212 = vshrl.u32 %v6135, 16
    %v6214 = vrot.slane %v6212, 5
    %v6215 = vshll.u32 %v6135, 16
    %v6217 = vrot.slane %v6215, 6
    %v6218 = vor.u32 %v6214, %v6217
    %v6219 = vsel %vm1704, %v6210, %v6218
    %v6221 = vshrl.u32 %v5678, 16
    %v6223 = vrot.slane %v6221, 5
    %v6224 = vshll.u32 %v5678, 16
    %v6226 = vrot.slane %v6224, 6
    %v6227 = vor.u32 %v6223, %v6226
    %v6228 = vrot.slane %v6227, 4
    %v6230 = vshrl.u32 %v6136, 16
    %v6232 = vrot.slane %v6230, 5
    %v6233 = vshll.u32 %v6136, 16
    %v6235 = vrot.slane %v6233, 6
    %v6236 = vor.u32 %v6232, %v6235
    %v6237 = vsel %vm1704, %v6228, %v6236
    %v6239 = vshrl.u32 %v5679, 16
    %v6241 = vrot.slane %v6239, 5
    %v6242 = vshll.u32 %v5679, 16
    %v6244 = vrot.slane %v6242, 6
    %v6245 = vor.u32 %v6241, %v6244
    %v6246 = vrot.slane %v6245, 4
    %v6248 = vshrl.u32 %v6137, 16
    %v6250 = vrot.slane %v6248, 5
    %v6251 = vshll.u32 %v6137, 16
    %v6253 = vrot.slane %v6251, 6
    %v6254 = vor.u32 %v6250, %v6253
    %v6255 = vsel %vm1704, %v6246, %v6254
    %v6257 = vshrl.u32 %v5680, 16
    %v6259 = vrot.slane %v6257, 5
    %v6260 = vshll.u32 %v5680, 16
    %v6262 = vrot.slane %v6260, 6
    %v6263 = vor.u32 %v6259, %v6262
    %v6264 = vrot.slane %v6263, 4
    %v6266 = vshrl.u32 %v6138, 16
    %v6268 = vrot.slane %v6266, 5
    %v6269 = vshll.u32 %v6138, 16
    %v6271 = vrot.slane %v6269, 6
    %v6272 = vor.u32 %v6268, %v6271
    %v6273 = vsel %vm1704, %v6264, %v6272
    %v6275 = vshrl.u32 %v5681, 16
    %v6277 = vrot.slane %v6275, 5
    %v6278 = vshll.u32 %v5681, 16
    %v6280 = vrot.slane %v6278, 6
    %v6281 = vor.u32 %v6277, %v6280
    %v6282 = vrot.slane %v6281, 4
    %v6284 = vshrl.u32 %v6139, 16
    %v6286 = vrot.slane %v6284, 5
    %v6287 = vshll.u32 %v6139, 16
    %v6289 = vrot.slane %v6287, 6
    %v6290 = vor.u32 %v6286, %v6289
    %v6291 = vsel %vm1704, %v6282, %v6290
    %v6293 = vshrl.u32 %v5682, 16
    %v6295 = vrot.slane %v6293, 5
    %v6296 = vshll.u32 %v5682, 16
    %v6298 = vrot.slane %v6296, 6
    %v6299 = vor.u32 %v6295, %v6298
    %v6300 = vrot.slane %v6299, 4
    %v6302 = vshrl.u32 %v6140, 16
    %v6304 = vrot.slane %v6302, 5
    %v6305 = vshll.u32 %v6140, 16
    %v6307 = vrot.slane %v6305, 6
    %v6308 = vor.u32 %v6304, %v6307
    %v6309 = vsel %vm1704, %v6300, %v6308
    %v6311 = vshrl.u32 %v5683, 16
    %v6313 = vrot.slane %v6311, 5
    %v6314 = vshll.u32 %v5683, 16
    %v6316 = vrot.slane %v6314, 6
    %v6317 = vor.u32 %v6313, %v6316
    %v6318 = vrot.slane %v6317, 4
    %v6320 = vshrl.u32 %v6141, 16
    %v6322 = vrot.slane %v6320, 5
    %v6323 = vshll.u32 %v6141, 16
    %v6325 = vrot.slane %v6323, 6
    %v6326 = vor.u32 %v6322, %v6325
    %v6327 = vsel %vm1704, %v6318, %v6326
    %v6329 = vshrl.u32 %v5684, 16
    %v6331 = vrot.slane %v6329, 5
    %v6332 = vshll.u32 %v5684, 16
    %v6334 = vrot.slane %v6332, 6
    %v6335 = vor.u32 %v6331, %v6334
    %v6336 = vrot.slane %v6335, 4
    %v6338 = vshrl.u32 %v6142, 16
    %v6340 = vrot.slane %v6338, 5
    %v6341 = vshll.u32 %v6142, 16
    %v6343 = vrot.slane %v6341, 6
    %v6344 = vor.u32 %v6340, %v6343
    %v6345 = vsel %vm1704, %v6336, %v6344
    %v6347 = vshrl.u32 %v5685, 16
    %v6349 = vrot.slane %v6347, 5
    %v6350 = vshll.u32 %v5685, 16
    %v6352 = vrot.slane %v6350, 6
    %v6353 = vor.u32 %v6349, %v6352
    %v6354 = vrot.slane %v6353, 4
    %v6356 = vshrl.u32 %v6143, 16
    %v6358 = vrot.slane %v6356, 5
    %v6359 = vshll.u32 %v6143, 16
    %v6361 = vrot.slane %v6359, 6
    %v6362 = vor.u32 %v6358, %v6361
    %v6363 = vsel %vm1704, %v6354, %v6362
    %v6365 = vshrl.u32 %v5686, 16
    %v6367 = vrot.slane %v6365, 5
    %v6368 = vshll.u32 %v5686, 16
    %v6370 = vrot.slane %v6368, 6
    %v6371 = vor.u32 %v6367, %v6370
    %v6372 = vrot.slane %v6371, 4
    %v6374 = vshrl.u32 %v6144, 16
    %v6376 = vrot.slane %v6374, 5
    %v6377 = vshll.u32 %v6144, 16
    %v6379 = vrot.slane %v6377, 6
    %v6380 = vor.u32 %v6376, %v6379
    %v6381 = vsel %vm1704, %v6372, %v6380
    %v6383 = vshrl.u32 %v5687, 16
    %v6385 = vrot.slane %v6383, 5
    %v6386 = vshll.u32 %v5687, 16
    %v6388 = vrot.slane %v6386, 6
    %v6389 = vor.u32 %v6385, %v6388
    %v6390 = vrot.slane %v6389, 4
    %v6392 = vshrl.u32 %v6145, 16
    %v6394 = vrot.slane %v6392, 5
    %v6395 = vshll.u32 %v6145, 16
    %v6397 = vrot.slane %v6395, 6
    %v6398 = vor.u32 %v6394, %v6397
    %v6399 = vsel %vm1704, %v6390, %v6398
    %v6401 = vshrl.u32 %v5688, 16
    %v6403 = vrot.slane %v6401, 5
    %v6404 = vshll.u32 %v5688, 16
    %v6406 = vrot.slane %v6404, 6
    %v6407 = vor.u32 %v6403, %v6406
    %v6408 = vrot.slane %v6407, 4
    %v6410 = vshrl.u32 %v6146, 16
    %v6412 = vrot.slane %v6410, 5
    %v6413 = vshll.u32 %v6146, 16
    %v6415 = vrot.slane %v6413, 6
    %v6416 = vor.u32 %v6412, %v6415
    %v6417 = vsel %vm1704, %v6408, %v6416
    %v6419 = vshrl.u32 %v5689, 16
    %v6421 = vrot.slane %v6419, 5
    %v6422 = vshll.u32 %v5689, 16
    %v6424 = vrot.slane %v6422, 6
    %v6425 = vor.u32 %v6421, %v6424
    %v6426 = vrot.slane %v6425, 4
    %v6428 = vshrl.u32 %v6147, 16
    %v6430 = vrot.slane %v6428, 5
    %v6431 = vshll.u32 %v6147, 16
    %v6433 = vrot.slane %v6431, 6
    %v6434 = vor.u32 %v6430, %v6433
    %v6435 = vsel %vm1704, %v6426, %v6434
    %v6436 = vld [vmem:[%s11 + $0x40] sm:$0xf]
    %v6437 = vld [vmem:[%s11 + $0x44] sm:$0xf]
    %v6438 = vld [vmem:[%s11 + $0x48] sm:$0xf]
    %v6439 = vld [vmem:[%s11 + $0x4c] sm:$0xf]
    %v6440 = vld [vmem:[%s11 + $0x50] sm:$0xf]
    %v6441 = vld [vmem:[%s11 + $0x54] sm:$0xf]
    %v6442 = vld [vmem:[%s11 + $0x58] sm:$0xf]
    %v6443 = vld [vmem:[%s11 + $0x5c] sm:$0xf]
    %v6444 = vunpack.c.l.b16 %v6165
    %v6445 = vunpack.c.l.b16 %v6183
    %v6446 = vunpack.c.l.b16 %v6201
    %v6447 = vunpack.c.l.b16 %v6219
    %v6448 = vunpack.c.l.b16 %v6237
    %v6449 = vunpack.c.l.b16 %v6255
    %v6450 = vunpack.c.l.b16 %v6273
    %v6451 = vunpack.c.l.b16 %v6291
    %v6452 = vunpack.c.l.b16 %v6309
    %v6453 = vunpack.c.l.b16 %v6327
    %v6454 = vunpack.c.l.b16 %v6345
    %v6455 = vunpack.c.l.b16 %v6363
    %v6456 = vunpack.c.l.b16 %v6381
    %v6457 = vunpack.c.l.b16 %v6399
    %v6458 = vunpack.c.l.b16 %v6417
    %v6459 = vunpack.c.l.b16 %v6435
    %v6460 = vpack.c.b16 %v6445, %v6444
    %v6461 = vpack.c.b16 %v6447, %v6446
    %v6462 = vpack.c.b16 %v6449, %v6448
    %v6463 = vpack.c.b16 %v6451, %v6450
    %v6464 = vpack.c.b16 %v6453, %v6452
    %v6465 = vpack.c.b16 %v6455, %v6454
    %v6466 = vpack.c.b16 %v6457, %v6456
    %v6467 = vpack.c.b16 %v6459, %v6458
    %v6476 = vunpack.c.l.b16 %v6436
    %v6477 = vunpack.c.l.b16 %v6437
    %v6478 = vunpack.c.l.b16 %v6438
    %v6479 = vunpack.c.l.b16 %v6439
    %v6480 = vunpack.c.l.b16 %v6440
    %v6481 = vunpack.c.l.b16 %v6441
    %v6482 = vunpack.c.l.b16 %v6442
    %v6483 = vunpack.c.l.b16 %v6443
    %v6484 = vpack.c.b16 %v6477, %v6476
    %v6485 = vpack.c.b16 %v6479, %v6478
    %v6486 = vpack.c.b16 %v6481, %v6480
    %v6487 = vpack.c.b16 %v6483, %v6482
    %v6493 = vsel %vm4607, %v6460, 0
    %v6496 = vsel %vm4607, %v6461, 0
    %v6499 = vsel %vm4607, %v6462, 0
    %v6502 = vsel %vm4607, %v6463, 0
    %v6505 = vsel %vm4607, %v6464, 0
    %v6508 = vsel %vm4607, %v6465, 0
    %v6511 = vsel %vm4607, %v6466, 0
    %v6514 = vsel %vm4607, %v6467, 0
    %6516 = vmatprep.subr.bf16.mxu0 0
    %6517 = vmatpush1.bf16.msra.mxu0 0
    %6518 = vmatprep.subr.bf16.mxu0 0
    %6519 = vmatpush1.bf16.msra.mxu0 0
    %6520 = vmatprep.subr.bf16.mxu0 0
    %6521 = vmatpush1.bf16.msra.mxu0 0
    %6522 = vmatprep.subr.bf16.mxu0 0
    %6523 = vmatpush1.bf16.msra.mxu0 0
    %6524 = vmatprep.subr.bf16.mxu0 0
    %6525 = vmatpush1.bf16.msra.mxu0 %v6487
    %6526 = vmatprep.subr.bf16.mxu0 0
    %6527 = vmatpush1.bf16.msra.mxu0 %v6486
    %6528 = vmatprep.subr.bf16.mxu0 0
    %6529 = vmatpush1.bf16.msra.mxu0 %v6485
    %6530 = vmatprep.subr.bf16.mxu0 0
    %6531 = vmatpush1.bf16.msra.mxu0 %v6484
    %6532 = vmatprep.subr.bf16.mxu0 0
    %6533 = vmatpush2.bf16.msra.mxu0 0
    %6534 = vmatprep.subr.bf16.mxu0 0
    %6535 = vmatpush2.bf16.msra.mxu0 0
    %6536 = vmatprep.subr.bf16.mxu0 0
    %6537 = vmatpush2.bf16.msra.mxu0 0
    %6538 = vmatprep.subr.bf16.mxu0 0
    %6539 = vmatpush2.bf16.msra.mxu0 0
    %6540 = vmatprep.subr.bf16.mxu0 0
    %6541 = vmatpush2.bf16.msra.mxu0 0
    %6542 = vmatprep.subr.bf16.mxu0 0
    %6543 = vmatpush2.bf16.msra.mxu0 0
    %6544 = vmatprep.subr.bf16.mxu0 0
    %6545 = vmatpush2.bf16.msra.mxu0 0
    %6546 = vmatprep.subr.bf16.mxu0 0
    %6547 = vmatpush2.bf16.msra.mxu0 0
    %6548 = vmatprep.mubr.bf16.mxu0 0
    %6549 = vmatmul.mubr.bf16.gmra.mxu0 %v6493
    %v6550 = vpop.f32.mrf.mxu0
    %v6551 = vadd.f32 0.0, %v6550
    %v6552 = vpop.f32.mrf.mxu0
    %v6553 = vpop.f32.mrf.mxu0
    %v6554 = vadd.f32 0.0, %v6553
    %v6555 = vpop.f32.mrf.mxu0
    %6556 = vmatprep.mubr.bf16.mxu0 0
    %6557 = vmatmul.mubr.bf16.gmra.mxu0 %v6496
    %v6558 = vpop.f32.mrf.mxu0
    %v6559 = vadd.f32 0.0, %v6558
    %v6560 = vpop.f32.mrf.mxu0
    %v6561 = vpop.f32.mrf.mxu0
    %v6562 = vadd.f32 0.0, %v6561
    %v6563 = vpop.f32.mrf.mxu0
    %6564 = vmatprep.mubr.bf16.mxu0 0
    %6565 = vmatmul.mubr.bf16.gmra.mxu0 %v6499
    %v6566 = vpop.f32.mrf.mxu0
    %v6567 = vadd.f32 0.0, %v6566
    %v6568 = vpop.f32.mrf.mxu0
    %v6569 = vpop.f32.mrf.mxu0
    %v6570 = vadd.f32 0.0, %v6569
    %v6571 = vpop.f32.mrf.mxu0
    %6572 = vmatprep.mubr.bf16.mxu0 0
    %6573 = vmatmul.mubr.bf16.gmra.mxu0 %v6502
    %v6574 = vpop.f32.mrf.mxu0
    %v6575 = vadd.f32 0.0, %v6574
    %v6576 = vpop.f32.mrf.mxu0
    %v6577 = vpop.f32.mrf.mxu0
    %v6578 = vadd.f32 0.0, %v6577
    %v6579 = vpop.f32.mrf.mxu0
    %6580 = vmatprep.mubr.bf16.mxu0 0
    %6581 = vmatmul.mubr.bf16.gmra.mxu0 %v6505
    %v6582 = vpop.f32.mrf.mxu0
    %v6583 = vadd.f32 0.0, %v6582
    %v6584 = vpop.f32.mrf.mxu0
    %v6585 = vpop.f32.mrf.mxu0
    %v6586 = vadd.f32 0.0, %v6585
    %v6587 = vpop.f32.mrf.mxu0
    %6588 = vmatprep.mubr.bf16.mxu0 0
    %6589 = vmatmul.mubr.bf16.gmra.mxu0 %v6508
    %v6590 = vpop.f32.mrf.mxu0
    %v6591 = vadd.f32 0.0, %v6590
    %v6592 = vpop.f32.mrf.mxu0
    %v6593 = vpop.f32.mrf.mxu0
    %v6594 = vadd.f32 0.0, %v6593
    %v6595 = vpop.f32.mrf.mxu0
    %6596 = vmatprep.mubr.bf16.mxu0 0
    %6597 = vmatmul.mubr.bf16.gmra.mxu0 %v6511
    %v6598 = vpop.f32.mrf.mxu0
    %v6599 = vadd.f32 0.0, %v6598
    %v6600 = vpop.f32.mrf.mxu0
    %v6601 = vpop.f32.mrf.mxu0
    %v6602 = vadd.f32 0.0, %v6601
    %v6603 = vpop.f32.mrf.mxu0
    %6604 = vmatprep.mubr.bf16.mxu0 0
    %6605 = vmatmul.mubr.bf16.gmra.mxu0 %v6514
    %v6606 = vpop.f32.mrf.mxu0
    %v6607 = vadd.f32 0.0, %v6606
    %v6608 = vpop.f32.mrf.mxu0
    %v6609 = vpop.f32.mrf.mxu0
    %v6610 = vadd.f32 0.0, %v6609
    %v6611 = vpop.f32.mrf.mxu0
    %6612 = vdwg.mxu0
    %v6613 = vadd.f32 %v6070, %v6551
    %v6614 = vadd.f32 %v6073, %v6554
    %v6615 = vadd.f32 %v6078, %v6559
    %v6616 = vadd.f32 %v6081, %v6562
    %v6617 = vadd.f32 %v6086, %v6567
    %v6618 = vadd.f32 %v6089, %v6570
    %v6619 = vadd.f32 %v6094, %v6575
    %v6620 = vadd.f32 %v6097, %v6578
    %v6621 = vadd.f32 %v6102, %v6583
    %v6622 = vadd.f32 %v6105, %v6586
    %v6623 = vadd.f32 %v6110, %v6591
    %v6624 = vadd.f32 %v6113, %v6594
    %v6625 = vadd.f32 %v6118, %v6599
    %v6626 = vadd.f32 %v6121, %v6602
    %v6627 = vadd.f32 %v6126, %v6607
    %v6628 = vadd.f32 %v6129, %v6610
    %v6629 = vld [vmem:[%s5376] sm:$0xf]
    %v6630 = vld [vmem:[%s5376 + $0x4] sm:$0x1]
    %v6631 = vld [vmem:[%s5376 + $0x8] sm:$0xf]
    %v6632 = vld [vmem:[%s5376 + $0xc] sm:$0x1]
    %v6633 = vld [vmem:[%s5376 + $0x10] sm:$0xf]
    %v6634 = vld [vmem:[%s5376 + $0x14] sm:$0x1]
    %v6635 = vld [vmem:[%s5376 + $0x18] sm:$0xf]
    %v6636 = vld [vmem:[%s5376 + $0x1c] sm:$0x1]
    %v6637 = vld [vmem:[%s5376 + $0x20] sm:$0xf]
    %v6638 = vld [vmem:[%s5376 + $0x24] sm:$0x1]
    %v6639 = vld [vmem:[%s5376 + $0x28] sm:$0xf]
    %v6640 = vld [vmem:[%s5376 + $0x2c] sm:$0x1]
    %v6641 = vld [vmem:[%s5376 + $0x30] sm:$0xf]
    %v6642 = vld [vmem:[%s5376 + $0x34] sm:$0x1]
    %v6643 = vld [vmem:[%s5376 + $0x38] sm:$0xf]
    %v6644 = vld [vmem:[%s5376 + $0x3c] sm:$0x1]
    %v6645 = vld [vmem:[%s5376 + $0x50] sm:$0xf]
    %v6646 = vld [vmem:[%s5376 + $0x54] sm:$0x1]
    %v6647 = vld [vmem:[%s5376 + $0x58] sm:$0xf]
    %v6648 = vld [vmem:[%s5376 + $0x5c] sm:$0x1]
    %v6649 = vld [vmem:[%s5376 + $0x60] sm:$0xf]
    %v6650 = vld [vmem:[%s5376 + $0x64] sm:$0x1]
    %v6651 = vld [vmem:[%s5376 + $0x68] sm:$0xf]
    %v6652 = vld [vmem:[%s5376 + $0x6c] sm:$0x1]
    %v6653 = vld [vmem:[%s5376 + $0x70] sm:$0xf]
    %v6654 = vld [vmem:[%s5376 + $0x74] sm:$0x1]
    %v6655 = vld [vmem:[%s5376 + $0x78] sm:$0xf]
    %v6656 = vld [vmem:[%s5376 + $0x7c] sm:$0x1]
    %v6657 = vld [vmem:[%s5376 + $0x80] sm:$0xf]
    %v6658 = vld [vmem:[%s5376 + $0x84] sm:$0x1]
    %v6659 = vld [vmem:[%s5376 + $0x88] sm:$0xf]
    %v6660 = vld [vmem:[%s5376 + $0x8c] sm:$0x1]
    %v6662 = vshrl.u32 %v6629, 16
    %v6664 = vrot.slane %v6662, 4
    %v6665 = vshll.u32 %v6629, 16
    %v6667 = vrot.slane %v6665, 5
    %v6668 = vor.u32 %v6664, %v6667
    %v6669 = vrot.slane %v6668, 4
    %v6671 = vshll.u32 %v6630, 16
    %v6673 = vrot.slane %v6671, 5
    %v6674 = vsel %vm1024, %v6669, %v6673
    %v6676 = vshrl.u32 %v6631, 16
    %v6678 = vrot.slane %v6676, 4
    %v6679 = vshll.u32 %v6631, 16
    %v6681 = vrot.slane %v6679, 5
    %v6682 = vor.u32 %v6678, %v6681
    %v6683 = vrot.slane %v6682, 4
    %v6685 = vshll.u32 %v6632, 16
    %v6687 = vrot.slane %v6685, 5
    %v6688 = vsel %vm1024, %v6683, %v6687
    %v6690 = vshrl.u32 %v6633, 16
    %v6692 = vrot.slane %v6690, 4
    %v6693 = vshll.u32 %v6633, 16
    %v6695 = vrot.slane %v6693, 5
    %v6696 = vor.u32 %v6692, %v6695
    %v6697 = vrot.slane %v6696, 4
    %v6699 = vshll.u32 %v6634, 16
    %v6701 = vrot.slane %v6699, 5
    %v6702 = vsel %vm1024, %v6697, %v6701
    %v6704 = vshrl.u32 %v6635, 16
    %v6706 = vrot.slane %v6704, 4
    %v6707 = vshll.u32 %v6635, 16
    %v6709 = vrot.slane %v6707, 5
    %v6710 = vor.u32 %v6706, %v6709
    %v6711 = vrot.slane %v6710, 4
    %v6713 = vshll.u32 %v6636, 16
    %v6715 = vrot.slane %v6713, 5
    %v6716 = vsel %vm1024, %v6711, %v6715
    %v6718 = vshrl.u32 %v6637, 16
    %v6720 = vrot.slane %v6718, 4
    %v6721 = vshll.u32 %v6637, 16
    %v6723 = vrot.slane %v6721, 5
    %v6724 = vor.u32 %v6720, %v6723
    %v6725 = vrot.slane %v6724, 4
    %v6727 = vshll.u32 %v6638, 16
    %v6729 = vrot.slane %v6727, 5
    %v6730 = vsel %vm1024, %v6725, %v6729
    %v6732 = vshrl.u32 %v6639, 16
    %v6734 = vrot.slane %v6732, 4
    %v6735 = vshll.u32 %v6639, 16
    %v6737 = vrot.slane %v6735, 5
    %v6738 = vor.u32 %v6734, %v6737
    %v6739 = vrot.slane %v6738, 4
    %v6741 = vshll.u32 %v6640, 16
    %v6743 = vrot.slane %v6741, 5
    %v6744 = vsel %vm1024, %v6739, %v6743
    %v6746 = vshrl.u32 %v6641, 16
    %v6748 = vrot.slane %v6746, 4
    %v6749 = vshll.u32 %v6641, 16
    %v6751 = vrot.slane %v6749, 5
    %v6752 = vor.u32 %v6748, %v6751
    %v6753 = vrot.slane %v6752, 4
    %v6755 = vshll.u32 %v6642, 16
    %v6757 = vrot.slane %v6755, 5
    %v6758 = vsel %vm1024, %v6753, %v6757
    %v6760 = vshrl.u32 %v6643, 16
    %v6762 = vrot.slane %v6760, 4
    %v6763 = vshll.u32 %v6643, 16
    %v6765 = vrot.slane %v6763, 5
    %v6766 = vor.u32 %v6762, %v6765
    %v6767 = vrot.slane %v6766, 4
    %v6769 = vshll.u32 %v6644, 16
    %v6771 = vrot.slane %v6769, 5
    %v6772 = vsel %vm1024, %v6767, %v6771
    %v6774 = vshrl.u32 %v6645, 16
    %v6776 = vrot.slane %v6774, 4
    %v6777 = vshll.u32 %v6645, 16
    %v6779 = vrot.slane %v6777, 5
    %v6780 = vor.u32 %v6776, %v6779
    %v6781 = vrot.slane %v6780, 4
    %v6783 = vshll.u32 %v6646, 16
    %v6785 = vrot.slane %v6783, 5
    %v6786 = vsel %vm1024, %v6781, %v6785
    %v6788 = vshrl.u32 %v6647, 16
    %v6790 = vrot.slane %v6788, 4
    %v6791 = vshll.u32 %v6647, 16
    %v6793 = vrot.slane %v6791, 5
    %v6794 = vor.u32 %v6790, %v6793
    %v6795 = vrot.slane %v6794, 4
    %v6797 = vshll.u32 %v6648, 16
    %v6799 = vrot.slane %v6797, 5
    %v6800 = vsel %vm1024, %v6795, %v6799
    %v6802 = vshrl.u32 %v6649, 16
    %v6804 = vrot.slane %v6802, 4
    %v6805 = vshll.u32 %v6649, 16
    %v6807 = vrot.slane %v6805, 5
    %v6808 = vor.u32 %v6804, %v6807
    %v6809 = vrot.slane %v6808, 4
    %v6811 = vshll.u32 %v6650, 16
    %v6813 = vrot.slane %v6811, 5
    %v6814 = vsel %vm1024, %v6809, %v6813
    %v6816 = vshrl.u32 %v6651, 16
    %v6818 = vrot.slane %v6816, 4
    %v6819 = vshll.u32 %v6651, 16
    %v6821 = vrot.slane %v6819, 5
    %v6822 = vor.u32 %v6818, %v6821
    %v6823 = vrot.slane %v6822, 4
    %v6825 = vshll.u32 %v6652, 16
    %v6827 = vrot.slane %v6825, 5
    %v6828 = vsel %vm1024, %v6823, %v6827
    %v6830 = vshrl.u32 %v6653, 16
    %v6832 = vrot.slane %v6830, 4
    %v6833 = vshll.u32 %v6653, 16
    %v6835 = vrot.slane %v6833, 5
    %v6836 = vor.u32 %v6832, %v6835
    %v6837 = vrot.slane %v6836, 4
    %v6839 = vshll.u32 %v6654, 16
    %v6841 = vrot.slane %v6839, 5
    %v6842 = vsel %vm1024, %v6837, %v6841
    %v6844 = vshrl.u32 %v6655, 16
    %v6846 = vrot.slane %v6844, 4
    %v6847 = vshll.u32 %v6655, 16
    %v6849 = vrot.slane %v6847, 5
    %v6850 = vor.u32 %v6846, %v6849
    %v6851 = vrot.slane %v6850, 4
    %v6853 = vshll.u32 %v6656, 16
    %v6855 = vrot.slane %v6853, 5
    %v6856 = vsel %vm1024, %v6851, %v6855
    %v6858 = vshrl.u32 %v6657, 16
    %v6860 = vrot.slane %v6858, 4
    %v6861 = vshll.u32 %v6657, 16
    %v6863 = vrot.slane %v6861, 5
    %v6864 = vor.u32 %v6860, %v6863
    %v6865 = vrot.slane %v6864, 4
    %v6867 = vshll.u32 %v6658, 16
    %v6869 = vrot.slane %v6867, 5
    %v6870 = vsel %vm1024, %v6865, %v6869
    %v6872 = vshrl.u32 %v6659, 16
    %v6874 = vrot.slane %v6872, 4
    %v6875 = vshll.u32 %v6659, 16
    %v6877 = vrot.slane %v6875, 5
    %v6878 = vor.u32 %v6874, %v6877
    %v6879 = vrot.slane %v6878, 4
    %v6881 = vshll.u32 %v6660, 16
    %v6883 = vrot.slane %v6881, 5
    %v6884 = vsel %vm1024, %v6879, %v6883
    %v6885 = vld [vmem:[%s11 + $0x60] sm:$0xf]
    %v6886 = vld [vmem:[%s11 + $0x64] sm:$0xf]
    %v6887 = vld [vmem:[%s11 + $0x68] sm:$0xf]
    %v6888 = vld [vmem:[%s11 + $0x6c] sm:$0xf]
    %v6889 = vld [vmem:[%s11 + $0x70] sm:$0xf]
    %v6890 = vld [vmem:[%s11 + $0x74] sm:$0xf]
    %v6891 = vld [vmem:[%s11 + $0x78] sm:$0xf]
    %v6892 = vld [vmem:[%s11 + $0x7c] sm:$0xf]
    %v6893 = vunpack.c.l.b16 %v6674
    %v6894 = vunpack.c.l.b16 %v6688
    %v6895 = vunpack.c.l.b16 %v6702
    %v6896 = vunpack.c.l.b16 %v6716
    %v6897 = vunpack.c.l.b16 %v6730
    %v6898 = vunpack.c.l.b16 %v6744
    %v6899 = vunpack.c.l.b16 %v6758
    %v6900 = vunpack.c.l.b16 %v6772
    %v6901 = vunpack.c.l.b16 %v6786
    %v6902 = vunpack.c.l.b16 %v6800
    %v6903 = vunpack.c.l.b16 %v6814
    %v6904 = vunpack.c.l.b16 %v6828
    %v6905 = vunpack.c.l.b16 %v6842
    %v6906 = vunpack.c.l.b16 %v6856
    %v6907 = vunpack.c.l.b16 %v6870
    %v6908 = vunpack.c.l.b16 %v6884
    %v6909 = vpack.c.b16 %v6894, %v6893
    %v6910 = vpack.c.b16 %v6896, %v6895
    %v6911 = vpack.c.b16 %v6898, %v6897
    %v6912 = vpack.c.b16 %v6900, %v6899
    %v6913 = vpack.c.b16 %v6902, %v6901
    %v6914 = vpack.c.b16 %v6904, %v6903
    %v6915 = vpack.c.b16 %v6906, %v6905
    %v6916 = vpack.c.b16 %v6908, %v6907
    %v6925 = vunpack.c.l.b16 %v6885
    %v6926 = vunpack.c.l.b16 %v6886
    %v6927 = vunpack.c.l.b16 %v6887
    %v6928 = vunpack.c.l.b16 %v6888
    %v6929 = vunpack.c.l.b16 %v6889
    %v6930 = vunpack.c.l.b16 %v6890
    %v6931 = vunpack.c.l.b16 %v6891
    %v6932 = vunpack.c.l.b16 %v6892
    %v6933 = vpack.c.b16 %v6926, %v6925
    %v6934 = vpack.c.b16 %v6928, %v6927
    %v6935 = vpack.c.b16 %v6930, %v6929
    %v6936 = vpack.c.b16 %v6932, %v6931
    %v6942 = vsel %vm4607, %v6909, 0
    %v6945 = vsel %vm4607, %v6910, 0
    %v6948 = vsel %vm4607, %v6911, 0
    %v6951 = vsel %vm4607, %v6912, 0
    %v6954 = vsel %vm4607, %v6913, 0
    %v6957 = vsel %vm4607, %v6914, 0
    %v6960 = vsel %vm4607, %v6915, 0
    %v6963 = vsel %vm4607, %v6916, 0
    %6965 = vmatprep.subr.bf16.mxu0 0
    %6966 = vmatpush1.bf16.msra.mxu0 0
    %6967 = vmatprep.subr.bf16.mxu0 0
    %6968 = vmatpush1.bf16.msra.mxu0 0
    %6969 = vmatprep.subr.bf16.mxu0 0
    %6970 = vmatpush1.bf16.msra.mxu0 0
    %6971 = vmatprep.subr.bf16.mxu0 0
    %6972 = vmatpush1.bf16.msra.mxu0 0
    %6973 = vmatprep.subr.bf16.mxu0 0
    %6974 = vmatpush1.bf16.msra.mxu0 %v6936
    %6975 = vmatprep.subr.bf16.mxu0 0
    %6976 = vmatpush1.bf16.msra.mxu0 %v6935
    %6977 = vmatprep.subr.bf16.mxu0 0
    %6978 = vmatpush1.bf16.msra.mxu0 %v6934
    %6979 = vmatprep.subr.bf16.mxu0 0
    %6980 = vmatpush1.bf16.msra.mxu0 %v6933
    %6981 = vmatprep.subr.bf16.mxu0 0
    %6982 = vmatpush2.bf16.msra.mxu0 0
    %6983 = vmatprep.subr.bf16.mxu0 0
    %6984 = vmatpush2.bf16.msra.mxu0 0
    %6985 = vmatprep.subr.bf16.mxu0 0
    %6986 = vmatpush2.bf16.msra.mxu0 0
    %6987 = vmatprep.subr.bf16.mxu0 0
    %6988 = vmatpush2.bf16.msra.mxu0 0
    %6989 = vmatprep.subr.bf16.mxu0 0
    %6990 = vmatpush2.bf16.msra.mxu0 0
    %6991 = vmatprep.subr.bf16.mxu0 0
    %6992 = vmatpush2.bf16.msra.mxu0 0
    %6993 = vmatprep.subr.bf16.mxu0 0
    %6994 = vmatpush2.bf16.msra.mxu0 0
    %6995 = vmatprep.subr.bf16.mxu0 0
    %6996 = vmatpush2.bf16.msra.mxu0 0
    %6997 = vmatprep.mubr.bf16.mxu0 0
    %6998 = vmatmul.mubr.bf16.gmra.mxu0 %v6942
    %v6999 = vpop.f32.mrf.mxu0
    %v7000 = vadd.f32 0.0, %v6999
    %v7001 = vpop.f32.mrf.mxu0
    %v7002 = vpop.f32.mrf.mxu0
    %v7003 = vadd.f32 0.0, %v7002
    %v7004 = vpop.f32.mrf.mxu0
    %7005 = vmatprep.mubr.bf16.mxu0 0
    %7006 = vmatmul.mubr.bf16.gmra.mxu0 %v6945
    %v7007 = vpop.f32.mrf.mxu0
    %v7008 = vadd.f32 0.0, %v7007
    %v7009 = vpop.f32.mrf.mxu0
    %v7010 = vpop.f32.mrf.mxu0
    %v7011 = vadd.f32 0.0, %v7010
    %v7012 = vpop.f32.mrf.mxu0
    %7013 = vmatprep.mubr.bf16.mxu0 0
    %7014 = vmatmul.mubr.bf16.gmra.mxu0 %v6948
    %v7015 = vpop.f32.mrf.mxu0
    %v7016 = vadd.f32 0.0, %v7015
    %v7017 = vpop.f32.mrf.mxu0
    %v7018 = vpop.f32.mrf.mxu0
    %v7019 = vadd.f32 0.0, %v7018
    %v7020 = vpop.f32.mrf.mxu0
    %7021 = vmatprep.mubr.bf16.mxu0 0
    %7022 = vmatmul.mubr.bf16.gmra.mxu0 %v6951
    %v7023 = vpop.f32.mrf.mxu0
    %v7024 = vadd.f32 0.0, %v7023
    %v7025 = vpop.f32.mrf.mxu0
    %v7026 = vpop.f32.mrf.mxu0
    %v7027 = vadd.f32 0.0, %v7026
    %v7028 = vpop.f32.mrf.mxu0
    %7029 = vmatprep.mubr.bf16.mxu0 0
    %7030 = vmatmul.mubr.bf16.gmra.mxu0 %v6954
    %v7031 = vpop.f32.mrf.mxu0
    %v7032 = vadd.f32 0.0, %v7031
    %v7033 = vpop.f32.mrf.mxu0
    %v7034 = vpop.f32.mrf.mxu0
    %v7035 = vadd.f32 0.0, %v7034
    %v7036 = vpop.f32.mrf.mxu0
    %7037 = vmatprep.mubr.bf16.mxu0 0
    %7038 = vmatmul.mubr.bf16.gmra.mxu0 %v6957
    %v7039 = vpop.f32.mrf.mxu0
    %v7040 = vadd.f32 0.0, %v7039
    %v7041 = vpop.f32.mrf.mxu0
    %v7042 = vpop.f32.mrf.mxu0
    %v7043 = vadd.f32 0.0, %v7042
    %v7044 = vpop.f32.mrf.mxu0
    %7045 = vmatprep.mubr.bf16.mxu0 0
    %7046 = vmatmul.mubr.bf16.gmra.mxu0 %v6960
    %v7047 = vpop.f32.mrf.mxu0
    %v7048 = vadd.f32 0.0, %v7047
    %v7049 = vpop.f32.mrf.mxu0
    %v7050 = vpop.f32.mrf.mxu0
    %v7051 = vadd.f32 0.0, %v7050
    %v7052 = vpop.f32.mrf.mxu0
    %7053 = vmatprep.mubr.bf16.mxu0 0
    %7054 = vmatmul.mubr.bf16.gmra.mxu0 %v6963
    %v7055 = vpop.f32.mrf.mxu0
    %v7056 = vadd.f32 0.0, %v7055
    %v7057 = vpop.f32.mrf.mxu0
    %v7058 = vpop.f32.mrf.mxu0
    %v7059 = vadd.f32 0.0, %v7058
    %v7060 = vpop.f32.mrf.mxu0
    %7061 = vdwg.mxu0
    %v7062 = vadd.f32 %v6613, %v7000
    %v7063 = vadd.f32 %v6614, %v7003
    %v7064 = vadd.f32 %v6615, %v7008
    %v7065 = vadd.f32 %v6616, %v7011
    %v7066 = vadd.f32 %v6617, %v7016
    %v7067 = vadd.f32 %v6618, %v7019
    %v7068 = vadd.f32 %v6619, %v7024
    %v7069 = vadd.f32 %v6620, %v7027
    %v7070 = vadd.f32 %v6621, %v7032
    %v7071 = vadd.f32 %v6622, %v7035
    %v7072 = vadd.f32 %v6623, %v7040
    %v7073 = vadd.f32 %v6624, %v7043
    %v7074 = vadd.f32 %v6625, %v7048
    %v7075 = vadd.f32 %v6626, %v7051
    %v7076 = vadd.f32 %v6627, %v7056
    %v7077 = vadd.f32 %v6628, %v7059
    %v7078 = vld [vmem:[%s5376] sm:$0xe]
    %v7079 = vld [vmem:[%s5376 + $0x8] sm:$0xe]
    %v7080 = vld [vmem:[%s5376 + $0x10] sm:$0xe]
    %v7081 = vld [vmem:[%s5376 + $0x18] sm:$0xe]
    %v7082 = vld [vmem:[%s5376 + $0x20] sm:$0xe]
    %v7083 = vld [vmem:[%s5376 + $0x28] sm:$0xe]
    %v7084 = vld [vmem:[%s5376 + $0x30] sm:$0xe]
    %v7085 = vld [vmem:[%s5376 + $0x38] sm:$0xe]
    %v7086 = vld [vmem:[%s5376 + $0x50] sm:$0xe]
    %v7087 = vld [vmem:[%s5376 + $0x58] sm:$0xe]
    %v7088 = vld [vmem:[%s5376 + $0x60] sm:$0xe]
    %v7089 = vld [vmem:[%s5376 + $0x68] sm:$0xe]
    %v7090 = vld [vmem:[%s5376 + $0x70] sm:$0xe]
    %v7091 = vld [vmem:[%s5376 + $0x78] sm:$0xe]
    %v7092 = vld [vmem:[%s5376 + $0x80] sm:$0xe]
    %v7093 = vld [vmem:[%s5376 + $0x88] sm:$0xe]
    %v7126 = vrot.slane %v7078, 5
    %v7127 = vrot.slane %v7126, 4
    %v7128 = vrot.slane %v6630, 5
    %v7129 = vsel %vm1303, %v7127, %v7128
    %v7130 = vrot.slane %v7079, 5
    %v7131 = vrot.slane %v7130, 4
    %v7132 = vrot.slane %v6632, 5
    %v7133 = vsel %vm1303, %v7131, %v7132
    %v7134 = vrot.slane %v7080, 5
    %v7135 = vrot.slane %v7134, 4
    %v7136 = vrot.slane %v6634, 5
    %v7137 = vsel %vm1303, %v7135, %v7136
    %v7138 = vrot.slane %v7081, 5
    %v7139 = vrot.slane %v7138, 4
    %v7140 = vrot.slane %v6636, 5
    %v7141 = vsel %vm1303, %v7139, %v7140
    %v7142 = vrot.slane %v7082, 5
    %v7143 = vrot.slane %v7142, 4
    %v7144 = vrot.slane %v6638, 5
    %v7145 = vsel %vm1303, %v7143, %v7144
    %v7146 = vrot.slane %v7083, 5
    %v7147 = vrot.slane %v7146, 4
    %v7148 = vrot.slane %v6640, 5
    %v7149 = vsel %vm1303, %v7147, %v7148
    %v7150 = vrot.slane %v7084, 5
    %v7151 = vrot.slane %v7150, 4
    %v7152 = vrot.slane %v6642, 5
    %v7153 = vsel %vm1303, %v7151, %v7152
    %v7154 = vrot.slane %v7085, 5
    %v7155 = vrot.slane %v7154, 4
    %v7156 = vrot.slane %v6644, 5
    %v7157 = vsel %vm1303, %v7155, %v7156
    %v7158 = vrot.slane %v7086, 5
    %v7159 = vrot.slane %v7158, 4
    %v7160 = vrot.slane %v6646, 5
    %v7161 = vsel %vm1303, %v7159, %v7160
    %v7162 = vrot.slane %v7087, 5
    %v7163 = vrot.slane %v7162, 4
    %v7164 = vrot.slane %v6648, 5
    %v7165 = vsel %vm1303, %v7163, %v7164
    %v7166 = vrot.slane %v7088, 5
    %v7167 = vrot.slane %v7166, 4
    %v7168 = vrot.slane %v6650, 5
    %v7169 = vsel %vm1303, %v7167, %v7168
    %v7170 = vrot.slane %v7089, 5
    %v7171 = vrot.slane %v7170, 4
    %v7172 = vrot.slane %v6652, 5
    %v7173 = vsel %vm1303, %v7171, %v7172
    %v7174 = vrot.slane %v7090, 5
    %v7175 = vrot.slane %v7174, 4
    %v7176 = vrot.slane %v6654, 5
    %v7177 = vsel %vm1303, %v7175, %v7176
    %v7178 = vrot.slane %v7091, 5
    %v7179 = vrot.slane %v7178, 4
    %v7180 = vrot.slane %v6656, 5
    %v7181 = vsel %vm1303, %v7179, %v7180
    %v7182 = vrot.slane %v7092, 5
    %v7183 = vrot.slane %v7182, 4
    %v7184 = vrot.slane %v6658, 5
    %v7185 = vsel %vm1303, %v7183, %v7184
    %v7186 = vrot.slane %v7093, 5
    %v7187 = vrot.slane %v7186, 4
    %v7188 = vrot.slane %v6660, 5
    %v7189 = vsel %vm1303, %v7187, %v7188
    %v7190 = vld [vmem:[%s11 + $0x80] sm:$0xf]
    %v7191 = vld [vmem:[%s11 + $0x84] sm:$0xf]
    %v7192 = vld [vmem:[%s11 + $0x88] sm:$0xf]
    %v7193 = vld [vmem:[%s11 + $0x8c] sm:$0xf]
    %v7194 = vld [vmem:[%s11 + $0x90] sm:$0xf]
    %v7195 = vld [vmem:[%s11 + $0x94] sm:$0xf]
    %v7196 = vld [vmem:[%s11 + $0x98] sm:$0xf]
    %v7197 = vld [vmem:[%s11 + $0x9c] sm:$0xf]
    %v7198 = vunpack.c.l.b16 %v7129
    %v7199 = vunpack.c.l.b16 %v7133
    %v7200 = vunpack.c.l.b16 %v7137
    %v7201 = vunpack.c.l.b16 %v7141
    %v7202 = vunpack.c.l.b16 %v7145
    %v7203 = vunpack.c.l.b16 %v7149
    %v7204 = vunpack.c.l.b16 %v7153
    %v7205 = vunpack.c.l.b16 %v7157
    %v7206 = vunpack.c.l.b16 %v7161
    %v7207 = vunpack.c.l.b16 %v7165
    %v7208 = vunpack.c.l.b16 %v7169
    %v7209 = vunpack.c.l.b16 %v7173
    %v7210 = vunpack.c.l.b16 %v7177
    %v7211 = vunpack.c.l.b16 %v7181
    %v7212 = vunpack.c.l.b16 %v7185
    %v7213 = vunpack.c.l.b16 %v7189
    %v7214 = vpack.c.b16 %v7199, %v7198
    %v7215 = vpack.c.b16 %v7201, %v7200
    %v7216 = vpack.c.b16 %v7203, %v7202
    %v7217 = vpack.c.b16 %v7205, %v7204
    %v7218 = vpack.c.b16 %v7207, %v7206
    %v7219 = vpack.c.b16 %v7209, %v7208
    %v7220 = vpack.c.b16 %v7211, %v7210
    %v7221 = vpack.c.b16 %v7213, %v7212
    %v7230 = vunpack.c.l.b16 %v7190
    %v7231 = vunpack.c.l.b16 %v7191
    %v7232 = vunpack.c.l.b16 %v7192
    %v7233 = vunpack.c.l.b16 %v7193
    %v7234 = vunpack.c.l.b16 %v7194
    %v7235 = vunpack.c.l.b16 %v7195
    %v7236 = vunpack.c.l.b16 %v7196
    %v7237 = vunpack.c.l.b16 %v7197
    %v7238 = vpack.c.b16 %v7231, %v7230
    %v7239 = vpack.c.b16 %v7233, %v7232
    %v7240 = vpack.c.b16 %v7235, %v7234
    %v7241 = vpack.c.b16 %v7237, %v7236
    %v7247 = vsel %vm4607, %v7214, 0
    %v7250 = vsel %vm4607, %v7215, 0
    %v7253 = vsel %vm4607, %v7216, 0
    %v7256 = vsel %vm4607, %v7217, 0
    %v7259 = vsel %vm4607, %v7218, 0
    %v7262 = vsel %vm4607, %v7219, 0
    %v7265 = vsel %vm4607, %v7220, 0
    %v7268 = vsel %vm4607, %v7221, 0
    %7270 = vmatprep.subr.bf16.mxu0 0
    %7271 = vmatpush1.bf16.msra.mxu0 0
    %7272 = vmatprep.subr.bf16.mxu0 0
    %7273 = vmatpush1.bf16.msra.mxu0 0
    %7274 = vmatprep.subr.bf16.mxu0 0
    %7275 = vmatpush1.bf16.msra.mxu0 0
    %7276 = vmatprep.subr.bf16.mxu0 0
    %7277 = vmatpush1.bf16.msra.mxu0 0
    %7278 = vmatprep.subr.bf16.mxu0 0
    %7279 = vmatpush1.bf16.msra.mxu0 %v7241
    %7280 = vmatprep.subr.bf16.mxu0 0
    %7281 = vmatpush1.bf16.msra.mxu0 %v7240
    %7282 = vmatprep.subr.bf16.mxu0 0
    %7283 = vmatpush1.bf16.msra.mxu0 %v7239
    %7284 = vmatprep.subr.bf16.mxu0 0
    %7285 = vmatpush1.bf16.msra.mxu0 %v7238
    %7286 = vmatprep.subr.bf16.mxu0 0
    %7287 = vmatpush2.bf16.msra.mxu0 0
    %7288 = vmatprep.subr.bf16.mxu0 0
    %7289 = vmatpush2.bf16.msra.mxu0 0
    %7290 = vmatprep.subr.bf16.mxu0 0
    %7291 = vmatpush2.bf16.msra.mxu0 0
    %7292 = vmatprep.subr.bf16.mxu0 0
    %7293 = vmatpush2.bf16.msra.mxu0 0
    %7294 = vmatprep.subr.bf16.mxu0 0
    %7295 = vmatpush2.bf16.msra.mxu0 0
    %7296 = vmatprep.subr.bf16.mxu0 0
    %7297 = vmatpush2.bf16.msra.mxu0 0
    %7298 = vmatprep.subr.bf16.mxu0 0
    %7299 = vmatpush2.bf16.msra.mxu0 0
    %7300 = vmatprep.subr.bf16.mxu0 0
    %7301 = vmatpush2.bf16.msra.mxu0 0
    %7302 = vmatprep.mubr.bf16.mxu0 0
    %7303 = vmatmul.mubr.bf16.gmra.mxu0 %v7247
    %v7304 = vpop.f32.mrf.mxu0
    %v7305 = vadd.f32 0.0, %v7304
    %v7306 = vpop.f32.mrf.mxu0
    %v7307 = vpop.f32.mrf.mxu0
    %v7308 = vadd.f32 0.0, %v7307
    %v7309 = vpop.f32.mrf.mxu0
    %7310 = vmatprep.mubr.bf16.mxu0 0
    %7311 = vmatmul.mubr.bf16.gmra.mxu0 %v7250
    %v7312 = vpop.f32.mrf.mxu0
    %v7313 = vadd.f32 0.0, %v7312
    %v7314 = vpop.f32.mrf.mxu0
    %v7315 = vpop.f32.mrf.mxu0
    %v7316 = vadd.f32 0.0, %v7315
    %v7317 = vpop.f32.mrf.mxu0
    %7318 = vmatprep.mubr.bf16.mxu0 0
    %7319 = vmatmul.mubr.bf16.gmra.mxu0 %v7253
    %v7320 = vpop.f32.mrf.mxu0
    %v7321 = vadd.f32 0.0, %v7320
    %v7322 = vpop.f32.mrf.mxu0
    %v7323 = vpop.f32.mrf.mxu0
    %v7324 = vadd.f32 0.0, %v7323
    %v7325 = vpop.f32.mrf.mxu0
    %7326 = vmatprep.mubr.bf16.mxu0 0
    %7327 = vmatmul.mubr.bf16.gmra.mxu0 %v7256
    %v7328 = vpop.f32.mrf.mxu0
    %v7329 = vadd.f32 0.0, %v7328
    %v7330 = vpop.f32.mrf.mxu0
    %v7331 = vpop.f32.mrf.mxu0
    %v7332 = vadd.f32 0.0, %v7331
    %v7333 = vpop.f32.mrf.mxu0
    %7334 = vmatprep.mubr.bf16.mxu0 0
    %7335 = vmatmul.mubr.bf16.gmra.mxu0 %v7259
    %v7336 = vpop.f32.mrf.mxu0
    %v7337 = vadd.f32 0.0, %v7336
    %v7338 = vpop.f32.mrf.mxu0
    %v7339 = vpop.f32.mrf.mxu0
    %v7340 = vadd.f32 0.0, %v7339
    %v7341 = vpop.f32.mrf.mxu0
    %7342 = vmatprep.mubr.bf16.mxu0 0
    %7343 = vmatmul.mubr.bf16.gmra.mxu0 %v7262
    %v7344 = vpop.f32.mrf.mxu0
    %v7345 = vadd.f32 0.0, %v7344
    %v7346 = vpop.f32.mrf.mxu0
    %v7347 = vpop.f32.mrf.mxu0
    %v7348 = vadd.f32 0.0, %v7347
    %v7349 = vpop.f32.mrf.mxu0
    %7350 = vmatprep.mubr.bf16.mxu0 0
    %7351 = vmatmul.mubr.bf16.gmra.mxu0 %v7265
    %v7352 = vpop.f32.mrf.mxu0
    %v7353 = vadd.f32 0.0, %v7352
    %v7354 = vpop.f32.mrf.mxu0
    %v7355 = vpop.f32.mrf.mxu0
    %v7356 = vadd.f32 0.0, %v7355
    %v7357 = vpop.f32.mrf.mxu0
    %7358 = vmatprep.mubr.bf16.mxu0 0
    %7359 = vmatmul.mubr.bf16.gmra.mxu0 %v7268
    %v7360 = vpop.f32.mrf.mxu0
    %v7361 = vadd.f32 0.0, %v7360
    %v7362 = vpop.f32.mrf.mxu0
    %v7363 = vpop.f32.mrf.mxu0
    %v7364 = vadd.f32 0.0, %v7363
    %v7365 = vpop.f32.mrf.mxu0
    %7366 = vdwg.mxu0
    %v7367 = vadd.f32 %v7062, %v7305
    %v7368 = vadd.f32 %v7063, %v7308
    %v7369 = vadd.f32 %v7064, %v7313
    %v7370 = vadd.f32 %v7065, %v7316
    %v7371 = vadd.f32 %v7066, %v7321
    %v7372 = vadd.f32 %v7067, %v7324
    %v7373 = vadd.f32 %v7068, %v7329
    %v7374 = vadd.f32 %v7069, %v7332
    %v7375 = vadd.f32 %v7070, %v7337
    %v7376 = vadd.f32 %v7071, %v7340
    %v7377 = vadd.f32 %v7072, %v7345
    %v7378 = vadd.f32 %v7073, %v7348
    %v7379 = vadd.f32 %v7074, %v7353
    %v7380 = vadd.f32 %v7075, %v7356
    %v7381 = vadd.f32 %v7076, %v7361
    %v7382 = vadd.f32 %v7077, %v7364
    %v7383 = vld [vmem:[%s5376 + $0x4] sm:$0x3]
    %v7384 = vld [vmem:[%s5376 + $0xc] sm:$0x3]
    %v7385 = vld [vmem:[%s5376 + $0x14] sm:$0x3]
    %v7386 = vld [vmem:[%s5376 + $0x1c] sm:$0x3]
    %v7387 = vld [vmem:[%s5376 + $0x24] sm:$0x3]
    %v7388 = vld [vmem:[%s5376 + $0x2c] sm:$0x3]
    %v7389 = vld [vmem:[%s5376 + $0x34] sm:$0x3]
    %v7390 = vld [vmem:[%s5376 + $0x3c] sm:$0x3]
    %v7391 = vld [vmem:[%s5376 + $0x54] sm:$0x3]
    %v7392 = vld [vmem:[%s5376 + $0x5c] sm:$0x3]
    %v7393 = vld [vmem:[%s5376 + $0x64] sm:$0x3]
    %v7394 = vld [vmem:[%s5376 + $0x6c] sm:$0x3]
    %v7395 = vld [vmem:[%s5376 + $0x74] sm:$0x3]
    %v7396 = vld [vmem:[%s5376 + $0x7c] sm:$0x3]
    %v7397 = vld [vmem:[%s5376 + $0x84] sm:$0x3]
    %v7398 = vld [vmem:[%s5376 + $0x8c] sm:$0x3]
    %v7400 = vshrl.u32 %v7078, 16
    %v7402 = vrot.slane %v7400, 5
    %v7403 = vshll.u32 %v7078, 16
    %v7405 = vrot.slane %v7403, 6
    %v7406 = vor.u32 %v7402, %v7405
    %v7407 = vrot.slane %v7406, 4
    %v7409 = vshrl.u32 %v7383, 16
    %v7411 = vrot.slane %v7409, 5
    %v7412 = vshll.u32 %v7383, 16
    %v7414 = vrot.slane %v7412, 6
    %v7415 = vor.u32 %v7411, %v7414
    %v7416 = vsel %vm1704, %v7407, %v7415
    %v7418 = vshrl.u32 %v7079, 16
    %v7420 = vrot.slane %v7418, 5
    %v7421 = vshll.u32 %v7079, 16
    %v7423 = vrot.slane %v7421, 6
    %v7424 = vor.u32 %v7420, %v7423
    %v7425 = vrot.slane %v7424, 4
    %v7427 = vshrl.u32 %v7384, 16
    %v7429 = vrot.slane %v7427, 5
    %v7430 = vshll.u32 %v7384, 16
    %v7432 = vrot.slane %v7430, 6
    %v7433 = vor.u32 %v7429, %v7432
    %v7434 = vsel %vm1704, %v7425, %v7433
    %v7436 = vshrl.u32 %v7080, 16
    %v7438 = vrot.slane %v7436, 5
    %v7439 = vshll.u32 %v7080, 16
    %v7441 = vrot.slane %v7439, 6
    %v7442 = vor.u32 %v7438, %v7441
    %v7443 = vrot.slane %v7442, 4
    %v7445 = vshrl.u32 %v7385, 16
    %v7447 = vrot.slane %v7445, 5
    %v7448 = vshll.u32 %v7385, 16
    %v7450 = vrot.slane %v7448, 6
    %v7451 = vor.u32 %v7447, %v7450
    %v7452 = vsel %vm1704, %v7443, %v7451
    %v7454 = vshrl.u32 %v7081, 16
    %v7456 = vrot.slane %v7454, 5
    %v7457 = vshll.u32 %v7081, 16
    %v7459 = vrot.slane %v7457, 6
    %v7460 = vor.u32 %v7456, %v7459
    %v7461 = vrot.slane %v7460, 4
    %v7463 = vshrl.u32 %v7386, 16
    %v7465 = vrot.slane %v7463, 5
    %v7466 = vshll.u32 %v7386, 16
    %v7468 = vrot.slane %v7466, 6
    %v7469 = vor.u32 %v7465, %v7468
    %v7470 = vsel %vm1704, %v7461, %v7469
    %v7472 = vshrl.u32 %v7082, 16
    %v7474 = vrot.slane %v7472, 5
    %v7475 = vshll.u32 %v7082, 16
    %v7477 = vrot.slane %v7475, 6
    %v7478 = vor.u32 %v7474, %v7477
    %v7479 = vrot.slane %v7478, 4
    %v7481 = vshrl.u32 %v7387, 16
    %v7483 = vrot.slane %v7481, 5
    %v7484 = vshll.u32 %v7387, 16
    %v7486 = vrot.slane %v7484, 6
    %v7487 = vor.u32 %v7483, %v7486
    %v7488 = vsel %vm1704, %v7479, %v7487
    %v7490 = vshrl.u32 %v7083, 16
    %v7492 = vrot.slane %v7490, 5
    %v7493 = vshll.u32 %v7083, 16
    %v7495 = vrot.slane %v7493, 6
    %v7496 = vor.u32 %v7492, %v7495
    %v7497 = vrot.slane %v7496, 4
    %v7499 = vshrl.u32 %v7388, 16
    %v7501 = vrot.slane %v7499, 5
    %v7502 = vshll.u32 %v7388, 16
    %v7504 = vrot.slane %v7502, 6
    %v7505 = vor.u32 %v7501, %v7504
    %v7506 = vsel %vm1704, %v7497, %v7505
    %v7508 = vshrl.u32 %v7084, 16
    %v7510 = vrot.slane %v7508, 5
    %v7511 = vshll.u32 %v7084, 16
    %v7513 = vrot.slane %v7511, 6
    %v7514 = vor.u32 %v7510, %v7513
    %v7515 = vrot.slane %v7514, 4
    %v7517 = vshrl.u32 %v7389, 16
    %v7519 = vrot.slane %v7517, 5
    %v7520 = vshll.u32 %v7389, 16
    %v7522 = vrot.slane %v7520, 6
    %v7523 = vor.u32 %v7519, %v7522
    %v7524 = vsel %vm1704, %v7515, %v7523
    %v7526 = vshrl.u32 %v7085, 16
    %v7528 = vrot.slane %v7526, 5
    %v7529 = vshll.u32 %v7085, 16
    %v7531 = vrot.slane %v7529, 6
    %v7532 = vor.u32 %v7528, %v7531
    %v7533 = vrot.slane %v7532, 4
    %v7535 = vshrl.u32 %v7390, 16
    %v7537 = vrot.slane %v7535, 5
    %v7538 = vshll.u32 %v7390, 16
    %v7540 = vrot.slane %v7538, 6
    %v7541 = vor.u32 %v7537, %v7540
    %v7542 = vsel %vm1704, %v7533, %v7541
    %v7544 = vshrl.u32 %v7086, 16
    %v7546 = vrot.slane %v7544, 5
    %v7547 = vshll.u32 %v7086, 16
    %v7549 = vrot.slane %v7547, 6
    %v7550 = vor.u32 %v7546, %v7549
    %v7551 = vrot.slane %v7550, 4
    %v7553 = vshrl.u32 %v7391, 16
    %v7555 = vrot.slane %v7553, 5
    %v7556 = vshll.u32 %v7391, 16
    %v7558 = vrot.slane %v7556, 6
    %v7559 = vor.u32 %v7555, %v7558
    %v7560 = vsel %vm1704, %v7551, %v7559
    %v7562 = vshrl.u32 %v7087, 16
    %v7564 = vrot.slane %v7562, 5
    %v7565 = vshll.u32 %v7087, 16
    %v7567 = vrot.slane %v7565, 6
    %v7568 = vor.u32 %v7564, %v7567
    %v7569 = vrot.slane %v7568, 4
    %v7571 = vshrl.u32 %v7392, 16
    %v7573 = vrot.slane %v7571, 5
    %v7574 = vshll.u32 %v7392, 16
    %v7576 = vrot.slane %v7574, 6
    %v7577 = vor.u32 %v7573, %v7576
    %v7578 = vsel %vm1704, %v7569, %v7577
    %v7580 = vshrl.u32 %v7088, 16
    %v7582 = vrot.slane %v7580, 5
    %v7583 = vshll.u32 %v7088, 16
    %v7585 = vrot.slane %v7583, 6
    %v7586 = vor.u32 %v7582, %v7585
    %v7587 = vrot.slane %v7586, 4
    %v7589 = vshrl.u32 %v7393, 16
    %v7591 = vrot.slane %v7589, 5
    %v7592 = vshll.u32 %v7393, 16
    %v7594 = vrot.slane %v7592, 6
    %v7595 = vor.u32 %v7591, %v7594
    %v7596 = vsel %vm1704, %v7587, %v7595
    %v7598 = vshrl.u32 %v7089, 16
    %v7600 = vrot.slane %v7598, 5
    %v7601 = vshll.u32 %v7089, 16
    %v7603 = vrot.slane %v7601, 6
    %v7604 = vor.u32 %v7600, %v7603
    %v7605 = vrot.slane %v7604, 4
    %v7607 = vshrl.u32 %v7394, 16
    %v7609 = vrot.slane %v7607, 5
    %v7610 = vshll.u32 %v7394, 16
    %v7612 = vrot.slane %v7610, 6
    %v7613 = vor.u32 %v7609, %v7612
    %v7614 = vsel %vm1704, %v7605, %v7613
    %v7616 = vshrl.u32 %v7090, 16
    %v7618 = vrot.slane %v7616, 5
    %v7619 = vshll.u32 %v7090, 16
    %v7621 = vrot.slane %v7619, 6
    %v7622 = vor.u32 %v7618, %v7621
    %v7623 = vrot.slane %v7622, 4
    %v7625 = vshrl.u32 %v7395, 16
    %v7627 = vrot.slane %v7625, 5
    %v7628 = vshll.u32 %v7395, 16
    %v7630 = vrot.slane %v7628, 6
    %v7631 = vor.u32 %v7627, %v7630
    %v7632 = vsel %vm1704, %v7623, %v7631
    %v7634 = vshrl.u32 %v7091, 16
    %v7636 = vrot.slane %v7634, 5
    %v7637 = vshll.u32 %v7091, 16
    %v7639 = vrot.slane %v7637, 6
    %v7640 = vor.u32 %v7636, %v7639
    %v7641 = vrot.slane %v7640, 4
    %v7643 = vshrl.u32 %v7396, 16
    %v7645 = vrot.slane %v7643, 5
    %v7646 = vshll.u32 %v7396, 16
    %v7648 = vrot.slane %v7646, 6
    %v7649 = vor.u32 %v7645, %v7648
    %v7650 = vsel %vm1704, %v7641, %v7649
    %v7652 = vshrl.u32 %v7092, 16
    %v7654 = vrot.slane %v7652, 5
    %v7655 = vshll.u32 %v7092, 16
    %v7657 = vrot.slane %v7655, 6
    %v7658 = vor.u32 %v7654, %v7657
    %v7659 = vrot.slane %v7658, 4
    %v7661 = vshrl.u32 %v7397, 16
    %v7663 = vrot.slane %v7661, 5
    %v7664 = vshll.u32 %v7397, 16
    %v7666 = vrot.slane %v7664, 6
    %v7667 = vor.u32 %v7663, %v7666
    %v7668 = vsel %vm1704, %v7659, %v7667
    %v7670 = vshrl.u32 %v7093, 16
    %v7672 = vrot.slane %v7670, 5
    %v7673 = vshll.u32 %v7093, 16
    %v7675 = vrot.slane %v7673, 6
    %v7676 = vor.u32 %v7672, %v7675
    %v7677 = vrot.slane %v7676, 4
    %v7679 = vshrl.u32 %v7398, 16
    %v7681 = vrot.slane %v7679, 5
    %v7682 = vshll.u32 %v7398, 16
    %v7684 = vrot.slane %v7682, 6
    %v7685 = vor.u32 %v7681, %v7684
    %v7686 = vsel %vm1704, %v7677, %v7685
    %v7687 = vld [vmem:[%s11 + $0xa0] sm:$0xf]
    %v7688 = vld [vmem:[%s11 + $0xa4] sm:$0xf]
    %v7689 = vld [vmem:[%s11 + $0xa8] sm:$0xf]
    %v7690 = vld [vmem:[%s11 + $0xac] sm:$0xf]
    %v7691 = vld [vmem:[%s11 + $0xb0] sm:$0xf]
    %v7692 = vld [vmem:[%s11 + $0xb4] sm:$0xf]
    %v7693 = vld [vmem:[%s11 + $0xb8] sm:$0xf]
    %v7694 = vld [vmem:[%s11 + $0xbc] sm:$0xf]
    %v7695 = vunpack.c.l.b16 %v7416
    %v7696 = vunpack.c.l.b16 %v7434
    %v7697 = vunpack.c.l.b16 %v7452
    %v7698 = vunpack.c.l.b16 %v7470
    %v7699 = vunpack.c.l.b16 %v7488
    %v7700 = vunpack.c.l.b16 %v7506
    %v7701 = vunpack.c.l.b16 %v7524
    %v7702 = vunpack.c.l.b16 %v7542
    %v7703 = vunpack.c.l.b16 %v7560
    %v7704 = vunpack.c.l.b16 %v7578
    %v7705 = vunpack.c.l.b16 %v7596
    %v7706 = vunpack.c.l.b16 %v7614
    %v7707 = vunpack.c.l.b16 %v7632
    %v7708 = vunpack.c.l.b16 %v7650
    %v7709 = vunpack.c.l.b16 %v7668
    %v7710 = vunpack.c.l.b16 %v7686
    %v7711 = vpack.c.b16 %v7696, %v7695
    %v7712 = vpack.c.b16 %v7698, %v7697
    %v7713 = vpack.c.b16 %v7700, %v7699
    %v7714 = vpack.c.b16 %v7702, %v7701
    %v7715 = vpack.c.b16 %v7704, %v7703
    %v7716 = vpack.c.b16 %v7706, %v7705
    %v7717 = vpack.c.b16 %v7708, %v7707
    %v7718 = vpack.c.b16 %v7710, %v7709
    %v7727 = vunpack.c.l.b16 %v7687
    %v7728 = vunpack.c.l.b16 %v7688
    %v7729 = vunpack.c.l.b16 %v7689
    %v7730 = vunpack.c.l.b16 %v7690
    %v7731 = vunpack.c.l.b16 %v7691
    %v7732 = vunpack.c.l.b16 %v7692
    %v7733 = vunpack.c.l.b16 %v7693
    %v7734 = vunpack.c.l.b16 %v7694
    %v7735 = vpack.c.b16 %v7728, %v7727
    %v7736 = vpack.c.b16 %v7730, %v7729
    %v7737 = vpack.c.b16 %v7732, %v7731
    %v7738 = vpack.c.b16 %v7734, %v7733
    %v7744 = vsel %vm4607, %v7711, 0
    %v7747 = vsel %vm4607, %v7712, 0
    %v7750 = vsel %vm4607, %v7713, 0
    %v7753 = vsel %vm4607, %v7714, 0
    %v7756 = vsel %vm4607, %v7715, 0
    %v7759 = vsel %vm4607, %v7716, 0
    %v7762 = vsel %vm4607, %v7717, 0
    %v7765 = vsel %vm4607, %v7718, 0
    %7767 = vmatprep.subr.bf16.mxu0 0
    %7768 = vmatpush1.bf16.msra.mxu0 0
    %7769 = vmatprep.subr.bf16.mxu0 0
    %7770 = vmatpush1.bf16.msra.mxu0 0
    %7771 = vmatprep.subr.bf16.mxu0 0
    %7772 = vmatpush1.bf16.msra.mxu0 0
    %7773 = vmatprep.subr.bf16.mxu0 0
    %7774 = vmatpush1.bf16.msra.mxu0 0
    %7775 = vmatprep.subr.bf16.mxu0 0
    %7776 = vmatpush1.bf16.msra.mxu0 %v7738
    %7777 = vmatprep.subr.bf16.mxu0 0
    %7778 = vmatpush1.bf16.msra.mxu0 %v7737
    %7779 = vmatprep.subr.bf16.mxu0 0
    %7780 = vmatpush1.bf16.msra.mxu0 %v7736
    %7781 = vmatprep.subr.bf16.mxu0 0
    %7782 = vmatpush1.bf16.msra.mxu0 %v7735
    %7783 = vmatprep.subr.bf16.mxu0 0
    %7784 = vmatpush2.bf16.msra.mxu0 0
    %7785 = vmatprep.subr.bf16.mxu0 0
    %7786 = vmatpush2.bf16.msra.mxu0 0
    %7787 = vmatprep.subr.bf16.mxu0 0
    %7788 = vmatpush2.bf16.msra.mxu0 0
    %7789 = vmatprep.subr.bf16.mxu0 0
    %7790 = vmatpush2.bf16.msra.mxu0 0
    %7791 = vmatprep.subr.bf16.mxu0 0
    %7792 = vmatpush2.bf16.msra.mxu0 0
    %7793 = vmatprep.subr.bf16.mxu0 0
    %7794 = vmatpush2.bf16.msra.mxu0 0
    %7795 = vmatprep.subr.bf16.mxu0 0
    %7796 = vmatpush2.bf16.msra.mxu0 0
    %7797 = vmatprep.subr.bf16.mxu0 0
    %7798 = vmatpush2.bf16.msra.mxu0 0
    %7799 = vmatprep.mubr.bf16.mxu0 0
    %7800 = vmatmul.mubr.bf16.gmra.mxu0 %v7744
    %v7801 = vpop.f32.mrf.mxu0
    %v7802 = vadd.f32 0.0, %v7801
    %v7803 = vpop.f32.mrf.mxu0
    %v7804 = vpop.f32.mrf.mxu0
    %v7805 = vadd.f32 0.0, %v7804
    %v7806 = vpop.f32.mrf.mxu0
    %7807 = vmatprep.mubr.bf16.mxu0 0
    %7808 = vmatmul.mubr.bf16.gmra.mxu0 %v7747
    %v7809 = vpop.f32.mrf.mxu0
    %v7810 = vadd.f32 0.0, %v7809
    %v7811 = vpop.f32.mrf.mxu0
    %v7812 = vpop.f32.mrf.mxu0
    %v7813 = vadd.f32 0.0, %v7812
    %v7814 = vpop.f32.mrf.mxu0
    %7815 = vmatprep.mubr.bf16.mxu0 0
    %7816 = vmatmul.mubr.bf16.gmra.mxu0 %v7750
    %v7817 = vpop.f32.mrf.mxu0
    %v7818 = vadd.f32 0.0, %v7817
    %v7819 = vpop.f32.mrf.mxu0
    %v7820 = vpop.f32.mrf.mxu0
    %v7821 = vadd.f32 0.0, %v7820
    %v7822 = vpop.f32.mrf.mxu0
    %7823 = vmatprep.mubr.bf16.mxu0 0
    %7824 = vmatmul.mubr.bf16.gmra.mxu0 %v7753
    %v7825 = vpop.f32.mrf.mxu0
    %v7826 = vadd.f32 0.0, %v7825
    %v7827 = vpop.f32.mrf.mxu0
    %v7828 = vpop.f32.mrf.mxu0
    %v7829 = vadd.f32 0.0, %v7828
    %v7830 = vpop.f32.mrf.mxu0
    %7831 = vmatprep.mubr.bf16.mxu0 0
    %7832 = vmatmul.mubr.bf16.gmra.mxu0 %v7756
    %v7833 = vpop.f32.mrf.mxu0
    %v7834 = vadd.f32 0.0, %v7833
    %v7835 = vpop.f32.mrf.mxu0
    %v7836 = vpop.f32.mrf.mxu0
    %v7837 = vadd.f32 0.0, %v7836
    %v7838 = vpop.f32.mrf.mxu0
    %7839 = vmatprep.mubr.bf16.mxu0 0
    %7840 = vmatmul.mubr.bf16.gmra.mxu0 %v7759
    %v7841 = vpop.f32.mrf.mxu0
    %v7842 = vadd.f32 0.0, %v7841
    %v7843 = vpop.f32.mrf.mxu0
    %v7844 = vpop.f32.mrf.mxu0
    %v7845 = vadd.f32 0.0, %v7844
    %v7846 = vpop.f32.mrf.mxu0
    %7847 = vmatprep.mubr.bf16.mxu0 0
    %7848 = vmatmul.mubr.bf16.gmra.mxu0 %v7762
    %v7849 = vpop.f32.mrf.mxu0
    %v7850 = vadd.f32 0.0, %v7849
    %v7851 = vpop.f32.mrf.mxu0
    %v7852 = vpop.f32.mrf.mxu0
    %v7853 = vadd.f32 0.0, %v7852
    %v7854 = vpop.f32.mrf.mxu0
    %7855 = vmatprep.mubr.bf16.mxu0 0
    %7856 = vmatmul.mubr.bf16.gmra.mxu0 %v7765
    %v7857 = vpop.f32.mrf.mxu0
    %v7858 = vadd.f32 0.0, %v7857
    %v7859 = vpop.f32.mrf.mxu0
    %v7860 = vpop.f32.mrf.mxu0
    %v7861 = vadd.f32 0.0, %v7860
    %v7862 = vpop.f32.mrf.mxu0
    %7863 = vdwg.mxu0
    %v7864 = vadd.f32 %v7367, %v7802
    %v7865 = vadd.f32 %v7368, %v7805
    %v7866 = vadd.f32 %v7369, %v7810
    %v7867 = vadd.f32 %v7370, %v7813
    %v7868 = vadd.f32 %v7371, %v7818
    %v7869 = vadd.f32 %v7372, %v7821
    %v7870 = vadd.f32 %v7373, %v7826
    %v7871 = vadd.f32 %v7374, %v7829
    %v7872 = vadd.f32 %v7375, %v7834
    %v7873 = vadd.f32 %v7376, %v7837
    %v7874 = vadd.f32 %v7377, %v7842
    %v7875 = vadd.f32 %v7378, %v7845
    %v7876 = vadd.f32 %v7379, %v7850
    %v7877 = vadd.f32 %v7380, %v7853
    %v7878 = vadd.f32 %v7381, %v7858
    %v7879 = vadd.f32 %v7382, %v7861
    %s7880 = scalar_lea.vmem [#allocation3], 16
    %v7881 = vld [vmem:[%s7880] sm:$0xf]
    %v7882 = vld [vmem:[%s7880 + $0x4] sm:$0x1]
    %v7883 = vld [vmem:[%s7880 + $0x8] sm:$0xf]
    %v7884 = vld [vmem:[%s7880 + $0xc] sm:$0x1]
    %v7885 = vld [vmem:[%s7880 + $0x10] sm:$0xf]
    %v7886 = vld [vmem:[%s7880 + $0x14] sm:$0x1]
    %v7887 = vld [vmem:[%s7880 + $0x18] sm:$0xf]
    %v7888 = vld [vmem:[%s7880 + $0x1c] sm:$0x1]
    %v7889 = vld [vmem:[%s7880 + $0x20] sm:$0xf]
    %v7890 = vld [vmem:[%s7880 + $0x24] sm:$0x1]
    %v7891 = vld [vmem:[%s7880 + $0x28] sm:$0xf]
    %v7892 = vld [vmem:[%s7880 + $0x2c] sm:$0x1]
    %v7893 = vld [vmem:[%s7880 + $0x30] sm:$0xf]
    %v7894 = vld [vmem:[%s7880 + $0x34] sm:$0x1]
    %v7895 = vld [vmem:[%s7880 + $0x38] sm:$0xf]
    %v7896 = vld [vmem:[%s7880 + $0x3c] sm:$0x1]
    %v7897 = vld [vmem:[%s7880 + $0x50] sm:$0xf]
    %v7898 = vld [vmem:[%s7880 + $0x54] sm:$0x1]
    %v7899 = vld [vmem:[%s7880 + $0x58] sm:$0xf]
    %v7900 = vld [vmem:[%s7880 + $0x5c] sm:$0x1]
    %v7901 = vld [vmem:[%s7880 + $0x60] sm:$0xf]
    %v7902 = vld [vmem:[%s7880 + $0x64] sm:$0x1]
    %v7903 = vld [vmem:[%s7880 + $0x68] sm:$0xf]
    %v7904 = vld [vmem:[%s7880 + $0x6c] sm:$0x1]
    %v7905 = vld [vmem:[%s7880 + $0x70] sm:$0xf]
    %v7906 = vld [vmem:[%s7880 + $0x74] sm:$0x1]
    %v7907 = vld [vmem:[%s7880 + $0x78] sm:$0xf]
    %v7908 = vld [vmem:[%s7880 + $0x7c] sm:$0x1]
    %v7909 = vld [vmem:[%s7880 + $0x80] sm:$0xf]
    %v7910 = vld [vmem:[%s7880 + $0x84] sm:$0x1]
    %v7911 = vld [vmem:[%s7880 + $0x88] sm:$0xf]
    %v7912 = vld [vmem:[%s7880 + $0x8c] sm:$0x1]
    %v7914 = vshrl.u32 %v7881, 16
    %v7916 = vrot.slane %v7914, 4
    %v7917 = vshll.u32 %v7881, 16
    %v7919 = vrot.slane %v7917, 5
    %v7920 = vor.u32 %v7916, %v7919
    %v7921 = vrot.slane %v7920, 4
    %v7923 = vshll.u32 %v7882, 16
    %v7925 = vrot.slane %v7923, 5
    %v7926 = vsel %vm1024, %v7921, %v7925
    %v7928 = vshrl.u32 %v7883, 16
    %v7930 = vrot.slane %v7928, 4
    %v7931 = vshll.u32 %v7883, 16
    %v7933 = vrot.slane %v7931, 5
    %v7934 = vor.u32 %v7930, %v7933
    %v7935 = vrot.slane %v7934, 4
    %v7937 = vshll.u32 %v7884, 16
    %v7939 = vrot.slane %v7937, 5
    %v7940 = vsel %vm1024, %v7935, %v7939
    %v7942 = vshrl.u32 %v7885, 16
    %v7944 = vrot.slane %v7942, 4
    %v7945 = vshll.u32 %v7885, 16
    %v7947 = vrot.slane %v7945, 5
    %v7948 = vor.u32 %v7944, %v7947
    %v7949 = vrot.slane %v7948, 4
    %v7951 = vshll.u32 %v7886, 16
    %v7953 = vrot.slane %v7951, 5
    %v7954 = vsel %vm1024, %v7949, %v7953
    %v7956 = vshrl.u32 %v7887, 16
    %v7958 = vrot.slane %v7956, 4
    %v7959 = vshll.u32 %v7887, 16
    %v7961 = vrot.slane %v7959, 5
    %v7962 = vor.u32 %v7958, %v7961
    %v7963 = vrot.slane %v7962, 4
    %v7965 = vshll.u32 %v7888, 16
    %v7967 = vrot.slane %v7965, 5
    %v7968 = vsel %vm1024, %v7963, %v7967
    %v7970 = vshrl.u32 %v7889, 16
    %v7972 = vrot.slane %v7970, 4
    %v7973 = vshll.u32 %v7889, 16
    %v7975 = vrot.slane %v7973, 5
    %v7976 = vor.u32 %v7972, %v7975
    %v7977 = vrot.slane %v7976, 4
    %v7979 = vshll.u32 %v7890, 16
    %v7981 = vrot.slane %v7979, 5
    %v7982 = vsel %vm1024, %v7977, %v7981
    %v7984 = vshrl.u32 %v7891, 16
    %v7986 = vrot.slane %v7984, 4
    %v7987 = vshll.u32 %v7891, 16
    %v7989 = vrot.slane %v7987, 5
    %v7990 = vor.u32 %v7986, %v7989
    %v7991 = vrot.slane %v7990, 4
    %v7993 = vshll.u32 %v7892, 16
    %v7995 = vrot.slane %v7993, 5
    %v7996 = vsel %vm1024, %v7991, %v7995
    %v7998 = vshrl.u32 %v7893, 16
    %v8000 = vrot.slane %v7998, 4
    %v8001 = vshll.u32 %v7893, 16
    %v8003 = vrot.slane %v8001, 5
    %v8004 = vor.u32 %v8000, %v8003
    %v8005 = vrot.slane %v8004, 4
    %v8007 = vshll.u32 %v7894, 16
    %v8009 = vrot.slane %v8007, 5
    %v8010 = vsel %vm1024, %v8005, %v8009
    %v8012 = vshrl.u32 %v7895, 16
    %v8014 = vrot.slane %v8012, 4
    %v8015 = vshll.u32 %v7895, 16
    %v8017 = vrot.slane %v8015, 5
    %v8018 = vor.u32 %v8014, %v8017
    %v8019 = vrot.slane %v8018, 4
    %v8021 = vshll.u32 %v7896, 16
    %v8023 = vrot.slane %v8021, 5
    %v8024 = vsel %vm1024, %v8019, %v8023
    %v8026 = vshrl.u32 %v7897, 16
    %v8028 = vrot.slane %v8026, 4
    %v8029 = vshll.u32 %v7897, 16
    %v8031 = vrot.slane %v8029, 5
    %v8032 = vor.u32 %v8028, %v8031
    %v8033 = vrot.slane %v8032, 4
    %v8035 = vshll.u32 %v7898, 16
    %v8037 = vrot.slane %v8035, 5
    %v8038 = vsel %vm1024, %v8033, %v8037
    %v8040 = vshrl.u32 %v7899, 16
    %v8042 = vrot.slane %v8040, 4
    %v8043 = vshll.u32 %v7899, 16
    %v8045 = vrot.slane %v8043, 5
    %v8046 = vor.u32 %v8042, %v8045
    %v8047 = vrot.slane %v8046, 4
    %v8049 = vshll.u32 %v7900, 16
    %v8051 = vrot.slane %v8049, 5
    %v8052 = vsel %vm1024, %v8047, %v8051
    %v8054 = vshrl.u32 %v7901, 16
    %v8056 = vrot.slane %v8054, 4
    %v8057 = vshll.u32 %v7901, 16
    %v8059 = vrot.slane %v8057, 5
    %v8060 = vor.u32 %v8056, %v8059
    %v8061 = vrot.slane %v8060, 4
    %v8063 = vshll.u32 %v7902, 16
    %v8065 = vrot.slane %v8063, 5
    %v8066 = vsel %vm1024, %v8061, %v8065
    %v8068 = vshrl.u32 %v7903, 16
    %v8070 = vrot.slane %v8068, 4
    %v8071 = vshll.u32 %v7903, 16
    %v8073 = vrot.slane %v8071, 5
    %v8074 = vor.u32 %v8070, %v8073
    %v8075 = vrot.slane %v8074, 4
    %v8077 = vshll.u32 %v7904, 16
    %v8079 = vrot.slane %v8077, 5
    %v8080 = vsel %vm1024, %v8075, %v8079
    %v8082 = vshrl.u32 %v7905, 16
    %v8084 = vrot.slane %v8082, 4
    %v8085 = vshll.u32 %v7905, 16
    %v8087 = vrot.slane %v8085, 5
    %v8088 = vor.u32 %v8084, %v8087
    %v8089 = vrot.slane %v8088, 4
    %v8091 = vshll.u32 %v7906, 16
    %v8093 = vrot.slane %v8091, 5
    %v8094 = vsel %vm1024, %v8089, %v8093
    %v8096 = vshrl.u32 %v7907, 16
    %v8098 = vrot.slane %v8096, 4
    %v8099 = vshll.u32 %v7907, 16
    %v8101 = vrot.slane %v8099, 5
    %v8102 = vor.u32 %v8098, %v8101
    %v8103 = vrot.slane %v8102, 4
    %v8105 = vshll.u32 %v7908, 16
    %v8107 = vrot.slane %v8105, 5
    %v8108 = vsel %vm1024, %v8103, %v8107
    %v8110 = vshrl.u32 %v7909, 16
    %v8112 = vrot.slane %v8110, 4
    %v8113 = vshll.u32 %v7909, 16
    %v8115 = vrot.slane %v8113, 5
    %v8116 = vor.u32 %v8112, %v8115
    %v8117 = vrot.slane %v8116, 4
    %v8119 = vshll.u32 %v7910, 16
    %v8121 = vrot.slane %v8119, 5
    %v8122 = vsel %vm1024, %v8117, %v8121
    %v8124 = vshrl.u32 %v7911, 16
    %v8126 = vrot.slane %v8124, 4
    %v8127 = vshll.u32 %v7911, 16
    %v8129 = vrot.slane %v8127, 5
    %v8130 = vor.u32 %v8126, %v8129
    %v8131 = vrot.slane %v8130, 4
    %v8133 = vshll.u32 %v7912, 16
    %v8135 = vrot.slane %v8133, 5
    %v8136 = vsel %vm1024, %v8131, %v8135
    %v8137 = vld [vmem:[%s11 + $0xc0] sm:$0xf]
    %v8138 = vld [vmem:[%s11 + $0xc4] sm:$0xf]
    %v8139 = vld [vmem:[%s11 + $0xc8] sm:$0xf]
    %v8140 = vld [vmem:[%s11 + $0xcc] sm:$0xf]
    %v8141 = vld [vmem:[%s11 + $0xd0] sm:$0xf]
    %v8142 = vld [vmem:[%s11 + $0xd4] sm:$0xf]
    %v8143 = vld [vmem:[%s11 + $0xd8] sm:$0xf]
    %v8144 = vld [vmem:[%s11 + $0xdc] sm:$0xf]
    %v8145 = vunpack.c.l.b16 %v7926
    %v8146 = vunpack.c.l.b16 %v7940
    %v8147 = vunpack.c.l.b16 %v7954
    %v8148 = vunpack.c.l.b16 %v7968
    %v8149 = vunpack.c.l.b16 %v7982
    %v8150 = vunpack.c.l.b16 %v7996
    %v8151 = vunpack.c.l.b16 %v8010
    %v8152 = vunpack.c.l.b16 %v8024
    %v8153 = vunpack.c.l.b16 %v8038
    %v8154 = vunpack.c.l.b16 %v8052
    %v8155 = vunpack.c.l.b16 %v8066
    %v8156 = vunpack.c.l.b16 %v8080
    %v8157 = vunpack.c.l.b16 %v8094
    %v8158 = vunpack.c.l.b16 %v8108
    %v8159 = vunpack.c.l.b16 %v8122
    %v8160 = vunpack.c.l.b16 %v8136
    %v8161 = vpack.c.b16 %v8146, %v8145
    %v8162 = vpack.c.b16 %v8148, %v8147
    %v8163 = vpack.c.b16 %v8150, %v8149
    %v8164 = vpack.c.b16 %v8152, %v8151
    %v8165 = vpack.c.b16 %v8154, %v8153
    %v8166 = vpack.c.b16 %v8156, %v8155
    %v8167 = vpack.c.b16 %v8158, %v8157
    %v8168 = vpack.c.b16 %v8160, %v8159
    %v8177 = vunpack.c.l.b16 %v8137
    %v8178 = vunpack.c.l.b16 %v8138
    %v8179 = vunpack.c.l.b16 %v8139
    %v8180 = vunpack.c.l.b16 %v8140
    %v8181 = vunpack.c.l.b16 %v8141
    %v8182 = vunpack.c.l.b16 %v8142
    %v8183 = vunpack.c.l.b16 %v8143
    %v8184 = vunpack.c.l.b16 %v8144
    %v8185 = vpack.c.b16 %v8178, %v8177
    %v8186 = vpack.c.b16 %v8180, %v8179
    %v8187 = vpack.c.b16 %v8182, %v8181
    %v8188 = vpack.c.b16 %v8184, %v8183
    %v8194 = vsel %vm4607, %v8161, 0
    %v8197 = vsel %vm4607, %v8162, 0
    %v8200 = vsel %vm4607, %v8163, 0
    %v8203 = vsel %vm4607, %v8164, 0
    %v8206 = vsel %vm4607, %v8165, 0
    %v8209 = vsel %vm4607, %v8166, 0
    %v8212 = vsel %vm4607, %v8167, 0
    %v8215 = vsel %vm4607, %v8168, 0
    %8217 = vmatprep.subr.bf16.mxu0 0
    %8218 = vmatpush1.bf16.msra.mxu0 0
    %8219 = vmatprep.subr.bf16.mxu0 0
    %8220 = vmatpush1.bf16.msra.mxu0 0
    %8221 = vmatprep.subr.bf16.mxu0 0
    %8222 = vmatpush1.bf16.msra.mxu0 0
    %8223 = vmatprep.subr.bf16.mxu0 0
    %8224 = vmatpush1.bf16.msra.mxu0 0
    %8225 = vmatprep.subr.bf16.mxu0 0
    %8226 = vmatpush1.bf16.msra.mxu0 %v8188
    %8227 = vmatprep.subr.bf16.mxu0 0
    %8228 = vmatpush1.bf16.msra.mxu0 %v8187
    %8229 = vmatprep.subr.bf16.mxu0 0
    %8230 = vmatpush1.bf16.msra.mxu0 %v8186
    %8231 = vmatprep.subr.bf16.mxu0 0
    %8232 = vmatpush1.bf16.msra.mxu0 %v8185
    %8233 = vmatprep.subr.bf16.mxu0 0
    %8234 = vmatpush2.bf16.msra.mxu0 0
    %8235 = vmatprep.subr.bf16.mxu0 0
    %8236 = vmatpush2.bf16.msra.mxu0 0
    %8237 = vmatprep.subr.bf16.mxu0 0
    %8238 = vmatpush2.bf16.msra.mxu0 0
    %8239 = vmatprep.subr.bf16.mxu0 0
    %8240 = vmatpush2.bf16.msra.mxu0 0
    %8241 = vmatprep.subr.bf16.mxu0 0
    %8242 = vmatpush2.bf16.msra.mxu0 0
    %8243 = vmatprep.subr.bf16.mxu0 0
    %8244 = vmatpush2.bf16.msra.mxu0 0
    %8245 = vmatprep.subr.bf16.mxu0 0
    %8246 = vmatpush2.bf16.msra.mxu0 0
    %8247 = vmatprep.subr.bf16.mxu0 0
    %8248 = vmatpush2.bf16.msra.mxu0 0
    %8249 = vmatprep.mubr.bf16.mxu0 0
    %8250 = vmatmul.mubr.bf16.gmra.mxu0 %v8194
    %v8251 = vpop.f32.mrf.mxu0
    %v8252 = vadd.f32 0.0, %v8251
    %v8253 = vpop.f32.mrf.mxu0
    %v8254 = vpop.f32.mrf.mxu0
    %v8255 = vadd.f32 0.0, %v8254
    %v8256 = vpop.f32.mrf.mxu0
    %8257 = vmatprep.mubr.bf16.mxu0 0
    %8258 = vmatmul.mubr.bf16.gmra.mxu0 %v8197
    %v8259 = vpop.f32.mrf.mxu0
    %v8260 = vadd.f32 0.0, %v8259
    %v8261 = vpop.f32.mrf.mxu0
    %v8262 = vpop.f32.mrf.mxu0
    %v8263 = vadd.f32 0.0, %v8262
    %v8264 = vpop.f32.mrf.mxu0
    %8265 = vmatprep.mubr.bf16.mxu0 0
    %8266 = vmatmul.mubr.bf16.gmra.mxu0 %v8200
    %v8267 = vpop.f32.mrf.mxu0
    %v8268 = vadd.f32 0.0, %v8267
    %v8269 = vpop.f32.mrf.mxu0
    %v8270 = vpop.f32.mrf.mxu0
    %v8271 = vadd.f32 0.0, %v8270
    %v8272 = vpop.f32.mrf.mxu0
    %8273 = vmatprep.mubr.bf16.mxu0 0
    %8274 = vmatmul.mubr.bf16.gmra.mxu0 %v8203
    %v8275 = vpop.f32.mrf.mxu0
    %v8276 = vadd.f32 0.0, %v8275
    %v8277 = vpop.f32.mrf.mxu0
    %v8278 = vpop.f32.mrf.mxu0
    %v8279 = vadd.f32 0.0, %v8278
    %v8280 = vpop.f32.mrf.mxu0
    %8281 = vmatprep.mubr.bf16.mxu0 0
    %8282 = vmatmul.mubr.bf16.gmra.mxu0 %v8206
    %v8283 = vpop.f32.mrf.mxu0
    %v8284 = vadd.f32 0.0, %v8283
    %v8285 = vpop.f32.mrf.mxu0
    %v8286 = vpop.f32.mrf.mxu0
    %v8287 = vadd.f32 0.0, %v8286
    %v8288 = vpop.f32.mrf.mxu0
    %8289 = vmatprep.mubr.bf16.mxu0 0
    %8290 = vmatmul.mubr.bf16.gmra.mxu0 %v8209
    %v8291 = vpop.f32.mrf.mxu0
    %v8292 = vadd.f32 0.0, %v8291
    %v8293 = vpop.f32.mrf.mxu0
    %v8294 = vpop.f32.mrf.mxu0
    %v8295 = vadd.f32 0.0, %v8294
    %v8296 = vpop.f32.mrf.mxu0
    %8297 = vmatprep.mubr.bf16.mxu0 0
    %8298 = vmatmul.mubr.bf16.gmra.mxu0 %v8212
    %v8299 = vpop.f32.mrf.mxu0
    %v8300 = vadd.f32 0.0, %v8299
    %v8301 = vpop.f32.mrf.mxu0
    %v8302 = vpop.f32.mrf.mxu0
    %v8303 = vadd.f32 0.0, %v8302
    %v8304 = vpop.f32.mrf.mxu0
    %8305 = vmatprep.mubr.bf16.mxu0 0
    %8306 = vmatmul.mubr.bf16.gmra.mxu0 %v8215
    %v8307 = vpop.f32.mrf.mxu0
    %v8308 = vadd.f32 0.0, %v8307
    %v8309 = vpop.f32.mrf.mxu0
    %v8310 = vpop.f32.mrf.mxu0
    %v8311 = vadd.f32 0.0, %v8310
    %v8312 = vpop.f32.mrf.mxu0
    %8313 = vdwg.mxu0
    %v8314 = vadd.f32 %v7864, %v8252
    %v8315 = vadd.f32 %v7865, %v8255
    %v8316 = vadd.f32 %v7866, %v8260
    %v8317 = vadd.f32 %v7867, %v8263
    %v8318 = vadd.f32 %v7868, %v8268
    %v8319 = vadd.f32 %v7869, %v8271
    %v8320 = vadd.f32 %v7870, %v8276
    %v8321 = vadd.f32 %v7871, %v8279
    %v8322 = vadd.f32 %v7872, %v8284
    %v8323 = vadd.f32 %v7873, %v8287
    %v8324 = vadd.f32 %v7874, %v8292
    %v8325 = vadd.f32 %v7875, %v8295
    %v8326 = vadd.f32 %v7876, %v8300
    %v8327 = vadd.f32 %v7877, %v8303
    %v8328 = vadd.f32 %v7878, %v8308
    %v8329 = vadd.f32 %v7879, %v8311
    %v8330 = vld [vmem:[%s7880] sm:$0xe]
    %v8331 = vld [vmem:[%s7880 + $0x8] sm:$0xe]
    %v8332 = vld [vmem:[%s7880 + $0x10] sm:$0xe]
    %v8333 = vld [vmem:[%s7880 + $0x18] sm:$0xe]
    %v8334 = vld [vmem:[%s7880 + $0x20] sm:$0xe]
    %v8335 = vld [vmem:[%s7880 + $0x28] sm:$0xe]
    %v8336 = vld [vmem:[%s7880 + $0x30] sm:$0xe]
    %v8337 = vld [vmem:[%s7880 + $0x38] sm:$0xe]
    %v8338 = vld [vmem:[%s7880 + $0x50] sm:$0xe]
    %v8339 = vld [vmem:[%s7880 + $0x58] sm:$0xe]
    %v8340 = vld [vmem:[%s7880 + $0x60] sm:$0xe]
    %v8341 = vld [vmem:[%s7880 + $0x68] sm:$0xe]
    %v8342 = vld [vmem:[%s7880 + $0x70] sm:$0xe]
    %v8343 = vld [vmem:[%s7880 + $0x78] sm:$0xe]
    %v8344 = vld [vmem:[%s7880 + $0x80] sm:$0xe]
    %v8345 = vld [vmem:[%s7880 + $0x88] sm:$0xe]
    %v8378 = vrot.slane %v8330, 5
    %v8379 = vrot.slane %v8378, 4
    %v8380 = vrot.slane %v7882, 5
    %v8381 = vsel %vm1303, %v8379, %v8380
    %v8382 = vrot.slane %v8331, 5
    %v8383 = vrot.slane %v8382, 4
    %v8384 = vrot.slane %v7884, 5
    %v8385 = vsel %vm1303, %v8383, %v8384
    %v8386 = vrot.slane %v8332, 5
    %v8387 = vrot.slane %v8386, 4
    %v8388 = vrot.slane %v7886, 5
    %v8389 = vsel %vm1303, %v8387, %v8388
    %v8390 = vrot.slane %v8333, 5
    %v8391 = vrot.slane %v8390, 4
    %v8392 = vrot.slane %v7888, 5
    %v8393 = vsel %vm1303, %v8391, %v8392
    %v8394 = vrot.slane %v8334, 5
    %v8395 = vrot.slane %v8394, 4
    %v8396 = vrot.slane %v7890, 5
    %v8397 = vsel %vm1303, %v8395, %v8396
    %v8398 = vrot.slane %v8335, 5
    %v8399 = vrot.slane %v8398, 4
    %v8400 = vrot.slane %v7892, 5
    %v8401 = vsel %vm1303, %v8399, %v8400
    %v8402 = vrot.slane %v8336, 5
    %v8403 = vrot.slane %v8402, 4
    %v8404 = vrot.slane %v7894, 5
    %v8405 = vsel %vm1303, %v8403, %v8404
    %v8406 = vrot.slane %v8337, 5
    %v8407 = vrot.slane %v8406, 4
    %v8408 = vrot.slane %v7896, 5
    %v8409 = vsel %vm1303, %v8407, %v8408
    %v8410 = vrot.slane %v8338, 5
    %v8411 = vrot.slane %v8410, 4
    %v8412 = vrot.slane %v7898, 5
    %v8413 = vsel %vm1303, %v8411, %v8412
    %v8414 = vrot.slane %v8339, 5
    %v8415 = vrot.slane %v8414, 4
    %v8416 = vrot.slane %v7900, 5
    %v8417 = vsel %vm1303, %v8415, %v8416
    %v8418 = vrot.slane %v8340, 5
    %v8419 = vrot.slane %v8418, 4
    %v8420 = vrot.slane %v7902, 5
    %v8421 = vsel %vm1303, %v8419, %v8420
    %v8422 = vrot.slane %v8341, 5
    %v8423 = vrot.slane %v8422, 4
    %v8424 = vrot.slane %v7904, 5
    %v8425 = vsel %vm1303, %v8423, %v8424
    %v8426 = vrot.slane %v8342, 5
    %v8427 = vrot.slane %v8426, 4
    %v8428 = vrot.slane %v7906, 5
    %v8429 = vsel %vm1303, %v8427, %v8428
    %v8430 = vrot.slane %v8343, 5
    %v8431 = vrot.slane %v8430, 4
    %v8432 = vrot.slane %v7908, 5
    %v8433 = vsel %vm1303, %v8431, %v8432
    %v8434 = vrot.slane %v8344, 5
    %v8435 = vrot.slane %v8434, 4
    %v8436 = vrot.slane %v7910, 5
    %v8437 = vsel %vm1303, %v8435, %v8436
    %v8438 = vrot.slane %v8345, 5
    %v8439 = vrot.slane %v8438, 4
    %v8440 = vrot.slane %v7912, 5
    %v8441 = vsel %vm1303, %v8439, %v8440
    %v8442 = vld [vmem:[%s11 + $0xe0] sm:$0xf]
    %v8443 = vld [vmem:[%s11 + $0xe4] sm:$0xf]
    %v8444 = vld [vmem:[%s11 + $0xe8] sm:$0xf]
    %v8445 = vld [vmem:[%s11 + $0xec] sm:$0xf]
    %v8446 = vld [vmem:[%s11 + $0xf0] sm:$0xf]
    %v8447 = vld [vmem:[%s11 + $0xf4] sm:$0xf]
    %v8448 = vld [vmem:[%s11 + $0xf8] sm:$0xf]
    %v8449 = vld [vmem:[%s11 + $0xfc] sm:$0xf]
    %v8450 = vunpack.c.l.b16 %v8381
    %v8451 = vunpack.c.l.b16 %v8385
    %v8452 = vunpack.c.l.b16 %v8389
    %v8453 = vunpack.c.l.b16 %v8393
    %v8454 = vunpack.c.l.b16 %v8397
    %v8455 = vunpack.c.l.b16 %v8401
    %v8456 = vunpack.c.l.b16 %v8405
    %v8457 = vunpack.c.l.b16 %v8409
    %v8458 = vunpack.c.l.b16 %v8413
    %v8459 = vunpack.c.l.b16 %v8417
    %v8460 = vunpack.c.l.b16 %v8421
    %v8461 = vunpack.c.l.b16 %v8425
    %v8462 = vunpack.c.l.b16 %v8429
    %v8463 = vunpack.c.l.b16 %v8433
    %v8464 = vunpack.c.l.b16 %v8437
    %v8465 = vunpack.c.l.b16 %v8441
    %v8466 = vpack.c.b16 %v8451, %v8450
    %v8467 = vpack.c.b16 %v8453, %v8452
    %v8468 = vpack.c.b16 %v8455, %v8454
    %v8469 = vpack.c.b16 %v8457, %v8456
    %v8470 = vpack.c.b16 %v8459, %v8458
    %v8471 = vpack.c.b16 %v8461, %v8460
    %v8472 = vpack.c.b16 %v8463, %v8462
    %v8473 = vpack.c.b16 %v8465, %v8464
    %v8482 = vunpack.c.l.b16 %v8442
    %v8483 = vunpack.c.l.b16 %v8443
    %v8484 = vunpack.c.l.b16 %v8444
    %v8485 = vunpack.c.l.b16 %v8445
    %v8486 = vunpack.c.l.b16 %v8446
    %v8487 = vunpack.c.l.b16 %v8447
    %v8488 = vunpack.c.l.b16 %v8448
    %v8489 = vunpack.c.l.b16 %v8449
    %v8490 = vpack.c.b16 %v8483, %v8482
    %v8491 = vpack.c.b16 %v8485, %v8484
    %v8492 = vpack.c.b16 %v8487, %v8486
    %v8493 = vpack.c.b16 %v8489, %v8488
    %v8499 = vsel %vm4607, %v8466, 0
    %v8502 = vsel %vm4607, %v8467, 0
    %v8505 = vsel %vm4607, %v8468, 0
    %v8508 = vsel %vm4607, %v8469, 0
    %v8511 = vsel %vm4607, %v8470, 0
    %v8514 = vsel %vm4607, %v8471, 0
    %v8517 = vsel %vm4607, %v8472, 0
    %v8520 = vsel %vm4607, %v8473, 0
    %8522 = vmatprep.subr.bf16.mxu0 0
    %8523 = vmatpush1.bf16.msra.mxu0 0
    %8524 = vmatprep.subr.bf16.mxu0 0
    %8525 = vmatpush1.bf16.msra.mxu0 0
    %8526 = vmatprep.subr.bf16.mxu0 0
    %8527 = vmatpush1.bf16.msra.mxu0 0
    %8528 = vmatprep.subr.bf16.mxu0 0
    %8529 = vmatpush1.bf16.msra.mxu0 0
    %8530 = vmatprep.subr.bf16.mxu0 0
    %8531 = vmatpush1.bf16.msra.mxu0 %v8493
    %8532 = vmatprep.subr.bf16.mxu0 0
    %8533 = vmatpush1.bf16.msra.mxu0 %v8492
    %8534 = vmatprep.subr.bf16.mxu0 0
    %8535 = vmatpush1.bf16.msra.mxu0 %v8491
    %8536 = vmatprep.subr.bf16.mxu0 0
    %8537 = vmatpush1.bf16.msra.mxu0 %v8490
    %8538 = vmatprep.subr.bf16.mxu0 0
    %8539 = vmatpush2.bf16.msra.mxu0 0
    %8540 = vmatprep.subr.bf16.mxu0 0
    %8541 = vmatpush2.bf16.msra.mxu0 0
    %8542 = vmatprep.subr.bf16.mxu0 0
    %8543 = vmatpush2.bf16.msra.mxu0 0
    %8544 = vmatprep.subr.bf16.mxu0 0
    %8545 = vmatpush2.bf16.msra.mxu0 0
    %8546 = vmatprep.subr.bf16.mxu0 0
    %8547 = vmatpush2.bf16.msra.mxu0 0
    %8548 = vmatprep.subr.bf16.mxu0 0
    %8549 = vmatpush2.bf16.msra.mxu0 0
    %8550 = vmatprep.subr.bf16.mxu0 0
    %8551 = vmatpush2.bf16.msra.mxu0 0
    %8552 = vmatprep.subr.bf16.mxu0 0
    %8553 = vmatpush2.bf16.msra.mxu0 0
    %8554 = vmatprep.mubr.bf16.mxu0 0
    %8555 = vmatmul.mubr.bf16.gmra.mxu0 %v8499
    %v8556 = vpop.f32.mrf.mxu0
    %v8557 = vadd.f32 0.0, %v8556
    %v8558 = vpop.f32.mrf.mxu0
    %v8559 = vpop.f32.mrf.mxu0
    %v8560 = vadd.f32 0.0, %v8559
    %v8561 = vpop.f32.mrf.mxu0
    %8562 = vmatprep.mubr.bf16.mxu0 0
    %8563 = vmatmul.mubr.bf16.gmra.mxu0 %v8502
    %v8564 = vpop.f32.mrf.mxu0
    %v8565 = vadd.f32 0.0, %v8564
    %v8566 = vpop.f32.mrf.mxu0
    %v8567 = vpop.f32.mrf.mxu0
    %v8568 = vadd.f32 0.0, %v8567
    %v8569 = vpop.f32.mrf.mxu0
    %8570 = vmatprep.mubr.bf16.mxu0 0
    %8571 = vmatmul.mubr.bf16.gmra.mxu0 %v8505
    %v8572 = vpop.f32.mrf.mxu0
    %v8573 = vadd.f32 0.0, %v8572
    %v8574 = vpop.f32.mrf.mxu0
    %v8575 = vpop.f32.mrf.mxu0
    %v8576 = vadd.f32 0.0, %v8575
    %v8577 = vpop.f32.mrf.mxu0
    %8578 = vmatprep.mubr.bf16.mxu0 0
    %8579 = vmatmul.mubr.bf16.gmra.mxu0 %v8508
    %v8580 = vpop.f32.mrf.mxu0
    %v8581 = vadd.f32 0.0, %v8580
    %v8582 = vpop.f32.mrf.mxu0
    %v8583 = vpop.f32.mrf.mxu0
    %v8584 = vadd.f32 0.0, %v8583
    %v8585 = vpop.f32.mrf.mxu0
    %8586 = vmatprep.mubr.bf16.mxu0 0
    %8587 = vmatmul.mubr.bf16.gmra.mxu0 %v8511
    %v8588 = vpop.f32.mrf.mxu0
    %v8589 = vadd.f32 0.0, %v8588
    %v8590 = vpop.f32.mrf.mxu0
    %v8591 = vpop.f32.mrf.mxu0
    %v8592 = vadd.f32 0.0, %v8591
    %v8593 = vpop.f32.mrf.mxu0
    %8594 = vmatprep.mubr.bf16.mxu0 0
    %8595 = vmatmul.mubr.bf16.gmra.mxu0 %v8514
    %v8596 = vpop.f32.mrf.mxu0
    %v8597 = vadd.f32 0.0, %v8596
    %v8598 = vpop.f32.mrf.mxu0
    %v8599 = vpop.f32.mrf.mxu0
    %v8600 = vadd.f32 0.0, %v8599
    %v8601 = vpop.f32.mrf.mxu0
    %8602 = vmatprep.mubr.bf16.mxu0 0
    %8603 = vmatmul.mubr.bf16.gmra.mxu0 %v8517
    %v8604 = vpop.f32.mrf.mxu0
    %v8605 = vadd.f32 0.0, %v8604
    %v8606 = vpop.f32.mrf.mxu0
    %v8607 = vpop.f32.mrf.mxu0
    %v8608 = vadd.f32 0.0, %v8607
    %v8609 = vpop.f32.mrf.mxu0
    %8610 = vmatprep.mubr.bf16.mxu0 0
    %8611 = vmatmul.mubr.bf16.gmra.mxu0 %v8520
    %v8612 = vpop.f32.mrf.mxu0
    %v8613 = vadd.f32 0.0, %v8612
    %v8614 = vpop.f32.mrf.mxu0
    %v8615 = vpop.f32.mrf.mxu0
    %v8616 = vadd.f32 0.0, %v8615
    %v8617 = vpop.f32.mrf.mxu0
    %8618 = vdwg.mxu0
    %v8619 = vadd.f32 %v8314, %v8557
    %v8620 = vadd.f32 %v8315, %v8560
    %v8621 = vadd.f32 %v8316, %v8565
    %v8622 = vadd.f32 %v8317, %v8568
    %v8623 = vadd.f32 %v8318, %v8573
    %v8624 = vadd.f32 %v8319, %v8576
    %v8625 = vadd.f32 %v8320, %v8581
    %v8626 = vadd.f32 %v8321, %v8584
    %v8627 = vadd.f32 %v8322, %v8589
    %v8628 = vadd.f32 %v8323, %v8592
    %v8629 = vadd.f32 %v8324, %v8597
    %v8630 = vadd.f32 %v8325, %v8600
    %v8631 = vadd.f32 %v8326, %v8605
    %v8632 = vadd.f32 %v8327, %v8608
    %v8633 = vadd.f32 %v8328, %v8613
    %v8634 = vadd.f32 %v8329, %v8616
    %v8635 = vld [vmem:[%s7880 + $0x4] sm:$0x3]
    %v8636 = vld [vmem:[%s7880 + $0xc] sm:$0x3]
    %v8637 = vld [vmem:[%s7880 + $0x14] sm:$0x3]
    %v8638 = vld [vmem:[%s7880 + $0x1c] sm:$0x3]
    %v8639 = vld [vmem:[%s7880 + $0x24] sm:$0x3]
    %v8640 = vld [vmem:[%s7880 + $0x2c] sm:$0x3]
    %v8641 = vld [vmem:[%s7880 + $0x34] sm:$0x3]
    %v8642 = vld [vmem:[%s7880 + $0x3c] sm:$0x3]
    %v8643 = vld [vmem:[%s7880 + $0x54] sm:$0x3]
    %v8644 = vld [vmem:[%s7880 + $0x5c] sm:$0x3]
    %v8645 = vld [vmem:[%s7880 + $0x64] sm:$0x3]
    %v8646 = vld [vmem:[%s7880 + $0x6c] sm:$0x3]
    %v8647 = vld [vmem:[%s7880 + $0x74] sm:$0x3]
    %v8648 = vld [vmem:[%s7880 + $0x7c] sm:$0x3]
    %v8649 = vld [vmem:[%s7880 + $0x84] sm:$0x3]
    %v8650 = vld [vmem:[%s7880 + $0x8c] sm:$0x3]
    %v8652 = vshrl.u32 %v8330, 16
    %v8654 = vrot.slane %v8652, 5
    %v8655 = vshll.u32 %v8330, 16
    %v8657 = vrot.slane %v8655, 6
    %v8658 = vor.u32 %v8654, %v8657
    %v8659 = vrot.slane %v8658, 4
    %v8661 = vshrl.u32 %v8635, 16
    %v8663 = vrot.slane %v8661, 5
    %v8664 = vshll.u32 %v8635, 16
    %v8666 = vrot.slane %v8664, 6
    %v8667 = vor.u32 %v8663, %v8666
    %v8668 = vsel %vm1704, %v8659, %v8667
    %v8670 = vshrl.u32 %v8331, 16
    %v8672 = vrot.slane %v8670, 5
    %v8673 = vshll.u32 %v8331, 16
    %v8675 = vrot.slane %v8673, 6
    %v8676 = vor.u32 %v8672, %v8675
    %v8677 = vrot.slane %v8676, 4
    %v8679 = vshrl.u32 %v8636, 16
    %v8681 = vrot.slane %v8679, 5
    %v8682 = vshll.u32 %v8636, 16
    %v8684 = vrot.slane %v8682, 6
    %v8685 = vor.u32 %v8681, %v8684
    %v8686 = vsel %vm1704, %v8677, %v8685
    %v8688 = vshrl.u32 %v8332, 16
    %v8690 = vrot.slane %v8688, 5
    %v8691 = vshll.u32 %v8332, 16
    %v8693 = vrot.slane %v8691, 6
    %v8694 = vor.u32 %v8690, %v8693
    %v8695 = vrot.slane %v8694, 4
    %v8697 = vshrl.u32 %v8637, 16
    %v8699 = vrot.slane %v8697, 5
    %v8700 = vshll.u32 %v8637, 16
    %v8702 = vrot.slane %v8700, 6
    %v8703 = vor.u32 %v8699, %v8702
    %v8704 = vsel %vm1704, %v8695, %v8703
    %v8706 = vshrl.u32 %v8333, 16
    %v8708 = vrot.slane %v8706, 5
    %v8709 = vshll.u32 %v8333, 16
    %v8711 = vrot.slane %v8709, 6
    %v8712 = vor.u32 %v8708, %v8711
    %v8713 = vrot.slane %v8712, 4
    %v8715 = vshrl.u32 %v8638, 16
    %v8717 = vrot.slane %v8715, 5
    %v8718 = vshll.u32 %v8638, 16
    %v8720 = vrot.slane %v8718, 6
    %v8721 = vor.u32 %v8717, %v8720
    %v8722 = vsel %vm1704, %v8713, %v8721
    %v8724 = vshrl.u32 %v8334, 16
    %v8726 = vrot.slane %v8724, 5
    %v8727 = vshll.u32 %v8334, 16
    %v8729 = vrot.slane %v8727, 6
    %v8730 = vor.u32 %v8726, %v8729
    %v8731 = vrot.slane %v8730, 4
    %v8733 = vshrl.u32 %v8639, 16
    %v8735 = vrot.slane %v8733, 5
    %v8736 = vshll.u32 %v8639, 16
    %v8738 = vrot.slane %v8736, 6
    %v8739 = vor.u32 %v8735, %v8738
    %v8740 = vsel %vm1704, %v8731, %v8739
    %v8742 = vshrl.u32 %v8335, 16
    %v8744 = vrot.slane %v8742, 5
    %v8745 = vshll.u32 %v8335, 16
    %v8747 = vrot.slane %v8745, 6
    %v8748 = vor.u32 %v8744, %v8747
    %v8749 = vrot.slane %v8748, 4
    %v8751 = vshrl.u32 %v8640, 16
    %v8753 = vrot.slane %v8751, 5
    %v8754 = vshll.u32 %v8640, 16
    %v8756 = vrot.slane %v8754, 6
    %v8757 = vor.u32 %v8753, %v8756
    %v8758 = vsel %vm1704, %v8749, %v8757
    %v8760 = vshrl.u32 %v8336, 16
    %v8762 = vrot.slane %v8760, 5
    %v8763 = vshll.u32 %v8336, 16
    %v8765 = vrot.slane %v8763, 6
    %v8766 = vor.u32 %v8762, %v8765
    %v8767 = vrot.slane %v8766, 4
    %v8769 = vshrl.u32 %v8641, 16
    %v8771 = vrot.slane %v8769, 5
    %v8772 = vshll.u32 %v8641, 16
    %v8774 = vrot.slane %v8772, 6
    %v8775 = vor.u32 %v8771, %v8774
    %v8776 = vsel %vm1704, %v8767, %v8775
    %v8778 = vshrl.u32 %v8337, 16
    %v8780 = vrot.slane %v8778, 5
    %v8781 = vshll.u32 %v8337, 16
    %v8783 = vrot.slane %v8781, 6
    %v8784 = vor.u32 %v8780, %v8783
    %v8785 = vrot.slane %v8784, 4
    %v8787 = vshrl.u32 %v8642, 16
    %v8789 = vrot.slane %v8787, 5
    %v8790 = vshll.u32 %v8642, 16
    %v8792 = vrot.slane %v8790, 6
    %v8793 = vor.u32 %v8789, %v8792
    %v8794 = vsel %vm1704, %v8785, %v8793
    %v8796 = vshrl.u32 %v8338, 16
    %v8798 = vrot.slane %v8796, 5
    %v8799 = vshll.u32 %v8338, 16
    %v8801 = vrot.slane %v8799, 6
    %v8802 = vor.u32 %v8798, %v8801
    %v8803 = vrot.slane %v8802, 4
    %v8805 = vshrl.u32 %v8643, 16
    %v8807 = vrot.slane %v8805, 5
    %v8808 = vshll.u32 %v8643, 16
    %v8810 = vrot.slane %v8808, 6
    %v8811 = vor.u32 %v8807, %v8810
    %v8812 = vsel %vm1704, %v8803, %v8811
    %v8814 = vshrl.u32 %v8339, 16
    %v8816 = vrot.slane %v8814, 5
    %v8817 = vshll.u32 %v8339, 16
    %v8819 = vrot.slane %v8817, 6
    %v8820 = vor.u32 %v8816, %v8819
    %v8821 = vrot.slane %v8820, 4
    %v8823 = vshrl.u32 %v8644, 16
    %v8825 = vrot.slane %v8823, 5
    %v8826 = vshll.u32 %v8644, 16
    %v8828 = vrot.slane %v8826, 6
    %v8829 = vor.u32 %v8825, %v8828
    %v8830 = vsel %vm1704, %v8821, %v8829
    %v8832 = vshrl.u32 %v8340, 16
    %v8834 = vrot.slane %v8832, 5
    %v8835 = vshll.u32 %v8340, 16
    %v8837 = vrot.slane %v8835, 6
    %v8838 = vor.u32 %v8834, %v8837
    %v8839 = vrot.slane %v8838, 4
    %v8841 = vshrl.u32 %v8645, 16
    %v8843 = vrot.slane %v8841, 5
    %v8844 = vshll.u32 %v8645, 16
    %v8846 = vrot.slane %v8844, 6
    %v8847 = vor.u32 %v8843, %v8846
    %v8848 = vsel %vm1704, %v8839, %v8847
    %v8850 = vshrl.u32 %v8341, 16
    %v8852 = vrot.slane %v8850, 5
    %v8853 = vshll.u32 %v8341, 16
    %v8855 = vrot.slane %v8853, 6
    %v8856 = vor.u32 %v8852, %v8855
    %v8857 = vrot.slane %v8856, 4
    %v8859 = vshrl.u32 %v8646, 16
    %v8861 = vrot.slane %v8859, 5
    %v8862 = vshll.u32 %v8646, 16
    %v8864 = vrot.slane %v8862, 6
    %v8865 = vor.u32 %v8861, %v8864
    %v8866 = vsel %vm1704, %v8857, %v8865
    %v8868 = vshrl.u32 %v8342, 16
    %v8870 = vrot.slane %v8868, 5
    %v8871 = vshll.u32 %v8342, 16
    %v8873 = vrot.slane %v8871, 6
    %v8874 = vor.u32 %v8870, %v8873
    %v8875 = vrot.slane %v8874, 4
    %v8877 = vshrl.u32 %v8647, 16
    %v8879 = vrot.slane %v8877, 5
    %v8880 = vshll.u32 %v8647, 16
    %v8882 = vrot.slane %v8880, 6
    %v8883 = vor.u32 %v8879, %v8882
    %v8884 = vsel %vm1704, %v8875, %v8883
    %v8886 = vshrl.u32 %v8343, 16
    %v8888 = vrot.slane %v8886, 5
    %v8889 = vshll.u32 %v8343, 16
    %v8891 = vrot.slane %v8889, 6
    %v8892 = vor.u32 %v8888, %v8891
    %v8893 = vrot.slane %v8892, 4
    %v8895 = vshrl.u32 %v8648, 16
    %v8897 = vrot.slane %v8895, 5
    %v8898 = vshll.u32 %v8648, 16
    %v8900 = vrot.slane %v8898, 6
    %v8901 = vor.u32 %v8897, %v8900
    %v8902 = vsel %vm1704, %v8893, %v8901
    %v8904 = vshrl.u32 %v8344, 16
    %v8906 = vrot.slane %v8904, 5
    %v8907 = vshll.u32 %v8344, 16
    %v8909 = vrot.slane %v8907, 6
    %v8910 = vor.u32 %v8906, %v8909
    %v8911 = vrot.slane %v8910, 4
    %v8913 = vshrl.u32 %v8649, 16
    %v8915 = vrot.slane %v8913, 5
    %v8916 = vshll.u32 %v8649, 16
    %v8918 = vrot.slane %v8916, 6
    %v8919 = vor.u32 %v8915, %v8918
    %v8920 = vsel %vm1704, %v8911, %v8919
    %v8922 = vshrl.u32 %v8345, 16
    %v8924 = vrot.slane %v8922, 5
    %v8925 = vshll.u32 %v8345, 16
    %v8927 = vrot.slane %v8925, 6
    %v8928 = vor.u32 %v8924, %v8927
    %v8929 = vrot.slane %v8928, 4
    %v8931 = vshrl.u32 %v8650, 16
    %v8933 = vrot.slane %v8931, 5
    %v8934 = vshll.u32 %v8650, 16
    %v8936 = vrot.slane %v8934, 6
    %v8937 = vor.u32 %v8933, %v8936
    %v8938 = vsel %vm1704, %v8929, %v8937
    %v8939 = vld [vmem:[%s11 + $0x100] sm:$0xf]
    %v8940 = vld [vmem:[%s11 + $0x104] sm:$0xf]
    %v8941 = vld [vmem:[%s11 + $0x108] sm:$0xf]
    %v8942 = vld [vmem:[%s11 + $0x10c] sm:$0xf]
    %v8943 = vld [vmem:[%s11 + $0x110] sm:$0xf]
    %v8944 = vld [vmem:[%s11 + $0x114] sm:$0xf]
    %v8945 = vld [vmem:[%s11 + $0x118] sm:$0xf]
    %v8946 = vld [vmem:[%s11 + $0x11c] sm:$0xf]
    %v8947 = vunpack.c.l.b16 %v8668
    %v8948 = vunpack.c.l.b16 %v8686
    %v8949 = vunpack.c.l.b16 %v8704
    %v8950 = vunpack.c.l.b16 %v8722
    %v8951 = vunpack.c.l.b16 %v8740
    %v8952 = vunpack.c.l.b16 %v8758
    %v8953 = vunpack.c.l.b16 %v8776
    %v8954 = vunpack.c.l.b16 %v8794
    %v8955 = vunpack.c.l.b16 %v8812
    %v8956 = vunpack.c.l.b16 %v8830
    %v8957 = vunpack.c.l.b16 %v8848
    %v8958 = vunpack.c.l.b16 %v8866
    %v8959 = vunpack.c.l.b16 %v8884
    %v8960 = vunpack.c.l.b16 %v8902
    %v8961 = vunpack.c.l.b16 %v8920
    %v8962 = vunpack.c.l.b16 %v8938
    %v8963 = vpack.c.b16 %v8948, %v8947
    %v8964 = vpack.c.b16 %v8950, %v8949
    %v8965 = vpack.c.b16 %v8952, %v8951
    %v8966 = vpack.c.b16 %v8954, %v8953
    %v8967 = vpack.c.b16 %v8956, %v8955
    %v8968 = vpack.c.b16 %v8958, %v8957
    %v8969 = vpack.c.b16 %v8960, %v8959
    %v8970 = vpack.c.b16 %v8962, %v8961
    %v8979 = vunpack.c.l.b16 %v8939
    %v8980 = vunpack.c.l.b16 %v8940
    %v8981 = vunpack.c.l.b16 %v8941
    %v8982 = vunpack.c.l.b16 %v8942
    %v8983 = vunpack.c.l.b16 %v8943
    %v8984 = vunpack.c.l.b16 %v8944
    %v8985 = vunpack.c.l.b16 %v8945
    %v8986 = vunpack.c.l.b16 %v8946
    %v8987 = vpack.c.b16 %v8980, %v8979
    %v8988 = vpack.c.b16 %v8982, %v8981
    %v8989 = vpack.c.b16 %v8984, %v8983
    %v8990 = vpack.c.b16 %v8986, %v8985
    %v8996 = vsel %vm4607, %v8963, 0
    %v8999 = vsel %vm4607, %v8964, 0
    %v9002 = vsel %vm4607, %v8965, 0
    %v9005 = vsel %vm4607, %v8966, 0
    %v9008 = vsel %vm4607, %v8967, 0
    %v9011 = vsel %vm4607, %v8968, 0
    %v9014 = vsel %vm4607, %v8969, 0
    %v9017 = vsel %vm4607, %v8970, 0
    %9019 = vmatprep.subr.bf16.mxu0 0
    %9020 = vmatpush1.bf16.msra.mxu0 0
    %9021 = vmatprep.subr.bf16.mxu0 0
    %9022 = vmatpush1.bf16.msra.mxu0 0
    %9023 = vmatprep.subr.bf16.mxu0 0
    %9024 = vmatpush1.bf16.msra.mxu0 0
    %9025 = vmatprep.subr.bf16.mxu0 0
    %9026 = vmatpush1.bf16.msra.mxu0 0
    %9027 = vmatprep.subr.bf16.mxu0 0
    %9028 = vmatpush1.bf16.msra.mxu0 %v8990
    %9029 = vmatprep.subr.bf16.mxu0 0
    %9030 = vmatpush1.bf16.msra.mxu0 %v8989
    %9031 = vmatprep.subr.bf16.mxu0 0
    %9032 = vmatpush1.bf16.msra.mxu0 %v8988
    %9033 = vmatprep.subr.bf16.mxu0 0
    %9034 = vmatpush1.bf16.msra.mxu0 %v8987
    %9035 = vmatprep.subr.bf16.mxu0 0
    %9036 = vmatpush2.bf16.msra.mxu0 0
    %9037 = vmatprep.subr.bf16.mxu0 0
    %9038 = vmatpush2.bf16.msra.mxu0 0
    %9039 = vmatprep.subr.bf16.mxu0 0
    %9040 = vmatpush2.bf16.msra.mxu0 0
    %9041 = vmatprep.subr.bf16.mxu0 0
    %9042 = vmatpush2.bf16.msra.mxu0 0
    %9043 = vmatprep.subr.bf16.mxu0 0
    %9044 = vmatpush2.bf16.msra.mxu0 0
    %9045 = vmatprep.subr.bf16.mxu0 0
    %9046 = vmatpush2.bf16.msra.mxu0 0
    %9047 = vmatprep.subr.bf16.mxu0 0
    %9048 = vmatpush2.bf16.msra.mxu0 0
    %9049 = vmatprep.subr.bf16.mxu0 0
    %9050 = vmatpush2.bf16.msra.mxu0 0
    %9051 = vmatprep.mubr.bf16.mxu0 0
    %9052 = vmatmul.mubr.bf16.gmra.mxu0 %v8996
    %v9053 = vpop.f32.mrf.mxu0
    %v9054 = vadd.f32 0.0, %v9053
    %v9055 = vpop.f32.mrf.mxu0
    %v9056 = vpop.f32.mrf.mxu0
    %v9057 = vadd.f32 0.0, %v9056
    %v9058 = vpop.f32.mrf.mxu0
    %9059 = vmatprep.mubr.bf16.mxu0 0
    %9060 = vmatmul.mubr.bf16.gmra.mxu0 %v8999
    %v9061 = vpop.f32.mrf.mxu0
    %v9062 = vadd.f32 0.0, %v9061
    %v9063 = vpop.f32.mrf.mxu0
    %v9064 = vpop.f32.mrf.mxu0
    %v9065 = vadd.f32 0.0, %v9064
    %v9066 = vpop.f32.mrf.mxu0
    %9067 = vmatprep.mubr.bf16.mxu0 0
    %9068 = vmatmul.mubr.bf16.gmra.mxu0 %v9002
    %v9069 = vpop.f32.mrf.mxu0
    %v9070 = vadd.f32 0.0, %v9069
    %v9071 = vpop.f32.mrf.mxu0
    %v9072 = vpop.f32.mrf.mxu0
    %v9073 = vadd.f32 0.0, %v9072
    %v9074 = vpop.f32.mrf.mxu0
    %9075 = vmatprep.mubr.bf16.mxu0 0
    %9076 = vmatmul.mubr.bf16.gmra.mxu0 %v9005
    %v9077 = vpop.f32.mrf.mxu0
    %v9078 = vadd.f32 0.0, %v9077
    %v9079 = vpop.f32.mrf.mxu0
    %v9080 = vpop.f32.mrf.mxu0
    %v9081 = vadd.f32 0.0, %v9080
    %v9082 = vpop.f32.mrf.mxu0
    %9083 = vmatprep.mubr.bf16.mxu0 0
    %9084 = vmatmul.mubr.bf16.gmra.mxu0 %v9008
    %v9085 = vpop.f32.mrf.mxu0
    %v9086 = vadd.f32 0.0, %v9085
    %v9087 = vpop.f32.mrf.mxu0
    %v9088 = vpop.f32.mrf.mxu0
    %v9089 = vadd.f32 0.0, %v9088
    %v9090 = vpop.f32.mrf.mxu0
    %9091 = vmatprep.mubr.bf16.mxu0 0
    %9092 = vmatmul.mubr.bf16.gmra.mxu0 %v9011
    %v9093 = vpop.f32.mrf.mxu0
    %v9094 = vadd.f32 0.0, %v9093
    %v9095 = vpop.f32.mrf.mxu0
    %v9096 = vpop.f32.mrf.mxu0
    %v9097 = vadd.f32 0.0, %v9096
    %v9098 = vpop.f32.mrf.mxu0
    %9099 = vmatprep.mubr.bf16.mxu0 0
    %9100 = vmatmul.mubr.bf16.gmra.mxu0 %v9014
    %v9101 = vpop.f32.mrf.mxu0
    %v9102 = vadd.f32 0.0, %v9101
    %v9103 = vpop.f32.mrf.mxu0
    %v9104 = vpop.f32.mrf.mxu0
    %v9105 = vadd.f32 0.0, %v9104
    %v9106 = vpop.f32.mrf.mxu0
    %9107 = vmatprep.mubr.bf16.mxu0 0
    %9108 = vmatmul.mubr.bf16.gmra.mxu0 %v9017
    %v9109 = vpop.f32.mrf.mxu0
    %v9110 = vadd.f32 0.0, %v9109
    %v9111 = vpop.f32.mrf.mxu0
    %v9112 = vpop.f32.mrf.mxu0
    %v9113 = vadd.f32 0.0, %v9112
    %v9114 = vpop.f32.mrf.mxu0
    %9115 = vdwg.mxu0
    %v9116 = vadd.f32 %v8619, %v9054
    %v9117 = vadd.f32 %v8620, %v9057
    %v9118 = vadd.f32 %v8621, %v9062
    %v9119 = vadd.f32 %v8622, %v9065
    %v9120 = vadd.f32 %v8623, %v9070
    %v9121 = vadd.f32 %v8624, %v9073
    %v9122 = vadd.f32 %v8625, %v9078
    %v9123 = vadd.f32 %v8626, %v9081
    %v9124 = vadd.f32 %v8627, %v9086
    %v9125 = vadd.f32 %v8628, %v9089
    %v9126 = vadd.f32 %v8629, %v9094
    %v9127 = vadd.f32 %v8630, %v9097
    %v9128 = vadd.f32 %v8631, %v9102
    %v9129 = vadd.f32 %v8632, %v9105
    %v9130 = vadd.f32 %v8633, %v9110
    %v9131 = vadd.f32 %v8634, %v9113
    %v9132 = vld [vmem:[%s12] sm:$0x1]
    %v9134 = vlaneseq
    %v9135 = vshrl.u32 %v9134, 7
    %v9136 = vsub.s32 0, %v9135
    %v9137 = vrot.slane %v9132, %v9136
    %v9139 = vadd.f32 %v9116, %v9137
    %v9140 = vadd.f32 %v9117, %v9137
    %v9141 = vadd.f32 %v9118, %v9137
    %v9142 = vadd.f32 %v9119, %v9137
    %v9143 = vadd.f32 %v9120, %v9137
    %v9144 = vadd.f32 %v9121, %v9137
    %v9145 = vadd.f32 %v9122, %v9137
    %v9146 = vadd.f32 %v9123, %v9137
    %v9147 = vadd.f32 %v9124, %v9137
    %v9148 = vadd.f32 %v9125, %v9137
    %v9149 = vadd.f32 %v9126, %v9137
    %v9150 = vadd.f32 %v9127, %v9137
    %v9151 = vadd.f32 %v9128, %v9137
    %v9152 = vadd.f32 %v9129, %v9137
    %v9153 = vadd.f32 %v9130, %v9137
    %v9154 = vadd.f32 %v9131, %v9137
    %v9155 = vld [vmem:[%s13] sm:$0xf]
    %v9156 = vld [vmem:[%s13 + $0x4] sm:$0xf]
    %v9157 = vld [vmem:[%s13 + $0x8] sm:$0xf]
    %v9158 = vld [vmem:[%s13 + $0xc] sm:$0xf]
    %v9175 = vunpack.c.l.b16 %v52
    %v9176 = vunpack.c.l.b16 %v53
    %v9177 = vunpack.c.l.b16 %v54
    %v9178 = vunpack.c.l.b16 %v55
    %v9179 = vunpack.c.l.b16 %v56
    %v9180 = vunpack.c.l.b16 %v57
    %v9181 = vunpack.c.l.b16 %v58
    %v9182 = vunpack.c.l.b16 %v59
    %v9183 = vunpack.c.l.b16 %v60
    %v9184 = vunpack.c.l.b16 %v61
    %v9185 = vunpack.c.l.b16 %v62
    %v9186 = vunpack.c.l.b16 %v63
    %v9187 = vunpack.c.l.b16 %v64
    %v9188 = vunpack.c.l.b16 %v65
    %v9189 = vunpack.c.l.b16 %v66
    %v9190 = vunpack.c.l.b16 %v67
    %v9191 = vpack.c.b16 %v9176, %v9175
    %v9192 = vpack.c.b16 %v9178, %v9177
    %v9193 = vpack.c.b16 %v9180, %v9179
    %v9194 = vpack.c.b16 %v9182, %v9181
    %v9195 = vpack.c.b16 %v9184, %v9183
    %v9196 = vpack.c.b16 %v9186, %v9185
    %v9197 = vpack.c.b16 %v9188, %v9187
    %v9198 = vpack.c.b16 %v9190, %v9189
    %v9203 = vunpack.c.l.b16 %v9155
    %v9204 = vunpack.c.l.b16 %v9156
    %v9205 = vunpack.c.l.b16 %v9157
    %v9206 = vunpack.c.l.b16 %v9158
    %v9207 = vpack.c.b16 %v9204, %v9203
    %v9208 = vpack.c.b16 %v9206, %v9205
    %v9212 = vsel %vm190, %v9191, 0
    %v9215 = vsel %vm190, %v9192, 0
    %v9218 = vsel %vm190, %v9193, 0
    %v9221 = vsel %vm190, %v9194, 0
    %v9224 = vsel %vm190, %v9195, 0
    %v9227 = vsel %vm190, %v9196, 0
    %v9230 = vsel %vm190, %v9197, 0
    %v9233 = vsel %vm190, %v9198, 0
    %9235 = vmatprep.subr.bf16.mxu0 0
    %9236 = vmatpush1.bf16.msra.mxu0 0
    %9237 = vmatprep.subr.bf16.mxu0 0
    %9238 = vmatpush1.bf16.msra.mxu0 0
    %9239 = vmatprep.subr.bf16.mxu0 0
    %9240 = vmatpush1.bf16.msra.mxu0 0
    %9241 = vmatprep.subr.bf16.mxu0 0
    %9242 = vmatpush1.bf16.msra.mxu0 0
    %9243 = vmatprep.subr.bf16.mxu0 0
    %9244 = vmatpush1.bf16.msra.mxu0 0
    %9245 = vmatprep.subr.bf16.mxu0 0
    %9246 = vmatpush1.bf16.msra.mxu0 0
    %9247 = vmatprep.subr.bf16.mxu0 0
    %9248 = vmatpush1.bf16.msra.mxu0 %v9208
    %9249 = vmatprep.subr.bf16.mxu0 0
    %9250 = vmatpush1.bf16.msra.mxu0 %v9207
    %9251 = vmatprep.subr.bf16.mxu0 0
    %9252 = vmatpush2.bf16.msra.mxu0 0
    %9253 = vmatprep.subr.bf16.mxu0 0
    %9254 = vmatpush2.bf16.msra.mxu0 0
    %9255 = vmatprep.subr.bf16.mxu0 0
    %9256 = vmatpush2.bf16.msra.mxu0 0
    %9257 = vmatprep.subr.bf16.mxu0 0
    %9258 = vmatpush2.bf16.msra.mxu0 0
    %9259 = vmatprep.subr.bf16.mxu0 0
    %9260 = vmatpush2.bf16.msra.mxu0 0
    %9261 = vmatprep.subr.bf16.mxu0 0
    %9262 = vmatpush2.bf16.msra.mxu0 0
    %9263 = vmatprep.subr.bf16.mxu0 0
    %9264 = vmatpush2.bf16.msra.mxu0 0
    %9265 = vmatprep.subr.bf16.mxu0 0
    %9266 = vmatpush2.bf16.msra.mxu0 0
    %9267 = vmatprep.mubr.bf16.mxu0 0
    %9268 = vmatmul.mubr.bf16.gmra.mxu0 %v9212
    %v9269 = vpop.f32.mrf.mxu0
    %v9270 = vadd.f32 0.0, %v9269
    %v9271 = vpop.f32.mrf.mxu0
    %v9272 = vpop.f32.mrf.mxu0
    %v9273 = vadd.f32 0.0, %v9272
    %v9274 = vpop.f32.mrf.mxu0
    %9275 = vmatprep.mubr.bf16.mxu0 0
    %9276 = vmatmul.mubr.bf16.gmra.mxu0 %v9215
    %v9277 = vpop.f32.mrf.mxu0
    %v9278 = vadd.f32 0.0, %v9277
    %v9279 = vpop.f32.mrf.mxu0
    %v9280 = vpop.f32.mrf.mxu0
    %v9281 = vadd.f32 0.0, %v9280
    %v9282 = vpop.f32.mrf.mxu0
    %9283 = vmatprep.mubr.bf16.mxu0 0
    %9284 = vmatmul.mubr.bf16.gmra.mxu0 %v9218
    %v9285 = vpop.f32.mrf.mxu0
    %v9286 = vadd.f32 0.0, %v9285
    %v9287 = vpop.f32.mrf.mxu0
    %v9288 = vpop.f32.mrf.mxu0
    %v9289 = vadd.f32 0.0, %v9288
    %v9290 = vpop.f32.mrf.mxu0
    %9291 = vmatprep.mubr.bf16.mxu0 0
    %9292 = vmatmul.mubr.bf16.gmra.mxu0 %v9221
    %v9293 = vpop.f32.mrf.mxu0
    %v9294 = vadd.f32 0.0, %v9293
    %v9295 = vpop.f32.mrf.mxu0
    %v9296 = vpop.f32.mrf.mxu0
    %v9297 = vadd.f32 0.0, %v9296
    %v9298 = vpop.f32.mrf.mxu0
    %9299 = vmatprep.mubr.bf16.mxu0 0
    %9300 = vmatmul.mubr.bf16.gmra.mxu0 %v9224
    %v9301 = vpop.f32.mrf.mxu0
    %v9302 = vadd.f32 0.0, %v9301
    %v9303 = vpop.f32.mrf.mxu0
    %v9304 = vpop.f32.mrf.mxu0
    %v9305 = vadd.f32 0.0, %v9304
    %v9306 = vpop.f32.mrf.mxu0
    %9307 = vmatprep.mubr.bf16.mxu0 0
    %9308 = vmatmul.mubr.bf16.gmra.mxu0 %v9227
    %v9309 = vpop.f32.mrf.mxu0
    %v9310 = vadd.f32 0.0, %v9309
    %v9311 = vpop.f32.mrf.mxu0
    %v9312 = vpop.f32.mrf.mxu0
    %v9313 = vadd.f32 0.0, %v9312
    %v9314 = vpop.f32.mrf.mxu0
    %9315 = vmatprep.mubr.bf16.mxu0 0
    %9316 = vmatmul.mubr.bf16.gmra.mxu0 %v9230
    %v9317 = vpop.f32.mrf.mxu0
    %v9318 = vadd.f32 0.0, %v9317
    %v9319 = vpop.f32.mrf.mxu0
    %v9320 = vpop.f32.mrf.mxu0
    %v9321 = vadd.f32 0.0, %v9320
    %v9322 = vpop.f32.mrf.mxu0
    %9323 = vmatprep.mubr.bf16.mxu0 0
    %9324 = vmatmul.mubr.bf16.gmra.mxu0 %v9233
    %v9325 = vpop.f32.mrf.mxu0
    %v9326 = vadd.f32 0.0, %v9325
    %v9327 = vpop.f32.mrf.mxu0
    %v9328 = vpop.f32.mrf.mxu0
    %v9329 = vadd.f32 0.0, %v9328
    %v9330 = vpop.f32.mrf.mxu0
    %9331 = vdwg.mxu0
    %v9332 = vld [vmem:[%s14] sm:$0x1]
    %v9334 = vlaneseq
    %v9335 = vshrl.u32 %v9334, 7
    %v9336 = vsub.s32 0, %v9335
    %v9337 = vrot.slane %v9332, %v9336
    %v9339 = vadd.f32 %v9270, %v9337
    %v9340 = vadd.f32 %v9273, %v9337
    %v9341 = vadd.f32 %v9278, %v9337
    %v9342 = vadd.f32 %v9281, %v9337
    %v9343 = vadd.f32 %v9286, %v9337
    %v9344 = vadd.f32 %v9289, %v9337
    %v9345 = vadd.f32 %v9294, %v9337
    %v9346 = vadd.f32 %v9297, %v9337
    %v9347 = vadd.f32 %v9302, %v9337
    %v9348 = vadd.f32 %v9305, %v9337
    %v9349 = vadd.f32 %v9310, %v9337
    %v9350 = vadd.f32 %v9313, %v9337
    %v9351 = vadd.f32 %v9318, %v9337
    %v9352 = vadd.f32 %v9321, %v9337
    %v9353 = vadd.f32 %v9326, %v9337
    %v9354 = vadd.f32 %v9329, %v9337
    %v9355 = vadd.f32 %v9339, %v9139
    %v9356 = vadd.f32 %v9340, %v9140
    %v9357 = vadd.f32 %v9341, %v9141
    %v9358 = vadd.f32 %v9342, %v9142
    %v9359 = vadd.f32 %v9343, %v9143
    %v9360 = vadd.f32 %v9344, %v9144
    %v9361 = vadd.f32 %v9345, %v9145
    %v9362 = vadd.f32 %v9346, %v9146
    %v9363 = vadd.f32 %v9347, %v9147
    %v9364 = vadd.f32 %v9348, %v9148
    %v9365 = vadd.f32 %v9349, %v9149
    %v9366 = vadd.f32 %v9350, %v9150
    %v9367 = vadd.f32 %v9351, %v9151
    %v9368 = vadd.f32 %v9352, %v9152
    %v9369 = vadd.f32 %v9353, %v9153
    %v9370 = vadd.f32 %v9354, %v9154
    %9371 = vst.msk [vmem:[#allocation4] sm:$0xff] %vm4607, %v9355
    %9372 = vst.msk [vmem:[#allocation4 + $0x8] sm:$0xff] %vm4607, %v9356
    %9373 = vst.msk [vmem:[#allocation4 + $0x10] sm:$0xff] %vm4607, %v9357
    %9374 = vst.msk [vmem:[#allocation4 + $0x18] sm:$0xff] %vm4607, %v9358
    %9375 = vst.msk [vmem:[#allocation4 + $0x20] sm:$0xff] %vm4607, %v9359
    %9376 = vst.msk [vmem:[#allocation4 + $0x28] sm:$0xff] %vm4607, %v9360
    %9377 = vst.msk [vmem:[#allocation4 + $0x30] sm:$0xff] %vm4607, %v9361
    %9378 = vst.msk [vmem:[#allocation4 + $0x38] sm:$0xff] %vm4607, %v9362
    %9379 = vst.msk [vmem:[#allocation4 + $0x40] sm:$0xff] %vm4607, %v9363
    %9380 = vst.msk [vmem:[#allocation4 + $0x48] sm:$0xff] %vm4607, %v9364
    %9381 = vst.msk [vmem:[#allocation4 + $0x50] sm:$0xff] %vm4607, %v9365
    %9382 = vst.msk [vmem:[#allocation4 + $0x58] sm:$0xff] %vm4607, %v9366
    %9383 = vst.msk [vmem:[#allocation4 + $0x60] sm:$0xff] %vm4607, %v9367
    %9384 = vst.msk [vmem:[#allocation4 + $0x68] sm:$0xff] %vm4607, %v9368
    %9385 = vst.msk [vmem:[#allocation4 + $0x70] sm:$0xff] %vm4607, %v9369
    %9386 = vst.msk [vmem:[#allocation4 + $0x78] sm:$0xff] %vm4607, %v9370
    // Predicated region
    $region62: #{tpu_custom_call.1} parent=1 // pred_check
      _
    $region63: #{tpu_custom_call.1} parent=1 // pred_check_branch
      %9388 = sbr.rel (0) target = $region65
    $region64: #{tpu_custom_call.1} parent=1 // pred_region
      %s9390 = ssub.s32 2048, 2048
      %9391 = vsyncadd [#allocation5], %s9390
      %s9392 = sshll.u32 [#allocation4], 4
      %s9393 = int_to_ptr.vmem [resolvable:$true] %s9392
      %9398 = dma.vmem_to_hbm [thread:$0]  %s9393, 2048, %s15, [#allocation5], 128, 128, 8
    $region65: #{tpu_custom_call.1} parent=1 // pred_fallthru
      _
    // Predicated region
    $region66: #{tpu_custom_call.1} parent=1 // pred_check
      _
    $region67: #{tpu_custom_call.1} parent=1 // pred_check_branch
      %9400 = sbr.rel (0) target = $region69
    $region68: #{tpu_custom_call.1} parent=1 // pred_region
      %9401 = dma.done [#allocation5], 2048
    $region69: #{tpu_custom_call.1} parent=1 // pred_fallthru
      _
    %9402 = vsyncpa [#allocation5], 1

</llo_original>
